<compile_context>
chip_gen: v5e
topology: v5e:2x2
jax: 0.10.0
libtpu: 0.0.40
codegen_flags: <defaults>
</compile_context>

<pallas_src>
import numpy as np
import jax
import jax.numpy as jnp
from jax.experimental import pallas as pl
from jax.experimental.pallas import tpu as pltpu


def centered_idft_matrix(n: int) -> np.ndarray:
    """Matrix A such that A @ x == fftshift(ifft(ifftshift(x), norm='ortho'))."""
    eye = np.eye(n, dtype=np.complex64)
    m = np.fft.ifftshift(eye, axes=0)
    m = np.fft.ifft(m, axis=0, norm="ortho")
    m = np.fft.fftshift(m, axes=0)
    return m.astype(np.complex64)


def _pick_row_tile(h: int, cap: int = 320) -> int:
    """Row tile of A_H / output: divisor of H, multiple of 8, <= cap."""
    if h <= cap:
        return h
    for th in range(cap, 7, -1):
        if h % th == 0 and th % 8 == 0:
            return th
    return h  # pathological H: single row tile


def _pick_coil_tile(c: int, h: int, w: int, wp: int, th: int,
                    budget_bytes: int, cap: int = 8) -> int:
    """Largest coil tile whose estimated VMEM footprint fits the budget."""
    def est(ct):
        dbl_in = 2 * (2 * ct * h * w)                 # double-buffered input block
        dbl_mats = 2 * (2 * th * h + 2 * w * wp)      # 4 DFT matrices, double-buffered
        out_buf = 2 * (th * wp)                       # resident output block
        temps = 8 * th * wp + 4 * th * w + 4 * h * w + w * wp + th * h
        return 4 * (dbl_in + dbl_mats + out_buf + temps)
    best = 1
    for ct in range(1, min(c, cap) + 1):
        if c % ct == 0 and est(ct) <= budget_bytes:
            best = ct
    return best


def _make_kernel(CT: int, precision):
    dot_kwargs = dict(preferred_element_type=jnp.float32)
    if precision is not None:
        dot_kwargs["precision"] = precision

    def kernel(kri_ref, ahr_ref, ahi_ref, awrt_ref, awit_ref, out_ref):
        ci = pl.program_id(2)
        nc = pl.num_programs(2)
        cdt = kri_ref.dtype                       # MXU operand dtype (f32 or bf16)

        ahr = ahr_ref[...]                        # (TH, H) row tile of A_H
        ahi = ahi_ref[...]
        ahs = (ahr + ahi).astype(cdt)             # sums computed in-kernel (2 fewer inputs)
        awrt = awrt_ref[...]                      # (W, Wp), zero-padded lanes
        awit = awit_ref[...]
        awst = (awrt + awit).astype(cdt)

        def coil_sq_mag(c):
            """|A_H[rows] @ X_c @ A_W^T|^2 for one coil; temps stay (TH, Wp)."""
            xr = kri_ref[0, 0, c]                 # (H, W)
            xi = kri_ref[1, 0, c]
            xs = xr + xi
            # Stage 1: T = A_H[rows] @ X   (Gauss 3-multiply complex matmul)
            t1 = jnp.dot(ahr, xr, **dot_kwargs)
            t2 = jnp.dot(ahi, xi, **dot_kwargs)
            t3 = jnp.dot(ahs, xs, **dot_kwargs)
            tr = t1 - t2                          # (TH, W)  real(T)
            ti = t3 - t1 - t2                     # (TH, W)  imag(T)
            ts = tr + ti
            # Stage 2: Y = T @ A_W^T  (Gauss, per coil so temps are bounded)
            u1 = jnp.dot(tr.astype(cdt), awrt, **dot_kwargs)
            u2 = jnp.dot(ti.astype(cdt), awit, **dot_kwargs)
            u3 = jnp.dot(ts.astype(cdt), awst, **dot_kwargs)
            yr = u1 - u2                          # (TH, Wp)
            yi = u3 - u1 - u2
            return yr * yr + yi * yi              # zero on padded lanes

        partial = coil_sq_mag(0)
        for c in range(1, CT):                    # static, small coil tile
            partial = partial + coil_sq_mag(c)

        # RSS^2 accumulated directly into the resident output block.
        @pl.when(ci == 0)
        def _init():
            out_ref[0] = partial

        @pl.when(ci != 0)
        def _accumulate():
            out_ref[0] = out_ref[0] + partial

        @pl.when(ci == nc - 1)
        def _finalize():
            out_ref[0] = jnp.sqrt(out_ref[0])     # RSS over coils

    return kernel


def reconstructor_forward(masked_kspace, mask=None, center_mask=None, *,
                          coil_tile=None, row_tile=None, use_bf16=False,
                          precision=jax.lax.Precision.HIGHEST):
    """Zero-filled Reconstructor.forward: rss(complex_abs(ifft2c_new(kspace)), dim=1).

    masked_kspace: (B, C, H, W, 2) float32 (torch BCHW2 convention).
    `mask` / `center_mask` accepted for interface parity; unused on this path.
    """
    B, C, H, W, two = masked_kspace.shape
    assert two == 2, "last dim must be 2 (real/imag)"
    Wp = ((W + 127) // 128) * 128                 # lane-dense output width

    # ---- hardware-aware VMEM budget & tile selection -----------------------
    vmem_phys = 64 * 1024 * 1024                  # conservative default (v7x per-TC)
    try:
        info = pltpu.get_tpu_info()
        vmem_phys = int(getattr(info, "vmem_capacity_bytes", vmem_phys))
    except Exception:
        pass
    vmem_limit = min(int(0.75 * vmem_phys), 96 * 1024 * 1024)
    budget = max(16 * 1024 * 1024, vmem_limit - 20 * 1024 * 1024)

    TH = row_tile if row_tile is not None else _pick_row_tile(H)
    assert H % TH == 0
    CT = coil_tile if coil_tile is not None else _pick_coil_tile(C, H, W, Wp, TH, budget)
    assert C % CT == 0

    in_dtype = jnp.bfloat16 if use_bf16 else jnp.float32
    if use_bf16:
        # TODO(synk): bf16 MXU path must be re-validated against the 1e-4 tolerance.
        precision = None

    # Planar (2, B, C, H, W): one transpose instead of two stride-2 gathers.
    # TODO(synk): if the upstream producer can emit this layout directly, drop this
    # transpose — it is a separate HBM round trip outside the kernel pipeline.
    kri = jnp.moveaxis(masked_kspace.astype(jnp.float32), -1, 0).astype(in_dtype)

    # Host-precomputed centered IDFT matrices (fft shifts folded in).
    ah = centered_idft_matrix(H)
    aw = centered_idft_matrix(W)
    ahr = np.ascontiguousarray(ah.real).astype(np.float32)
    ahi = np.ascontiguousarray(ah.imag).astype(np.float32)
    awt = np.ascontiguousarray(aw.T)
    awrt = np.zeros((W, Wp), np.float32)
    awit = np.zeros((W, Wp), np.float32)
    awrt[:, :W] = awt.real
    awit[:, :W] = awt.imag

    bpe = 2 if use_bf16 else 4
    flops = int(B) * int(C) * (6 * H * H * W + 6 * H * W * Wp)
    bytes_accessed = ((H // TH) * kri.size * bpe                # X re-fetched per row tile
                      + B * H * Wp * 4                          # output
                      + (H // TH) * (2 * H * H + 2 * W * Wp) * bpe)

    args = (kri,
            jnp.asarray(ahr, dtype=in_dtype), jnp.asarray(ahi, dtype=in_dtype),
            jnp.asarray(awrt, dtype=in_dtype), jnp.asarray(awit, dtype=in_dtype))

    def _run(prec):
        return pl.pallas_call(
            _make_kernel(CT, prec),
            out_shape=jax.ShapeDtypeStruct((B, H, Wp), jnp.float32),
            grid=(B, H // TH, C // CT),
            in_specs=[
                pl.BlockSpec((2, 1, CT, H, W), lambda b, h, c: (0, b, c, 0, 0)),
                pl.BlockSpec((TH, H), lambda b, h, c: (h, 0)),
                pl.BlockSpec((TH, H), lambda b, h, c: (h, 0)),
                pl.BlockSpec((W, Wp), lambda b, h, c: (0, 0)),
                pl.BlockSpec((W, Wp), lambda b, h, c: (0, 0)),
            ],
            out_specs=pl.BlockSpec((1, TH, Wp), lambda b, h, c: (b, h, 0)),
            compiler_params=pltpu.CompilerParams(
                dimension_semantics=("parallel", "parallel", "arbitrary"),
                vmem_limit_bytes=vmem_limit),
            cost_estimate=pl.CostEstimate(
                flops=flops, transcendentals=int(B * H * Wp),
                bytes_accessed=int(bytes_accessed)),
        )(*args)

    try:
        out = _run(precision)
    except Exception:
        if precision is None:
            raise
        # Fallback: some Mosaic builds reject an explicit dot precision attribute;
        # f32 operands still get exact-f32 MXU passes under the default.
        out = _run(None)

    if Wp != W:
        out = out[:, :, :W]
    return out


if __name__ == "__main__":
    B, C, H, W = 2, 4, 16, 16
    key = jax.random.PRNGKey(0)
    k1, k2 = jax.random.split(key)

    masked_kspace = jax.random.normal(k1, (B, C, H, W, 2), dtype=jnp.float32)
    # Acquisition mask (unused by the zero-filled path; kept for interface parity).
    mask = (jax.random.uniform(k2, (B, 1, 1, W, 1)) > 0.5).astype(jnp.float32)

    out = reconstructor_forward(masked_kspace, mask)
    out = jax.block_until_ready(out)

    # Reference: numpy rss(complex_abs(ifft2c_new(kspace)), dim=1)
    ks = np.asarray(masked_kspace)
    kc = ks[..., 0] + 1j * ks[..., 1]
    img = np.fft.fftshift(
        np.fft.ifft2(np.fft.ifftshift(kc, axes=(-2, -1)), axes=(-2, -1), norm="ortho"),
        axes=(-2, -1),
    )
    ref = np.sqrt(np.sum(np.abs(img) ** 2, axis=1))

    assert out.shape == (B, H, W) and out.dtype == jnp.float32
    np.testing.assert_allclose(np.asarray(out), ref, rtol=1e-4, atol=1e-4)
    print("KERNEL_OK")
</pallas_src>

<mosaic_0001>
module attributes {stable_mosaic.version = 11 : i64} {
  func.func @kernel(%arg0: i32, %arg1: i32, %arg2: i32, %arg3: memref<2x1x4x16x16xf32, #tpu.memory_space<vmem>>, %arg4: memref<16x16xf32, #tpu.memory_space<vmem>>, %arg5: memref<16x16xf32, #tpu.memory_space<vmem>>, %arg6: memref<16x128xf32, #tpu.memory_space<vmem>>, %arg7: memref<16x128xf32, #tpu.memory_space<vmem>>, %arg8: memref<1x16x128xf32, #tpu.memory_space<vmem>>) attributes {dimension_semantics = [#tpu.dimension_semantics<parallel>, #tpu.dimension_semantics<parallel>, #tpu.dimension_semantics<arbitrary>], iteration_bounds = array<i64: 2, 1, 1>, scalar_prefetch = 0 : i64, scratch_operands = 0 : i64, tpu.core_type = #tpu.core_type<tc>, window_params = [{transform_indices = @transform_0, window_bounds = array<i64: 2, 1, 4, 16, 16>}, {transform_indices = @transform_1, window_bounds = array<i64: 16, 16>}, {transform_indices = @transform_2, window_bounds = array<i64: 16, 16>}, {pipeline_mode = #tpu.pipeline_mode<synchronous>, transform_indices = @transform_3, window_bounds = array<i64: 16, 128>}, {pipeline_mode = #tpu.pipeline_mode<synchronous>, transform_indices = @transform_4, window_bounds = array<i64: 16, 128>}, {transform_indices = @transform_5, window_bounds = array<i64: 1, 16, 128>}]} {
    %c0 = arith.constant 0 : index
    %c0_0 = arith.constant 0 : index
    %0 = vector.load %arg4[%c0, %c0_0] : memref<16x16xf32, #tpu.memory_space<vmem>>, vector<16x16xf32>
    %c0_1 = arith.constant 0 : index
    %c0_2 = arith.constant 0 : index
    %1 = vector.load %arg5[%c0_1, %c0_2] : memref<16x16xf32, #tpu.memory_space<vmem>>, vector<16x16xf32>
    %2 = arith.addf %0, %1 : vector<16x16xf32>
    %c0_3 = arith.constant 0 : index
    %c0_4 = arith.constant 0 : index
    %3 = vector.load %arg6[%c0_3, %c0_4] : memref<16x128xf32, #tpu.memory_space<vmem>>, vector<16x128xf32>
    %c0_5 = arith.constant 0 : index
    %c0_6 = arith.constant 0 : index
    %4 = vector.load %arg7[%c0_5, %c0_6] : memref<16x128xf32, #tpu.memory_space<vmem>>, vector<16x128xf32>
    %5 = arith.addf %3, %4 : vector<16x128xf32>
    %c0_7 = arith.constant 0 : index
    %c0_8 = arith.constant 0 : index
    %c0_9 = arith.constant 0 : index
    %c0_10 = arith.constant 0 : index
    %c0_11 = arith.constant 0 : index
    %6 = vector.load %arg3[%c0_7, %c0_8, %c0_9, %c0_10, %c0_11] : memref<2x1x4x16x16xf32, #tpu.memory_space<vmem>>, vector<1x1x1x16x16xf32>
    %7 = vector.shape_cast %6 : vector<1x1x1x16x16xf32> to vector<16x16xf32>
    %c1 = arith.constant 1 : index
    %c0_12 = arith.constant 0 : index
    %c0_13 = arith.constant 0 : index
    %c0_14 = arith.constant 0 : index
    %c0_15 = arith.constant 0 : index
    %8 = vector.load %arg3[%c1, %c0_12, %c0_13, %c0_14, %c0_15] : memref<2x1x4x16x16xf32, #tpu.memory_space<vmem>>, vector<1x1x1x16x16xf32>
    %9 = vector.shape_cast %8 : vector<1x1x1x16x16xf32> to vector<16x16xf32>
    %10 = arith.addf %7, %9 : vector<16x16xf32>
    %cst = arith.constant dense<0.000000e+00> : vector<16x16xf32>
    %11 = tpu.matmul %0, %7, %cst {dimension_numbers = #tpu.dot_dimension_numbers<[1], [0], [0], [1], [0, 0, 1, 1], [], []>, precision = #tpu.contract_precision<fp32>} : vector<16x16xf32>, vector<16x16xf32>, vector<16x16xf32> -> vector<16x16xf32>
    %cst_16 = arith.constant dense<0.000000e+00> : vector<16x16xf32>
    %12 = tpu.matmul %1, %9, %cst_16 {dimension_numbers = #tpu.dot_dimension_numbers<[1], [0], [0], [1], [0, 0, 1, 1], [], []>, precision = #tpu.contract_precision<fp32>} : vector<16x16xf32>, vector<16x16xf32>, vector<16x16xf32> -> vector<16x16xf32>
    %cst_17 = arith.constant dense<0.000000e+00> : vector<16x16xf32>
    %13 = tpu.matmul %2, %10, %cst_17 {dimension_numbers = #tpu.dot_dimension_numbers<[1], [0], [0], [1], [0, 0, 1, 1], [], []>, precision = #tpu.contract_precision<fp32>} : vector<16x16xf32>, vector<16x16xf32>, vector<16x16xf32> -> vector<16x16xf32>
    %14 = arith.subf %11, %12 : vector<16x16xf32>
    %15 = arith.subf %13, %11 : vector<16x16xf32>
    %16 = arith.subf %15, %12 : vector<16x16xf32>
    %17 = arith.addf %14, %16 : vector<16x16xf32>
    %cst_18 = arith.constant dense<0.000000e+00> : vector<16x128xf32>
    %18 = tpu.matmul %14, %3, %cst_18 {dimension_numbers = #tpu.dot_dimension_numbers<[1], [0], [0], [1], [0, 0, 1, 1], [], []>, precision = #tpu.contract_precision<fp32>} : vector<16x16xf32>, vector<16x128xf32>, vector<16x128xf32> -> vector<16x128xf32>
    %cst_19 = arith.constant dense<0.000000e+00> : vector<16x128xf32>
    %19 = tpu.matmul %16, %4, %cst_19 {dimension_numbers = #tpu.dot_dimension_numbers<[1], [0], [0], [1], [0, 0, 1, 1], [], []>, precision = #tpu.contract_precision<fp32>} : vector<16x16xf32>, vector<16x128xf32>, vector<16x128xf32> -> vector<16x128xf32>
    %cst_20 = arith.constant dense<0.000000e+00> : vector<16x128xf32>
    %20 = tpu.matmul %17, %5, %cst_20 {dimension_numbers = #tpu.dot_dimension_numbers<[1], [0], [0], [1], [0, 0, 1, 1], [], []>, precision = #tpu.contract_precision<fp32>} : vector<16x16xf32>, vector<16x128xf32>, vector<16x128xf32> -> vector<16x128xf32>
    %21 = arith.subf %18, %19 : vector<16x128xf32>
    %22 = arith.subf %20, %18 : vector<16x128xf32>
    %23 = arith.subf %22, %19 : vector<16x128xf32>
    %24 = arith.mulf %21, %21 : vector<16x128xf32>
    %25 = arith.mulf %23, %23 : vector<16x128xf32>
    %26 = arith.addf %24, %25 : vector<16x128xf32>
    %c0_21 = arith.constant 0 : index
    %c0_22 = arith.constant 0 : index
    %c1_23 = arith.constant 1 : index
    %c0_24 = arith.constant 0 : index
    %c0_25 = arith.constant 0 : index
    %27 = vector.load %arg3[%c0_21, %c0_22, %c1_23, %c0_24, %c0_25] : memref<2x1x4x16x16xf32, #tpu.memory_space<vmem>>, vector<1x1x1x16x16xf32>
    %28 = vector.shape_cast %27 : vector<1x1x1x16x16xf32> to vector<16x16xf32>
    %c1_26 = arith.constant 1 : index
    %c0_27 = arith.constant 0 : index
    %c1_28 = arith.constant 1 : index
    %c0_29 = arith.constant 0 : index
    %c0_30 = arith.constant 0 : index
    %29 = vector.load %arg3[%c1_26, %c0_27, %c1_28, %c0_29, %c0_30] : memref<2x1x4x16x16xf32, #tpu.memory_space<vmem>>, vector<1x1x1x16x16xf32>
    %30 = vector.shape_cast %29 : vector<1x1x1x16x16xf32> to vector<16x16xf32>
    %31 = arith.addf %28, %30 : vector<16x16xf32>
    %cst_31 = arith.constant dense<0.000000e+00> : vector<16x16xf32>
    %32 = tpu.matmul %0, %28, %cst_31 {dimension_numbers = #tpu.dot_dimension_numbers<[1], [0], [0], [1], [0, 0, 1, 1], [], []>, precision = #tpu.contract_precision<fp32>} : vector<16x16xf32>, vector<16x16xf32>, vector<16x16xf32> -> vector<16x16xf32>
    %cst_32 = arith.constant dense<0.000000e+00> : vector<16x16xf32>
    %33 = tpu.matmul %1, %30, %cst_32 {dimension_numbers = #tpu.dot_dimension_numbers<[1], [0], [0], [1], [0, 0, 1, 1], [], []>, precision = #tpu.contract_precision<fp32>} : vector<16x16xf32>, vector<16x16xf32>, vector<16x16xf32> -> vector<16x16xf32>
    %cst_33 = arith.constant dense<0.000000e+00> : vector<16x16xf32>
    %34 = tpu.matmul %2, %31, %cst_33 {dimension_numbers = #tpu.dot_dimension_numbers<[1], [0], [0], [1], [0, 0, 1, 1], [], []>, precision = #tpu.contract_precision<fp32>} : vector<16x16xf32>, vector<16x16xf32>, vector<16x16xf32> -> vector<16x16xf32>
    %35 = arith.subf %32, %33 : vector<16x16xf32>
    %36 = arith.subf %34, %32 : vector<16x16xf32>
    %37 = arith.subf %36, %33 : vector<16x16xf32>
    %38 = arith.addf %35, %37 : vector<16x16xf32>
    %cst_34 = arith.constant dense<0.000000e+00> : vector<16x128xf32>
    %39 = tpu.matmul %35, %3, %cst_34 {dimension_numbers = #tpu.dot_dimension_numbers<[1], [0], [0], [1], [0, 0, 1, 1], [], []>, precision = #tpu.contract_precision<fp32>} : vector<16x16xf32>, vector<16x128xf32>, vector<16x128xf32> -> vector<16x128xf32>
    %cst_35 = arith.constant dense<0.000000e+00> : vector<16x128xf32>
    %40 = tpu.matmul %37, %4, %cst_35 {dimension_numbers = #tpu.dot_dimension_numbers<[1], [0], [0], [1], [0, 0, 1, 1], [], []>, precision = #tpu.contract_precision<fp32>} : vector<16x16xf32>, vector<16x128xf32>, vector<16x128xf32> -> vector<16x128xf32>
    %cst_36 = arith.constant dense<0.000000e+00> : vector<16x128xf32>
    %41 = tpu.matmul %38, %5, %cst_36 {dimension_numbers = #tpu.dot_dimension_numbers<[1], [0], [0], [1], [0, 0, 1, 1], [], []>, precision = #tpu.contract_precision<fp32>} : vector<16x16xf32>, vector<16x128xf32>, vector<16x128xf32> -> vector<16x128xf32>
    %42 = arith.subf %39, %40 : vector<16x128xf32>
    %43 = arith.subf %41, %39 : vector<16x128xf32>
    %44 = arith.subf %43, %40 : vector<16x128xf32>
    %45 = arith.mulf %42, %42 : vector<16x128xf32>
    %46 = arith.mulf %44, %44 : vector<16x128xf32>
    %47 = arith.addf %45, %46 : vector<16x128xf32>
    %48 = arith.addf %26, %47 : vector<16x128xf32>
    %c0_37 = arith.constant 0 : index
    %c0_38 = arith.constant 0 : index
    %c2 = arith.constant 2 : index
    %c0_39 = arith.constant 0 : index
    %c0_40 = arith.constant 0 : index
    %49 = vector.load %arg3[%c0_37, %c0_38, %c2, %c0_39, %c0_40] : memref<2x1x4x16x16xf32, #tpu.memory_space<vmem>>, vector<1x1x1x16x16xf32>
    %50 = vector.shape_cast %49 : vector<1x1x1x16x16xf32> to vector<16x16xf32>
    %c1_41 = arith.constant 1 : index
    %c0_42 = arith.constant 0 : index
    %c2_43 = arith.constant 2 : index
    %c0_44 = arith.constant 0 : index
    %c0_45 = arith.constant 0 : index
    %51 = vector.load %arg3[%c1_41, %c0_42, %c2_43, %c0_44, %c0_45] : memref<2x1x4x16x16xf32, #tpu.memory_space<vmem>>, vector<1x1x1x16x16xf32>
    %52 = vector.shape_cast %51 : vector<1x1x1x16x16xf32> to vector<16x16xf32>
    %53 = arith.addf %50, %52 : vector<16x16xf32>
    %cst_46 = arith.constant dense<0.000000e+00> : vector<16x16xf32>
    %54 = tpu.matmul %0, %50, %cst_46 {dimension_numbers = #tpu.dot_dimension_numbers<[1], [0], [0], [1], [0, 0, 1, 1], [], []>, precision = #tpu.contract_precision<fp32>} : vector<16x16xf32>, vector<16x16xf32>, vector<16x16xf32> -> vector<16x16xf32>
    %cst_47 = arith.constant dense<0.000000e+00> : vector<16x16xf32>
    %55 = tpu.matmul %1, %52, %cst_47 {dimension_numbers = #tpu.dot_dimension_numbers<[1], [0], [0], [1], [0, 0, 1, 1], [], []>, precision = #tpu.contract_precision<fp32>} : vector<16x16xf32>, vector<16x16xf32>, vector<16x16xf32> -> vector<16x16xf32>
    %cst_48 = arith.constant dense<0.000000e+00> : vector<16x16xf32>
    %56 = tpu.matmul %2, %53, %cst_48 {dimension_numbers = #tpu.dot_dimension_numbers<[1], [0], [0], [1], [0, 0, 1, 1], [], []>, precision = #tpu.contract_precision<fp32>} : vector<16x16xf32>, vector<16x16xf32>, vector<16x16xf32> -> vector<16x16xf32>
    %57 = arith.subf %54, %55 : vector<16x16xf32>
    %58 = arith.subf %56, %54 : vector<16x16xf32>
    %59 = arith.subf %58, %55 : vector<16x16xf32>
    %60 = arith.addf %57, %59 : vector<16x16xf32>
    %cst_49 = arith.constant dense<0.000000e+00> : vector<16x128xf32>
    %61 = tpu.matmul %57, %3, %cst_49 {dimension_numbers = #tpu.dot_dimension_numbers<[1], [0], [0], [1], [0, 0, 1, 1], [], []>, precision = #tpu.contract_precision<fp32>} : vector<16x16xf32>, vector<16x128xf32>, vector<16x128xf32> -> vector<16x128xf32>
    %cst_50 = arith.constant dense<0.000000e+00> : vector<16x128xf32>
    %62 = tpu.matmul %59, %4, %cst_50 {dimension_numbers = #tpu.dot_dimension_numbers<[1], [0], [0], [1], [0, 0, 1, 1], [], []>, precision = #tpu.contract_precision<fp32>} : vector<16x16xf32>, vector<16x128xf32>, vector<16x128xf32> -> vector<16x128xf32>
    %cst_51 = arith.constant dense<0.000000e+00> : vector<16x128xf32>
    %63 = tpu.matmul %60, %5, %cst_51 {dimension_numbers = #tpu.dot_dimension_numbers<[1], [0], [0], [1], [0, 0, 1, 1], [], []>, precision = #tpu.contract_precision<fp32>} : vector<16x16xf32>, vector<16x128xf32>, vector<16x128xf32> -> vector<16x128xf32>
    %64 = arith.subf %61, %62 : vector<16x128xf32>
    %65 = arith.subf %63, %61 : vector<16x128xf32>
    %66 = arith.subf %65, %62 : vector<16x128xf32>
    %67 = arith.mulf %64, %64 : vector<16x128xf32>
    %68 = arith.mulf %66, %66 : vector<16x128xf32>
    %69 = arith.addf %67, %68 : vector<16x128xf32>
    %70 = arith.addf %48, %69 : vector<16x128xf32>
    %c0_52 = arith.constant 0 : index
    %c0_53 = arith.constant 0 : index
    %c3 = arith.constant 3 : index
    %c0_54 = arith.constant 0 : index
    %c0_55 = arith.constant 0 : index
    %71 = vector.load %arg3[%c0_52, %c0_53, %c3, %c0_54, %c0_55] : memref<2x1x4x16x16xf32, #tpu.memory_space<vmem>>, vector<1x1x1x16x16xf32>
    %72 = vector.shape_cast %71 : vector<1x1x1x16x16xf32> to vector<16x16xf32>
    %c1_56 = arith.constant 1 : index
    %c0_57 = arith.constant 0 : index
    %c3_58 = arith.constant 3 : index
    %c0_59 = arith.constant 0 : index
    %c0_60 = arith.constant 0 : index
    %73 = vector.load %arg3[%c1_56, %c0_57, %c3_58, %c0_59, %c0_60] : memref<2x1x4x16x16xf32, #tpu.memory_space<vmem>>, vector<1x1x1x16x16xf32>
    %74 = vector.shape_cast %73 : vector<1x1x1x16x16xf32> to vector<16x16xf32>
    %75 = arith.addf %72, %74 : vector<16x16xf32>
    %cst_61 = arith.constant dense<0.000000e+00> : vector<16x16xf32>
    %76 = tpu.matmul %0, %72, %cst_61 {dimension_numbers = #tpu.dot_dimension_numbers<[1], [0], [0], [1], [0, 0, 1, 1], [], []>, precision = #tpu.contract_precision<fp32>} : vector<16x16xf32>, vector<16x16xf32>, vector<16x16xf32> -> vector<16x16xf32>
    %cst_62 = arith.constant dense<0.000000e+00> : vector<16x16xf32>
    %77 = tpu.matmul %1, %74, %cst_62 {dimension_numbers = #tpu.dot_dimension_numbers<[1], [0], [0], [1], [0, 0, 1, 1], [], []>, precision = #tpu.contract_precision<fp32>} : vector<16x16xf32>, vector<16x16xf32>, vector<16x16xf32> -> vector<16x16xf32>
    %cst_63 = arith.constant dense<0.000000e+00> : vector<16x16xf32>
    %78 = tpu.matmul %2, %75, %cst_63 {dimension_numbers = #tpu.dot_dimension_numbers<[1], [0], [0], [1], [0, 0, 1, 1], [], []>, precision = #tpu.contract_precision<fp32>} : vector<16x16xf32>, vector<16x16xf32>, vector<16x16xf32> -> vector<16x16xf32>
    %79 = arith.subf %76, %77 : vector<16x16xf32>
    %80 = arith.subf %78, %76 : vector<16x16xf32>
    %81 = arith.subf %80, %77 : vector<16x16xf32>
    %82 = arith.addf %79, %81 : vector<16x16xf32>
    %cst_64 = arith.constant dense<0.000000e+00> : vector<16x128xf32>
    %83 = tpu.matmul %79, %3, %cst_64 {dimension_numbers = #tpu.dot_dimension_numbers<[1], [0], [0], [1], [0, 0, 1, 1], [], []>, precision = #tpu.contract_precision<fp32>} : vector<16x16xf32>, vector<16x128xf32>, vector<16x128xf32> -> vector<16x128xf32>
    %cst_65 = arith.constant dense<0.000000e+00> : vector<16x128xf32>
    %84 = tpu.matmul %81, %4, %cst_65 {dimension_numbers = #tpu.dot_dimension_numbers<[1], [0], [0], [1], [0, 0, 1, 1], [], []>, precision = #tpu.contract_precision<fp32>} : vector<16x16xf32>, vector<16x128xf32>, vector<16x128xf32> -> vector<16x128xf32>
    %cst_66 = arith.constant dense<0.000000e+00> : vector<16x128xf32>
    %85 = tpu.matmul %82, %5, %cst_66 {dimension_numbers = #tpu.dot_dimension_numbers<[1], [0], [0], [1], [0, 0, 1, 1], [], []>, precision = #tpu.contract_precision<fp32>} : vector<16x16xf32>, vector<16x128xf32>, vector<16x128xf32> -> vector<16x128xf32>
    %86 = arith.subf %83, %84 : vector<16x128xf32>
    %87 = arith.subf %85, %83 : vector<16x128xf32>
    %88 = arith.subf %87, %84 : vector<16x128xf32>
    %89 = arith.mulf %86, %86 : vector<16x128xf32>
    %90 = arith.mulf %88, %88 : vector<16x128xf32>
    %91 = arith.addf %89, %90 : vector<16x128xf32>
    %92 = arith.addf %70, %91 : vector<16x128xf32>
    %c0_i32 = arith.constant 0 : i32
    %93 = arith.cmpi eq, %arg2, %c0_i32 : i32
    %94 = arith.extui %93 : i1 to i32
    %c0_i32_67 = arith.constant 0 : i32
    %95 = arith.cmpi ne, %94, %c0_i32_67 : i32
    scf.if %95 {
      %c0_72 = arith.constant 0 : index
      %c0_73 = arith.constant 0 : index
      %c0_74 = arith.constant 0 : index
      %102 = vector.load %arg8[%c0_72, %c0_73, %c0_74] : memref<1x16x128xf32, #tpu.memory_space<vmem>>, vector<1x16x128xf32>
      %103 = vector.shape_cast %102 : vector<1x16x128xf32> to vector<16x128xf32>
      %104 = vector.shape_cast %92 : vector<16x128xf32> to vector<1x16x128xf32>
      tpu.vector_store %arg8[%c0_72, %c0_73, %c0_74], %104 {strides = array<i32>} : memref<1x16x128xf32, #tpu.memory_space<vmem>>, vector<1x16x128xf32>,
    } else {
    }
    %c0_i32_68 = arith.constant 0 : i32
    %96 = arith.cmpi ne, %arg2, %c0_i32_68 : i32
    %97 = arith.extui %96 : i1 to i32
    %c0_i32_69 = arith.constant 0 : i32
    %98 = arith.cmpi ne, %97, %c0_i32_69 : i32
    scf.if %98 {
      %c0_72 = arith.constant 0 : index
      %c0_73 = arith.constant 0 : index
      %c0_74 = arith.constant 0 : index
      %102 = vector.load %arg8[%c0_72, %c0_73, %c0_74] : memref<1x16x128xf32, #tpu.memory_space<vmem>>, vector<1x16x128xf32>
      %103 = vector.shape_cast %102 : vector<1x16x128xf32> to vector<16x128xf32>
      %104 = arith.addf %103, %92 : vector<16x128xf32>
      %c0_75 = arith.constant 0 : index
      %c0_76 = arith.constant 0 : index
      %c0_77 = arith.constant 0 : index
      %105 = vector.load %arg8[%c0_75, %c0_76, %c0_77] : memref<1x16x128xf32, #tpu.memory_space<vmem>>, vector<1x16x128xf32>
      %106 = vector.shape_cast %105 : vector<1x16x128xf32> to vector<16x128xf32>
      %107 = vector.shape_cast %104 : vector<16x128xf32> to vector<1x16x128xf32>
      tpu.vector_store %arg8[%c0_75, %c0_76, %c0_77], %107 {strides = array<i32>} : memref<1x16x128xf32, #tpu.memory_space<vmem>>, vector<1x16x128xf32>,
    } else {
    }
    %c0_i32_70 = arith.constant 0 : i32
    %99 = arith.cmpi eq, %arg2, %c0_i32_70 : i32
    %100 = arith.extui %99 : i1 to i32
    %c0_i32_71 = arith.constant 0 : i32
    %101 = arith.cmpi ne, %100, %c0_i32_71 : i32
    scf.if %101 {
      %c0_72 = arith.constant 0 : index
      %c0_73 = arith.constant 0 : index
      %c0_74 = arith.constant 0 : index
      %102 = vector.load %arg8[%c0_72, %c0_73, %c0_74] : memref<1x16x128xf32, #tpu.memory_space<vmem>>, vector<1x16x128xf32>
      %103 = vector.shape_cast %102 : vector<1x16x128xf32> to vector<16x128xf32>
      %104 = math.sqrt %103 : vector<16x128xf32>
      %c0_75 = arith.constant 0 : index
      %c0_76 = arith.constant 0 : index
      %c0_77 = arith.constant 0 : index
      %105 = vector.load %arg8[%c0_75, %c0_76, %c0_77] : memref<1x16x128xf32, #tpu.memory_space<vmem>>, vector<1x16x128xf32>
      %106 = vector.shape_cast %105 : vector<1x16x128xf32> to vector<16x128xf32>
      %107 = vector.shape_cast %104 : vector<16x128xf32> to vector<1x16x128xf32>
      tpu.vector_store %arg8[%c0_75, %c0_76, %c0_77], %107 {strides = array<i32>} : memref<1x16x128xf32, #tpu.memory_space<vmem>>, vector<1x16x128xf32>,
    } else {
    }
    return
  }
  func.func @transform_0(%arg0: i32, %arg1: i32, %arg2: i32) -> (i32, i32, i32, i32, i32) {
    %c0_i32 = arith.constant 0 : i32
    %c0_i32_0 = arith.constant 0 : i32
    %c0_i32_1 = arith.constant 0 : i32
    %c0_i32_2 = arith.constant 0 : i32
    return %c0_i32, %arg0, %arg2, %c0_i32_0, %c0_i32_1 : i32, i32, i32, i32, i32
  }
  func.func @transform_1(%arg0: i32, %arg1: i32, %arg2: i32) -> (i32, i32) {
    %c0_i32 = arith.constant 0 : i32
    %c0_i32_0 = arith.constant 0 : i32
    return %arg1, %c0_i32 : i32, i32
  }
  func.func @transform_2(%arg0: i32, %arg1: i32, %arg2: i32) -> (i32, i32) {
    %c0_i32 = arith.constant 0 : i32
    %c0_i32_0 = arith.constant 0 : i32
    return %arg1, %c0_i32 : i32, i32
  }
  func.func @transform_3(%arg0: i32, %arg1: i32, %arg2: i32) -> (i32, i32) {
    %c0_i32 = arith.constant 0 : i32
    %c0_i32_0 = arith.constant 0 : i32
    %c0_i32_1 = arith.constant 0 : i32
    return %c0_i32, %c0_i32_0 : i32, i32
  }
  func.func @transform_4(%arg0: i32, %arg1: i32, %arg2: i32) -> (i32, i32) {
    %c0_i32 = arith.constant 0 : i32
    %c0_i32_0 = arith.constant 0 : i32
    %c0_i32_1 = arith.constant 0 : i32
    return %c0_i32, %c0_i32_0 : i32, i32
  }
  func.func @transform_5(%arg0: i32, %arg1: i32, %arg2: i32) -> (i32, i32, i32) {
    %c0_i32 = arith.constant 0 : i32
    %c0_i32_0 = arith.constant 0 : i32
    return %arg0, %arg1, %c0_i32 : i32, i32, i32
  }
}

module attributes {stable_mosaic.version = 11 : i64} {
  func.func @kernel(%arg0: i32, %arg1: i32, %arg2: i32, %arg3: memref<2x1x4x16x16xf32, #tpu.memory_space<vmem>>, %arg4: memref<16x16xf32, #tpu.memory_space<vmem>>, %arg5: memref<16x16xf32, #tpu.memory_space<vmem>>, %arg6: memref<16x128xf32, #tpu.memory_space<vmem>>, %arg7: memref<16x128xf32, #tpu.memory_space<vmem>>, %arg8: memref<1x16x128xf32, #tpu.memory_space<vmem>>) attributes {dimension_semantics = [#tpu.dimension_semantics<parallel>, #tpu.dimension_semantics<parallel>, #tpu.dimension_semantics<arbitrary>], iteration_bounds = array<i64: 2, 1, 1>, scalar_prefetch = 0 : i64, scratch_operands = 0 : i64, tpu.core_type = #tpu.core_type<tc>, window_params = [{transform_indices = @transform_0, window_bounds = array<i64: 2, 1, 4, 16, 16>}, {transform_indices = @transform_1, window_bounds = array<i64: 16, 16>}, {transform_indices = @transform_2, window_bounds = array<i64: 16, 16>}, {pipeline_mode = #tpu.pipeline_mode<synchronous>, transform_indices = @transform_3, window_bounds = array<i64: 16, 128>}, {pipeline_mode = #tpu.pipeline_mode<synchronous>, transform_indices = @transform_4, window_bounds = array<i64: 16, 128>}, {transform_indices = @transform_5, window_bounds = array<i64: 1, 16, 128>}]} {
    %c0 = arith.constant 0 : index
    %c0_0 = arith.constant 0 : index
    %0 = vector.load %arg4[%c0, %c0_0] : memref<16x16xf32, #tpu.memory_space<vmem>>, vector<16x16xf32>
    %c0_1 = arith.constant 0 : index
    %c0_2 = arith.constant 0 : index
    %1 = vector.load %arg5[%c0_1, %c0_2] : memref<16x16xf32, #tpu.memory_space<vmem>>, vector<16x16xf32>
    %2 = arith.addf %0, %1 : vector<16x16xf32>
    %c0_3 = arith.constant 0 : index
    %c0_4 = arith.constant 0 : index
    %3 = vector.load %arg6[%c0_3, %c0_4] : memref<16x128xf32, #tpu.memory_space<vmem>>, vector<16x128xf32>
    %c0_5 = arith.constant 0 : index
    %c0_6 = arith.constant 0 : index
    %4 = vector.load %arg7[%c0_5, %c0_6] : memref<16x128xf32, #tpu.memory_space<vmem>>, vector<16x128xf32>
    %5 = arith.addf %3, %4 : vector<16x128xf32>
    %c0_7 = arith.constant 0 : index
    %c0_8 = arith.constant 0 : index
    %c0_9 = arith.constant 0 : index
    %c0_10 = arith.constant 0 : index
    %c0_11 = arith.constant 0 : index
    %6 = vector.load %arg3[%c0_7, %c0_8, %c0_9, %c0_10, %c0_11] : memref<2x1x4x16x16xf32, #tpu.memory_space<vmem>>, vector<1x1x1x16x16xf32>
    %7 = vector.shape_cast %6 : vector<1x1x1x16x16xf32> to vector<16x16xf32>
    %c1 = arith.constant 1 : index
    %c0_12 = arith.constant 0 : index
    %c0_13 = arith.constant 0 : index
    %c0_14 = arith.constant 0 : index
    %c0_15 = arith.constant 0 : index
    %8 = vector.load %arg3[%c1, %c0_12, %c0_13, %c0_14, %c0_15] : memref<2x1x4x16x16xf32, #tpu.memory_space<vmem>>, vector<1x1x1x16x16xf32>
    %9 = vector.shape_cast %8 : vector<1x1x1x16x16xf32> to vector<16x16xf32>
    %10 = arith.addf %7, %9 : vector<16x16xf32>
    %cst = arith.constant dense<0.000000e+00> : vector<16x16xf32>
    %11 = tpu.matmul %0, %7, %cst {dimension_numbers = #tpu.dot_dimension_numbers<[1], [0], [0], [1], [0, 0, 1, 1], [], []>} : vector<16x16xf32>, vector<16x16xf32>, vector<16x16xf32> -> vector<16x16xf32>
    %cst_16 = arith.constant dense<0.000000e+00> : vector<16x16xf32>
    %12 = tpu.matmul %1, %9, %cst_16 {dimension_numbers = #tpu.dot_dimension_numbers<[1], [0], [0], [1], [0, 0, 1, 1], [], []>} : vector<16x16xf32>, vector<16x16xf32>, vector<16x16xf32> -> vector<16x16xf32>
    %cst_17 = arith.constant dense<0.000000e+00> : vector<16x16xf32>
    %13 = tpu.matmul %2, %10, %cst_17 {dimension_numbers = #tpu.dot_dimension_numbers<[1], [0], [0], [1], [0, 0, 1, 1], [], []>} : vector<16x16xf32>, vector<16x16xf32>, vector<16x16xf32> -> vector<16x16xf32>
    %14 = arith.subf %11, %12 : vector<16x16xf32>
    %15 = arith.subf %13, %11 : vector<16x16xf32>
    %16 = arith.subf %15, %12 : vector<16x16xf32>
    %17 = arith.addf %14, %16 : vector<16x16xf32>
    %cst_18 = arith.constant dense<0.000000e+00> : vector<16x128xf32>
    %18 = tpu.matmul %14, %3, %cst_18 {dimension_numbers = #tpu.dot_dimension_numbers<[1], [0], [0], [1], [0, 0, 1, 1], [], []>} : vector<16x16xf32>, vector<16x128xf32>, vector<16x128xf32> -> vector<16x128xf32>
    %cst_19 = arith.constant dense<0.000000e+00> : vector<16x128xf32>
    %19 = tpu.matmul %16, %4, %cst_19 {dimension_numbers = #tpu.dot_dimension_numbers<[1], [0], [0], [1], [0, 0, 1, 1], [], []>} : vector<16x16xf32>, vector<16x128xf32>, vector<16x128xf32> -> vector<16x128xf32>
    %cst_20 = arith.constant dense<0.000000e+00> : vector<16x128xf32>
    %20 = tpu.matmul %17, %5, %cst_20 {dimension_numbers = #tpu.dot_dimension_numbers<[1], [0], [0], [1], [0, 0, 1, 1], [], []>} : vector<16x16xf32>, vector<16x128xf32>, vector<16x128xf32> -> vector<16x128xf32>
    %21 = arith.subf %18, %19 : vector<16x128xf32>
    %22 = arith.subf %20, %18 : vector<16x128xf32>
    %23 = arith.subf %22, %19 : vector<16x128xf32>
    %24 = arith.mulf %21, %21 : vector<16x128xf32>
    %25 = arith.mulf %23, %23 : vector<16x128xf32>
    %26 = arith.addf %24, %25 : vector<16x128xf32>
    %c0_21 = arith.constant 0 : index
    %c0_22 = arith.constant 0 : index
    %c1_23 = arith.constant 1 : index
    %c0_24 = arith.constant 0 : index
    %c0_25 = arith.constant 0 : index
    %27 = vector.load %arg3[%c0_21, %c0_22, %c1_23, %c0_24, %c0_25] : memref<2x1x4x16x16xf32, #tpu.memory_space<vmem>>, vector<1x1x1x16x16xf32>
    %28 = vector.shape_cast %27 : vector<1x1x1x16x16xf32> to vector<16x16xf32>
    %c1_26 = arith.constant 1 : index
    %c0_27 = arith.constant 0 : index
    %c1_28 = arith.constant 1 : index
    %c0_29 = arith.constant 0 : index
    %c0_30 = arith.constant 0 : index
    %29 = vector.load %arg3[%c1_26, %c0_27, %c1_28, %c0_29, %c0_30] : memref<2x1x4x16x16xf32, #tpu.memory_space<vmem>>, vector<1x1x1x16x16xf32>
    %30 = vector.shape_cast %29 : vector<1x1x1x16x16xf32> to vector<16x16xf32>
    %31 = arith.addf %28, %30 : vector<16x16xf32>
    %cst_31 = arith.constant dense<0.000000e+00> : vector<16x16xf32>
    %32 = tpu.matmul %0, %28, %cst_31 {dimension_numbers = #tpu.dot_dimension_numbers<[1], [0], [0], [1], [0, 0, 1, 1], [], []>} : vector<16x16xf32>, vector<16x16xf32>, vector<16x16xf32> -> vector<16x16xf32>
    %cst_32 = arith.constant dense<0.000000e+00> : vector<16x16xf32>
    %33 = tpu.matmul %1, %30, %cst_32 {dimension_numbers = #tpu.dot_dimension_numbers<[1], [0], [0], [1], [0, 0, 1, 1], [], []>} : vector<16x16xf32>, vector<16x16xf32>, vector<16x16xf32> -> vector<16x16xf32>
    %cst_33 = arith.constant dense<0.000000e+00> : vector<16x16xf32>
    %34 = tpu.matmul %2, %31, %cst_33 {dimension_numbers = #tpu.dot_dimension_numbers<[1], [0], [0], [1], [0, 0, 1, 1], [], []>} : vector<16x16xf32>, vector<16x16xf32>, vector<16x16xf32> -> vector<16x16xf32>
    %35 = arith.subf %32, %33 : vector<16x16xf32>
    %36 = arith.subf %34, %32 : vector<16x16xf32>
    %37 = arith.subf %36, %33 : vector<16x16xf32>
    %38 = arith.addf %35, %37 : vector<16x16xf32>
    %cst_34 = arith.constant dense<0.000000e+00> : vector<16x128xf32>
    %39 = tpu.matmul %35, %3, %cst_34 {dimension_numbers = #tpu.dot_dimension_numbers<[1], [0], [0], [1], [0, 0, 1, 1], [], []>} : vector<16x16xf32>, vector<16x128xf32>, vector<16x128xf32> -> vector<16x128xf32>
    %cst_35 = arith.constant dense<0.000000e+00> : vector<16x128xf32>
    %40 = tpu.matmul %37, %4, %cst_35 {dimension_numbers = #tpu.dot_dimension_numbers<[1], [0], [0], [1], [0, 0, 1, 1], [], []>} : vector<16x16xf32>, vector<16x128xf32>, vector<16x128xf32> -> vector<16x128xf32>
    %cst_36 = arith.constant dense<0.000000e+00> : vector<16x128xf32>
    %41 = tpu.matmul %38, %5, %cst_36 {dimension_numbers = #tpu.dot_dimension_numbers<[1], [0], [0], [1], [0, 0, 1, 1], [], []>} : vector<16x16xf32>, vector<16x128xf32>, vector<16x128xf32> -> vector<16x128xf32>
    %42 = arith.subf %39, %40 : vector<16x128xf32>
    %43 = arith.subf %41, %39 : vector<16x128xf32>
    %44 = arith.subf %43, %40 : vector<16x128xf32>
    %45 = arith.mulf %42, %42 : vector<16x128xf32>
    %46 = arith.mulf %44, %44 : vector<16x128xf32>
    %47 = arith.addf %45, %46 : vector<16x128xf32>
    %48 = arith.addf %26, %47 : vector<16x128xf32>
    %c0_37 = arith.constant 0 : index
    %c0_38 = arith.constant 0 : index
    %c2 = arith.constant 2 : index
    %c0_39 = arith.constant 0 : index
    %c0_40 = arith.constant 0 : index
    %49 = vector.load %arg3[%c0_37, %c0_38, %c2, %c0_39, %c0_40] : memref<2x1x4x16x16xf32, #tpu.memory_space<vmem>>, vector<1x1x1x16x16xf32>
    %50 = vector.shape_cast %49 : vector<1x1x1x16x16xf32> to vector<16x16xf32>
    %c1_41 = arith.constant 1 : index
    %c0_42 = arith.constant 0 : index
    %c2_43 = arith.constant 2 : index
    %c0_44 = arith.constant 0 : index
    %c0_45 = arith.constant 0 : index
    %51 = vector.load %arg3[%c1_41, %c0_42, %c2_43, %c0_44, %c0_45] : memref<2x1x4x16x16xf32, #tpu.memory_space<vmem>>, vector<1x1x1x16x16xf32>
    %52 = vector.shape_cast %51 : vector<1x1x1x16x16xf32> to vector<16x16xf32>
    %53 = arith.addf %50, %52 : vector<16x16xf32>
    %cst_46 = arith.constant dense<0.000000e+00> : vector<16x16xf32>
    %54 = tpu.matmul %0, %50, %cst_46 {dimension_numbers = #tpu.dot_dimension_numbers<[1], [0], [0], [1], [0, 0, 1, 1], [], []>} : vector<16x16xf32>, vector<16x16xf32>, vector<16x16xf32> -> vector<16x16xf32>
    %cst_47 = arith.constant dense<0.000000e+00> : vector<16x16xf32>
    %55 = tpu.matmul %1, %52, %cst_47 {dimension_numbers = #tpu.dot_dimension_numbers<[1], [0], [0], [1], [0, 0, 1, 1], [], []>} : vector<16x16xf32>, vector<16x16xf32>, vector<16x16xf32> -> vector<16x16xf32>
    %cst_48 = arith.constant dense<0.000000e+00> : vector<16x16xf32>
    %56 = tpu.matmul %2, %53, %cst_48 {dimension_numbers = #tpu.dot_dimension_numbers<[1], [0], [0], [1], [0, 0, 1, 1], [], []>} : vector<16x16xf32>, vector<16x16xf32>, vector<16x16xf32> -> vector<16x16xf32>
    %57 = arith.subf %54, %55 : vector<16x16xf32>
    %58 = arith.subf %56, %54 : vector<16x16xf32>
    %59 = arith.subf %58, %55 : vector<16x16xf32>
    %60 = arith.addf %57, %59 : vector<16x16xf32>
    %cst_49 = arith.constant dense<0.000000e+00> : vector<16x128xf32>
    %61 = tpu.matmul %57, %3, %cst_49 {dimension_numbers = #tpu.dot_dimension_numbers<[1], [0], [0], [1], [0, 0, 1, 1], [], []>} : vector<16x16xf32>, vector<16x128xf32>, vector<16x128xf32> -> vector<16x128xf32>
    %cst_50 = arith.constant dense<0.000000e+00> : vector<16x128xf32>
    %62 = tpu.matmul %59, %4, %cst_50 {dimension_numbers = #tpu.dot_dimension_numbers<[1], [0], [0], [1], [0, 0, 1, 1], [], []>} : vector<16x16xf32>, vector<16x128xf32>, vector<16x128xf32> -> vector<16x128xf32>
    %cst_51 = arith.constant dense<0.000000e+00> : vector<16x128xf32>
    %63 = tpu.matmul %60, %5, %cst_51 {dimension_numbers = #tpu.dot_dimension_numbers<[1], [0], [0], [1], [0, 0, 1, 1], [], []>} : vector<16x16xf32>, vector<16x128xf32>, vector<16x128xf32> -> vector<16x128xf32>
    %64 = arith.subf %61, %62 : vector<16x128xf32>
    %65 = arith.subf %63, %61 : vector<16x128xf32>
    %66 = arith.subf %65, %62 : vector<16x128xf32>
    %67 = arith.mulf %64, %64 : vector<16x128xf32>
    %68 = arith.mulf %66, %66 : vector<16x128xf32>
    %69 = arith.addf %67, %68 : vector<16x128xf32>
    %70 = arith.addf %48, %69 : vector<16x128xf32>
    %c0_52 = arith.constant 0 : index
    %c0_53 = arith.constant 0 : index
    %c3 = arith.constant 3 : index
    %c0_54 = arith.constant 0 : index
    %c0_55 = arith.constant 0 : index
    %71 = vector.load %arg3[%c0_52, %c0_53, %c3, %c0_54, %c0_55] : memref<2x1x4x16x16xf32, #tpu.memory_space<vmem>>, vector<1x1x1x16x16xf32>
    %72 = vector.shape_cast %71 : vector<1x1x1x16x16xf32> to vector<16x16xf32>
    %c1_56 = arith.constant 1 : index
    %c0_57 = arith.constant 0 : index
    %c3_58 = arith.constant 3 : index
    %c0_59 = arith.constant 0 : index
    %c0_60 = arith.constant 0 : index
    %73 = vector.load %arg3[%c1_56, %c0_57, %c3_58, %c0_59, %c0_60] : memref<2x1x4x16x16xf32, #tpu.memory_space<vmem>>, vector<1x1x1x16x16xf32>
    %74 = vector.shape_cast %73 : vector<1x1x1x16x16xf32> to vector<16x16xf32>
    %75 = arith.addf %72, %74 : vector<16x16xf32>
    %cst_61 = arith.constant dense<0.000000e+00> : vector<16x16xf32>
    %76 = tpu.matmul %0, %72, %cst_61 {dimension_numbers = #tpu.dot_dimension_numbers<[1], [0], [0], [1], [0, 0, 1, 1], [], []>} : vector<16x16xf32>, vector<16x16xf32>, vector<16x16xf32> -> vector<16x16xf32>
    %cst_62 = arith.constant dense<0.000000e+00> : vector<16x16xf32>
    %77 = tpu.matmul %1, %74, %cst_62 {dimension_numbers = #tpu.dot_dimension_numbers<[1], [0], [0], [1], [0, 0, 1, 1], [], []>} : vector<16x16xf32>, vector<16x16xf32>, vector<16x16xf32> -> vector<16x16xf32>
    %cst_63 = arith.constant dense<0.000000e+00> : vector<16x16xf32>
    %78 = tpu.matmul %2, %75, %cst_63 {dimension_numbers = #tpu.dot_dimension_numbers<[1], [0], [0], [1], [0, 0, 1, 1], [], []>} : vector<16x16xf32>, vector<16x16xf32>, vector<16x16xf32> -> vector<16x16xf32>
    %79 = arith.subf %76, %77 : vector<16x16xf32>
    %80 = arith.subf %78, %76 : vector<16x16xf32>
    %81 = arith.subf %80, %77 : vector<16x16xf32>
    %82 = arith.addf %79, %81 : vector<16x16xf32>
    %cst_64 = arith.constant dense<0.000000e+00> : vector<16x128xf32>
    %83 = tpu.matmul %79, %3, %cst_64 {dimension_numbers = #tpu.dot_dimension_numbers<[1], [0], [0], [1], [0, 0, 1, 1], [], []>} : vector<16x16xf32>, vector<16x128xf32>, vector<16x128xf32> -> vector<16x128xf32>
    %cst_65 = arith.constant dense<0.000000e+00> : vector<16x128xf32>
    %84 = tpu.matmul %81, %4, %cst_65 {dimension_numbers = #tpu.dot_dimension_numbers<[1], [0], [0], [1], [0, 0, 1, 1], [], []>} : vector<16x16xf32>, vector<16x128xf32>, vector<16x128xf32> -> vector<16x128xf32>
    %cst_66 = arith.constant dense<0.000000e+00> : vector<16x128xf32>
    %85 = tpu.matmul %82, %5, %cst_66 {dimension_numbers = #tpu.dot_dimension_numbers<[1], [0], [0], [1], [0, 0, 1, 1], [], []>} : vector<16x16xf32>, vector<16x128xf32>, vector<16x128xf32> -> vector<16x128xf32>
    %86 = arith.subf %83, %84 : vector<16x128xf32>
    %87 = arith.subf %85, %83 : vector<16x128xf32>
    %88 = arith.subf %87, %84 : vector<16x128xf32>
    %89 = arith.mulf %86, %86 : vector<16x128xf32>
    %90 = arith.mulf %88, %88 : vector<16x128xf32>
    %91 = arith.addf %89, %90 : vector<16x128xf32>
    %92 = arith.addf %70, %91 : vector<16x128xf32>
    %c0_i32 = arith.constant 0 : i32
    %93 = arith.cmpi eq, %arg2, %c0_i32 : i32
    %94 = arith.extui %93 : i1 to i32
    %c0_i32_67 = arith.constant 0 : i32
    %95 = arith.cmpi ne, %94, %c0_i32_67 : i32
    scf.if %95 {
      %c0_72 = arith.constant 0 : index
      %c0_73 = arith.constant 0 : index
      %c0_74 = arith.constant 0 : index
      %102 = vector.load %arg8[%c0_72, %c0_73, %c0_74] : memref<1x16x128xf32, #tpu.memory_space<vmem>>, vector<1x16x128xf32>
      %103 = vector.shape_cast %102 : vector<1x16x128xf32> to vector<16x128xf32>
      %104 = vector.shape_cast %92 : vector<16x128xf32> to vector<1x16x128xf32>
      tpu.vector_store %arg8[%c0_72, %c0_73, %c0_74], %104 {strides = array<i32>} : memref<1x16x128xf32, #tpu.memory_space<vmem>>, vector<1x16x128xf32>,
    } else {
    }
    %c0_i32_68 = arith.constant 0 : i32
    %96 = arith.cmpi ne, %arg2, %c0_i32_68 : i32
    %97 = arith.extui %96 : i1 to i32
    %c0_i32_69 = arith.constant 0 : i32
    %98 = arith.cmpi ne, %97, %c0_i32_69 : i32
    scf.if %98 {
      %c0_72 = arith.constant 0 : index
      %c0_73 = arith.constant 0 : index
      %c0_74 = arith.constant 0 : index
      %102 = vector.load %arg8[%c0_72, %c0_73, %c0_74] : memref<1x16x128xf32, #tpu.memory_space<vmem>>, vector<1x16x128xf32>
      %103 = vector.shape_cast %102 : vector<1x16x128xf32> to vector<16x128xf32>
      %104 = arith.addf %103, %92 : vector<16x128xf32>
      %c0_75 = arith.constant 0 : index
      %c0_76 = arith.constant 0 : index
      %c0_77 = arith.constant 0 : index
      %105 = vector.load %arg8[%c0_75, %c0_76, %c0_77] : memref<1x16x128xf32, #tpu.memory_space<vmem>>, vector<1x16x128xf32>
      %106 = vector.shape_cast %105 : vector<1x16x128xf32> to vector<16x128xf32>
      %107 = vector.shape_cast %104 : vector<16x128xf32> to vector<1x16x128xf32>
      tpu.vector_store %arg8[%c0_75, %c0_76, %c0_77], %107 {strides = array<i32>} : memref<1x16x128xf32, #tpu.memory_space<vmem>>, vector<1x16x128xf32>,
    } else {
    }
    %c0_i32_70 = arith.constant 0 : i32
    %99 = arith.cmpi eq, %arg2, %c0_i32_70 : i32
    %100 = arith.extui %99 : i1 to i32
    %c0_i32_71 = arith.constant 0 : i32
    %101 = arith.cmpi ne, %100, %c0_i32_71 : i32
    scf.if %101 {
      %c0_72 = arith.constant 0 : index
      %c0_73 = arith.constant 0 : index
      %c0_74 = arith.constant 0 : index
      %102 = vector.load %arg8[%c0_72, %c0_73, %c0_74] : memref<1x16x128xf32, #tpu.memory_space<vmem>>, vector<1x16x128xf32>
      %103 = vector.shape_cast %102 : vector<1x16x128xf32> to vector<16x128xf32>
      %104 = math.sqrt %103 : vector<16x128xf32>
      %c0_75 = arith.constant 0 : index
      %c0_76 = arith.constant 0 : index
      %c0_77 = arith.constant 0 : index
      %105 = vector.load %arg8[%c0_75, %c0_76, %c0_77] : memref<1x16x128xf32, #tpu.memory_space<vmem>>, vector<1x16x128xf32>
      %106 = vector.shape_cast %105 : vector<1x16x128xf32> to vector<16x128xf32>
      %107 = vector.shape_cast %104 : vector<16x128xf32> to vector<1x16x128xf32>
      tpu.vector_store %arg8[%c0_75, %c0_76, %c0_77], %107 {strides = array<i32>} : memref<1x16x128xf32, #tpu.memory_space<vmem>>, vector<1x16x128xf32>,
    } else {
    }
    return
  }
  func.func @transform_0(%arg0: i32, %arg1: i32, %arg2: i32) -> (i32, i32, i32, i32, i32) {
    %c0_i32 = arith.constant 0 : i32
    %c0_i32_0 = arith.constant 0 : i32
    %c0_i32_1 = arith.constant 0 : i32
    %c0_i32_2 = arith.constant 0 : i32
    return %c0_i32, %arg0, %arg2, %c0_i32_0, %c0_i32_1 : i32, i32, i32, i32, i32
  }
  func.func @transform_1(%arg0: i32, %arg1: i32, %arg2: i32) -> (i32, i32) {
    %c0_i32 = arith.constant 0 : i32
    %c0_i32_0 = arith.constant 0 : i32
    return %arg1, %c0_i32 : i32, i32
  }
  func.func @transform_2(%arg0: i32, %arg1: i32, %arg2: i32) -> (i32, i32) {
    %c0_i32 = arith.constant 0 : i32
    %c0_i32_0 = arith.constant 0 : i32
    return %arg1, %c0_i32 : i32, i32
  }
  func.func @transform_3(%arg0: i32, %arg1: i32, %arg2: i32) -> (i32, i32) {
    %c0_i32 = arith.constant 0 : i32
    %c0_i32_0 = arith.constant 0 : i32
    %c0_i32_1 = arith.constant 0 : i32
    return %c0_i32, %c0_i32_0 : i32, i32
  }
  func.func @transform_4(%arg0: i32, %arg1: i32, %arg2: i32) -> (i32, i32) {
    %c0_i32 = arith.constant 0 : i32
    %c0_i32_0 = arith.constant 0 : i32
    %c0_i32_1 = arith.constant 0 : i32
    return %c0_i32, %c0_i32_0 : i32, i32
  }
  func.func @transform_5(%arg0: i32, %arg1: i32, %arg2: i32) -> (i32, i32, i32) {
    %c0_i32 = arith.constant 0 : i32
    %c0_i32_0 = arith.constant 0 : i32
    return %arg0, %arg1, %c0_i32 : i32, i32, i32
  }
}

</mosaic_0001>

<llo_original>
// kernel: tpu_custom_call.1
$region0: #{tpu_custom_call.1}
  #allocation0 [shape = 'u32[]', space=smem, size = 0x4, offset = 0x4, fixed_abs, tag = 'smem constant byte address 0x4 - core index']
  #allocation1 [shape = 'u32[72,128]{1,0:T(1,128)}', space=vmem, size = 0x9000, scoped, tag = 'internal scratch']
  #allocation12 [shape = 's32[]', space=sflag, size = 0x4, offset = 0, fixed_abs, tag = 'sflag constant byte address 0x0 - dummy sync flag']
  %s0 = inlined_call_operand.hbm [shape: f32[2,2,4,16,16], index: 0, kind: input, shape index: {}]
  %s1 = inlined_call_operand.hbm [shape: f32[16,16], index: 1, kind: input, shape index: {}]
  %s2 = inlined_call_operand.hbm [shape: f32[16,16], index: 2, kind: input, shape index: {}]
  %s3 = inlined_call_operand.hbm [shape: f32[16,128], index: 3, kind: input, shape index: {}]
  %s4 = inlined_call_operand.hbm [shape: f32[16,128], index: 4, kind: input, shape index: {}]
  %s5 = inlined_call_operand.hbm [shape: f32[2,16,128], index: 5, kind: output, shape index: {}]
  %s6 = sld [smem:[#allocation0]]
  $region85: #{tpu_custom_call.1} parent=0
    _
  %s8 = ssub.s32 1, %s6
  %s9 = scalar_select 0, %s8, %s6
  $region1: #{tpu_custom_call.1} parent=0
    #allocation2 [shape = 'u8[131072]{0}', space=vmem, size = 0x20000, scoped, tag = 'input window, operand 0']
    #allocation3 [shape = 's32[2]{0}', space=sflag, size = 0x8, scoped, tag = 'scoped memory for tpu_custom_call.1']
    #allocation4 [shape = 's32[2]{0}', space=sflag, size = 0x8, scoped, tag = 'scoped memory for tpu_custom_call.1']
    #allocation5 [shape = 'u8[8192]{0}', space=vmem, size = 0x2000, scoped, tag = 'input window, operand 1, single buffered']
    #allocation6 [shape = 's32[1]{0}', space=sflag, size = 0x4, scoped, tag = 'scoped memory for tpu_custom_call.1']
    #allocation7 [shape = 'u8[8192]{0}', space=vmem, size = 0x2000, scoped, tag = 'input window, operand 2, single buffered']
    #allocation8 [shape = 'u8[8192]{0}', space=vmem, size = 0x2000, scoped, tag = 'input window, operand 3, single buffered']
    #allocation9 [shape = 's32[1]{0}', space=sflag, size = 0x4, scoped, tag = 'scoped memory for tpu_custom_call.1']
    #allocation10 [shape = 'u8[8192]{0}', space=vmem, size = 0x2000, scoped, tag = 'input window, operand 4, single buffered']
    #allocation11 [shape = 'u8[16384]{0}', space=vmem, size = 0x4000, scoped, tag = 'output window, operand 0']
    %10 = vsyncpa [#allocation3], 0
    %s11 = scalar_lea.sflag [#allocation3], 1
    %12 = vsyncpa %s11, 0
    %13 = vsyncpa [#allocation6], 0
    %14 = vsyncpa [#allocation9], 0
    %15 = vsyncpa [#allocation4], 0
    %s16 = scalar_lea.sflag [#allocation4], 1
    %17 = vsyncpa %s16, 0
    loop: start=0, step=1, limit=4
    $region2: #{tpu_custom_call.1} parent=1 // loop_pre_header
      _
    $region3: #{tpu_custom_call.1} parent=1 // loop_header
      %s19 = sphi 0, %s23
      %p20 = scmp.ge.s32.totalorder %s19, 4
      %s26 = sphi 0, %s45
      %s27 = sphi 0, %s41
      %s28 = sphi 0, %s37
      %s29 = sphi 0, %s26
      %s30 = sphi 0, %s27
      %s31 = sphi 0, %s28
      %s32 = sphi 0, %s29
      %s33 = sphi 0, %s30
      %s34 = sphi 0, %s31
      %s50 = sphi 0, %s52
      %s53 = sphi 0, %s50
      %s54 = sphi 0, %s53
      %s70 = sphi 0, %s54
      %s76 = sphi 0, %s78
      %s79 = sphi 0, %s76
      %s80 = sphi 0, %s79
      %s96 = sphi 0, %s80
      %s102 = sphi 0, %s104
      %s105 = sphi 0, %s102
      %s106 = sphi 0, %s105
      %s122 = sphi 0, %s106
      %s126 = sphi 0, %s126
      %s128 = sphi 0, %s126
      %s129 = sphi 0, %s128
      %s143 = sphi 0, %s129
      %s147 = sphi 0, %s147
      %s149 = sphi 0, %s147
      %s150 = sphi 0, %s149
      %s164 = sphi 0, %s150
      %s172 = sphi 0, %s174
      %s175 = sphi 0, %s172
      %s176 = sphi 0, %s175
      %s192 = sphi 0, %s176
    $region4: #{tpu_custom_call.1} parent=1 // loop_header_branch
      %22 = sbr.rel (%p20) target = $region8
    $region5: #{tpu_custom_call.1} parent=1 // loop_body
      %s24 = ssub.s32 %s19, 1
      %s25 = ssub.s32 %s19, 2
      %s35 = sadd.s32 1, %s28
      %p36 = scmp.ge.s32.totalorder %s35, 1
      %s37 = scalar_select %p36, 0, %s35
      %s38 = sadd.s32 1, %s27
      %s39 = scalar_select %p36, %s38, %s27
      %p40 = scmp.ge.s32.totalorder %s39, 1
      %s41 = scalar_select %p40, 0, %s39
      %s42 = sadd.s32 1, %s26
      %s43 = scalar_select %p40, %s42, %s26
      %p44 = scmp.ge.s32.totalorder %s43, 2
      %s45 = scalar_select %p44, 0, %s43
      %s46 = ssub.s32 %s26, %s45
      %s47 = ssub.s32 %s28, %s37
      %s48 = sor.u32 %s46, %s47
      %p49 = scmp.eq.s32.totalorder %s48, 0
      %s51 = sadd.s32 %s50, 1
      %s52 = scalar_select %p49, %s50, %s51
      %p55 = pneg %p49
      %p56 = scmp.eq.s32.totalorder %s19, 1
      %p57 = por %p55, %p56
      %p58 = scmp.ne.s32.totalorder %s50, %s53
      %p59 = scmp.eq.s32.totalorder %s19, 0
      %p60 = por %p58, %p59
      %p61 = scmp.ne.s32.totalorder %s50, %s53
      %p62 = scmp.eq.s32.totalorder %s24, 1
      %p63 = por %p61, %p62
      %p64 = scmp.ne.s32.totalorder %s53, %s54
      %p65 = scmp.eq.s32.totalorder %s24, 0
      %p66 = por %p64, %p65
      %p67 = scmp.ne.s32.totalorder %s53, %s54
      %p68 = scmp.eq.s32.totalorder %s25, 1
      %p69 = por %p67, %p68
      %p71 = scmp.ne.s32.totalorder %s54, %s70
      %p72 = scmp.eq.s32.totalorder %s25, 0
      %p73 = por %p71, %p72
      %s74 = ssub.s32 %s27, %s41
      %p75 = scmp.eq.s32.totalorder %s74, 0
      %s77 = sadd.s32 %s76, 1
      %s78 = scalar_select %p75, %s76, %s77
      %p81 = pneg %p75
      %p82 = scmp.eq.s32.totalorder %s19, 1
      %p83 = por %p81, %p82
      %p84 = scmp.ne.s32.totalorder %s76, %s79
      %p85 = scmp.eq.s32.totalorder %s19, 0
      %p86 = por %p84, %p85
      %p87 = scmp.ne.s32.totalorder %s76, %s79
      %p88 = scmp.eq.s32.totalorder %s24, 1
      %p89 = por %p87, %p88
      %p90 = scmp.ne.s32.totalorder %s79, %s80
      %p91 = scmp.eq.s32.totalorder %s24, 0
      %p92 = por %p90, %p91
      %p93 = scmp.ne.s32.totalorder %s79, %s80
      %p94 = scmp.eq.s32.totalorder %s25, 1
      %p95 = por %p93, %p94
      %p97 = scmp.ne.s32.totalorder %s80, %s96
      %p98 = scmp.eq.s32.totalorder %s25, 0
      %p99 = por %p97, %p98
      %s100 = ssub.s32 %s27, %s41
      %p101 = scmp.eq.s32.totalorder %s100, 0
      %s103 = sadd.s32 %s102, 1
      %s104 = scalar_select %p101, %s102, %s103
      %p107 = pneg %p101
      %p108 = scmp.eq.s32.totalorder %s19, 1
      %p109 = por %p107, %p108
      %p110 = scmp.ne.s32.totalorder %s102, %s105
      %p111 = scmp.eq.s32.totalorder %s19, 0
      %p112 = por %p110, %p111
      %p113 = scmp.ne.s32.totalorder %s102, %s105
      %p114 = scmp.eq.s32.totalorder %s24, 1
      %p115 = por %p113, %p114
      %p116 = scmp.ne.s32.totalorder %s105, %s106
      %p117 = scmp.eq.s32.totalorder %s24, 0
      %p118 = por %p116, %p117
      %p119 = scmp.ne.s32.totalorder %s105, %s106
      %p120 = scmp.eq.s32.totalorder %s25, 1
      %p121 = por %p119, %p120
      %p123 = scmp.ne.s32.totalorder %s106, %s122
      %p124 = scmp.eq.s32.totalorder %s25, 0
      %p125 = por %p123, %p124
      %s127 = sadd.s32 %s126, 1
      %p130 = scmp.eq.s32.totalorder %s19, 1
      %p131 = scmp.ne.s32.totalorder %s126, %s128
      %p132 = scmp.eq.s32.totalorder %s19, 0
      %p133 = por %p131, %p132
      %p134 = scmp.ne.s32.totalorder %s126, %s128
      %p135 = scmp.eq.s32.totalorder %s24, 1
      %p136 = por %p134, %p135
      %p137 = scmp.ne.s32.totalorder %s128, %s129
      %p138 = scmp.eq.s32.totalorder %s24, 0
      %p139 = por %p137, %p138
      %p140 = scmp.ne.s32.totalorder %s128, %s129
      %p141 = scmp.eq.s32.totalorder %s25, 1
      %p142 = por %p140, %p141
      %p144 = scmp.ne.s32.totalorder %s129, %s143
      %p145 = scmp.eq.s32.totalorder %s25, 0
      %p146 = por %p144, %p145
      %s148 = sadd.s32 %s147, 1
      %p151 = scmp.eq.s32.totalorder %s19, 1
      %p152 = scmp.ne.s32.totalorder %s147, %s149
      %p153 = scmp.eq.s32.totalorder %s19, 0
      %p154 = por %p152, %p153
      %p155 = scmp.ne.s32.totalorder %s147, %s149
      %p156 = scmp.eq.s32.totalorder %s24, 1
      %p157 = por %p155, %p156
      %p158 = scmp.ne.s32.totalorder %s149, %s150
      %p159 = scmp.eq.s32.totalorder %s24, 0
      %p160 = por %p158, %p159
      %p161 = scmp.ne.s32.totalorder %s149, %s150
      %p162 = scmp.eq.s32.totalorder %s25, 1
      %p163 = por %p161, %p162
      %p165 = scmp.ne.s32.totalorder %s150, %s164
      %p166 = scmp.eq.s32.totalorder %s25, 0
      %p167 = por %p165, %p166
      %s168 = ssub.s32 %s26, %s45
      %s169 = ssub.s32 %s27, %s41
      %s170 = sor.u32 %s168, %s169
      %p171 = scmp.eq.s32.totalorder %s170, 0
      %s173 = sadd.s32 %s172, 1
      %s174 = scalar_select %p171, %s172, %s173
      %p177 = pneg %p171
      %p178 = scmp.eq.s32.totalorder %s19, 1
      %p179 = por %p177, %p178
      %p180 = scmp.ne.s32.totalorder %s172, %s175
      %p181 = scmp.eq.s32.totalorder %s19, 0
      %p182 = por %p180, %p181
      %p183 = scmp.ne.s32.totalorder %s172, %s175
      %p184 = scmp.eq.s32.totalorder %s24, 1
      %p185 = por %p183, %p184
      %p186 = scmp.ne.s32.totalorder %s175, %s176
      %p187 = scmp.eq.s32.totalorder %s24, 0
      %p188 = por %p186, %p187
      %p189 = scmp.ne.s32.totalorder %s175, %s176
      %p190 = scmp.eq.s32.totalorder %s25, 1
      %p191 = por %p189, %p190
      %p193 = scmp.ne.s32.totalorder %s176, %s192
      %p194 = scmp.eq.s32.totalorder %s25, 0
      %p195 = por %p193, %p194
      %p196 = scmp.le.s32.totalorder 1, %s19
      %p197 = scmp.lt.s32.totalorder %s19, 3
      %p198 = pnand %p196, %p197
      %p199 = pneg %p198
      // Predicated region
      $region9: #{tpu_custom_call.1} parent=5 // pred_check
        _
      $region10: #{tpu_custom_call.1} parent=5 // pred_check_branch
        %201 = sbr.rel (%p198) target = $region12
      $region11: #{tpu_custom_call.1} parent=5 // pred_region
        %s202 = ssub.s32 %s19, 1
        // Predicated region
        $region13: #{tpu_custom_call.1} parent=11 // pred_check
          %p203 = pneg %p92
        $region14: #{tpu_custom_call.1} parent=11 // pred_check_branch
          %205 = sbr.rel (%p203) target = $region16
        $region15: #{tpu_custom_call.1} parent=11 // pred_region
          %s206 = smul.u32 2, %s30
          %208 = vsyncadd [#allocation6], 0
          %s209 = smul.addr %s206, 8
          %s210 = scalar_lea.hbm %s1, %s209
          %s211 = sshll.u32 %s210, 4
          %s212 = int_to_ptr.hbm [resolvable:$true] %s211
          %s213 = sshll.u32 [#allocation5], 4
          %s214 = int_to_ptr.vmem [resolvable:$true] %s213
          %219 = dma.hbm_to_vmem [thread:$0]  %s212, 256, %s214, [#allocation6], 128, 128, 8
        $region16: #{tpu_custom_call.1} parent=11 // pred_fallthru
          _
        // Predicated region
        $region17: #{tpu_custom_call.1} parent=11 // pred_check
          %p220 = pneg %p118
        $region18: #{tpu_custom_call.1} parent=11 // pred_check_branch
          %222 = sbr.rel (%p220) target = $region20
        $region19: #{tpu_custom_call.1} parent=11 // pred_region
          %s223 = smul.u32 2, %s30
          %225 = vsyncadd [#allocation6], 0
          %s226 = smul.addr %s223, 8
          %s227 = scalar_lea.hbm %s2, %s226
          %s228 = sshll.u32 %s227, 4
          %s229 = int_to_ptr.hbm [resolvable:$true] %s228
          %s230 = sshll.u32 [#allocation7], 4
          %s231 = int_to_ptr.vmem [resolvable:$true] %s230
          %236 = dma.hbm_to_vmem [thread:$0]  %s229, 256, %s231, [#allocation6], 128, 128, 8
        $region20: #{tpu_custom_call.1} parent=11 // pred_fallthru
          _
        // Predicated region
        $region21: #{tpu_custom_call.1} parent=11 // pred_check
          %p237 = pneg %p139
        $region22: #{tpu_custom_call.1} parent=11 // pred_check_branch
          %239 = sbr.rel (%p237) target = $region24
        $region23: #{tpu_custom_call.1} parent=11 // pred_region
          %241 = vsyncadd [#allocation9], 0
          %s242 = sshll.u32 %s3, 4
          %s243 = int_to_ptr.hbm [resolvable:$true] %s242
          %s244 = sshll.u32 [#allocation8], 4
          %s245 = int_to_ptr.vmem [resolvable:$true] %s244
          %250 = dma.hbm_to_vmem [thread:$0]  %s243, 256, %s245, [#allocation9], 128, 128, 8
        $region24: #{tpu_custom_call.1} parent=11 // pred_fallthru
          _
        // Predicated region
        $region25: #{tpu_custom_call.1} parent=11 // pred_check
          %p251 = pneg %p160
        $region26: #{tpu_custom_call.1} parent=11 // pred_check_branch
          %253 = sbr.rel (%p251) target = $region28
        $region27: #{tpu_custom_call.1} parent=11 // pred_region
          %255 = vsyncadd [#allocation9], 0
          %s256 = sshll.u32 %s4, 4
          %s257 = int_to_ptr.hbm [resolvable:$true] %s256
          %s258 = sshll.u32 [#allocation10], 4
          %s259 = int_to_ptr.vmem [resolvable:$true] %s258
          %264 = dma.hbm_to_vmem [thread:$0]  %s257, 256, %s259, [#allocation9], 128, 128, 8
        $region28: #{tpu_custom_call.1} parent=11 // pred_fallthru
          _
      $region12: #{tpu_custom_call.1} parent=5 // pred_fallthru
        _
      %p265 = scmp.lt.s32.totalorder %s19, 2
      // Predicated region
      $region29: #{tpu_custom_call.1} parent=5 // pred_check
        %p266 = pneg %p265
      $region30: #{tpu_custom_call.1} parent=5 // pred_check_branch
        %268 = sbr.rel (%p266) target = $region32
      $region31: #{tpu_custom_call.1} parent=5 // pred_region
        // Predicated region
        $region33: #{tpu_custom_call.1} parent=31 // pred_check
          %p269 = pneg %p60
        $region34: #{tpu_custom_call.1} parent=31 // pred_check_branch
          %271 = sbr.rel (%p269) target = $region36
        $region35: #{tpu_custom_call.1} parent=31 // pred_region
          #allocation13 [shape = 'u32[6]{0}', space=smem, size = 0x18, scoped, tag = 'DMA stride descriptor']
          %s272 = sand.u32 %s50, 1
          %s273 = scalar_lea.sflag [#allocation3], %s272
          %s274 = sand.u32 %s50, 1
          %s275 = smul.addr %s274, 128
          %s276 = scalar_lea.vmem [#allocation2], %s275
          %s277 = smul.u32 4, %s28
          %279 = vsyncadd %s273, 0
          %s280 = smul.addr %s277, 2
          %s281 = smul.addr %s26, 8
          %s282 = sadd.s32 %s280, %s281
          %s283 = smul.addr %s282, 8
          %s284 = scalar_lea.hbm %s0, %s283
          %s286 = sshll.u32 1, 14
          %s287 = sxor.u32 4294967295, %s286
          %s289 = sld [smem:[#allocation0]]
          %s290 = sadd.s32 2, %s289
          %s292 = sshll.u32 7, 26
          %s293 = sxor.u32 4294967295, %s292
          %s294 = sand.u32 0, %s293
          %s295 = sshll.u32 %s290, 26
          %s296 = sor.u32 %s294, %s295
          %s297 = sshll.u32 %s284, 4
          %s298 = int_to_ptr.hbm [resolvable:$true] %s297
          %s299 = sshll.u32 %s276, 4
          %s300 = int_to_ptr.vmem [resolvable:$true] %s299
          %306 = sst [smem:[#allocation13]] 2048
          %s307 = scalar_lea.smem [#allocation13], 1
          %308 = sst [smem:[%s307]] 1024
          %s309 = scalar_lea.smem [#allocation13], 2
          %310 = sst [smem:[%s309]] 8
          %s311 = scalar_lea.smem [#allocation13], 3
          %312 = sst [smem:[%s311]] 128
          %s313 = scalar_lea.smem [#allocation13], 4
          %314 = sst [smem:[%s313]] 128
          %s315 = scalar_lea.smem [#allocation13], 5
          %316 = sst [smem:[%s315]] 8
          %318 = dma.general %s298, 2048, %s300, %s273, [#allocation12], [#allocation13], %s296, 0
        $region36: #{tpu_custom_call.1} parent=31 // pred_fallthru
          _
      $region32: #{tpu_custom_call.1} parent=5 // pred_fallthru
        _
      %p319 = scmp.le.s32.totalorder 1, %s19
      %p320 = scmp.lt.s32.totalorder %s19, 3
      %p321 = pnand %p319, %p320
      %p322 = pneg %p321
      // Predicated region
      $region37: #{tpu_custom_call.1} parent=5 // pred_check
        _
      $region38: #{tpu_custom_call.1} parent=5 // pred_check_branch
        %324 = sbr.rel (%p321) target = $region40
      $region39: #{tpu_custom_call.1} parent=5 // pred_region
        %s325 = ssub.s32 %s19, 1
        %s326 = sand.u32 %s53, 1
        %s327 = scalar_lea.sflag [#allocation3], %s326
        %s328 = sand.u32 %s53, 1
        %s329 = smul.addr %s328, 128
        %s330 = scalar_lea.vmem [#allocation2], %s329
        // Predicated region
        $region41: #{tpu_custom_call.1} parent=39 // pred_check
          %p331 = pneg %p66
        $region42: #{tpu_custom_call.1} parent=39 // pred_check_branch
          %333 = sbr.rel (%p331) target = $region44
        $region43: #{tpu_custom_call.1} parent=39 // pred_region
          %335 = dma.done %s327, 2048
        $region44: #{tpu_custom_call.1} parent=39 // pred_fallthru
          _
        // Predicated region
        $region45: #{tpu_custom_call.1} parent=39 // pred_check
          %p336 = pneg %p92
        $region46: #{tpu_custom_call.1} parent=39 // pred_check_branch
          %338 = sbr.rel (%p336) target = $region48
        $region47: #{tpu_custom_call.1} parent=39 // pred_region
          %340 = dma.done [#allocation6], 256
        $region48: #{tpu_custom_call.1} parent=39 // pred_fallthru
          _
        // Predicated region
        $region49: #{tpu_custom_call.1} parent=39 // pred_check
          %p341 = pneg %p118
        $region50: #{tpu_custom_call.1} parent=39 // pred_check_branch
          %343 = sbr.rel (%p341) target = $region52
        $region51: #{tpu_custom_call.1} parent=39 // pred_region
          %345 = dma.done [#allocation6], 256
        $region52: #{tpu_custom_call.1} parent=39 // pred_fallthru
          _
        // Predicated region
        $region53: #{tpu_custom_call.1} parent=39 // pred_check
          %p346 = pneg %p139
        $region54: #{tpu_custom_call.1} parent=39 // pred_check_branch
          %348 = sbr.rel (%p346) target = $region56
        $region55: #{tpu_custom_call.1} parent=39 // pred_region
          %350 = dma.done [#allocation9], 256
        $region56: #{tpu_custom_call.1} parent=39 // pred_fallthru
          _
        // Predicated region
        $region57: #{tpu_custom_call.1} parent=39 // pred_check
          %p351 = pneg %p160
        $region58: #{tpu_custom_call.1} parent=39 // pred_check_branch
          %353 = sbr.rel (%p351) target = $region60
        $region59: #{tpu_custom_call.1} parent=39 // pred_region
          %355 = dma.done [#allocation9], 256
        $region60: #{tpu_custom_call.1} parent=39 // pred_fallthru
          _
        %s356 = sand.u32 %s53, 1
        %s357 = scalar_lea.sflag [#allocation3], %s356
        %s358 = sand.u32 %s53, 1
        %s359 = smul.addr %s358, 128
        %s360 = scalar_lea.vmem [#allocation2], %s359
        %p361 = pneg %p66
        %p362 = pneg %p63
        %p363 = pneg %p92
        %p364 = pneg %p89
        %p365 = pneg %p118
        %p366 = pneg %p115
        %p367 = pneg %p139
        %p368 = pneg %p136
        %p369 = pneg %p160
        %p370 = pneg %p157
        %p371 = pneg %p188
        %p372 = pneg %p185
        %s373 = sand.u32 %s175, 1
        %s374 = scalar_lea.sflag [#allocation4], %s373
        %s375 = sand.u32 %s175, 1
        %s376 = smul.addr %s375, 16
        %s377 = scalar_lea.vmem [#allocation11], %s376
        %s378 = smul.u32 4, %s31
        %s379 = smul.u32 2, %s30
        %s380 = smul.u32 2, %s30
        %s381 = smul.u32 2, %s30
        %v382 = vld [vmem:[#allocation5] sm:$0xff]
        %v383 = vld [vmem:[#allocation5 + $0x8] sm:$0xff]
        %v384 = vld [vmem:[#allocation7] sm:$0xff]
        %v385 = vld [vmem:[#allocation7 + $0x8] sm:$0xff]
        %v386 = vadd.f32 %v382, %v384
        %v387 = vadd.f32 %v383, %v385
        %v388 = vld [vmem:[#allocation8] sm:$0xff]
        %v389 = vld [vmem:[#allocation8 + $0x8] sm:$0xff]
        %v390 = vld [vmem:[#allocation10] sm:$0xff]
        %v391 = vld [vmem:[#allocation10 + $0x8] sm:$0xff]
        %v392 = vadd.f32 %v388, %v390
        %v393 = vadd.f32 %v389, %v391
        %v394 = vld [vmem:[%s330] sm:$0xff]
        %v395 = vld [vmem:[%s330 + $0x8] sm:$0xff]
        %s396 = scalar_lea.vmem %s330, 64 [#allocation2]
        %v397 = vld [vmem:[%s396] sm:$0xff]
        %v398 = vld [vmem:[%s396 + $0x8] sm:$0xff]
        %v399 = vadd.f32 %v394, %v397
        %v400 = vadd.f32 %v395, %v398
        %vm401 = vcmask 130048
        %v403 = vsel %vm401, %v382, 0
        %v406 = vsel %vm401, %v383, 0
        %408 = vmatpush.msra.mxu0 0.0
        %409 = vmatpush.msra.mxu0 0.0
        %410 = vmatpush.msra.mxu0 0.0
        %411 = vmatpush.msra.mxu0 0.0
        %412 = vmatpush.msra.mxu0 0.0
        %413 = vmatpush.msra.mxu0 0.0
        %414 = vmatpush.msra.mxu0 0.0
        %415 = vmatpush.msra.mxu0 0.0
        %416 = vmatpush.msra.mxu0 0.0
        %417 = vmatpush.msra.mxu0 0.0
        %418 = vmatpush.msra.mxu0 0.0
        %419 = vmatpush.msra.mxu0 0.0
        %420 = vmatpush.msra.mxu0 0.0
        %421 = vmatpush.msra.mxu0 0.0
        %v422 = vand.u32 %v395, 4294901760
        %423 = vmatpush.msra.mxu0 %v422
        %v424 = vand.u32 %v394, 4294901760
        %425 = vmatpush.msra.mxu0 %v424
        %v426 = vand.u32 %v403, 4294901760
        %v427 = vsub.f32 %v403, %v426
        %v428 = vand.u32 %v427, 4294901760
        %v429 = vsub.f32 %v427, %v428
        %v430 = vand.u32 %v429, 4294901760
        %431 = vmatmul.f32.gmra.mxu0 %v430
        %v432 = vpop.f32.mrf.mxu0
        %v433 = vadd.f32 0.0, %v432
        %v434 = vand.u32 %v406, 4294901760
        %v435 = vsub.f32 %v406, %v434
        %v436 = vand.u32 %v435, 4294901760
        %v437 = vsub.f32 %v435, %v436
        %v438 = vand.u32 %v437, 4294901760
        %439 = vmatmul.f32.gmra.mxu0 %v438
        %v440 = vpop.f32.mrf.mxu0
        %v441 = vadd.f32 0.0, %v440
        %442 = vdwg.mxu0
        %443 = vmatpush.msra.mxu0 0.0
        %444 = vmatpush.msra.mxu0 0.0
        %445 = vmatpush.msra.mxu0 0.0
        %446 = vmatpush.msra.mxu0 0.0
        %447 = vmatpush.msra.mxu0 0.0
        %448 = vmatpush.msra.mxu0 0.0
        %449 = vmatpush.msra.mxu0 0.0
        %450 = vmatpush.msra.mxu0 0.0
        %451 = vmatpush.msra.mxu0 0.0
        %452 = vmatpush.msra.mxu0 0.0
        %453 = vmatpush.msra.mxu0 0.0
        %454 = vmatpush.msra.mxu0 0.0
        %455 = vmatpush.msra.mxu0 0.0
        %456 = vmatpush.msra.mxu0 0.0
        %v457 = vand.u32 %v395, 4294901760
        %v458 = vsub.f32 %v395, %v457
        %v459 = vand.u32 %v458, 4294901760
        %v460 = vsub.f32 %v458, %v459
        %v461 = vand.u32 %v460, 4294901760
        %462 = vmatpush.msra.mxu0 %v461
        %v463 = vand.u32 %v394, 4294901760
        %v464 = vsub.f32 %v394, %v463
        %v465 = vand.u32 %v464, 4294901760
        %v466 = vsub.f32 %v464, %v465
        %v467 = vand.u32 %v466, 4294901760
        %468 = vmatpush.msra.mxu0 %v467
        %v469 = vand.u32 %v403, 4294901760
        %470 = vmatmul.f32.gmra.mxu0 %v469
        %v471 = vpop.f32.mrf.mxu0
        %v472 = vadd.f32 %v433, %v471
        %v473 = vand.u32 %v406, 4294901760
        %474 = vmatmul.f32.gmra.mxu0 %v473
        %v475 = vpop.f32.mrf.mxu0
        %v476 = vadd.f32 %v441, %v475
        %477 = vdwg.mxu0
        %478 = vmatpush.msra.mxu0 0.0
        %479 = vmatpush.msra.mxu0 0.0
        %480 = vmatpush.msra.mxu0 0.0
        %481 = vmatpush.msra.mxu0 0.0
        %482 = vmatpush.msra.mxu0 0.0
        %483 = vmatpush.msra.mxu0 0.0
        %484 = vmatpush.msra.mxu0 0.0
        %485 = vmatpush.msra.mxu0 0.0
        %486 = vmatpush.msra.mxu0 0.0
        %487 = vmatpush.msra.mxu0 0.0
        %488 = vmatpush.msra.mxu0 0.0
        %489 = vmatpush.msra.mxu0 0.0
        %490 = vmatpush.msra.mxu0 0.0
        %491 = vmatpush.msra.mxu0 0.0
        %v492 = vand.u32 %v395, 4294901760
        %v493 = vsub.f32 %v395, %v492
        %494 = vmatpush.msra.mxu0 %v493
        %v495 = vand.u32 %v394, 4294901760
        %v496 = vsub.f32 %v394, %v495
        %497 = vmatpush.msra.mxu0 %v496
        %v498 = vand.u32 %v403, 4294901760
        %v499 = vsub.f32 %v403, %v498
        %500 = vmatmul.f32.gmra.mxu0 %v499
        %v501 = vpop.f32.mrf.mxu0
        %v502 = vadd.f32 %v472, %v501
        %v503 = vand.u32 %v406, 4294901760
        %v504 = vsub.f32 %v406, %v503
        %505 = vmatmul.f32.gmra.mxu0 %v504
        %v506 = vpop.f32.mrf.mxu0
        %v507 = vadd.f32 %v476, %v506
        %508 = vdwg.mxu0
        %509 = vmatpush.msra.mxu0 0.0
        %510 = vmatpush.msra.mxu0 0.0
        %511 = vmatpush.msra.mxu0 0.0
        %512 = vmatpush.msra.mxu0 0.0
        %513 = vmatpush.msra.mxu0 0.0
        %514 = vmatpush.msra.mxu0 0.0
        %515 = vmatpush.msra.mxu0 0.0
        %516 = vmatpush.msra.mxu0 0.0
        %517 = vmatpush.msra.mxu0 0.0
        %518 = vmatpush.msra.mxu0 0.0
        %519 = vmatpush.msra.mxu0 0.0
        %520 = vmatpush.msra.mxu0 0.0
        %521 = vmatpush.msra.mxu0 0.0
        %522 = vmatpush.msra.mxu0 0.0
        %v523 = vand.u32 %v395, 4294901760
        %524 = vmatpush.msra.mxu0 %v523
        %v525 = vand.u32 %v394, 4294901760
        %526 = vmatpush.msra.mxu0 %v525
        %v527 = vand.u32 %v403, 4294901760
        %v528 = vsub.f32 %v403, %v527
        %v529 = vand.u32 %v528, 4294901760
        %530 = vmatmul.f32.gmra.mxu0 %v529
        %v531 = vpop.f32.mrf.mxu0
        %v532 = vadd.f32 %v502, %v531
        %v533 = vand.u32 %v406, 4294901760
        %v534 = vsub.f32 %v406, %v533
        %v535 = vand.u32 %v534, 4294901760
        %536 = vmatmul.f32.gmra.mxu0 %v535
        %v537 = vpop.f32.mrf.mxu0
        %v538 = vadd.f32 %v507, %v537
        %539 = vdwg.mxu0
        %540 = vmatpush.msra.mxu0 0.0
        %541 = vmatpush.msra.mxu0 0.0
        %542 = vmatpush.msra.mxu0 0.0
        %543 = vmatpush.msra.mxu0 0.0
        %544 = vmatpush.msra.mxu0 0.0
        %545 = vmatpush.msra.mxu0 0.0
        %546 = vmatpush.msra.mxu0 0.0
        %547 = vmatpush.msra.mxu0 0.0
        %548 = vmatpush.msra.mxu0 0.0
        %549 = vmatpush.msra.mxu0 0.0
        %550 = vmatpush.msra.mxu0 0.0
        %551 = vmatpush.msra.mxu0 0.0
        %552 = vmatpush.msra.mxu0 0.0
        %553 = vmatpush.msra.mxu0 0.0
        %v554 = vand.u32 %v395, 4294901760
        %v555 = vsub.f32 %v395, %v554
        %v556 = vand.u32 %v555, 4294901760
        %557 = vmatpush.msra.mxu0 %v556
        %v558 = vand.u32 %v394, 4294901760
        %v559 = vsub.f32 %v394, %v558
        %v560 = vand.u32 %v559, 4294901760
        %561 = vmatpush.msra.mxu0 %v560
        %v562 = vand.u32 %v403, 4294901760
        %563 = vmatmul.f32.gmra.mxu0 %v562
        %v564 = vpop.f32.mrf.mxu0
        %v565 = vadd.f32 %v532, %v564
        %v566 = vand.u32 %v406, 4294901760
        %567 = vmatmul.f32.gmra.mxu0 %v566
        %v568 = vpop.f32.mrf.mxu0
        %v569 = vadd.f32 %v538, %v568
        %570 = vdwg.mxu0
        %571 = vmatpush.msra.mxu0 0.0
        %572 = vmatpush.msra.mxu0 0.0
        %573 = vmatpush.msra.mxu0 0.0
        %574 = vmatpush.msra.mxu0 0.0
        %575 = vmatpush.msra.mxu0 0.0
        %576 = vmatpush.msra.mxu0 0.0
        %577 = vmatpush.msra.mxu0 0.0
        %578 = vmatpush.msra.mxu0 0.0
        %579 = vmatpush.msra.mxu0 0.0
        %580 = vmatpush.msra.mxu0 0.0
        %581 = vmatpush.msra.mxu0 0.0
        %582 = vmatpush.msra.mxu0 0.0
        %583 = vmatpush.msra.mxu0 0.0
        %584 = vmatpush.msra.mxu0 0.0
        %v585 = vand.u32 %v395, 4294901760
        %586 = vmatpush.msra.mxu0 %v585
        %v587 = vand.u32 %v394, 4294901760
        %588 = vmatpush.msra.mxu0 %v587
        %v589 = vand.u32 %v403, 4294901760
        %590 = vmatmul.f32.gmra.mxu0 %v589
        %v591 = vpop.f32.mrf.mxu0
        %v592 = vadd.f32 %v565, %v591
        %v593 = vand.u32 %v406, 4294901760
        %594 = vmatmul.f32.gmra.mxu0 %v593
        %v595 = vpop.f32.mrf.mxu0
        %v596 = vadd.f32 %v569, %v595
        %597 = vdwg.mxu0
        %v599 = vsel %vm401, %v384, 0
        %v602 = vsel %vm401, %v385, 0
        %604 = vmatpush.msra.mxu0 0.0
        %605 = vmatpush.msra.mxu0 0.0
        %606 = vmatpush.msra.mxu0 0.0
        %607 = vmatpush.msra.mxu0 0.0
        %608 = vmatpush.msra.mxu0 0.0
        %609 = vmatpush.msra.mxu0 0.0
        %610 = vmatpush.msra.mxu0 0.0
        %611 = vmatpush.msra.mxu0 0.0
        %612 = vmatpush.msra.mxu0 0.0
        %613 = vmatpush.msra.mxu0 0.0
        %614 = vmatpush.msra.mxu0 0.0
        %615 = vmatpush.msra.mxu0 0.0
        %616 = vmatpush.msra.mxu0 0.0
        %617 = vmatpush.msra.mxu0 0.0
        %v618 = vand.u32 %v398, 4294901760
        %619 = vmatpush.msra.mxu0 %v618
        %v620 = vand.u32 %v397, 4294901760
        %621 = vmatpush.msra.mxu0 %v620
        %v622 = vand.u32 %v599, 4294901760
        %v623 = vsub.f32 %v599, %v622
        %v624 = vand.u32 %v623, 4294901760
        %v625 = vsub.f32 %v623, %v624
        %v626 = vand.u32 %v625, 4294901760
        %627 = vmatmul.f32.gmra.mxu0 %v626
        %v628 = vpop.f32.mrf.mxu0
        %v629 = vadd.f32 0.0, %v628
        %v630 = vand.u32 %v602, 4294901760
        %v631 = vsub.f32 %v602, %v630
        %v632 = vand.u32 %v631, 4294901760
        %v633 = vsub.f32 %v631, %v632
        %v634 = vand.u32 %v633, 4294901760
        %635 = vmatmul.f32.gmra.mxu0 %v634
        %v636 = vpop.f32.mrf.mxu0
        %v637 = vadd.f32 0.0, %v636
        %638 = vdwg.mxu0
        %639 = vmatpush.msra.mxu0 0.0
        %640 = vmatpush.msra.mxu0 0.0
        %641 = vmatpush.msra.mxu0 0.0
        %642 = vmatpush.msra.mxu0 0.0
        %643 = vmatpush.msra.mxu0 0.0
        %644 = vmatpush.msra.mxu0 0.0
        %645 = vmatpush.msra.mxu0 0.0
        %646 = vmatpush.msra.mxu0 0.0
        %647 = vmatpush.msra.mxu0 0.0
        %648 = vmatpush.msra.mxu0 0.0
        %649 = vmatpush.msra.mxu0 0.0
        %650 = vmatpush.msra.mxu0 0.0
        %651 = vmatpush.msra.mxu0 0.0
        %652 = vmatpush.msra.mxu0 0.0
        %v653 = vand.u32 %v398, 4294901760
        %v654 = vsub.f32 %v398, %v653
        %v655 = vand.u32 %v654, 4294901760
        %v656 = vsub.f32 %v654, %v655
        %v657 = vand.u32 %v656, 4294901760
        %658 = vmatpush.msra.mxu0 %v657
        %v659 = vand.u32 %v397, 4294901760
        %v660 = vsub.f32 %v397, %v659
        %v661 = vand.u32 %v660, 4294901760
        %v662 = vsub.f32 %v660, %v661
        %v663 = vand.u32 %v662, 4294901760
        %664 = vmatpush.msra.mxu0 %v663
        %v665 = vand.u32 %v599, 4294901760
        %666 = vmatmul.f32.gmra.mxu0 %v665
        %v667 = vpop.f32.mrf.mxu0
        %v668 = vadd.f32 %v629, %v667
        %v669 = vand.u32 %v602, 4294901760
        %670 = vmatmul.f32.gmra.mxu0 %v669
        %v671 = vpop.f32.mrf.mxu0
        %v672 = vadd.f32 %v637, %v671
        %673 = vdwg.mxu0
        %674 = vmatpush.msra.mxu0 0.0
        %675 = vmatpush.msra.mxu0 0.0
        %676 = vmatpush.msra.mxu0 0.0
        %677 = vmatpush.msra.mxu0 0.0
        %678 = vmatpush.msra.mxu0 0.0
        %679 = vmatpush.msra.mxu0 0.0
        %680 = vmatpush.msra.mxu0 0.0
        %681 = vmatpush.msra.mxu0 0.0
        %682 = vmatpush.msra.mxu0 0.0
        %683 = vmatpush.msra.mxu0 0.0
        %684 = vmatpush.msra.mxu0 0.0
        %685 = vmatpush.msra.mxu0 0.0
        %686 = vmatpush.msra.mxu0 0.0
        %687 = vmatpush.msra.mxu0 0.0
        %v688 = vand.u32 %v398, 4294901760
        %v689 = vsub.f32 %v398, %v688
        %690 = vmatpush.msra.mxu0 %v689
        %v691 = vand.u32 %v397, 4294901760
        %v692 = vsub.f32 %v397, %v691
        %693 = vmatpush.msra.mxu0 %v692
        %v694 = vand.u32 %v599, 4294901760
        %v695 = vsub.f32 %v599, %v694
        %696 = vmatmul.f32.gmra.mxu0 %v695
        %v697 = vpop.f32.mrf.mxu0
        %v698 = vadd.f32 %v668, %v697
        %v699 = vand.u32 %v602, 4294901760
        %v700 = vsub.f32 %v602, %v699
        %701 = vmatmul.f32.gmra.mxu0 %v700
        %v702 = vpop.f32.mrf.mxu0
        %v703 = vadd.f32 %v672, %v702
        %704 = vdwg.mxu0
        %705 = vmatpush.msra.mxu0 0.0
        %706 = vmatpush.msra.mxu0 0.0
        %707 = vmatpush.msra.mxu0 0.0
        %708 = vmatpush.msra.mxu0 0.0
        %709 = vmatpush.msra.mxu0 0.0
        %710 = vmatpush.msra.mxu0 0.0
        %711 = vmatpush.msra.mxu0 0.0
        %712 = vmatpush.msra.mxu0 0.0
        %713 = vmatpush.msra.mxu0 0.0
        %714 = vmatpush.msra.mxu0 0.0
        %715 = vmatpush.msra.mxu0 0.0
        %716 = vmatpush.msra.mxu0 0.0
        %717 = vmatpush.msra.mxu0 0.0
        %718 = vmatpush.msra.mxu0 0.0
        %v719 = vand.u32 %v398, 4294901760
        %720 = vmatpush.msra.mxu0 %v719
        %v721 = vand.u32 %v397, 4294901760
        %722 = vmatpush.msra.mxu0 %v721
        %v723 = vand.u32 %v599, 4294901760
        %v724 = vsub.f32 %v599, %v723
        %v725 = vand.u32 %v724, 4294901760
        %726 = vmatmul.f32.gmra.mxu0 %v725
        %v727 = vpop.f32.mrf.mxu0
        %v728 = vadd.f32 %v698, %v727
        %v729 = vand.u32 %v602, 4294901760
        %v730 = vsub.f32 %v602, %v729
        %v731 = vand.u32 %v730, 4294901760
        %732 = vmatmul.f32.gmra.mxu0 %v731
        %v733 = vpop.f32.mrf.mxu0
        %v734 = vadd.f32 %v703, %v733
        %735 = vdwg.mxu0
        %736 = vmatpush.msra.mxu0 0.0
        %737 = vmatpush.msra.mxu0 0.0
        %738 = vmatpush.msra.mxu0 0.0
        %739 = vmatpush.msra.mxu0 0.0
        %740 = vmatpush.msra.mxu0 0.0
        %741 = vmatpush.msra.mxu0 0.0
        %742 = vmatpush.msra.mxu0 0.0
        %743 = vmatpush.msra.mxu0 0.0
        %744 = vmatpush.msra.mxu0 0.0
        %745 = vmatpush.msra.mxu0 0.0
        %746 = vmatpush.msra.mxu0 0.0
        %747 = vmatpush.msra.mxu0 0.0
        %748 = vmatpush.msra.mxu0 0.0
        %749 = vmatpush.msra.mxu0 0.0
        %v750 = vand.u32 %v398, 4294901760
        %v751 = vsub.f32 %v398, %v750
        %v752 = vand.u32 %v751, 4294901760
        %753 = vmatpush.msra.mxu0 %v752
        %v754 = vand.u32 %v397, 4294901760
        %v755 = vsub.f32 %v397, %v754
        %v756 = vand.u32 %v755, 4294901760
        %757 = vmatpush.msra.mxu0 %v756
        %v758 = vand.u32 %v599, 4294901760
        %759 = vmatmul.f32.gmra.mxu0 %v758
        %v760 = vpop.f32.mrf.mxu0
        %v761 = vadd.f32 %v728, %v760
        %v762 = vand.u32 %v602, 4294901760
        %763 = vmatmul.f32.gmra.mxu0 %v762
        %v764 = vpop.f32.mrf.mxu0
        %v765 = vadd.f32 %v734, %v764
        %766 = vdwg.mxu0
        %767 = vmatpush.msra.mxu0 0.0
        %768 = vmatpush.msra.mxu0 0.0
        %769 = vmatpush.msra.mxu0 0.0
        %770 = vmatpush.msra.mxu0 0.0
        %771 = vmatpush.msra.mxu0 0.0
        %772 = vmatpush.msra.mxu0 0.0
        %773 = vmatpush.msra.mxu0 0.0
        %774 = vmatpush.msra.mxu0 0.0
        %775 = vmatpush.msra.mxu0 0.0
        %776 = vmatpush.msra.mxu0 0.0
        %777 = vmatpush.msra.mxu0 0.0
        %778 = vmatpush.msra.mxu0 0.0
        %779 = vmatpush.msra.mxu0 0.0
        %780 = vmatpush.msra.mxu0 0.0
        %v781 = vand.u32 %v398, 4294901760
        %782 = vmatpush.msra.mxu0 %v781
        %v783 = vand.u32 %v397, 4294901760
        %784 = vmatpush.msra.mxu0 %v783
        %v785 = vand.u32 %v599, 4294901760
        %786 = vmatmul.f32.gmra.mxu0 %v785
        %v787 = vpop.f32.mrf.mxu0
        %v788 = vadd.f32 %v761, %v787
        %v789 = vand.u32 %v602, 4294901760
        %790 = vmatmul.f32.gmra.mxu0 %v789
        %v791 = vpop.f32.mrf.mxu0
        %v792 = vadd.f32 %v765, %v791
        %793 = vdwg.mxu0
        %v795 = vsel %vm401, %v386, 0
        %v798 = vsel %vm401, %v387, 0
        %800 = vmatpush.msra.mxu0 0.0
        %801 = vmatpush.msra.mxu0 0.0
        %802 = vmatpush.msra.mxu0 0.0
        %803 = vmatpush.msra.mxu0 0.0
        %804 = vmatpush.msra.mxu0 0.0
        %805 = vmatpush.msra.mxu0 0.0
        %806 = vmatpush.msra.mxu0 0.0
        %807 = vmatpush.msra.mxu0 0.0
        %808 = vmatpush.msra.mxu0 0.0
        %809 = vmatpush.msra.mxu0 0.0
        %810 = vmatpush.msra.mxu0 0.0
        %811 = vmatpush.msra.mxu0 0.0
        %812 = vmatpush.msra.mxu0 0.0
        %813 = vmatpush.msra.mxu0 0.0
        %v814 = vand.u32 %v400, 4294901760
        %815 = vmatpush.msra.mxu0 %v814
        %v816 = vand.u32 %v399, 4294901760
        %817 = vmatpush.msra.mxu0 %v816
        %v818 = vand.u32 %v795, 4294901760
        %v819 = vsub.f32 %v795, %v818
        %v820 = vand.u32 %v819, 4294901760
        %v821 = vsub.f32 %v819, %v820
        %v822 = vand.u32 %v821, 4294901760
        %823 = vmatmul.f32.gmra.mxu0 %v822
        %v824 = vpop.f32.mrf.mxu0
        %v825 = vadd.f32 0.0, %v824
        %v826 = vand.u32 %v798, 4294901760
        %v827 = vsub.f32 %v798, %v826
        %v828 = vand.u32 %v827, 4294901760
        %v829 = vsub.f32 %v827, %v828
        %v830 = vand.u32 %v829, 4294901760
        %831 = vmatmul.f32.gmra.mxu0 %v830
        %v832 = vpop.f32.mrf.mxu0
        %v833 = vadd.f32 0.0, %v832
        %834 = vdwg.mxu0
        %835 = vmatpush.msra.mxu0 0.0
        %836 = vmatpush.msra.mxu0 0.0
        %837 = vmatpush.msra.mxu0 0.0
        %838 = vmatpush.msra.mxu0 0.0
        %839 = vmatpush.msra.mxu0 0.0
        %840 = vmatpush.msra.mxu0 0.0
        %841 = vmatpush.msra.mxu0 0.0
        %842 = vmatpush.msra.mxu0 0.0
        %843 = vmatpush.msra.mxu0 0.0
        %844 = vmatpush.msra.mxu0 0.0
        %845 = vmatpush.msra.mxu0 0.0
        %846 = vmatpush.msra.mxu0 0.0
        %847 = vmatpush.msra.mxu0 0.0
        %848 = vmatpush.msra.mxu0 0.0
        %v849 = vand.u32 %v400, 4294901760
        %v850 = vsub.f32 %v400, %v849
        %v851 = vand.u32 %v850, 4294901760
        %v852 = vsub.f32 %v850, %v851
        %v853 = vand.u32 %v852, 4294901760
        %854 = vmatpush.msra.mxu0 %v853
        %v855 = vand.u32 %v399, 4294901760
        %v856 = vsub.f32 %v399, %v855
        %v857 = vand.u32 %v856, 4294901760
        %v858 = vsub.f32 %v856, %v857
        %v859 = vand.u32 %v858, 4294901760
        %860 = vmatpush.msra.mxu0 %v859
        %v861 = vand.u32 %v795, 4294901760
        %862 = vmatmul.f32.gmra.mxu0 %v861
        %v863 = vpop.f32.mrf.mxu0
        %v864 = vadd.f32 %v825, %v863
        %v865 = vand.u32 %v798, 4294901760
        %866 = vmatmul.f32.gmra.mxu0 %v865
        %v867 = vpop.f32.mrf.mxu0
        %v868 = vadd.f32 %v833, %v867
        %869 = vdwg.mxu0
        %870 = vmatpush.msra.mxu0 0.0
        %871 = vmatpush.msra.mxu0 0.0
        %872 = vmatpush.msra.mxu0 0.0
        %873 = vmatpush.msra.mxu0 0.0
        %874 = vmatpush.msra.mxu0 0.0
        %875 = vmatpush.msra.mxu0 0.0
        %876 = vmatpush.msra.mxu0 0.0
        %877 = vmatpush.msra.mxu0 0.0
        %878 = vmatpush.msra.mxu0 0.0
        %879 = vmatpush.msra.mxu0 0.0
        %880 = vmatpush.msra.mxu0 0.0
        %881 = vmatpush.msra.mxu0 0.0
        %882 = vmatpush.msra.mxu0 0.0
        %883 = vmatpush.msra.mxu0 0.0
        %v884 = vand.u32 %v400, 4294901760
        %v885 = vsub.f32 %v400, %v884
        %886 = vmatpush.msra.mxu0 %v885
        %v887 = vand.u32 %v399, 4294901760
        %v888 = vsub.f32 %v399, %v887
        %889 = vmatpush.msra.mxu0 %v888
        %v890 = vand.u32 %v795, 4294901760
        %v891 = vsub.f32 %v795, %v890
        %892 = vmatmul.f32.gmra.mxu0 %v891
        %v893 = vpop.f32.mrf.mxu0
        %v894 = vadd.f32 %v864, %v893
        %v895 = vand.u32 %v798, 4294901760
        %v896 = vsub.f32 %v798, %v895
        %897 = vmatmul.f32.gmra.mxu0 %v896
        %v898 = vpop.f32.mrf.mxu0
        %v899 = vadd.f32 %v868, %v898
        %900 = vdwg.mxu0
        %901 = vmatpush.msra.mxu0 0.0
        %902 = vmatpush.msra.mxu0 0.0
        %903 = vmatpush.msra.mxu0 0.0
        %904 = vmatpush.msra.mxu0 0.0
        %905 = vmatpush.msra.mxu0 0.0
        %906 = vmatpush.msra.mxu0 0.0
        %907 = vmatpush.msra.mxu0 0.0
        %908 = vmatpush.msra.mxu0 0.0
        %909 = vmatpush.msra.mxu0 0.0
        %910 = vmatpush.msra.mxu0 0.0
        %911 = vmatpush.msra.mxu0 0.0
        %912 = vmatpush.msra.mxu0 0.0
        %913 = vmatpush.msra.mxu0 0.0
        %914 = vmatpush.msra.mxu0 0.0
        %v915 = vand.u32 %v400, 4294901760
        %916 = vmatpush.msra.mxu0 %v915
        %v917 = vand.u32 %v399, 4294901760
        %918 = vmatpush.msra.mxu0 %v917
        %v919 = vand.u32 %v795, 4294901760
        %v920 = vsub.f32 %v795, %v919
        %v921 = vand.u32 %v920, 4294901760
        %922 = vmatmul.f32.gmra.mxu0 %v921
        %v923 = vpop.f32.mrf.mxu0
        %v924 = vadd.f32 %v894, %v923
        %v925 = vand.u32 %v798, 4294901760
        %v926 = vsub.f32 %v798, %v925
        %v927 = vand.u32 %v926, 4294901760
        %928 = vmatmul.f32.gmra.mxu0 %v927
        %v929 = vpop.f32.mrf.mxu0
        %v930 = vadd.f32 %v899, %v929
        %931 = vdwg.mxu0
        %932 = vmatpush.msra.mxu0 0.0
        %933 = vmatpush.msra.mxu0 0.0
        %934 = vmatpush.msra.mxu0 0.0
        %935 = vmatpush.msra.mxu0 0.0
        %936 = vmatpush.msra.mxu0 0.0
        %937 = vmatpush.msra.mxu0 0.0
        %938 = vmatpush.msra.mxu0 0.0
        %939 = vmatpush.msra.mxu0 0.0
        %940 = vmatpush.msra.mxu0 0.0
        %941 = vmatpush.msra.mxu0 0.0
        %942 = vmatpush.msra.mxu0 0.0
        %943 = vmatpush.msra.mxu0 0.0
        %944 = vmatpush.msra.mxu0 0.0
        %945 = vmatpush.msra.mxu0 0.0
        %v946 = vand.u32 %v400, 4294901760
        %v947 = vsub.f32 %v400, %v946
        %v948 = vand.u32 %v947, 4294901760
        %949 = vmatpush.msra.mxu0 %v948
        %v950 = vand.u32 %v399, 4294901760
        %v951 = vsub.f32 %v399, %v950
        %v952 = vand.u32 %v951, 4294901760
        %953 = vmatpush.msra.mxu0 %v952
        %v954 = vand.u32 %v795, 4294901760
        %955 = vmatmul.f32.gmra.mxu0 %v954
        %v956 = vpop.f32.mrf.mxu0
        %v957 = vadd.f32 %v924, %v956
        %v958 = vand.u32 %v798, 4294901760
        %959 = vmatmul.f32.gmra.mxu0 %v958
        %v960 = vpop.f32.mrf.mxu0
        %v961 = vadd.f32 %v930, %v960
        %962 = vdwg.mxu0
        %963 = vmatpush.msra.mxu0 0.0
        %964 = vmatpush.msra.mxu0 0.0
        %965 = vmatpush.msra.mxu0 0.0
        %966 = vmatpush.msra.mxu0 0.0
        %967 = vmatpush.msra.mxu0 0.0
        %968 = vmatpush.msra.mxu0 0.0
        %969 = vmatpush.msra.mxu0 0.0
        %970 = vmatpush.msra.mxu0 0.0
        %971 = vmatpush.msra.mxu0 0.0
        %972 = vmatpush.msra.mxu0 0.0
        %973 = vmatpush.msra.mxu0 0.0
        %974 = vmatpush.msra.mxu0 0.0
        %975 = vmatpush.msra.mxu0 0.0
        %976 = vmatpush.msra.mxu0 0.0
        %v977 = vand.u32 %v400, 4294901760
        %978 = vmatpush.msra.mxu0 %v977
        %v979 = vand.u32 %v399, 4294901760
        %980 = vmatpush.msra.mxu0 %v979
        %v981 = vand.u32 %v795, 4294901760
        %982 = vmatmul.f32.gmra.mxu0 %v981
        %v983 = vpop.f32.mrf.mxu0
        %v984 = vadd.f32 %v957, %v983
        %v985 = vand.u32 %v798, 4294901760
        %986 = vmatmul.f32.gmra.mxu0 %v985
        %v987 = vpop.f32.mrf.mxu0
        %v988 = vadd.f32 %v961, %v987
        %989 = vdwg.mxu0
        %v990 = vsub.f32 %v592, %v788
        %v991 = vsub.f32 %v596, %v792
        %v992 = vsub.f32 %v984, %v592
        %v993 = vsub.f32 %v988, %v596
        %v994 = vsub.f32 %v992, %v788
        %v995 = vsub.f32 %v993, %v792
        %v996 = vadd.f32 %v990, %v994
        %v997 = vadd.f32 %v991, %v995
        %v999 = vsel %vm401, %v990, 0
        %v1002 = vsel %vm401, %v991, 0
        %1004 = vmatpush.msra.mxu0 0.0
        %1005 = vmatpush.msra.mxu0 0.0
        %1006 = vmatpush.msra.mxu0 0.0
        %1007 = vmatpush.msra.mxu0 0.0
        %1008 = vmatpush.msra.mxu0 0.0
        %1009 = vmatpush.msra.mxu0 0.0
        %1010 = vmatpush.msra.mxu0 0.0
        %1011 = vmatpush.msra.mxu0 0.0
        %1012 = vmatpush.msra.mxu0 0.0
        %1013 = vmatpush.msra.mxu0 0.0
        %1014 = vmatpush.msra.mxu0 0.0
        %1015 = vmatpush.msra.mxu0 0.0
        %1016 = vmatpush.msra.mxu0 0.0
        %1017 = vmatpush.msra.mxu0 0.0
        %v1018 = vand.u32 %v389, 4294901760
        %1019 = vmatpush.msra.mxu0 %v1018
        %v1020 = vand.u32 %v388, 4294901760
        %1021 = vmatpush.msra.mxu0 %v1020
        %v1022 = vand.u32 %v999, 4294901760
        %v1023 = vsub.f32 %v999, %v1022
        %v1024 = vand.u32 %v1023, 4294901760
        %v1025 = vsub.f32 %v1023, %v1024
        %v1026 = vand.u32 %v1025, 4294901760
        %1027 = vmatmul.f32.gmra.mxu0 %v1026
        %v1028 = vpop.f32.mrf.mxu0
        %v1029 = vadd.f32 0.0, %v1028
        %v1030 = vand.u32 %v1002, 4294901760
        %v1031 = vsub.f32 %v1002, %v1030
        %v1032 = vand.u32 %v1031, 4294901760
        %v1033 = vsub.f32 %v1031, %v1032
        %v1034 = vand.u32 %v1033, 4294901760
        %1035 = vmatmul.f32.gmra.mxu0 %v1034
        %v1036 = vpop.f32.mrf.mxu0
        %v1037 = vadd.f32 0.0, %v1036
        %1038 = vdwg.mxu0
        %1039 = vmatpush.msra.mxu0 0.0
        %1040 = vmatpush.msra.mxu0 0.0
        %1041 = vmatpush.msra.mxu0 0.0
        %1042 = vmatpush.msra.mxu0 0.0
        %1043 = vmatpush.msra.mxu0 0.0
        %1044 = vmatpush.msra.mxu0 0.0
        %1045 = vmatpush.msra.mxu0 0.0
        %1046 = vmatpush.msra.mxu0 0.0
        %1047 = vmatpush.msra.mxu0 0.0
        %1048 = vmatpush.msra.mxu0 0.0
        %1049 = vmatpush.msra.mxu0 0.0
        %1050 = vmatpush.msra.mxu0 0.0
        %1051 = vmatpush.msra.mxu0 0.0
        %1052 = vmatpush.msra.mxu0 0.0
        %v1053 = vand.u32 %v389, 4294901760
        %v1054 = vsub.f32 %v389, %v1053
        %v1055 = vand.u32 %v1054, 4294901760
        %v1056 = vsub.f32 %v1054, %v1055
        %v1057 = vand.u32 %v1056, 4294901760
        %1058 = vmatpush.msra.mxu0 %v1057
        %v1059 = vand.u32 %v388, 4294901760
        %v1060 = vsub.f32 %v388, %v1059
        %v1061 = vand.u32 %v1060, 4294901760
        %v1062 = vsub.f32 %v1060, %v1061
        %v1063 = vand.u32 %v1062, 4294901760
        %1064 = vmatpush.msra.mxu0 %v1063
        %v1065 = vand.u32 %v999, 4294901760
        %1066 = vmatmul.f32.gmra.mxu0 %v1065
        %v1067 = vpop.f32.mrf.mxu0
        %v1068 = vadd.f32 %v1029, %v1067
        %v1069 = vand.u32 %v1002, 4294901760
        %1070 = vmatmul.f32.gmra.mxu0 %v1069
        %v1071 = vpop.f32.mrf.mxu0
        %v1072 = vadd.f32 %v1037, %v1071
        %1073 = vdwg.mxu0
        %1074 = vmatpush.msra.mxu0 0.0
        %1075 = vmatpush.msra.mxu0 0.0
        %1076 = vmatpush.msra.mxu0 0.0
        %1077 = vmatpush.msra.mxu0 0.0
        %1078 = vmatpush.msra.mxu0 0.0
        %1079 = vmatpush.msra.mxu0 0.0
        %1080 = vmatpush.msra.mxu0 0.0
        %1081 = vmatpush.msra.mxu0 0.0
        %1082 = vmatpush.msra.mxu0 0.0
        %1083 = vmatpush.msra.mxu0 0.0
        %1084 = vmatpush.msra.mxu0 0.0
        %1085 = vmatpush.msra.mxu0 0.0
        %1086 = vmatpush.msra.mxu0 0.0
        %1087 = vmatpush.msra.mxu0 0.0
        %v1088 = vand.u32 %v389, 4294901760
        %v1089 = vsub.f32 %v389, %v1088
        %1090 = vmatpush.msra.mxu0 %v1089
        %v1091 = vand.u32 %v388, 4294901760
        %v1092 = vsub.f32 %v388, %v1091
        %1093 = vmatpush.msra.mxu0 %v1092
        %v1094 = vand.u32 %v999, 4294901760
        %v1095 = vsub.f32 %v999, %v1094
        %1096 = vmatmul.f32.gmra.mxu0 %v1095
        %v1097 = vpop.f32.mrf.mxu0
        %v1098 = vadd.f32 %v1068, %v1097
        %v1099 = vand.u32 %v1002, 4294901760
        %v1100 = vsub.f32 %v1002, %v1099
        %1101 = vmatmul.f32.gmra.mxu0 %v1100
        %v1102 = vpop.f32.mrf.mxu0
        %v1103 = vadd.f32 %v1072, %v1102
        %1104 = vdwg.mxu0
        %1105 = vmatpush.msra.mxu0 0.0
        %1106 = vmatpush.msra.mxu0 0.0
        %1107 = vmatpush.msra.mxu0 0.0
        %1108 = vmatpush.msra.mxu0 0.0
        %1109 = vmatpush.msra.mxu0 0.0
        %1110 = vmatpush.msra.mxu0 0.0
        %1111 = vmatpush.msra.mxu0 0.0
        %1112 = vmatpush.msra.mxu0 0.0
        %1113 = vmatpush.msra.mxu0 0.0
        %1114 = vmatpush.msra.mxu0 0.0
        %1115 = vmatpush.msra.mxu0 0.0
        %1116 = vmatpush.msra.mxu0 0.0
        %1117 = vmatpush.msra.mxu0 0.0
        %1118 = vmatpush.msra.mxu0 0.0
        %v1119 = vand.u32 %v389, 4294901760
        %1120 = vmatpush.msra.mxu0 %v1119
        %v1121 = vand.u32 %v388, 4294901760
        %1122 = vmatpush.msra.mxu0 %v1121
        %v1123 = vand.u32 %v999, 4294901760
        %v1124 = vsub.f32 %v999, %v1123
        %v1125 = vand.u32 %v1124, 4294901760
        %1126 = vmatmul.f32.gmra.mxu0 %v1125
        %v1127 = vpop.f32.mrf.mxu0
        %v1128 = vadd.f32 %v1098, %v1127
        %v1129 = vand.u32 %v1002, 4294901760
        %v1130 = vsub.f32 %v1002, %v1129
        %v1131 = vand.u32 %v1130, 4294901760
        %1132 = vmatmul.f32.gmra.mxu0 %v1131
        %v1133 = vpop.f32.mrf.mxu0
        %v1134 = vadd.f32 %v1103, %v1133
        %1135 = vdwg.mxu0
        %1136 = vmatpush.msra.mxu0 0.0
        %1137 = vmatpush.msra.mxu0 0.0
        %1138 = vmatpush.msra.mxu0 0.0
        %1139 = vmatpush.msra.mxu0 0.0
        %1140 = vmatpush.msra.mxu0 0.0
        %1141 = vmatpush.msra.mxu0 0.0
        %1142 = vmatpush.msra.mxu0 0.0
        %1143 = vmatpush.msra.mxu0 0.0
        %1144 = vmatpush.msra.mxu0 0.0
        %1145 = vmatpush.msra.mxu0 0.0
        %1146 = vmatpush.msra.mxu0 0.0
        %1147 = vmatpush.msra.mxu0 0.0
        %1148 = vmatpush.msra.mxu0 0.0
        %1149 = vmatpush.msra.mxu0 0.0
        %v1150 = vand.u32 %v389, 4294901760
        %v1151 = vsub.f32 %v389, %v1150
        %v1152 = vand.u32 %v1151, 4294901760
        %1153 = vmatpush.msra.mxu0 %v1152
        %v1154 = vand.u32 %v388, 4294901760
        %v1155 = vsub.f32 %v388, %v1154
        %v1156 = vand.u32 %v1155, 4294901760
        %1157 = vmatpush.msra.mxu0 %v1156
        %v1158 = vand.u32 %v999, 4294901760
        %1159 = vmatmul.f32.gmra.mxu0 %v1158
        %v1160 = vpop.f32.mrf.mxu0
        %v1161 = vadd.f32 %v1128, %v1160
        %v1162 = vand.u32 %v1002, 4294901760
        %1163 = vmatmul.f32.gmra.mxu0 %v1162
        %v1164 = vpop.f32.mrf.mxu0
        %v1165 = vadd.f32 %v1134, %v1164
        %1166 = vdwg.mxu0
        %1167 = vmatpush.msra.mxu0 0.0
        %1168 = vmatpush.msra.mxu0 0.0
        %1169 = vmatpush.msra.mxu0 0.0
        %1170 = vmatpush.msra.mxu0 0.0
        %1171 = vmatpush.msra.mxu0 0.0
        %1172 = vmatpush.msra.mxu0 0.0
        %1173 = vmatpush.msra.mxu0 0.0
        %1174 = vmatpush.msra.mxu0 0.0
        %1175 = vmatpush.msra.mxu0 0.0
        %1176 = vmatpush.msra.mxu0 0.0
        %1177 = vmatpush.msra.mxu0 0.0
        %1178 = vmatpush.msra.mxu0 0.0
        %1179 = vmatpush.msra.mxu0 0.0
        %1180 = vmatpush.msra.mxu0 0.0
        %v1181 = vand.u32 %v389, 4294901760
        %1182 = vmatpush.msra.mxu0 %v1181
        %v1183 = vand.u32 %v388, 4294901760
        %1184 = vmatpush.msra.mxu0 %v1183
        %v1185 = vand.u32 %v999, 4294901760
        %1186 = vmatmul.f32.gmra.mxu0 %v1185
        %v1187 = vpop.f32.mrf.mxu0
        %v1188 = vadd.f32 %v1161, %v1187
        %v1189 = vand.u32 %v1002, 4294901760
        %1190 = vmatmul.f32.gmra.mxu0 %v1189
        %v1191 = vpop.f32.mrf.mxu0
        %v1192 = vadd.f32 %v1165, %v1191
        %1193 = vdwg.mxu0
        %v1195 = vsel %vm401, %v994, 0
        %v1198 = vsel %vm401, %v995, 0
        %1200 = vmatpush.msra.mxu0 0.0
        %1201 = vmatpush.msra.mxu0 0.0
        %1202 = vmatpush.msra.mxu0 0.0
        %1203 = vmatpush.msra.mxu0 0.0
        %1204 = vmatpush.msra.mxu0 0.0
        %1205 = vmatpush.msra.mxu0 0.0
        %1206 = vmatpush.msra.mxu0 0.0
        %1207 = vmatpush.msra.mxu0 0.0
        %1208 = vmatpush.msra.mxu0 0.0
        %1209 = vmatpush.msra.mxu0 0.0
        %1210 = vmatpush.msra.mxu0 0.0
        %1211 = vmatpush.msra.mxu0 0.0
        %1212 = vmatpush.msra.mxu0 0.0
        %1213 = vmatpush.msra.mxu0 0.0
        %v1214 = vand.u32 %v391, 4294901760
        %1215 = vmatpush.msra.mxu0 %v1214
        %v1216 = vand.u32 %v390, 4294901760
        %1217 = vmatpush.msra.mxu0 %v1216
        %v1218 = vand.u32 %v1195, 4294901760
        %v1219 = vsub.f32 %v1195, %v1218
        %v1220 = vand.u32 %v1219, 4294901760
        %v1221 = vsub.f32 %v1219, %v1220
        %v1222 = vand.u32 %v1221, 4294901760
        %1223 = vmatmul.f32.gmra.mxu0 %v1222
        %v1224 = vpop.f32.mrf.mxu0
        %v1225 = vadd.f32 0.0, %v1224
        %v1226 = vand.u32 %v1198, 4294901760
        %v1227 = vsub.f32 %v1198, %v1226
        %v1228 = vand.u32 %v1227, 4294901760
        %v1229 = vsub.f32 %v1227, %v1228
        %v1230 = vand.u32 %v1229, 4294901760
        %1231 = vmatmul.f32.gmra.mxu0 %v1230
        %v1232 = vpop.f32.mrf.mxu0
        %v1233 = vadd.f32 0.0, %v1232
        %1234 = vdwg.mxu0
        %1235 = vmatpush.msra.mxu0 0.0
        %1236 = vmatpush.msra.mxu0 0.0
        %1237 = vmatpush.msra.mxu0 0.0
        %1238 = vmatpush.msra.mxu0 0.0
        %1239 = vmatpush.msra.mxu0 0.0
        %1240 = vmatpush.msra.mxu0 0.0
        %1241 = vmatpush.msra.mxu0 0.0
        %1242 = vmatpush.msra.mxu0 0.0
        %1243 = vmatpush.msra.mxu0 0.0
        %1244 = vmatpush.msra.mxu0 0.0
        %1245 = vmatpush.msra.mxu0 0.0
        %1246 = vmatpush.msra.mxu0 0.0
        %1247 = vmatpush.msra.mxu0 0.0
        %1248 = vmatpush.msra.mxu0 0.0
        %v1249 = vand.u32 %v391, 4294901760
        %v1250 = vsub.f32 %v391, %v1249
        %v1251 = vand.u32 %v1250, 4294901760
        %v1252 = vsub.f32 %v1250, %v1251
        %v1253 = vand.u32 %v1252, 4294901760
        %1254 = vmatpush.msra.mxu0 %v1253
        %v1255 = vand.u32 %v390, 4294901760
        %v1256 = vsub.f32 %v390, %v1255
        %v1257 = vand.u32 %v1256, 4294901760
        %v1258 = vsub.f32 %v1256, %v1257
        %v1259 = vand.u32 %v1258, 4294901760
        %1260 = vmatpush.msra.mxu0 %v1259
        %v1261 = vand.u32 %v1195, 4294901760
        %1262 = vmatmul.f32.gmra.mxu0 %v1261
        %v1263 = vpop.f32.mrf.mxu0
        %v1264 = vadd.f32 %v1225, %v1263
        %v1265 = vand.u32 %v1198, 4294901760
        %1266 = vmatmul.f32.gmra.mxu0 %v1265
        %v1267 = vpop.f32.mrf.mxu0
        %v1268 = vadd.f32 %v1233, %v1267
        %1269 = vdwg.mxu0
        %1270 = vmatpush.msra.mxu0 0.0
        %1271 = vmatpush.msra.mxu0 0.0
        %1272 = vmatpush.msra.mxu0 0.0
        %1273 = vmatpush.msra.mxu0 0.0
        %1274 = vmatpush.msra.mxu0 0.0
        %1275 = vmatpush.msra.mxu0 0.0
        %1276 = vmatpush.msra.mxu0 0.0
        %1277 = vmatpush.msra.mxu0 0.0
        %1278 = vmatpush.msra.mxu0 0.0
        %1279 = vmatpush.msra.mxu0 0.0
        %1280 = vmatpush.msra.mxu0 0.0
        %1281 = vmatpush.msra.mxu0 0.0
        %1282 = vmatpush.msra.mxu0 0.0
        %1283 = vmatpush.msra.mxu0 0.0
        %v1284 = vand.u32 %v391, 4294901760
        %v1285 = vsub.f32 %v391, %v1284
        %1286 = vmatpush.msra.mxu0 %v1285
        %v1287 = vand.u32 %v390, 4294901760
        %v1288 = vsub.f32 %v390, %v1287
        %1289 = vmatpush.msra.mxu0 %v1288
        %v1290 = vand.u32 %v1195, 4294901760
        %v1291 = vsub.f32 %v1195, %v1290
        %1292 = vmatmul.f32.gmra.mxu0 %v1291
        %v1293 = vpop.f32.mrf.mxu0
        %v1294 = vadd.f32 %v1264, %v1293
        %v1295 = vand.u32 %v1198, 4294901760
        %v1296 = vsub.f32 %v1198, %v1295
        %1297 = vmatmul.f32.gmra.mxu0 %v1296
        %v1298 = vpop.f32.mrf.mxu0
        %v1299 = vadd.f32 %v1268, %v1298
        %1300 = vdwg.mxu0
        %1301 = vmatpush.msra.mxu0 0.0
        %1302 = vmatpush.msra.mxu0 0.0
        %1303 = vmatpush.msra.mxu0 0.0
        %1304 = vmatpush.msra.mxu0 0.0
        %1305 = vmatpush.msra.mxu0 0.0
        %1306 = vmatpush.msra.mxu0 0.0
        %1307 = vmatpush.msra.mxu0 0.0
        %1308 = vmatpush.msra.mxu0 0.0
        %1309 = vmatpush.msra.mxu0 0.0
        %1310 = vmatpush.msra.mxu0 0.0
        %1311 = vmatpush.msra.mxu0 0.0
        %1312 = vmatpush.msra.mxu0 0.0
        %1313 = vmatpush.msra.mxu0 0.0
        %1314 = vmatpush.msra.mxu0 0.0
        %v1315 = vand.u32 %v391, 4294901760
        %1316 = vmatpush.msra.mxu0 %v1315
        %v1317 = vand.u32 %v390, 4294901760
        %1318 = vmatpush.msra.mxu0 %v1317
        %v1319 = vand.u32 %v1195, 4294901760
        %v1320 = vsub.f32 %v1195, %v1319
        %v1321 = vand.u32 %v1320, 4294901760
        %1322 = vmatmul.f32.gmra.mxu0 %v1321
        %v1323 = vpop.f32.mrf.mxu0
        %v1324 = vadd.f32 %v1294, %v1323
        %v1325 = vand.u32 %v1198, 4294901760
        %v1326 = vsub.f32 %v1198, %v1325
        %v1327 = vand.u32 %v1326, 4294901760
        %1328 = vmatmul.f32.gmra.mxu0 %v1327
        %v1329 = vpop.f32.mrf.mxu0
        %v1330 = vadd.f32 %v1299, %v1329
        %1331 = vdwg.mxu0
        %1332 = vmatpush.msra.mxu0 0.0
        %1333 = vmatpush.msra.mxu0 0.0
        %1334 = vmatpush.msra.mxu0 0.0
        %1335 = vmatpush.msra.mxu0 0.0
        %1336 = vmatpush.msra.mxu0 0.0
        %1337 = vmatpush.msra.mxu0 0.0
        %1338 = vmatpush.msra.mxu0 0.0
        %1339 = vmatpush.msra.mxu0 0.0
        %1340 = vmatpush.msra.mxu0 0.0
        %1341 = vmatpush.msra.mxu0 0.0
        %1342 = vmatpush.msra.mxu0 0.0
        %1343 = vmatpush.msra.mxu0 0.0
        %1344 = vmatpush.msra.mxu0 0.0
        %1345 = vmatpush.msra.mxu0 0.0
        %v1346 = vand.u32 %v391, 4294901760
        %v1347 = vsub.f32 %v391, %v1346
        %v1348 = vand.u32 %v1347, 4294901760
        %1349 = vmatpush.msra.mxu0 %v1348
        %v1350 = vand.u32 %v390, 4294901760
        %v1351 = vsub.f32 %v390, %v1350
        %v1352 = vand.u32 %v1351, 4294901760
        %1353 = vmatpush.msra.mxu0 %v1352
        %v1354 = vand.u32 %v1195, 4294901760
        %1355 = vmatmul.f32.gmra.mxu0 %v1354
        %v1356 = vpop.f32.mrf.mxu0
        %v1357 = vadd.f32 %v1324, %v1356
        %v1358 = vand.u32 %v1198, 4294901760
        %1359 = vmatmul.f32.gmra.mxu0 %v1358
        %v1360 = vpop.f32.mrf.mxu0
        %v1361 = vadd.f32 %v1330, %v1360
        %1362 = vdwg.mxu0
        %1363 = vmatpush.msra.mxu0 0.0
        %1364 = vmatpush.msra.mxu0 0.0
        %1365 = vmatpush.msra.mxu0 0.0
        %1366 = vmatpush.msra.mxu0 0.0
        %1367 = vmatpush.msra.mxu0 0.0
        %1368 = vmatpush.msra.mxu0 0.0
        %1369 = vmatpush.msra.mxu0 0.0
        %1370 = vmatpush.msra.mxu0 0.0
        %1371 = vmatpush.msra.mxu0 0.0
        %1372 = vmatpush.msra.mxu0 0.0
        %1373 = vmatpush.msra.mxu0 0.0
        %1374 = vmatpush.msra.mxu0 0.0
        %1375 = vmatpush.msra.mxu0 0.0
        %1376 = vmatpush.msra.mxu0 0.0
        %v1377 = vand.u32 %v391, 4294901760
        %1378 = vmatpush.msra.mxu0 %v1377
        %v1379 = vand.u32 %v390, 4294901760
        %1380 = vmatpush.msra.mxu0 %v1379
        %v1381 = vand.u32 %v1195, 4294901760
        %1382 = vmatmul.f32.gmra.mxu0 %v1381
        %v1383 = vpop.f32.mrf.mxu0
        %v1384 = vadd.f32 %v1357, %v1383
        %v1385 = vand.u32 %v1198, 4294901760
        %1386 = vmatmul.f32.gmra.mxu0 %v1385
        %v1387 = vpop.f32.mrf.mxu0
        %v1388 = vadd.f32 %v1361, %v1387
        %1389 = vdwg.mxu0
        %v1391 = vsel %vm401, %v996, 0
        %v1394 = vsel %vm401, %v997, 0
        %1396 = vmatpush.msra.mxu0 0.0
        %1397 = vmatpush.msra.mxu0 0.0
        %1398 = vmatpush.msra.mxu0 0.0
        %1399 = vmatpush.msra.mxu0 0.0
        %1400 = vmatpush.msra.mxu0 0.0
        %1401 = vmatpush.msra.mxu0 0.0
        %1402 = vmatpush.msra.mxu0 0.0
        %1403 = vmatpush.msra.mxu0 0.0
        %1404 = vmatpush.msra.mxu0 0.0
        %1405 = vmatpush.msra.mxu0 0.0
        %1406 = vmatpush.msra.mxu0 0.0
        %1407 = vmatpush.msra.mxu0 0.0
        %1408 = vmatpush.msra.mxu0 0.0
        %1409 = vmatpush.msra.mxu0 0.0
        %v1410 = vand.u32 %v393, 4294901760
        %1411 = vmatpush.msra.mxu0 %v1410
        %v1412 = vand.u32 %v392, 4294901760
        %1413 = vmatpush.msra.mxu0 %v1412
        %v1414 = vand.u32 %v1391, 4294901760
        %v1415 = vsub.f32 %v1391, %v1414
        %v1416 = vand.u32 %v1415, 4294901760
        %v1417 = vsub.f32 %v1415, %v1416
        %v1418 = vand.u32 %v1417, 4294901760
        %1419 = vmatmul.f32.gmra.mxu0 %v1418
        %v1420 = vpop.f32.mrf.mxu0
        %v1421 = vadd.f32 0.0, %v1420
        %v1422 = vand.u32 %v1394, 4294901760
        %v1423 = vsub.f32 %v1394, %v1422
        %v1424 = vand.u32 %v1423, 4294901760
        %v1425 = vsub.f32 %v1423, %v1424
        %v1426 = vand.u32 %v1425, 4294901760
        %1427 = vmatmul.f32.gmra.mxu0 %v1426
        %v1428 = vpop.f32.mrf.mxu0
        %v1429 = vadd.f32 0.0, %v1428
        %1430 = vdwg.mxu0
        %1431 = vmatpush.msra.mxu0 0.0
        %1432 = vmatpush.msra.mxu0 0.0
        %1433 = vmatpush.msra.mxu0 0.0
        %1434 = vmatpush.msra.mxu0 0.0
        %1435 = vmatpush.msra.mxu0 0.0
        %1436 = vmatpush.msra.mxu0 0.0
        %1437 = vmatpush.msra.mxu0 0.0
        %1438 = vmatpush.msra.mxu0 0.0
        %1439 = vmatpush.msra.mxu0 0.0
        %1440 = vmatpush.msra.mxu0 0.0
        %1441 = vmatpush.msra.mxu0 0.0
        %1442 = vmatpush.msra.mxu0 0.0
        %1443 = vmatpush.msra.mxu0 0.0
        %1444 = vmatpush.msra.mxu0 0.0
        %v1445 = vand.u32 %v393, 4294901760
        %v1446 = vsub.f32 %v393, %v1445
        %v1447 = vand.u32 %v1446, 4294901760
        %v1448 = vsub.f32 %v1446, %v1447
        %v1449 = vand.u32 %v1448, 4294901760
        %1450 = vmatpush.msra.mxu0 %v1449
        %v1451 = vand.u32 %v392, 4294901760
        %v1452 = vsub.f32 %v392, %v1451
        %v1453 = vand.u32 %v1452, 4294901760
        %v1454 = vsub.f32 %v1452, %v1453
        %v1455 = vand.u32 %v1454, 4294901760
        %1456 = vmatpush.msra.mxu0 %v1455
        %v1457 = vand.u32 %v1391, 4294901760
        %1458 = vmatmul.f32.gmra.mxu0 %v1457
        %v1459 = vpop.f32.mrf.mxu0
        %v1460 = vadd.f32 %v1421, %v1459
        %v1461 = vand.u32 %v1394, 4294901760
        %1462 = vmatmul.f32.gmra.mxu0 %v1461
        %v1463 = vpop.f32.mrf.mxu0
        %v1464 = vadd.f32 %v1429, %v1463
        %1465 = vdwg.mxu0
        %1466 = vmatpush.msra.mxu0 0.0
        %1467 = vmatpush.msra.mxu0 0.0
        %1468 = vmatpush.msra.mxu0 0.0
        %1469 = vmatpush.msra.mxu0 0.0
        %1470 = vmatpush.msra.mxu0 0.0
        %1471 = vmatpush.msra.mxu0 0.0
        %1472 = vmatpush.msra.mxu0 0.0
        %1473 = vmatpush.msra.mxu0 0.0
        %1474 = vmatpush.msra.mxu0 0.0
        %1475 = vmatpush.msra.mxu0 0.0
        %1476 = vmatpush.msra.mxu0 0.0
        %1477 = vmatpush.msra.mxu0 0.0
        %1478 = vmatpush.msra.mxu0 0.0
        %1479 = vmatpush.msra.mxu0 0.0
        %v1480 = vand.u32 %v393, 4294901760
        %v1481 = vsub.f32 %v393, %v1480
        %1482 = vmatpush.msra.mxu0 %v1481
        %v1483 = vand.u32 %v392, 4294901760
        %v1484 = vsub.f32 %v392, %v1483
        %1485 = vmatpush.msra.mxu0 %v1484
        %v1486 = vand.u32 %v1391, 4294901760
        %v1487 = vsub.f32 %v1391, %v1486
        %1488 = vmatmul.f32.gmra.mxu0 %v1487
        %v1489 = vpop.f32.mrf.mxu0
        %v1490 = vadd.f32 %v1460, %v1489
        %v1491 = vand.u32 %v1394, 4294901760
        %v1492 = vsub.f32 %v1394, %v1491
        %1493 = vmatmul.f32.gmra.mxu0 %v1492
        %v1494 = vpop.f32.mrf.mxu0
        %v1495 = vadd.f32 %v1464, %v1494
        %1496 = vdwg.mxu0
        %1497 = vmatpush.msra.mxu0 0.0
        %1498 = vmatpush.msra.mxu0 0.0
        %1499 = vmatpush.msra.mxu0 0.0
        %1500 = vmatpush.msra.mxu0 0.0
        %1501 = vmatpush.msra.mxu0 0.0
        %1502 = vmatpush.msra.mxu0 0.0
        %1503 = vmatpush.msra.mxu0 0.0
        %1504 = vmatpush.msra.mxu0 0.0
        %1505 = vmatpush.msra.mxu0 0.0
        %1506 = vmatpush.msra.mxu0 0.0
        %1507 = vmatpush.msra.mxu0 0.0
        %1508 = vmatpush.msra.mxu0 0.0
        %1509 = vmatpush.msra.mxu0 0.0
        %1510 = vmatpush.msra.mxu0 0.0
        %v1511 = vand.u32 %v393, 4294901760
        %1512 = vmatpush.msra.mxu0 %v1511
        %v1513 = vand.u32 %v392, 4294901760
        %1514 = vmatpush.msra.mxu0 %v1513
        %v1515 = vand.u32 %v1391, 4294901760
        %v1516 = vsub.f32 %v1391, %v1515
        %v1517 = vand.u32 %v1516, 4294901760
        %1518 = vmatmul.f32.gmra.mxu0 %v1517
        %v1519 = vpop.f32.mrf.mxu0
        %v1520 = vadd.f32 %v1490, %v1519
        %v1521 = vand.u32 %v1394, 4294901760
        %v1522 = vsub.f32 %v1394, %v1521
        %v1523 = vand.u32 %v1522, 4294901760
        %1524 = vmatmul.f32.gmra.mxu0 %v1523
        %v1525 = vpop.f32.mrf.mxu0
        %v1526 = vadd.f32 %v1495, %v1525
        %1527 = vdwg.mxu0
        %1528 = vmatpush.msra.mxu0 0.0
        %1529 = vmatpush.msra.mxu0 0.0
        %1530 = vmatpush.msra.mxu0 0.0
        %1531 = vmatpush.msra.mxu0 0.0
        %1532 = vmatpush.msra.mxu0 0.0
        %1533 = vmatpush.msra.mxu0 0.0
        %1534 = vmatpush.msra.mxu0 0.0
        %1535 = vmatpush.msra.mxu0 0.0
        %1536 = vmatpush.msra.mxu0 0.0
        %1537 = vmatpush.msra.mxu0 0.0
        %1538 = vmatpush.msra.mxu0 0.0
        %1539 = vmatpush.msra.mxu0 0.0
        %1540 = vmatpush.msra.mxu0 0.0
        %1541 = vmatpush.msra.mxu0 0.0
        %v1542 = vand.u32 %v393, 4294901760
        %v1543 = vsub.f32 %v393, %v1542
        %v1544 = vand.u32 %v1543, 4294901760
        %1545 = vmatpush.msra.mxu0 %v1544
        %v1546 = vand.u32 %v392, 4294901760
        %v1547 = vsub.f32 %v392, %v1546
        %v1548 = vand.u32 %v1547, 4294901760
        %1549 = vmatpush.msra.mxu0 %v1548
        %v1550 = vand.u32 %v1391, 4294901760
        %1551 = vmatmul.f32.gmra.mxu0 %v1550
        %v1552 = vpop.f32.mrf.mxu0
        %v1553 = vadd.f32 %v1520, %v1552
        %v1554 = vand.u32 %v1394, 4294901760
        %1555 = vmatmul.f32.gmra.mxu0 %v1554
        %v1556 = vpop.f32.mrf.mxu0
        %v1557 = vadd.f32 %v1526, %v1556
        %1558 = vdwg.mxu0
        %1559 = vmatpush.msra.mxu0 0.0
        %1560 = vmatpush.msra.mxu0 0.0
        %1561 = vmatpush.msra.mxu0 0.0
        %1562 = vmatpush.msra.mxu0 0.0
        %1563 = vmatpush.msra.mxu0 0.0
        %1564 = vmatpush.msra.mxu0 0.0
        %1565 = vmatpush.msra.mxu0 0.0
        %1566 = vmatpush.msra.mxu0 0.0
        %1567 = vmatpush.msra.mxu0 0.0
        %1568 = vmatpush.msra.mxu0 0.0
        %1569 = vmatpush.msra.mxu0 0.0
        %1570 = vmatpush.msra.mxu0 0.0
        %1571 = vmatpush.msra.mxu0 0.0
        %1572 = vmatpush.msra.mxu0 0.0
        %v1573 = vand.u32 %v393, 4294901760
        %1574 = vmatpush.msra.mxu0 %v1573
        %v1575 = vand.u32 %v392, 4294901760
        %1576 = vmatpush.msra.mxu0 %v1575
        %v1577 = vand.u32 %v1391, 4294901760
        %1578 = vmatmul.f32.gmra.mxu0 %v1577
        %v1579 = vpop.f32.mrf.mxu0
        %v1580 = vadd.f32 %v1553, %v1579
        %v1581 = vand.u32 %v1394, 4294901760
        %1582 = vmatmul.f32.gmra.mxu0 %v1581
        %v1583 = vpop.f32.mrf.mxu0
        %v1584 = vadd.f32 %v1557, %v1583
        %1585 = vdwg.mxu0
        %v1586 = vsub.f32 %v1188, %v1384
        %v1587 = vsub.f32 %v1192, %v1388
        %v1588 = vsub.f32 %v1580, %v1188
        %v1589 = vsub.f32 %v1584, %v1192
        %v1590 = vsub.f32 %v1588, %v1384
        %v1591 = vsub.f32 %v1589, %v1388
        %v1592 = vmul.f32 %v1586, %v1586
        %v1593 = vmul.f32 %v1587, %v1587
        %v1594 = vmul.f32 %v1590, %v1590
        %v1595 = vmul.f32 %v1591, %v1591
        %v1596 = vadd.f32 %v1592, %v1594
        %v1597 = vadd.f32 %v1593, %v1595
        %s1598 = scalar_lea.vmem %s330, 16 [#allocation2]
        %v1599 = vld [vmem:[%s1598] sm:$0xff]
        %v1600 = vld [vmem:[%s1598 + $0x8] sm:$0xff]
        %s1601 = scalar_lea.vmem %s330, 80 [#allocation2]
        %v1602 = vld [vmem:[%s1601] sm:$0xff]
        %v1603 = vld [vmem:[%s1601 + $0x8] sm:$0xff]
        %v1604 = vadd.f32 %v1599, %v1602
        %v1605 = vadd.f32 %v1600, %v1603
        %1606 = vmatpush.msra.mxu0 0.0
        %1607 = vmatpush.msra.mxu0 0.0
        %1608 = vmatpush.msra.mxu0 0.0
        %1609 = vmatpush.msra.mxu0 0.0
        %1610 = vmatpush.msra.mxu0 0.0
        %1611 = vmatpush.msra.mxu0 0.0
        %1612 = vmatpush.msra.mxu0 0.0
        %1613 = vmatpush.msra.mxu0 0.0
        %1614 = vmatpush.msra.mxu0 0.0
        %1615 = vmatpush.msra.mxu0 0.0
        %1616 = vmatpush.msra.mxu0 0.0
        %1617 = vmatpush.msra.mxu0 0.0
        %1618 = vmatpush.msra.mxu0 0.0
        %1619 = vmatpush.msra.mxu0 0.0
        %v1620 = vand.u32 %v1600, 4294901760
        %1621 = vmatpush.msra.mxu0 %v1620
        %v1622 = vand.u32 %v1599, 4294901760
        %1623 = vmatpush.msra.mxu0 %v1622
        %v1624 = vand.u32 %v403, 4294901760
        %v1625 = vsub.f32 %v403, %v1624
        %v1626 = vand.u32 %v1625, 4294901760
        %v1627 = vsub.f32 %v1625, %v1626
        %v1628 = vand.u32 %v1627, 4294901760
        %1629 = vmatmul.f32.gmra.mxu0 %v1628
        %v1630 = vpop.f32.mrf.mxu0
        %v1631 = vadd.f32 0.0, %v1630
        %v1632 = vand.u32 %v406, 4294901760
        %v1633 = vsub.f32 %v406, %v1632
        %v1634 = vand.u32 %v1633, 4294901760
        %v1635 = vsub.f32 %v1633, %v1634
        %v1636 = vand.u32 %v1635, 4294901760
        %1637 = vmatmul.f32.gmra.mxu0 %v1636
        %v1638 = vpop.f32.mrf.mxu0
        %v1639 = vadd.f32 0.0, %v1638
        %1640 = vdwg.mxu0
        %1641 = vmatpush.msra.mxu0 0.0
        %1642 = vmatpush.msra.mxu0 0.0
        %1643 = vmatpush.msra.mxu0 0.0
        %1644 = vmatpush.msra.mxu0 0.0
        %1645 = vmatpush.msra.mxu0 0.0
        %1646 = vmatpush.msra.mxu0 0.0
        %1647 = vmatpush.msra.mxu0 0.0
        %1648 = vmatpush.msra.mxu0 0.0
        %1649 = vmatpush.msra.mxu0 0.0
        %1650 = vmatpush.msra.mxu0 0.0
        %1651 = vmatpush.msra.mxu0 0.0
        %1652 = vmatpush.msra.mxu0 0.0
        %1653 = vmatpush.msra.mxu0 0.0
        %1654 = vmatpush.msra.mxu0 0.0
        %v1655 = vand.u32 %v1600, 4294901760
        %v1656 = vsub.f32 %v1600, %v1655
        %v1657 = vand.u32 %v1656, 4294901760
        %v1658 = vsub.f32 %v1656, %v1657
        %v1659 = vand.u32 %v1658, 4294901760
        %1660 = vmatpush.msra.mxu0 %v1659
        %v1661 = vand.u32 %v1599, 4294901760
        %v1662 = vsub.f32 %v1599, %v1661
        %v1663 = vand.u32 %v1662, 4294901760
        %v1664 = vsub.f32 %v1662, %v1663
        %v1665 = vand.u32 %v1664, 4294901760
        %1666 = vmatpush.msra.mxu0 %v1665
        %v1667 = vand.u32 %v403, 4294901760
        %1668 = vmatmul.f32.gmra.mxu0 %v1667
        %v1669 = vpop.f32.mrf.mxu0
        %v1670 = vadd.f32 %v1631, %v1669
        %v1671 = vand.u32 %v406, 4294901760
        %1672 = vmatmul.f32.gmra.mxu0 %v1671
        %v1673 = vpop.f32.mrf.mxu0
        %v1674 = vadd.f32 %v1639, %v1673
        %1675 = vdwg.mxu0
        %1676 = vmatpush.msra.mxu0 0.0
        %1677 = vmatpush.msra.mxu0 0.0
        %1678 = vmatpush.msra.mxu0 0.0
        %1679 = vmatpush.msra.mxu0 0.0
        %1680 = vmatpush.msra.mxu0 0.0
        %1681 = vmatpush.msra.mxu0 0.0
        %1682 = vmatpush.msra.mxu0 0.0
        %1683 = vmatpush.msra.mxu0 0.0
        %1684 = vmatpush.msra.mxu0 0.0
        %1685 = vmatpush.msra.mxu0 0.0
        %1686 = vmatpush.msra.mxu0 0.0
        %1687 = vmatpush.msra.mxu0 0.0
        %1688 = vmatpush.msra.mxu0 0.0
        %1689 = vmatpush.msra.mxu0 0.0
        %v1690 = vand.u32 %v1600, 4294901760
        %v1691 = vsub.f32 %v1600, %v1690
        %1692 = vmatpush.msra.mxu0 %v1691
        %v1693 = vand.u32 %v1599, 4294901760
        %v1694 = vsub.f32 %v1599, %v1693
        %1695 = vmatpush.msra.mxu0 %v1694
        %v1696 = vand.u32 %v403, 4294901760
        %v1697 = vsub.f32 %v403, %v1696
        %1698 = vmatmul.f32.gmra.mxu0 %v1697
        %v1699 = vpop.f32.mrf.mxu0
        %v1700 = vadd.f32 %v1670, %v1699
        %v1701 = vand.u32 %v406, 4294901760
        %v1702 = vsub.f32 %v406, %v1701
        %1703 = vmatmul.f32.gmra.mxu0 %v1702
        %v1704 = vpop.f32.mrf.mxu0
        %v1705 = vadd.f32 %v1674, %v1704
        %1706 = vdwg.mxu0
        %1707 = vmatpush.msra.mxu0 0.0
        %1708 = vmatpush.msra.mxu0 0.0
        %1709 = vmatpush.msra.mxu0 0.0
        %1710 = vmatpush.msra.mxu0 0.0
        %1711 = vmatpush.msra.mxu0 0.0
        %1712 = vmatpush.msra.mxu0 0.0
        %1713 = vmatpush.msra.mxu0 0.0
        %1714 = vmatpush.msra.mxu0 0.0
        %1715 = vmatpush.msra.mxu0 0.0
        %1716 = vmatpush.msra.mxu0 0.0
        %1717 = vmatpush.msra.mxu0 0.0
        %1718 = vmatpush.msra.mxu0 0.0
        %1719 = vmatpush.msra.mxu0 0.0
        %1720 = vmatpush.msra.mxu0 0.0
        %v1721 = vand.u32 %v1600, 4294901760
        %1722 = vmatpush.msra.mxu0 %v1721
        %v1723 = vand.u32 %v1599, 4294901760
        %1724 = vmatpush.msra.mxu0 %v1723
        %v1725 = vand.u32 %v403, 4294901760
        %v1726 = vsub.f32 %v403, %v1725
        %v1727 = vand.u32 %v1726, 4294901760
        %1728 = vmatmul.f32.gmra.mxu0 %v1727
        %v1729 = vpop.f32.mrf.mxu0
        %v1730 = vadd.f32 %v1700, %v1729
        %v1731 = vand.u32 %v406, 4294901760
        %v1732 = vsub.f32 %v406, %v1731
        %v1733 = vand.u32 %v1732, 4294901760
        %1734 = vmatmul.f32.gmra.mxu0 %v1733
        %v1735 = vpop.f32.mrf.mxu0
        %v1736 = vadd.f32 %v1705, %v1735
        %1737 = vdwg.mxu0
        %1738 = vmatpush.msra.mxu0 0.0
        %1739 = vmatpush.msra.mxu0 0.0
        %1740 = vmatpush.msra.mxu0 0.0
        %1741 = vmatpush.msra.mxu0 0.0
        %1742 = vmatpush.msra.mxu0 0.0
        %1743 = vmatpush.msra.mxu0 0.0
        %1744 = vmatpush.msra.mxu0 0.0
        %1745 = vmatpush.msra.mxu0 0.0
        %1746 = vmatpush.msra.mxu0 0.0
        %1747 = vmatpush.msra.mxu0 0.0
        %1748 = vmatpush.msra.mxu0 0.0
        %1749 = vmatpush.msra.mxu0 0.0
        %1750 = vmatpush.msra.mxu0 0.0
        %1751 = vmatpush.msra.mxu0 0.0
        %v1752 = vand.u32 %v1600, 4294901760
        %v1753 = vsub.f32 %v1600, %v1752
        %v1754 = vand.u32 %v1753, 4294901760
        %1755 = vmatpush.msra.mxu0 %v1754
        %v1756 = vand.u32 %v1599, 4294901760
        %v1757 = vsub.f32 %v1599, %v1756
        %v1758 = vand.u32 %v1757, 4294901760
        %1759 = vmatpush.msra.mxu0 %v1758
        %v1760 = vand.u32 %v403, 4294901760
        %1761 = vmatmul.f32.gmra.mxu0 %v1760
        %v1762 = vpop.f32.mrf.mxu0
        %v1763 = vadd.f32 %v1730, %v1762
        %v1764 = vand.u32 %v406, 4294901760
        %1765 = vmatmul.f32.gmra.mxu0 %v1764
        %v1766 = vpop.f32.mrf.mxu0
        %v1767 = vadd.f32 %v1736, %v1766
        %1768 = vdwg.mxu0
        %1769 = vmatpush.msra.mxu0 0.0
        %1770 = vmatpush.msra.mxu0 0.0
        %1771 = vmatpush.msra.mxu0 0.0
        %1772 = vmatpush.msra.mxu0 0.0
        %1773 = vmatpush.msra.mxu0 0.0
        %1774 = vmatpush.msra.mxu0 0.0
        %1775 = vmatpush.msra.mxu0 0.0
        %1776 = vmatpush.msra.mxu0 0.0
        %1777 = vmatpush.msra.mxu0 0.0
        %1778 = vmatpush.msra.mxu0 0.0
        %1779 = vmatpush.msra.mxu0 0.0
        %1780 = vmatpush.msra.mxu0 0.0
        %1781 = vmatpush.msra.mxu0 0.0
        %1782 = vmatpush.msra.mxu0 0.0
        %v1783 = vand.u32 %v1600, 4294901760
        %1784 = vmatpush.msra.mxu0 %v1783
        %v1785 = vand.u32 %v1599, 4294901760
        %1786 = vmatpush.msra.mxu0 %v1785
        %v1787 = vand.u32 %v403, 4294901760
        %1788 = vmatmul.f32.gmra.mxu0 %v1787
        %v1789 = vpop.f32.mrf.mxu0
        %v1790 = vadd.f32 %v1763, %v1789
        %v1791 = vand.u32 %v406, 4294901760
        %1792 = vmatmul.f32.gmra.mxu0 %v1791
        %v1793 = vpop.f32.mrf.mxu0
        %v1794 = vadd.f32 %v1767, %v1793
        %1795 = vdwg.mxu0
        %1796 = vmatpush.msra.mxu0 0.0
        %1797 = vmatpush.msra.mxu0 0.0
        %1798 = vmatpush.msra.mxu0 0.0
        %1799 = vmatpush.msra.mxu0 0.0
        %1800 = vmatpush.msra.mxu0 0.0
        %1801 = vmatpush.msra.mxu0 0.0
        %1802 = vmatpush.msra.mxu0 0.0
        %1803 = vmatpush.msra.mxu0 0.0
        %1804 = vmatpush.msra.mxu0 0.0
        %1805 = vmatpush.msra.mxu0 0.0
        %1806 = vmatpush.msra.mxu0 0.0
        %1807 = vmatpush.msra.mxu0 0.0
        %1808 = vmatpush.msra.mxu0 0.0
        %1809 = vmatpush.msra.mxu0 0.0
        %v1810 = vand.u32 %v1603, 4294901760
        %1811 = vmatpush.msra.mxu0 %v1810
        %v1812 = vand.u32 %v1602, 4294901760
        %1813 = vmatpush.msra.mxu0 %v1812
        %v1814 = vand.u32 %v599, 4294901760
        %v1815 = vsub.f32 %v599, %v1814
        %v1816 = vand.u32 %v1815, 4294901760
        %v1817 = vsub.f32 %v1815, %v1816
        %v1818 = vand.u32 %v1817, 4294901760
        %1819 = vmatmul.f32.gmra.mxu0 %v1818
        %v1820 = vpop.f32.mrf.mxu0
        %v1821 = vadd.f32 0.0, %v1820
        %v1822 = vand.u32 %v602, 4294901760
        %v1823 = vsub.f32 %v602, %v1822
        %v1824 = vand.u32 %v1823, 4294901760
        %v1825 = vsub.f32 %v1823, %v1824
        %v1826 = vand.u32 %v1825, 4294901760
        %1827 = vmatmul.f32.gmra.mxu0 %v1826
        %v1828 = vpop.f32.mrf.mxu0
        %v1829 = vadd.f32 0.0, %v1828
        %1830 = vdwg.mxu0
        %1831 = vmatpush.msra.mxu0 0.0
        %1832 = vmatpush.msra.mxu0 0.0
        %1833 = vmatpush.msra.mxu0 0.0
        %1834 = vmatpush.msra.mxu0 0.0
        %1835 = vmatpush.msra.mxu0 0.0
        %1836 = vmatpush.msra.mxu0 0.0
        %1837 = vmatpush.msra.mxu0 0.0
        %1838 = vmatpush.msra.mxu0 0.0
        %1839 = vmatpush.msra.mxu0 0.0
        %1840 = vmatpush.msra.mxu0 0.0
        %1841 = vmatpush.msra.mxu0 0.0
        %1842 = vmatpush.msra.mxu0 0.0
        %1843 = vmatpush.msra.mxu0 0.0
        %1844 = vmatpush.msra.mxu0 0.0
        %v1845 = vand.u32 %v1603, 4294901760
        %v1846 = vsub.f32 %v1603, %v1845
        %v1847 = vand.u32 %v1846, 4294901760
        %v1848 = vsub.f32 %v1846, %v1847
        %v1849 = vand.u32 %v1848, 4294901760
        %1850 = vmatpush.msra.mxu0 %v1849
        %v1851 = vand.u32 %v1602, 4294901760
        %v1852 = vsub.f32 %v1602, %v1851
        %v1853 = vand.u32 %v1852, 4294901760
        %v1854 = vsub.f32 %v1852, %v1853
        %v1855 = vand.u32 %v1854, 4294901760
        %1856 = vmatpush.msra.mxu0 %v1855
        %v1857 = vand.u32 %v599, 4294901760
        %1858 = vmatmul.f32.gmra.mxu0 %v1857
        %v1859 = vpop.f32.mrf.mxu0
        %v1860 = vadd.f32 %v1821, %v1859
        %v1861 = vand.u32 %v602, 4294901760
        %1862 = vmatmul.f32.gmra.mxu0 %v1861
        %v1863 = vpop.f32.mrf.mxu0
        %v1864 = vadd.f32 %v1829, %v1863
        %1865 = vdwg.mxu0
        %1866 = vmatpush.msra.mxu0 0.0
        %1867 = vmatpush.msra.mxu0 0.0
        %1868 = vmatpush.msra.mxu0 0.0
        %1869 = vmatpush.msra.mxu0 0.0
        %1870 = vmatpush.msra.mxu0 0.0
        %1871 = vmatpush.msra.mxu0 0.0
        %1872 = vmatpush.msra.mxu0 0.0
        %1873 = vmatpush.msra.mxu0 0.0
        %1874 = vmatpush.msra.mxu0 0.0
        %1875 = vmatpush.msra.mxu0 0.0
        %1876 = vmatpush.msra.mxu0 0.0
        %1877 = vmatpush.msra.mxu0 0.0
        %1878 = vmatpush.msra.mxu0 0.0
        %1879 = vmatpush.msra.mxu0 0.0
        %v1880 = vand.u32 %v1603, 4294901760
        %v1881 = vsub.f32 %v1603, %v1880
        %1882 = vmatpush.msra.mxu0 %v1881
        %v1883 = vand.u32 %v1602, 4294901760
        %v1884 = vsub.f32 %v1602, %v1883
        %1885 = vmatpush.msra.mxu0 %v1884
        %v1886 = vand.u32 %v599, 4294901760
        %v1887 = vsub.f32 %v599, %v1886
        %1888 = vmatmul.f32.gmra.mxu0 %v1887
        %v1889 = vpop.f32.mrf.mxu0
        %v1890 = vadd.f32 %v1860, %v1889
        %v1891 = vand.u32 %v602, 4294901760
        %v1892 = vsub.f32 %v602, %v1891
        %1893 = vmatmul.f32.gmra.mxu0 %v1892
        %v1894 = vpop.f32.mrf.mxu0
        %v1895 = vadd.f32 %v1864, %v1894
        %1896 = vdwg.mxu0
        %1897 = vmatpush.msra.mxu0 0.0
        %1898 = vmatpush.msra.mxu0 0.0
        %1899 = vmatpush.msra.mxu0 0.0
        %1900 = vmatpush.msra.mxu0 0.0
        %1901 = vmatpush.msra.mxu0 0.0
        %1902 = vmatpush.msra.mxu0 0.0
        %1903 = vmatpush.msra.mxu0 0.0
        %1904 = vmatpush.msra.mxu0 0.0
        %1905 = vmatpush.msra.mxu0 0.0
        %1906 = vmatpush.msra.mxu0 0.0
        %1907 = vmatpush.msra.mxu0 0.0
        %1908 = vmatpush.msra.mxu0 0.0
        %1909 = vmatpush.msra.mxu0 0.0
        %1910 = vmatpush.msra.mxu0 0.0
        %v1911 = vand.u32 %v1603, 4294901760
        %1912 = vmatpush.msra.mxu0 %v1911
        %v1913 = vand.u32 %v1602, 4294901760
        %1914 = vmatpush.msra.mxu0 %v1913
        %v1915 = vand.u32 %v599, 4294901760
        %v1916 = vsub.f32 %v599, %v1915
        %v1917 = vand.u32 %v1916, 4294901760
        %1918 = vmatmul.f32.gmra.mxu0 %v1917
        %v1919 = vpop.f32.mrf.mxu0
        %v1920 = vadd.f32 %v1890, %v1919
        %v1921 = vand.u32 %v602, 4294901760
        %v1922 = vsub.f32 %v602, %v1921
        %v1923 = vand.u32 %v1922, 4294901760
        %1924 = vmatmul.f32.gmra.mxu0 %v1923
        %v1925 = vpop.f32.mrf.mxu0
        %v1926 = vadd.f32 %v1895, %v1925
        %1927 = vdwg.mxu0
        %1928 = vmatpush.msra.mxu0 0.0
        %1929 = vmatpush.msra.mxu0 0.0
        %1930 = vmatpush.msra.mxu0 0.0
        %1931 = vmatpush.msra.mxu0 0.0
        %1932 = vmatpush.msra.mxu0 0.0
        %1933 = vmatpush.msra.mxu0 0.0
        %1934 = vmatpush.msra.mxu0 0.0
        %1935 = vmatpush.msra.mxu0 0.0
        %1936 = vmatpush.msra.mxu0 0.0
        %1937 = vmatpush.msra.mxu0 0.0
        %1938 = vmatpush.msra.mxu0 0.0
        %1939 = vmatpush.msra.mxu0 0.0
        %1940 = vmatpush.msra.mxu0 0.0
        %1941 = vmatpush.msra.mxu0 0.0
        %v1942 = vand.u32 %v1603, 4294901760
        %v1943 = vsub.f32 %v1603, %v1942
        %v1944 = vand.u32 %v1943, 4294901760
        %1945 = vmatpush.msra.mxu0 %v1944
        %v1946 = vand.u32 %v1602, 4294901760
        %v1947 = vsub.f32 %v1602, %v1946
        %v1948 = vand.u32 %v1947, 4294901760
        %1949 = vmatpush.msra.mxu0 %v1948
        %v1950 = vand.u32 %v599, 4294901760
        %1951 = vmatmul.f32.gmra.mxu0 %v1950
        %v1952 = vpop.f32.mrf.mxu0
        %v1953 = vadd.f32 %v1920, %v1952
        %v1954 = vand.u32 %v602, 4294901760
        %1955 = vmatmul.f32.gmra.mxu0 %v1954
        %v1956 = vpop.f32.mrf.mxu0
        %v1957 = vadd.f32 %v1926, %v1956
        %1958 = vdwg.mxu0
        %1959 = vmatpush.msra.mxu0 0.0
        %1960 = vmatpush.msra.mxu0 0.0
        %1961 = vmatpush.msra.mxu0 0.0
        %1962 = vmatpush.msra.mxu0 0.0
        %1963 = vmatpush.msra.mxu0 0.0
        %1964 = vmatpush.msra.mxu0 0.0
        %1965 = vmatpush.msra.mxu0 0.0
        %1966 = vmatpush.msra.mxu0 0.0
        %1967 = vmatpush.msra.mxu0 0.0
        %1968 = vmatpush.msra.mxu0 0.0
        %1969 = vmatpush.msra.mxu0 0.0
        %1970 = vmatpush.msra.mxu0 0.0
        %1971 = vmatpush.msra.mxu0 0.0
        %1972 = vmatpush.msra.mxu0 0.0
        %v1973 = vand.u32 %v1603, 4294901760
        %1974 = vmatpush.msra.mxu0 %v1973
        %v1975 = vand.u32 %v1602, 4294901760
        %1976 = vmatpush.msra.mxu0 %v1975
        %v1977 = vand.u32 %v599, 4294901760
        %1978 = vmatmul.f32.gmra.mxu0 %v1977
        %v1979 = vpop.f32.mrf.mxu0
        %v1980 = vadd.f32 %v1953, %v1979
        %v1981 = vand.u32 %v602, 4294901760
        %1982 = vmatmul.f32.gmra.mxu0 %v1981
        %v1983 = vpop.f32.mrf.mxu0
        %v1984 = vadd.f32 %v1957, %v1983
        %1985 = vdwg.mxu0
        %1986 = vmatpush.msra.mxu0 0.0
        %1987 = vmatpush.msra.mxu0 0.0
        %1988 = vmatpush.msra.mxu0 0.0
        %1989 = vmatpush.msra.mxu0 0.0
        %1990 = vmatpush.msra.mxu0 0.0
        %1991 = vmatpush.msra.mxu0 0.0
        %1992 = vmatpush.msra.mxu0 0.0
        %1993 = vmatpush.msra.mxu0 0.0
        %1994 = vmatpush.msra.mxu0 0.0
        %1995 = vmatpush.msra.mxu0 0.0
        %1996 = vmatpush.msra.mxu0 0.0
        %1997 = vmatpush.msra.mxu0 0.0
        %1998 = vmatpush.msra.mxu0 0.0
        %1999 = vmatpush.msra.mxu0 0.0
        %v2000 = vand.u32 %v1605, 4294901760
        %2001 = vmatpush.msra.mxu0 %v2000
        %v2002 = vand.u32 %v1604, 4294901760
        %2003 = vmatpush.msra.mxu0 %v2002
        %v2004 = vand.u32 %v795, 4294901760
        %v2005 = vsub.f32 %v795, %v2004
        %v2006 = vand.u32 %v2005, 4294901760
        %v2007 = vsub.f32 %v2005, %v2006
        %v2008 = vand.u32 %v2007, 4294901760
        %2009 = vmatmul.f32.gmra.mxu0 %v2008
        %v2010 = vpop.f32.mrf.mxu0
        %v2011 = vadd.f32 0.0, %v2010
        %v2012 = vand.u32 %v798, 4294901760
        %v2013 = vsub.f32 %v798, %v2012
        %v2014 = vand.u32 %v2013, 4294901760
        %v2015 = vsub.f32 %v2013, %v2014
        %v2016 = vand.u32 %v2015, 4294901760
        %2017 = vmatmul.f32.gmra.mxu0 %v2016
        %v2018 = vpop.f32.mrf.mxu0
        %v2019 = vadd.f32 0.0, %v2018
        %2020 = vdwg.mxu0
        %2021 = vmatpush.msra.mxu0 0.0
        %2022 = vmatpush.msra.mxu0 0.0
        %2023 = vmatpush.msra.mxu0 0.0
        %2024 = vmatpush.msra.mxu0 0.0
        %2025 = vmatpush.msra.mxu0 0.0
        %2026 = vmatpush.msra.mxu0 0.0
        %2027 = vmatpush.msra.mxu0 0.0
        %2028 = vmatpush.msra.mxu0 0.0
        %2029 = vmatpush.msra.mxu0 0.0
        %2030 = vmatpush.msra.mxu0 0.0
        %2031 = vmatpush.msra.mxu0 0.0
        %2032 = vmatpush.msra.mxu0 0.0
        %2033 = vmatpush.msra.mxu0 0.0
        %2034 = vmatpush.msra.mxu0 0.0
        %v2035 = vand.u32 %v1605, 4294901760
        %v2036 = vsub.f32 %v1605, %v2035
        %v2037 = vand.u32 %v2036, 4294901760
        %v2038 = vsub.f32 %v2036, %v2037
        %v2039 = vand.u32 %v2038, 4294901760
        %2040 = vmatpush.msra.mxu0 %v2039
        %v2041 = vand.u32 %v1604, 4294901760
        %v2042 = vsub.f32 %v1604, %v2041
        %v2043 = vand.u32 %v2042, 4294901760
        %v2044 = vsub.f32 %v2042, %v2043
        %v2045 = vand.u32 %v2044, 4294901760
        %2046 = vmatpush.msra.mxu0 %v2045
        %v2047 = vand.u32 %v795, 4294901760
        %2048 = vmatmul.f32.gmra.mxu0 %v2047
        %v2049 = vpop.f32.mrf.mxu0
        %v2050 = vadd.f32 %v2011, %v2049
        %v2051 = vand.u32 %v798, 4294901760
        %2052 = vmatmul.f32.gmra.mxu0 %v2051
        %v2053 = vpop.f32.mrf.mxu0
        %v2054 = vadd.f32 %v2019, %v2053
        %2055 = vdwg.mxu0
        %2056 = vmatpush.msra.mxu0 0.0
        %2057 = vmatpush.msra.mxu0 0.0
        %2058 = vmatpush.msra.mxu0 0.0
        %2059 = vmatpush.msra.mxu0 0.0
        %2060 = vmatpush.msra.mxu0 0.0
        %2061 = vmatpush.msra.mxu0 0.0
        %2062 = vmatpush.msra.mxu0 0.0
        %2063 = vmatpush.msra.mxu0 0.0
        %2064 = vmatpush.msra.mxu0 0.0
        %2065 = vmatpush.msra.mxu0 0.0
        %2066 = vmatpush.msra.mxu0 0.0
        %2067 = vmatpush.msra.mxu0 0.0
        %2068 = vmatpush.msra.mxu0 0.0
        %2069 = vmatpush.msra.mxu0 0.0
        %v2070 = vand.u32 %v1605, 4294901760
        %v2071 = vsub.f32 %v1605, %v2070
        %2072 = vmatpush.msra.mxu0 %v2071
        %v2073 = vand.u32 %v1604, 4294901760
        %v2074 = vsub.f32 %v1604, %v2073
        %2075 = vmatpush.msra.mxu0 %v2074
        %v2076 = vand.u32 %v795, 4294901760
        %v2077 = vsub.f32 %v795, %v2076
        %2078 = vmatmul.f32.gmra.mxu0 %v2077
        %v2079 = vpop.f32.mrf.mxu0
        %v2080 = vadd.f32 %v2050, %v2079
        %v2081 = vand.u32 %v798, 4294901760
        %v2082 = vsub.f32 %v798, %v2081
        %2083 = vmatmul.f32.gmra.mxu0 %v2082
        %v2084 = vpop.f32.mrf.mxu0
        %v2085 = vadd.f32 %v2054, %v2084
        %2086 = vdwg.mxu0
        %2087 = vmatpush.msra.mxu0 0.0
        %2088 = vmatpush.msra.mxu0 0.0
        %2089 = vmatpush.msra.mxu0 0.0
        %2090 = vmatpush.msra.mxu0 0.0
        %2091 = vmatpush.msra.mxu0 0.0
        %2092 = vmatpush.msra.mxu0 0.0
        %2093 = vmatpush.msra.mxu0 0.0
        %2094 = vmatpush.msra.mxu0 0.0
        %2095 = vmatpush.msra.mxu0 0.0
        %2096 = vmatpush.msra.mxu0 0.0
        %2097 = vmatpush.msra.mxu0 0.0
        %2098 = vmatpush.msra.mxu0 0.0
        %2099 = vmatpush.msra.mxu0 0.0
        %2100 = vmatpush.msra.mxu0 0.0
        %v2101 = vand.u32 %v1605, 4294901760
        %2102 = vmatpush.msra.mxu0 %v2101
        %v2103 = vand.u32 %v1604, 4294901760
        %2104 = vmatpush.msra.mxu0 %v2103
        %v2105 = vand.u32 %v795, 4294901760
        %v2106 = vsub.f32 %v795, %v2105
        %v2107 = vand.u32 %v2106, 4294901760
        %2108 = vmatmul.f32.gmra.mxu0 %v2107
        %v2109 = vpop.f32.mrf.mxu0
        %v2110 = vadd.f32 %v2080, %v2109
        %v2111 = vand.u32 %v798, 4294901760
        %v2112 = vsub.f32 %v798, %v2111
        %v2113 = vand.u32 %v2112, 4294901760
        %2114 = vmatmul.f32.gmra.mxu0 %v2113
        %v2115 = vpop.f32.mrf.mxu0
        %v2116 = vadd.f32 %v2085, %v2115
        %2117 = vdwg.mxu0
        %2118 = vmatpush.msra.mxu0 0.0
        %2119 = vmatpush.msra.mxu0 0.0
        %2120 = vmatpush.msra.mxu0 0.0
        %2121 = vmatpush.msra.mxu0 0.0
        %2122 = vmatpush.msra.mxu0 0.0
        %2123 = vmatpush.msra.mxu0 0.0
        %2124 = vmatpush.msra.mxu0 0.0
        %2125 = vmatpush.msra.mxu0 0.0
        %2126 = vmatpush.msra.mxu0 0.0
        %2127 = vmatpush.msra.mxu0 0.0
        %2128 = vmatpush.msra.mxu0 0.0
        %2129 = vmatpush.msra.mxu0 0.0
        %2130 = vmatpush.msra.mxu0 0.0
        %2131 = vmatpush.msra.mxu0 0.0
        %v2132 = vand.u32 %v1605, 4294901760
        %v2133 = vsub.f32 %v1605, %v2132
        %v2134 = vand.u32 %v2133, 4294901760
        %2135 = vmatpush.msra.mxu0 %v2134
        %v2136 = vand.u32 %v1604, 4294901760
        %v2137 = vsub.f32 %v1604, %v2136
        %v2138 = vand.u32 %v2137, 4294901760
        %2139 = vmatpush.msra.mxu0 %v2138
        %v2140 = vand.u32 %v795, 4294901760
        %2141 = vmatmul.f32.gmra.mxu0 %v2140
        %v2142 = vpop.f32.mrf.mxu0
        %v2143 = vadd.f32 %v2110, %v2142
        %v2144 = vand.u32 %v798, 4294901760
        %2145 = vmatmul.f32.gmra.mxu0 %v2144
        %v2146 = vpop.f32.mrf.mxu0
        %v2147 = vadd.f32 %v2116, %v2146
        %2148 = vdwg.mxu0
        %2149 = vmatpush.msra.mxu0 0.0
        %2150 = vmatpush.msra.mxu0 0.0
        %2151 = vmatpush.msra.mxu0 0.0
        %2152 = vmatpush.msra.mxu0 0.0
        %2153 = vmatpush.msra.mxu0 0.0
        %2154 = vmatpush.msra.mxu0 0.0
        %2155 = vmatpush.msra.mxu0 0.0
        %2156 = vmatpush.msra.mxu0 0.0
        %2157 = vmatpush.msra.mxu0 0.0
        %2158 = vmatpush.msra.mxu0 0.0
        %2159 = vmatpush.msra.mxu0 0.0
        %2160 = vmatpush.msra.mxu0 0.0
        %2161 = vmatpush.msra.mxu0 0.0
        %2162 = vmatpush.msra.mxu0 0.0
        %v2163 = vand.u32 %v1605, 4294901760
        %2164 = vmatpush.msra.mxu0 %v2163
        %v2165 = vand.u32 %v1604, 4294901760
        %2166 = vmatpush.msra.mxu0 %v2165
        %v2167 = vand.u32 %v795, 4294901760
        %2168 = vmatmul.f32.gmra.mxu0 %v2167
        %v2169 = vpop.f32.mrf.mxu0
        %v2170 = vadd.f32 %v2143, %v2169
        %v2171 = vand.u32 %v798, 4294901760
        %2172 = vmatmul.f32.gmra.mxu0 %v2171
        %v2173 = vpop.f32.mrf.mxu0
        %v2174 = vadd.f32 %v2147, %v2173
        %2175 = vdwg.mxu0
        %v2176 = vsub.f32 %v1790, %v1980
        %v2177 = vsub.f32 %v1794, %v1984
        %v2178 = vsub.f32 %v2170, %v1790
        %v2179 = vsub.f32 %v2174, %v1794
        %v2180 = vsub.f32 %v2178, %v1980
        %v2181 = vsub.f32 %v2179, %v1984
        %v2182 = vadd.f32 %v2176, %v2180
        %v2183 = vadd.f32 %v2177, %v2181
        %v2185 = vsel %vm401, %v2176, 0
        %v2188 = vsel %vm401, %v2177, 0
        %2190 = vmatpush.msra.mxu0 0.0
        %2191 = vmatpush.msra.mxu0 0.0
        %2192 = vmatpush.msra.mxu0 0.0
        %2193 = vmatpush.msra.mxu0 0.0
        %2194 = vmatpush.msra.mxu0 0.0
        %2195 = vmatpush.msra.mxu0 0.0
        %2196 = vmatpush.msra.mxu0 0.0
        %2197 = vmatpush.msra.mxu0 0.0
        %2198 = vmatpush.msra.mxu0 0.0
        %2199 = vmatpush.msra.mxu0 0.0
        %2200 = vmatpush.msra.mxu0 0.0
        %2201 = vmatpush.msra.mxu0 0.0
        %2202 = vmatpush.msra.mxu0 0.0
        %2203 = vmatpush.msra.mxu0 0.0
        %v2204 = vand.u32 %v389, 4294901760
        %2205 = vmatpush.msra.mxu0 %v2204
        %v2206 = vand.u32 %v388, 4294901760
        %2207 = vmatpush.msra.mxu0 %v2206
        %v2208 = vand.u32 %v2185, 4294901760
        %v2209 = vsub.f32 %v2185, %v2208
        %v2210 = vand.u32 %v2209, 4294901760
        %v2211 = vsub.f32 %v2209, %v2210
        %v2212 = vand.u32 %v2211, 4294901760
        %2213 = vmatmul.f32.gmra.mxu0 %v2212
        %v2214 = vpop.f32.mrf.mxu0
        %v2215 = vadd.f32 0.0, %v2214
        %v2216 = vand.u32 %v2188, 4294901760
        %v2217 = vsub.f32 %v2188, %v2216
        %v2218 = vand.u32 %v2217, 4294901760
        %v2219 = vsub.f32 %v2217, %v2218
        %v2220 = vand.u32 %v2219, 4294901760
        %2221 = vmatmul.f32.gmra.mxu0 %v2220
        %v2222 = vpop.f32.mrf.mxu0
        %v2223 = vadd.f32 0.0, %v2222
        %2224 = vdwg.mxu0
        %2225 = vmatpush.msra.mxu0 0.0
        %2226 = vmatpush.msra.mxu0 0.0
        %2227 = vmatpush.msra.mxu0 0.0
        %2228 = vmatpush.msra.mxu0 0.0
        %2229 = vmatpush.msra.mxu0 0.0
        %2230 = vmatpush.msra.mxu0 0.0
        %2231 = vmatpush.msra.mxu0 0.0
        %2232 = vmatpush.msra.mxu0 0.0
        %2233 = vmatpush.msra.mxu0 0.0
        %2234 = vmatpush.msra.mxu0 0.0
        %2235 = vmatpush.msra.mxu0 0.0
        %2236 = vmatpush.msra.mxu0 0.0
        %2237 = vmatpush.msra.mxu0 0.0
        %2238 = vmatpush.msra.mxu0 0.0
        %v2239 = vand.u32 %v389, 4294901760
        %v2240 = vsub.f32 %v389, %v2239
        %v2241 = vand.u32 %v2240, 4294901760
        %v2242 = vsub.f32 %v2240, %v2241
        %v2243 = vand.u32 %v2242, 4294901760
        %2244 = vmatpush.msra.mxu0 %v2243
        %v2245 = vand.u32 %v388, 4294901760
        %v2246 = vsub.f32 %v388, %v2245
        %v2247 = vand.u32 %v2246, 4294901760
        %v2248 = vsub.f32 %v2246, %v2247
        %v2249 = vand.u32 %v2248, 4294901760
        %2250 = vmatpush.msra.mxu0 %v2249
        %v2251 = vand.u32 %v2185, 4294901760
        %2252 = vmatmul.f32.gmra.mxu0 %v2251
        %v2253 = vpop.f32.mrf.mxu0
        %v2254 = vadd.f32 %v2215, %v2253
        %v2255 = vand.u32 %v2188, 4294901760
        %2256 = vmatmul.f32.gmra.mxu0 %v2255
        %v2257 = vpop.f32.mrf.mxu0
        %v2258 = vadd.f32 %v2223, %v2257
        %2259 = vdwg.mxu0
        %2260 = vmatpush.msra.mxu0 0.0
        %2261 = vmatpush.msra.mxu0 0.0
        %2262 = vmatpush.msra.mxu0 0.0
        %2263 = vmatpush.msra.mxu0 0.0
        %2264 = vmatpush.msra.mxu0 0.0
        %2265 = vmatpush.msra.mxu0 0.0
        %2266 = vmatpush.msra.mxu0 0.0
        %2267 = vmatpush.msra.mxu0 0.0
        %2268 = vmatpush.msra.mxu0 0.0
        %2269 = vmatpush.msra.mxu0 0.0
        %2270 = vmatpush.msra.mxu0 0.0
        %2271 = vmatpush.msra.mxu0 0.0
        %2272 = vmatpush.msra.mxu0 0.0
        %2273 = vmatpush.msra.mxu0 0.0
        %v2274 = vand.u32 %v389, 4294901760
        %v2275 = vsub.f32 %v389, %v2274
        %2276 = vmatpush.msra.mxu0 %v2275
        %v2277 = vand.u32 %v388, 4294901760
        %v2278 = vsub.f32 %v388, %v2277
        %2279 = vmatpush.msra.mxu0 %v2278
        %v2280 = vand.u32 %v2185, 4294901760
        %v2281 = vsub.f32 %v2185, %v2280
        %2282 = vmatmul.f32.gmra.mxu0 %v2281
        %v2283 = vpop.f32.mrf.mxu0
        %v2284 = vadd.f32 %v2254, %v2283
        %v2285 = vand.u32 %v2188, 4294901760
        %v2286 = vsub.f32 %v2188, %v2285
        %2287 = vmatmul.f32.gmra.mxu0 %v2286
        %v2288 = vpop.f32.mrf.mxu0
        %v2289 = vadd.f32 %v2258, %v2288
        %2290 = vdwg.mxu0
        %2291 = vmatpush.msra.mxu0 0.0
        %2292 = vmatpush.msra.mxu0 0.0
        %2293 = vmatpush.msra.mxu0 0.0
        %2294 = vmatpush.msra.mxu0 0.0
        %2295 = vmatpush.msra.mxu0 0.0
        %2296 = vmatpush.msra.mxu0 0.0
        %2297 = vmatpush.msra.mxu0 0.0
        %2298 = vmatpush.msra.mxu0 0.0
        %2299 = vmatpush.msra.mxu0 0.0
        %2300 = vmatpush.msra.mxu0 0.0
        %2301 = vmatpush.msra.mxu0 0.0
        %2302 = vmatpush.msra.mxu0 0.0
        %2303 = vmatpush.msra.mxu0 0.0
        %2304 = vmatpush.msra.mxu0 0.0
        %v2305 = vand.u32 %v389, 4294901760
        %2306 = vmatpush.msra.mxu0 %v2305
        %v2307 = vand.u32 %v388, 4294901760
        %2308 = vmatpush.msra.mxu0 %v2307
        %v2309 = vand.u32 %v2185, 4294901760
        %v2310 = vsub.f32 %v2185, %v2309
        %v2311 = vand.u32 %v2310, 4294901760
        %2312 = vmatmul.f32.gmra.mxu0 %v2311
        %v2313 = vpop.f32.mrf.mxu0
        %v2314 = vadd.f32 %v2284, %v2313
        %v2315 = vand.u32 %v2188, 4294901760
        %v2316 = vsub.f32 %v2188, %v2315
        %v2317 = vand.u32 %v2316, 4294901760
        %2318 = vmatmul.f32.gmra.mxu0 %v2317
        %v2319 = vpop.f32.mrf.mxu0
        %v2320 = vadd.f32 %v2289, %v2319
        %2321 = vdwg.mxu0
        %2322 = vmatpush.msra.mxu0 0.0
        %2323 = vmatpush.msra.mxu0 0.0
        %2324 = vmatpush.msra.mxu0 0.0
        %2325 = vmatpush.msra.mxu0 0.0
        %2326 = vmatpush.msra.mxu0 0.0
        %2327 = vmatpush.msra.mxu0 0.0
        %2328 = vmatpush.msra.mxu0 0.0
        %2329 = vmatpush.msra.mxu0 0.0
        %2330 = vmatpush.msra.mxu0 0.0
        %2331 = vmatpush.msra.mxu0 0.0
        %2332 = vmatpush.msra.mxu0 0.0
        %2333 = vmatpush.msra.mxu0 0.0
        %2334 = vmatpush.msra.mxu0 0.0
        %2335 = vmatpush.msra.mxu0 0.0
        %v2336 = vand.u32 %v389, 4294901760
        %v2337 = vsub.f32 %v389, %v2336
        %v2338 = vand.u32 %v2337, 4294901760
        %2339 = vmatpush.msra.mxu0 %v2338
        %v2340 = vand.u32 %v388, 4294901760
        %v2341 = vsub.f32 %v388, %v2340
        %v2342 = vand.u32 %v2341, 4294901760
        %2343 = vmatpush.msra.mxu0 %v2342
        %v2344 = vand.u32 %v2185, 4294901760
        %2345 = vmatmul.f32.gmra.mxu0 %v2344
        %v2346 = vpop.f32.mrf.mxu0
        %v2347 = vadd.f32 %v2314, %v2346
        %v2348 = vand.u32 %v2188, 4294901760
        %2349 = vmatmul.f32.gmra.mxu0 %v2348
        %v2350 = vpop.f32.mrf.mxu0
        %v2351 = vadd.f32 %v2320, %v2350
        %2352 = vdwg.mxu0
        %2353 = vmatpush.msra.mxu0 0.0
        %2354 = vmatpush.msra.mxu0 0.0
        %2355 = vmatpush.msra.mxu0 0.0
        %2356 = vmatpush.msra.mxu0 0.0
        %2357 = vmatpush.msra.mxu0 0.0
        %2358 = vmatpush.msra.mxu0 0.0
        %2359 = vmatpush.msra.mxu0 0.0
        %2360 = vmatpush.msra.mxu0 0.0
        %2361 = vmatpush.msra.mxu0 0.0
        %2362 = vmatpush.msra.mxu0 0.0
        %2363 = vmatpush.msra.mxu0 0.0
        %2364 = vmatpush.msra.mxu0 0.0
        %2365 = vmatpush.msra.mxu0 0.0
        %2366 = vmatpush.msra.mxu0 0.0
        %v2367 = vand.u32 %v389, 4294901760
        %2368 = vmatpush.msra.mxu0 %v2367
        %v2369 = vand.u32 %v388, 4294901760
        %2370 = vmatpush.msra.mxu0 %v2369
        %v2371 = vand.u32 %v2185, 4294901760
        %2372 = vmatmul.f32.gmra.mxu0 %v2371
        %v2373 = vpop.f32.mrf.mxu0
        %v2374 = vadd.f32 %v2347, %v2373
        %v2375 = vand.u32 %v2188, 4294901760
        %2376 = vmatmul.f32.gmra.mxu0 %v2375
        %v2377 = vpop.f32.mrf.mxu0
        %v2378 = vadd.f32 %v2351, %v2377
        %2379 = vdwg.mxu0
        %v2381 = vsel %vm401, %v2180, 0
        %v2384 = vsel %vm401, %v2181, 0
        %2386 = vmatpush.msra.mxu0 0.0
        %2387 = vmatpush.msra.mxu0 0.0
        %2388 = vmatpush.msra.mxu0 0.0
        %2389 = vmatpush.msra.mxu0 0.0
        %2390 = vmatpush.msra.mxu0 0.0
        %2391 = vmatpush.msra.mxu0 0.0
        %2392 = vmatpush.msra.mxu0 0.0
        %2393 = vmatpush.msra.mxu0 0.0
        %2394 = vmatpush.msra.mxu0 0.0
        %2395 = vmatpush.msra.mxu0 0.0
        %2396 = vmatpush.msra.mxu0 0.0
        %2397 = vmatpush.msra.mxu0 0.0
        %2398 = vmatpush.msra.mxu0 0.0
        %2399 = vmatpush.msra.mxu0 0.0
        %v2400 = vand.u32 %v391, 4294901760
        %2401 = vmatpush.msra.mxu0 %v2400
        %v2402 = vand.u32 %v390, 4294901760
        %2403 = vmatpush.msra.mxu0 %v2402
        %v2404 = vand.u32 %v2381, 4294901760
        %v2405 = vsub.f32 %v2381, %v2404
        %v2406 = vand.u32 %v2405, 4294901760
        %v2407 = vsub.f32 %v2405, %v2406
        %v2408 = vand.u32 %v2407, 4294901760
        %2409 = vmatmul.f32.gmra.mxu0 %v2408
        %v2410 = vpop.f32.mrf.mxu0
        %v2411 = vadd.f32 0.0, %v2410
        %v2412 = vand.u32 %v2384, 4294901760
        %v2413 = vsub.f32 %v2384, %v2412
        %v2414 = vand.u32 %v2413, 4294901760
        %v2415 = vsub.f32 %v2413, %v2414
        %v2416 = vand.u32 %v2415, 4294901760
        %2417 = vmatmul.f32.gmra.mxu0 %v2416
        %v2418 = vpop.f32.mrf.mxu0
        %v2419 = vadd.f32 0.0, %v2418
        %2420 = vdwg.mxu0
        %2421 = vmatpush.msra.mxu0 0.0
        %2422 = vmatpush.msra.mxu0 0.0
        %2423 = vmatpush.msra.mxu0 0.0
        %2424 = vmatpush.msra.mxu0 0.0
        %2425 = vmatpush.msra.mxu0 0.0
        %2426 = vmatpush.msra.mxu0 0.0
        %2427 = vmatpush.msra.mxu0 0.0
        %2428 = vmatpush.msra.mxu0 0.0
        %2429 = vmatpush.msra.mxu0 0.0
        %2430 = vmatpush.msra.mxu0 0.0
        %2431 = vmatpush.msra.mxu0 0.0
        %2432 = vmatpush.msra.mxu0 0.0
        %2433 = vmatpush.msra.mxu0 0.0
        %2434 = vmatpush.msra.mxu0 0.0
        %v2435 = vand.u32 %v391, 4294901760
        %v2436 = vsub.f32 %v391, %v2435
        %v2437 = vand.u32 %v2436, 4294901760
        %v2438 = vsub.f32 %v2436, %v2437
        %v2439 = vand.u32 %v2438, 4294901760
        %2440 = vmatpush.msra.mxu0 %v2439
        %v2441 = vand.u32 %v390, 4294901760
        %v2442 = vsub.f32 %v390, %v2441
        %v2443 = vand.u32 %v2442, 4294901760
        %v2444 = vsub.f32 %v2442, %v2443
        %v2445 = vand.u32 %v2444, 4294901760
        %2446 = vmatpush.msra.mxu0 %v2445
        %v2447 = vand.u32 %v2381, 4294901760
        %2448 = vmatmul.f32.gmra.mxu0 %v2447
        %v2449 = vpop.f32.mrf.mxu0
        %v2450 = vadd.f32 %v2411, %v2449
        %v2451 = vand.u32 %v2384, 4294901760
        %2452 = vmatmul.f32.gmra.mxu0 %v2451
        %v2453 = vpop.f32.mrf.mxu0
        %v2454 = vadd.f32 %v2419, %v2453
        %2455 = vdwg.mxu0
        %2456 = vmatpush.msra.mxu0 0.0
        %2457 = vmatpush.msra.mxu0 0.0
        %2458 = vmatpush.msra.mxu0 0.0
        %2459 = vmatpush.msra.mxu0 0.0
        %2460 = vmatpush.msra.mxu0 0.0
        %2461 = vmatpush.msra.mxu0 0.0
        %2462 = vmatpush.msra.mxu0 0.0
        %2463 = vmatpush.msra.mxu0 0.0
        %2464 = vmatpush.msra.mxu0 0.0
        %2465 = vmatpush.msra.mxu0 0.0
        %2466 = vmatpush.msra.mxu0 0.0
        %2467 = vmatpush.msra.mxu0 0.0
        %2468 = vmatpush.msra.mxu0 0.0
        %2469 = vmatpush.msra.mxu0 0.0
        %v2470 = vand.u32 %v391, 4294901760
        %v2471 = vsub.f32 %v391, %v2470
        %2472 = vmatpush.msra.mxu0 %v2471
        %v2473 = vand.u32 %v390, 4294901760
        %v2474 = vsub.f32 %v390, %v2473
        %2475 = vmatpush.msra.mxu0 %v2474
        %v2476 = vand.u32 %v2381, 4294901760
        %v2477 = vsub.f32 %v2381, %v2476
        %2478 = vmatmul.f32.gmra.mxu0 %v2477
        %v2479 = vpop.f32.mrf.mxu0
        %v2480 = vadd.f32 %v2450, %v2479
        %v2481 = vand.u32 %v2384, 4294901760
        %v2482 = vsub.f32 %v2384, %v2481
        %2483 = vmatmul.f32.gmra.mxu0 %v2482
        %v2484 = vpop.f32.mrf.mxu0
        %v2485 = vadd.f32 %v2454, %v2484
        %2486 = vdwg.mxu0
        %2487 = vmatpush.msra.mxu0 0.0
        %2488 = vmatpush.msra.mxu0 0.0
        %2489 = vmatpush.msra.mxu0 0.0
        %2490 = vmatpush.msra.mxu0 0.0
        %2491 = vmatpush.msra.mxu0 0.0
        %2492 = vmatpush.msra.mxu0 0.0
        %2493 = vmatpush.msra.mxu0 0.0
        %2494 = vmatpush.msra.mxu0 0.0
        %2495 = vmatpush.msra.mxu0 0.0
        %2496 = vmatpush.msra.mxu0 0.0
        %2497 = vmatpush.msra.mxu0 0.0
        %2498 = vmatpush.msra.mxu0 0.0
        %2499 = vmatpush.msra.mxu0 0.0
        %2500 = vmatpush.msra.mxu0 0.0
        %v2501 = vand.u32 %v391, 4294901760
        %2502 = vmatpush.msra.mxu0 %v2501
        %v2503 = vand.u32 %v390, 4294901760
        %2504 = vmatpush.msra.mxu0 %v2503
        %v2505 = vand.u32 %v2381, 4294901760
        %v2506 = vsub.f32 %v2381, %v2505
        %v2507 = vand.u32 %v2506, 4294901760
        %2508 = vmatmul.f32.gmra.mxu0 %v2507
        %v2509 = vpop.f32.mrf.mxu0
        %v2510 = vadd.f32 %v2480, %v2509
        %v2511 = vand.u32 %v2384, 4294901760
        %v2512 = vsub.f32 %v2384, %v2511
        %v2513 = vand.u32 %v2512, 4294901760
        %2514 = vmatmul.f32.gmra.mxu0 %v2513
        %v2515 = vpop.f32.mrf.mxu0
        %v2516 = vadd.f32 %v2485, %v2515
        %2517 = vdwg.mxu0
        %2518 = vmatpush.msra.mxu0 0.0
        %2519 = vmatpush.msra.mxu0 0.0
        %2520 = vmatpush.msra.mxu0 0.0
        %2521 = vmatpush.msra.mxu0 0.0
        %2522 = vmatpush.msra.mxu0 0.0
        %2523 = vmatpush.msra.mxu0 0.0
        %2524 = vmatpush.msra.mxu0 0.0
        %2525 = vmatpush.msra.mxu0 0.0
        %2526 = vmatpush.msra.mxu0 0.0
        %2527 = vmatpush.msra.mxu0 0.0
        %2528 = vmatpush.msra.mxu0 0.0
        %2529 = vmatpush.msra.mxu0 0.0
        %2530 = vmatpush.msra.mxu0 0.0
        %2531 = vmatpush.msra.mxu0 0.0
        %v2532 = vand.u32 %v391, 4294901760
        %v2533 = vsub.f32 %v391, %v2532
        %v2534 = vand.u32 %v2533, 4294901760
        %2535 = vmatpush.msra.mxu0 %v2534
        %v2536 = vand.u32 %v390, 4294901760
        %v2537 = vsub.f32 %v390, %v2536
        %v2538 = vand.u32 %v2537, 4294901760
        %2539 = vmatpush.msra.mxu0 %v2538
        %v2540 = vand.u32 %v2381, 4294901760
        %2541 = vmatmul.f32.gmra.mxu0 %v2540
        %v2542 = vpop.f32.mrf.mxu0
        %v2543 = vadd.f32 %v2510, %v2542
        %v2544 = vand.u32 %v2384, 4294901760
        %2545 = vmatmul.f32.gmra.mxu0 %v2544
        %v2546 = vpop.f32.mrf.mxu0
        %v2547 = vadd.f32 %v2516, %v2546
        %2548 = vdwg.mxu0
        %2549 = vmatpush.msra.mxu0 0.0
        %2550 = vmatpush.msra.mxu0 0.0
        %2551 = vmatpush.msra.mxu0 0.0
        %2552 = vmatpush.msra.mxu0 0.0
        %2553 = vmatpush.msra.mxu0 0.0
        %2554 = vmatpush.msra.mxu0 0.0
        %2555 = vmatpush.msra.mxu0 0.0
        %2556 = vmatpush.msra.mxu0 0.0
        %2557 = vmatpush.msra.mxu0 0.0
        %2558 = vmatpush.msra.mxu0 0.0
        %2559 = vmatpush.msra.mxu0 0.0
        %2560 = vmatpush.msra.mxu0 0.0
        %2561 = vmatpush.msra.mxu0 0.0
        %2562 = vmatpush.msra.mxu0 0.0
        %v2563 = vand.u32 %v391, 4294901760
        %2564 = vmatpush.msra.mxu0 %v2563
        %v2565 = vand.u32 %v390, 4294901760
        %2566 = vmatpush.msra.mxu0 %v2565
        %v2567 = vand.u32 %v2381, 4294901760
        %2568 = vmatmul.f32.gmra.mxu0 %v2567
        %v2569 = vpop.f32.mrf.mxu0
        %v2570 = vadd.f32 %v2543, %v2569
        %v2571 = vand.u32 %v2384, 4294901760
        %2572 = vmatmul.f32.gmra.mxu0 %v2571
        %v2573 = vpop.f32.mrf.mxu0
        %v2574 = vadd.f32 %v2547, %v2573
        %2575 = vdwg.mxu0
        %v2577 = vsel %vm401, %v2182, 0
        %v2580 = vsel %vm401, %v2183, 0
        %2582 = vmatpush.msra.mxu0 0.0
        %2583 = vmatpush.msra.mxu0 0.0
        %2584 = vmatpush.msra.mxu0 0.0
        %2585 = vmatpush.msra.mxu0 0.0
        %2586 = vmatpush.msra.mxu0 0.0
        %2587 = vmatpush.msra.mxu0 0.0
        %2588 = vmatpush.msra.mxu0 0.0
        %2589 = vmatpush.msra.mxu0 0.0
        %2590 = vmatpush.msra.mxu0 0.0
        %2591 = vmatpush.msra.mxu0 0.0
        %2592 = vmatpush.msra.mxu0 0.0
        %2593 = vmatpush.msra.mxu0 0.0
        %2594 = vmatpush.msra.mxu0 0.0
        %2595 = vmatpush.msra.mxu0 0.0
        %v2596 = vand.u32 %v393, 4294901760
        %2597 = vmatpush.msra.mxu0 %v2596
        %v2598 = vand.u32 %v392, 4294901760
        %2599 = vmatpush.msra.mxu0 %v2598
        %v2600 = vand.u32 %v2577, 4294901760
        %v2601 = vsub.f32 %v2577, %v2600
        %v2602 = vand.u32 %v2601, 4294901760
        %v2603 = vsub.f32 %v2601, %v2602
        %v2604 = vand.u32 %v2603, 4294901760
        %2605 = vmatmul.f32.gmra.mxu0 %v2604
        %v2606 = vpop.f32.mrf.mxu0
        %v2607 = vadd.f32 0.0, %v2606
        %v2608 = vand.u32 %v2580, 4294901760
        %v2609 = vsub.f32 %v2580, %v2608
        %v2610 = vand.u32 %v2609, 4294901760
        %v2611 = vsub.f32 %v2609, %v2610
        %v2612 = vand.u32 %v2611, 4294901760
        %2613 = vmatmul.f32.gmra.mxu0 %v2612
        %v2614 = vpop.f32.mrf.mxu0
        %v2615 = vadd.f32 0.0, %v2614
        %2616 = vdwg.mxu0
        %2617 = vmatpush.msra.mxu0 0.0
        %2618 = vmatpush.msra.mxu0 0.0
        %2619 = vmatpush.msra.mxu0 0.0
        %2620 = vmatpush.msra.mxu0 0.0
        %2621 = vmatpush.msra.mxu0 0.0
        %2622 = vmatpush.msra.mxu0 0.0
        %2623 = vmatpush.msra.mxu0 0.0
        %2624 = vmatpush.msra.mxu0 0.0
        %2625 = vmatpush.msra.mxu0 0.0
        %2626 = vmatpush.msra.mxu0 0.0
        %2627 = vmatpush.msra.mxu0 0.0
        %2628 = vmatpush.msra.mxu0 0.0
        %2629 = vmatpush.msra.mxu0 0.0
        %2630 = vmatpush.msra.mxu0 0.0
        %v2631 = vand.u32 %v393, 4294901760
        %v2632 = vsub.f32 %v393, %v2631
        %v2633 = vand.u32 %v2632, 4294901760
        %v2634 = vsub.f32 %v2632, %v2633
        %v2635 = vand.u32 %v2634, 4294901760
        %2636 = vmatpush.msra.mxu0 %v2635
        %v2637 = vand.u32 %v392, 4294901760
        %v2638 = vsub.f32 %v392, %v2637
        %v2639 = vand.u32 %v2638, 4294901760
        %v2640 = vsub.f32 %v2638, %v2639
        %v2641 = vand.u32 %v2640, 4294901760
        %2642 = vmatpush.msra.mxu0 %v2641
        %v2643 = vand.u32 %v2577, 4294901760
        %2644 = vmatmul.f32.gmra.mxu0 %v2643
        %v2645 = vpop.f32.mrf.mxu0
        %v2646 = vadd.f32 %v2607, %v2645
        %v2647 = vand.u32 %v2580, 4294901760
        %2648 = vmatmul.f32.gmra.mxu0 %v2647
        %v2649 = vpop.f32.mrf.mxu0
        %v2650 = vadd.f32 %v2615, %v2649
        %2651 = vdwg.mxu0
        %2652 = vmatpush.msra.mxu0 0.0
        %2653 = vmatpush.msra.mxu0 0.0
        %2654 = vmatpush.msra.mxu0 0.0
        %2655 = vmatpush.msra.mxu0 0.0
        %2656 = vmatpush.msra.mxu0 0.0
        %2657 = vmatpush.msra.mxu0 0.0
        %2658 = vmatpush.msra.mxu0 0.0
        %2659 = vmatpush.msra.mxu0 0.0
        %2660 = vmatpush.msra.mxu0 0.0
        %2661 = vmatpush.msra.mxu0 0.0
        %2662 = vmatpush.msra.mxu0 0.0
        %2663 = vmatpush.msra.mxu0 0.0
        %2664 = vmatpush.msra.mxu0 0.0
        %2665 = vmatpush.msra.mxu0 0.0
        %v2666 = vand.u32 %v393, 4294901760
        %v2667 = vsub.f32 %v393, %v2666
        %2668 = vmatpush.msra.mxu0 %v2667
        %v2669 = vand.u32 %v392, 4294901760
        %v2670 = vsub.f32 %v392, %v2669
        %2671 = vmatpush.msra.mxu0 %v2670
        %v2672 = vand.u32 %v2577, 4294901760
        %v2673 = vsub.f32 %v2577, %v2672
        %2674 = vmatmul.f32.gmra.mxu0 %v2673
        %v2675 = vpop.f32.mrf.mxu0
        %v2676 = vadd.f32 %v2646, %v2675
        %v2677 = vand.u32 %v2580, 4294901760
        %v2678 = vsub.f32 %v2580, %v2677
        %2679 = vmatmul.f32.gmra.mxu0 %v2678
        %v2680 = vpop.f32.mrf.mxu0
        %v2681 = vadd.f32 %v2650, %v2680
        %2682 = vdwg.mxu0
        %2683 = vmatpush.msra.mxu0 0.0
        %2684 = vmatpush.msra.mxu0 0.0
        %2685 = vmatpush.msra.mxu0 0.0
        %2686 = vmatpush.msra.mxu0 0.0
        %2687 = vmatpush.msra.mxu0 0.0
        %2688 = vmatpush.msra.mxu0 0.0
        %2689 = vmatpush.msra.mxu0 0.0
        %2690 = vmatpush.msra.mxu0 0.0
        %2691 = vmatpush.msra.mxu0 0.0
        %2692 = vmatpush.msra.mxu0 0.0
        %2693 = vmatpush.msra.mxu0 0.0
        %2694 = vmatpush.msra.mxu0 0.0
        %2695 = vmatpush.msra.mxu0 0.0
        %2696 = vmatpush.msra.mxu0 0.0
        %v2697 = vand.u32 %v393, 4294901760
        %2698 = vmatpush.msra.mxu0 %v2697
        %v2699 = vand.u32 %v392, 4294901760
        %2700 = vmatpush.msra.mxu0 %v2699
        %v2701 = vand.u32 %v2577, 4294901760
        %v2702 = vsub.f32 %v2577, %v2701
        %v2703 = vand.u32 %v2702, 4294901760
        %2704 = vmatmul.f32.gmra.mxu0 %v2703
        %v2705 = vpop.f32.mrf.mxu0
        %v2706 = vadd.f32 %v2676, %v2705
        %v2707 = vand.u32 %v2580, 4294901760
        %v2708 = vsub.f32 %v2580, %v2707
        %v2709 = vand.u32 %v2708, 4294901760
        %2710 = vmatmul.f32.gmra.mxu0 %v2709
        %v2711 = vpop.f32.mrf.mxu0
        %v2712 = vadd.f32 %v2681, %v2711
        %2713 = vdwg.mxu0
        %2714 = vmatpush.msra.mxu0 0.0
        %2715 = vmatpush.msra.mxu0 0.0
        %2716 = vmatpush.msra.mxu0 0.0
        %2717 = vmatpush.msra.mxu0 0.0
        %2718 = vmatpush.msra.mxu0 0.0
        %2719 = vmatpush.msra.mxu0 0.0
        %2720 = vmatpush.msra.mxu0 0.0
        %2721 = vmatpush.msra.mxu0 0.0
        %2722 = vmatpush.msra.mxu0 0.0
        %2723 = vmatpush.msra.mxu0 0.0
        %2724 = vmatpush.msra.mxu0 0.0
        %2725 = vmatpush.msra.mxu0 0.0
        %2726 = vmatpush.msra.mxu0 0.0
        %2727 = vmatpush.msra.mxu0 0.0
        %v2728 = vand.u32 %v393, 4294901760
        %v2729 = vsub.f32 %v393, %v2728
        %v2730 = vand.u32 %v2729, 4294901760
        %2731 = vmatpush.msra.mxu0 %v2730
        %v2732 = vand.u32 %v392, 4294901760
        %v2733 = vsub.f32 %v392, %v2732
        %v2734 = vand.u32 %v2733, 4294901760
        %2735 = vmatpush.msra.mxu0 %v2734
        %v2736 = vand.u32 %v2577, 4294901760
        %2737 = vmatmul.f32.gmra.mxu0 %v2736
        %v2738 = vpop.f32.mrf.mxu0
        %v2739 = vadd.f32 %v2706, %v2738
        %v2740 = vand.u32 %v2580, 4294901760
        %2741 = vmatmul.f32.gmra.mxu0 %v2740
        %v2742 = vpop.f32.mrf.mxu0
        %v2743 = vadd.f32 %v2712, %v2742
        %2744 = vdwg.mxu0
        %2745 = vmatpush.msra.mxu0 0.0
        %2746 = vmatpush.msra.mxu0 0.0
        %2747 = vmatpush.msra.mxu0 0.0
        %2748 = vmatpush.msra.mxu0 0.0
        %2749 = vmatpush.msra.mxu0 0.0
        %2750 = vmatpush.msra.mxu0 0.0
        %2751 = vmatpush.msra.mxu0 0.0
        %2752 = vmatpush.msra.mxu0 0.0
        %2753 = vmatpush.msra.mxu0 0.0
        %2754 = vmatpush.msra.mxu0 0.0
        %2755 = vmatpush.msra.mxu0 0.0
        %2756 = vmatpush.msra.mxu0 0.0
        %2757 = vmatpush.msra.mxu0 0.0
        %2758 = vmatpush.msra.mxu0 0.0
        %v2759 = vand.u32 %v393, 4294901760
        %2760 = vmatpush.msra.mxu0 %v2759
        %v2761 = vand.u32 %v392, 4294901760
        %2762 = vmatpush.msra.mxu0 %v2761
        %v2763 = vand.u32 %v2577, 4294901760
        %2764 = vmatmul.f32.gmra.mxu0 %v2763
        %v2765 = vpop.f32.mrf.mxu0
        %v2766 = vadd.f32 %v2739, %v2765
        %v2767 = vand.u32 %v2580, 4294901760
        %2768 = vmatmul.f32.gmra.mxu0 %v2767
        %v2769 = vpop.f32.mrf.mxu0
        %v2770 = vadd.f32 %v2743, %v2769
        %2771 = vdwg.mxu0
        %v2772 = vsub.f32 %v2374, %v2570
        %v2773 = vsub.f32 %v2378, %v2574
        %v2774 = vsub.f32 %v2766, %v2374
        %v2775 = vsub.f32 %v2770, %v2378
        %v2776 = vsub.f32 %v2774, %v2570
        %v2777 = vsub.f32 %v2775, %v2574
        %v2778 = vmul.f32 %v2772, %v2772
        %v2779 = vmul.f32 %v2773, %v2773
        %v2780 = vmul.f32 %v2776, %v2776
        %v2781 = vmul.f32 %v2777, %v2777
        %v2782 = vadd.f32 %v2778, %v2780
        %v2783 = vadd.f32 %v2779, %v2781
        %v2784 = vadd.f32 %v1596, %v2782
        %v2785 = vadd.f32 %v1597, %v2783
        %s2786 = scalar_lea.vmem %s330, 32 [#allocation2]
        %v2787 = vld [vmem:[%s2786] sm:$0xff]
        %v2788 = vld [vmem:[%s2786 + $0x8] sm:$0xff]
        %s2789 = scalar_lea.vmem %s330, 96 [#allocation2]
        %v2790 = vld [vmem:[%s2789] sm:$0xff]
        %v2791 = vld [vmem:[%s2789 + $0x8] sm:$0xff]
        %v2792 = vadd.f32 %v2787, %v2790
        %v2793 = vadd.f32 %v2788, %v2791
        %2794 = vmatpush.msra.mxu0 0.0
        %2795 = vmatpush.msra.mxu0 0.0
        %2796 = vmatpush.msra.mxu0 0.0
        %2797 = vmatpush.msra.mxu0 0.0
        %2798 = vmatpush.msra.mxu0 0.0
        %2799 = vmatpush.msra.mxu0 0.0
        %2800 = vmatpush.msra.mxu0 0.0
        %2801 = vmatpush.msra.mxu0 0.0
        %2802 = vmatpush.msra.mxu0 0.0
        %2803 = vmatpush.msra.mxu0 0.0
        %2804 = vmatpush.msra.mxu0 0.0
        %2805 = vmatpush.msra.mxu0 0.0
        %2806 = vmatpush.msra.mxu0 0.0
        %2807 = vmatpush.msra.mxu0 0.0
        %v2808 = vand.u32 %v2788, 4294901760
        %2809 = vmatpush.msra.mxu0 %v2808
        %v2810 = vand.u32 %v2787, 4294901760
        %2811 = vmatpush.msra.mxu0 %v2810
        %v2812 = vand.u32 %v403, 4294901760
        %v2813 = vsub.f32 %v403, %v2812
        %v2814 = vand.u32 %v2813, 4294901760
        %v2815 = vsub.f32 %v2813, %v2814
        %v2816 = vand.u32 %v2815, 4294901760
        %2817 = vmatmul.f32.gmra.mxu0 %v2816
        %v2818 = vpop.f32.mrf.mxu0
        %v2819 = vadd.f32 0.0, %v2818
        %v2820 = vand.u32 %v406, 4294901760
        %v2821 = vsub.f32 %v406, %v2820
        %v2822 = vand.u32 %v2821, 4294901760
        %v2823 = vsub.f32 %v2821, %v2822
        %v2824 = vand.u32 %v2823, 4294901760
        %2825 = vmatmul.f32.gmra.mxu0 %v2824
        %v2826 = vpop.f32.mrf.mxu0
        %v2827 = vadd.f32 0.0, %v2826
        %2828 = vdwg.mxu0
        %2829 = vmatpush.msra.mxu0 0.0
        %2830 = vmatpush.msra.mxu0 0.0
        %2831 = vmatpush.msra.mxu0 0.0
        %2832 = vmatpush.msra.mxu0 0.0
        %2833 = vmatpush.msra.mxu0 0.0
        %2834 = vmatpush.msra.mxu0 0.0
        %2835 = vmatpush.msra.mxu0 0.0
        %2836 = vmatpush.msra.mxu0 0.0
        %2837 = vmatpush.msra.mxu0 0.0
        %2838 = vmatpush.msra.mxu0 0.0
        %2839 = vmatpush.msra.mxu0 0.0
        %2840 = vmatpush.msra.mxu0 0.0
        %2841 = vmatpush.msra.mxu0 0.0
        %2842 = vmatpush.msra.mxu0 0.0
        %v2843 = vand.u32 %v2788, 4294901760
        %v2844 = vsub.f32 %v2788, %v2843
        %v2845 = vand.u32 %v2844, 4294901760
        %v2846 = vsub.f32 %v2844, %v2845
        %v2847 = vand.u32 %v2846, 4294901760
        %2848 = vmatpush.msra.mxu0 %v2847
        %v2849 = vand.u32 %v2787, 4294901760
        %v2850 = vsub.f32 %v2787, %v2849
        %v2851 = vand.u32 %v2850, 4294901760
        %v2852 = vsub.f32 %v2850, %v2851
        %v2853 = vand.u32 %v2852, 4294901760
        %2854 = vmatpush.msra.mxu0 %v2853
        %v2855 = vand.u32 %v403, 4294901760
        %2856 = vmatmul.f32.gmra.mxu0 %v2855
        %v2857 = vpop.f32.mrf.mxu0
        %v2858 = vadd.f32 %v2819, %v2857
        %v2859 = vand.u32 %v406, 4294901760
        %2860 = vmatmul.f32.gmra.mxu0 %v2859
        %v2861 = vpop.f32.mrf.mxu0
        %v2862 = vadd.f32 %v2827, %v2861
        %2863 = vdwg.mxu0
        %2864 = vmatpush.msra.mxu0 0.0
        %2865 = vmatpush.msra.mxu0 0.0
        %2866 = vmatpush.msra.mxu0 0.0
        %2867 = vmatpush.msra.mxu0 0.0
        %2868 = vmatpush.msra.mxu0 0.0
        %2869 = vmatpush.msra.mxu0 0.0
        %2870 = vmatpush.msra.mxu0 0.0
        %2871 = vmatpush.msra.mxu0 0.0
        %2872 = vmatpush.msra.mxu0 0.0
        %2873 = vmatpush.msra.mxu0 0.0
        %2874 = vmatpush.msra.mxu0 0.0
        %2875 = vmatpush.msra.mxu0 0.0
        %2876 = vmatpush.msra.mxu0 0.0
        %2877 = vmatpush.msra.mxu0 0.0
        %v2878 = vand.u32 %v2788, 4294901760
        %v2879 = vsub.f32 %v2788, %v2878
        %2880 = vmatpush.msra.mxu0 %v2879
        %v2881 = vand.u32 %v2787, 4294901760
        %v2882 = vsub.f32 %v2787, %v2881
        %2883 = vmatpush.msra.mxu0 %v2882
        %v2884 = vand.u32 %v403, 4294901760
        %v2885 = vsub.f32 %v403, %v2884
        %2886 = vmatmul.f32.gmra.mxu0 %v2885
        %v2887 = vpop.f32.mrf.mxu0
        %v2888 = vadd.f32 %v2858, %v2887
        %v2889 = vand.u32 %v406, 4294901760
        %v2890 = vsub.f32 %v406, %v2889
        %2891 = vmatmul.f32.gmra.mxu0 %v2890
        %v2892 = vpop.f32.mrf.mxu0
        %v2893 = vadd.f32 %v2862, %v2892
        %2894 = vdwg.mxu0
        %2895 = vmatpush.msra.mxu0 0.0
        %2896 = vmatpush.msra.mxu0 0.0
        %2897 = vmatpush.msra.mxu0 0.0
        %2898 = vmatpush.msra.mxu0 0.0
        %2899 = vmatpush.msra.mxu0 0.0
        %2900 = vmatpush.msra.mxu0 0.0
        %2901 = vmatpush.msra.mxu0 0.0
        %2902 = vmatpush.msra.mxu0 0.0
        %2903 = vmatpush.msra.mxu0 0.0
        %2904 = vmatpush.msra.mxu0 0.0
        %2905 = vmatpush.msra.mxu0 0.0
        %2906 = vmatpush.msra.mxu0 0.0
        %2907 = vmatpush.msra.mxu0 0.0
        %2908 = vmatpush.msra.mxu0 0.0
        %v2909 = vand.u32 %v2788, 4294901760
        %2910 = vmatpush.msra.mxu0 %v2909
        %v2911 = vand.u32 %v2787, 4294901760
        %2912 = vmatpush.msra.mxu0 %v2911
        %v2913 = vand.u32 %v403, 4294901760
        %v2914 = vsub.f32 %v403, %v2913
        %v2915 = vand.u32 %v2914, 4294901760
        %2916 = vmatmul.f32.gmra.mxu0 %v2915
        %v2917 = vpop.f32.mrf.mxu0
        %v2918 = vadd.f32 %v2888, %v2917
        %v2919 = vand.u32 %v406, 4294901760
        %v2920 = vsub.f32 %v406, %v2919
        %v2921 = vand.u32 %v2920, 4294901760
        %2922 = vmatmul.f32.gmra.mxu0 %v2921
        %v2923 = vpop.f32.mrf.mxu0
        %v2924 = vadd.f32 %v2893, %v2923
        %2925 = vdwg.mxu0
        %2926 = vmatpush.msra.mxu0 0.0
        %2927 = vmatpush.msra.mxu0 0.0
        %2928 = vmatpush.msra.mxu0 0.0
        %2929 = vmatpush.msra.mxu0 0.0
        %2930 = vmatpush.msra.mxu0 0.0
        %2931 = vmatpush.msra.mxu0 0.0
        %2932 = vmatpush.msra.mxu0 0.0
        %2933 = vmatpush.msra.mxu0 0.0
        %2934 = vmatpush.msra.mxu0 0.0
        %2935 = vmatpush.msra.mxu0 0.0
        %2936 = vmatpush.msra.mxu0 0.0
        %2937 = vmatpush.msra.mxu0 0.0
        %2938 = vmatpush.msra.mxu0 0.0
        %2939 = vmatpush.msra.mxu0 0.0
        %v2940 = vand.u32 %v2788, 4294901760
        %v2941 = vsub.f32 %v2788, %v2940
        %v2942 = vand.u32 %v2941, 4294901760
        %2943 = vmatpush.msra.mxu0 %v2942
        %v2944 = vand.u32 %v2787, 4294901760
        %v2945 = vsub.f32 %v2787, %v2944
        %v2946 = vand.u32 %v2945, 4294901760
        %2947 = vmatpush.msra.mxu0 %v2946
        %v2948 = vand.u32 %v403, 4294901760
        %2949 = vmatmul.f32.gmra.mxu0 %v2948
        %v2950 = vpop.f32.mrf.mxu0
        %v2951 = vadd.f32 %v2918, %v2950
        %v2952 = vand.u32 %v406, 4294901760
        %2953 = vmatmul.f32.gmra.mxu0 %v2952
        %v2954 = vpop.f32.mrf.mxu0
        %v2955 = vadd.f32 %v2924, %v2954
        %2956 = vdwg.mxu0
        %2957 = vmatpush.msra.mxu0 0.0
        %2958 = vmatpush.msra.mxu0 0.0
        %2959 = vmatpush.msra.mxu0 0.0
        %2960 = vmatpush.msra.mxu0 0.0
        %2961 = vmatpush.msra.mxu0 0.0
        %2962 = vmatpush.msra.mxu0 0.0
        %2963 = vmatpush.msra.mxu0 0.0
        %2964 = vmatpush.msra.mxu0 0.0
        %2965 = vmatpush.msra.mxu0 0.0
        %2966 = vmatpush.msra.mxu0 0.0
        %2967 = vmatpush.msra.mxu0 0.0
        %2968 = vmatpush.msra.mxu0 0.0
        %2969 = vmatpush.msra.mxu0 0.0
        %2970 = vmatpush.msra.mxu0 0.0
        %v2971 = vand.u32 %v2788, 4294901760
        %2972 = vmatpush.msra.mxu0 %v2971
        %v2973 = vand.u32 %v2787, 4294901760
        %2974 = vmatpush.msra.mxu0 %v2973
        %v2975 = vand.u32 %v403, 4294901760
        %2976 = vmatmul.f32.gmra.mxu0 %v2975
        %v2977 = vpop.f32.mrf.mxu0
        %v2978 = vadd.f32 %v2951, %v2977
        %v2979 = vand.u32 %v406, 4294901760
        %2980 = vmatmul.f32.gmra.mxu0 %v2979
        %v2981 = vpop.f32.mrf.mxu0
        %v2982 = vadd.f32 %v2955, %v2981
        %2983 = vdwg.mxu0
        %2984 = vmatpush.msra.mxu0 0.0
        %2985 = vmatpush.msra.mxu0 0.0
        %2986 = vmatpush.msra.mxu0 0.0
        %2987 = vmatpush.msra.mxu0 0.0
        %2988 = vmatpush.msra.mxu0 0.0
        %2989 = vmatpush.msra.mxu0 0.0
        %2990 = vmatpush.msra.mxu0 0.0
        %2991 = vmatpush.msra.mxu0 0.0
        %2992 = vmatpush.msra.mxu0 0.0
        %2993 = vmatpush.msra.mxu0 0.0
        %2994 = vmatpush.msra.mxu0 0.0
        %2995 = vmatpush.msra.mxu0 0.0
        %2996 = vmatpush.msra.mxu0 0.0
        %2997 = vmatpush.msra.mxu0 0.0
        %v2998 = vand.u32 %v2791, 4294901760
        %2999 = vmatpush.msra.mxu0 %v2998
        %v3000 = vand.u32 %v2790, 4294901760
        %3001 = vmatpush.msra.mxu0 %v3000
        %v3002 = vand.u32 %v599, 4294901760
        %v3003 = vsub.f32 %v599, %v3002
        %v3004 = vand.u32 %v3003, 4294901760
        %v3005 = vsub.f32 %v3003, %v3004
        %v3006 = vand.u32 %v3005, 4294901760
        %3007 = vmatmul.f32.gmra.mxu0 %v3006
        %v3008 = vpop.f32.mrf.mxu0
        %v3009 = vadd.f32 0.0, %v3008
        %v3010 = vand.u32 %v602, 4294901760
        %v3011 = vsub.f32 %v602, %v3010
        %v3012 = vand.u32 %v3011, 4294901760
        %v3013 = vsub.f32 %v3011, %v3012
        %v3014 = vand.u32 %v3013, 4294901760
        %3015 = vmatmul.f32.gmra.mxu0 %v3014
        %v3016 = vpop.f32.mrf.mxu0
        %v3017 = vadd.f32 0.0, %v3016
        %3018 = vdwg.mxu0
        %3019 = vmatpush.msra.mxu0 0.0
        %3020 = vmatpush.msra.mxu0 0.0
        %3021 = vmatpush.msra.mxu0 0.0
        %3022 = vmatpush.msra.mxu0 0.0
        %3023 = vmatpush.msra.mxu0 0.0
        %3024 = vmatpush.msra.mxu0 0.0
        %3025 = vmatpush.msra.mxu0 0.0
        %3026 = vmatpush.msra.mxu0 0.0
        %3027 = vmatpush.msra.mxu0 0.0
        %3028 = vmatpush.msra.mxu0 0.0
        %3029 = vmatpush.msra.mxu0 0.0
        %3030 = vmatpush.msra.mxu0 0.0
        %3031 = vmatpush.msra.mxu0 0.0
        %3032 = vmatpush.msra.mxu0 0.0
        %v3033 = vand.u32 %v2791, 4294901760
        %v3034 = vsub.f32 %v2791, %v3033
        %v3035 = vand.u32 %v3034, 4294901760
        %v3036 = vsub.f32 %v3034, %v3035
        %v3037 = vand.u32 %v3036, 4294901760
        %3038 = vmatpush.msra.mxu0 %v3037
        %v3039 = vand.u32 %v2790, 4294901760
        %v3040 = vsub.f32 %v2790, %v3039
        %v3041 = vand.u32 %v3040, 4294901760
        %v3042 = vsub.f32 %v3040, %v3041
        %v3043 = vand.u32 %v3042, 4294901760
        %3044 = vmatpush.msra.mxu0 %v3043
        %v3045 = vand.u32 %v599, 4294901760
        %3046 = vmatmul.f32.gmra.mxu0 %v3045
        %v3047 = vpop.f32.mrf.mxu0
        %v3048 = vadd.f32 %v3009, %v3047
        %v3049 = vand.u32 %v602, 4294901760
        %3050 = vmatmul.f32.gmra.mxu0 %v3049
        %v3051 = vpop.f32.mrf.mxu0
        %v3052 = vadd.f32 %v3017, %v3051
        %3053 = vdwg.mxu0
        %3054 = vmatpush.msra.mxu0 0.0
        %3055 = vmatpush.msra.mxu0 0.0
        %3056 = vmatpush.msra.mxu0 0.0
        %3057 = vmatpush.msra.mxu0 0.0
        %3058 = vmatpush.msra.mxu0 0.0
        %3059 = vmatpush.msra.mxu0 0.0
        %3060 = vmatpush.msra.mxu0 0.0
        %3061 = vmatpush.msra.mxu0 0.0
        %3062 = vmatpush.msra.mxu0 0.0
        %3063 = vmatpush.msra.mxu0 0.0
        %3064 = vmatpush.msra.mxu0 0.0
        %3065 = vmatpush.msra.mxu0 0.0
        %3066 = vmatpush.msra.mxu0 0.0
        %3067 = vmatpush.msra.mxu0 0.0
        %v3068 = vand.u32 %v2791, 4294901760
        %v3069 = vsub.f32 %v2791, %v3068
        %3070 = vmatpush.msra.mxu0 %v3069
        %v3071 = vand.u32 %v2790, 4294901760
        %v3072 = vsub.f32 %v2790, %v3071
        %3073 = vmatpush.msra.mxu0 %v3072
        %v3074 = vand.u32 %v599, 4294901760
        %v3075 = vsub.f32 %v599, %v3074
        %3076 = vmatmul.f32.gmra.mxu0 %v3075
        %v3077 = vpop.f32.mrf.mxu0
        %v3078 = vadd.f32 %v3048, %v3077
        %v3079 = vand.u32 %v602, 4294901760
        %v3080 = vsub.f32 %v602, %v3079
        %3081 = vmatmul.f32.gmra.mxu0 %v3080
        %v3082 = vpop.f32.mrf.mxu0
        %v3083 = vadd.f32 %v3052, %v3082
        %3084 = vdwg.mxu0
        %3085 = vmatpush.msra.mxu0 0.0
        %3086 = vmatpush.msra.mxu0 0.0
        %3087 = vmatpush.msra.mxu0 0.0
        %3088 = vmatpush.msra.mxu0 0.0
        %3089 = vmatpush.msra.mxu0 0.0
        %3090 = vmatpush.msra.mxu0 0.0
        %3091 = vmatpush.msra.mxu0 0.0
        %3092 = vmatpush.msra.mxu0 0.0
        %3093 = vmatpush.msra.mxu0 0.0
        %3094 = vmatpush.msra.mxu0 0.0
        %3095 = vmatpush.msra.mxu0 0.0
        %3096 = vmatpush.msra.mxu0 0.0
        %3097 = vmatpush.msra.mxu0 0.0
        %3098 = vmatpush.msra.mxu0 0.0
        %v3099 = vand.u32 %v2791, 4294901760
        %3100 = vmatpush.msra.mxu0 %v3099
        %v3101 = vand.u32 %v2790, 4294901760
        %3102 = vmatpush.msra.mxu0 %v3101
        %v3103 = vand.u32 %v599, 4294901760
        %v3104 = vsub.f32 %v599, %v3103
        %v3105 = vand.u32 %v3104, 4294901760
        %3106 = vmatmul.f32.gmra.mxu0 %v3105
        %v3107 = vpop.f32.mrf.mxu0
        %v3108 = vadd.f32 %v3078, %v3107
        %v3109 = vand.u32 %v602, 4294901760
        %v3110 = vsub.f32 %v602, %v3109
        %v3111 = vand.u32 %v3110, 4294901760
        %3112 = vmatmul.f32.gmra.mxu0 %v3111
        %v3113 = vpop.f32.mrf.mxu0
        %v3114 = vadd.f32 %v3083, %v3113
        %3115 = vdwg.mxu0
        %3116 = vmatpush.msra.mxu0 0.0
        %3117 = vmatpush.msra.mxu0 0.0
        %3118 = vmatpush.msra.mxu0 0.0
        %3119 = vmatpush.msra.mxu0 0.0
        %3120 = vmatpush.msra.mxu0 0.0
        %3121 = vmatpush.msra.mxu0 0.0
        %3122 = vmatpush.msra.mxu0 0.0
        %3123 = vmatpush.msra.mxu0 0.0
        %3124 = vmatpush.msra.mxu0 0.0
        %3125 = vmatpush.msra.mxu0 0.0
        %3126 = vmatpush.msra.mxu0 0.0
        %3127 = vmatpush.msra.mxu0 0.0
        %3128 = vmatpush.msra.mxu0 0.0
        %3129 = vmatpush.msra.mxu0 0.0
        %v3130 = vand.u32 %v2791, 4294901760
        %v3131 = vsub.f32 %v2791, %v3130
        %v3132 = vand.u32 %v3131, 4294901760
        %3133 = vmatpush.msra.mxu0 %v3132
        %v3134 = vand.u32 %v2790, 4294901760
        %v3135 = vsub.f32 %v2790, %v3134
        %v3136 = vand.u32 %v3135, 4294901760
        %3137 = vmatpush.msra.mxu0 %v3136
        %v3138 = vand.u32 %v599, 4294901760
        %3139 = vmatmul.f32.gmra.mxu0 %v3138
        %v3140 = vpop.f32.mrf.mxu0
        %v3141 = vadd.f32 %v3108, %v3140
        %v3142 = vand.u32 %v602, 4294901760
        %3143 = vmatmul.f32.gmra.mxu0 %v3142
        %v3144 = vpop.f32.mrf.mxu0
        %v3145 = vadd.f32 %v3114, %v3144
        %3146 = vdwg.mxu0
        %3147 = vmatpush.msra.mxu0 0.0
        %3148 = vmatpush.msra.mxu0 0.0
        %3149 = vmatpush.msra.mxu0 0.0
        %3150 = vmatpush.msra.mxu0 0.0
        %3151 = vmatpush.msra.mxu0 0.0
        %3152 = vmatpush.msra.mxu0 0.0
        %3153 = vmatpush.msra.mxu0 0.0
        %3154 = vmatpush.msra.mxu0 0.0
        %3155 = vmatpush.msra.mxu0 0.0
        %3156 = vmatpush.msra.mxu0 0.0
        %3157 = vmatpush.msra.mxu0 0.0
        %3158 = vmatpush.msra.mxu0 0.0
        %3159 = vmatpush.msra.mxu0 0.0
        %3160 = vmatpush.msra.mxu0 0.0
        %v3161 = vand.u32 %v2791, 4294901760
        %3162 = vmatpush.msra.mxu0 %v3161
        %v3163 = vand.u32 %v2790, 4294901760
        %3164 = vmatpush.msra.mxu0 %v3163
        %v3165 = vand.u32 %v599, 4294901760
        %3166 = vmatmul.f32.gmra.mxu0 %v3165
        %v3167 = vpop.f32.mrf.mxu0
        %v3168 = vadd.f32 %v3141, %v3167
        %v3169 = vand.u32 %v602, 4294901760
        %3170 = vmatmul.f32.gmra.mxu0 %v3169
        %v3171 = vpop.f32.mrf.mxu0
        %v3172 = vadd.f32 %v3145, %v3171
        %3173 = vdwg.mxu0
        %3174 = vmatpush.msra.mxu0 0.0
        %3175 = vmatpush.msra.mxu0 0.0
        %3176 = vmatpush.msra.mxu0 0.0
        %3177 = vmatpush.msra.mxu0 0.0
        %3178 = vmatpush.msra.mxu0 0.0
        %3179 = vmatpush.msra.mxu0 0.0
        %3180 = vmatpush.msra.mxu0 0.0
        %3181 = vmatpush.msra.mxu0 0.0
        %3182 = vmatpush.msra.mxu0 0.0
        %3183 = vmatpush.msra.mxu0 0.0
        %3184 = vmatpush.msra.mxu0 0.0
        %3185 = vmatpush.msra.mxu0 0.0
        %3186 = vmatpush.msra.mxu0 0.0
        %3187 = vmatpush.msra.mxu0 0.0
        %v3188 = vand.u32 %v2793, 4294901760
        %3189 = vmatpush.msra.mxu0 %v3188
        %v3190 = vand.u32 %v2792, 4294901760
        %3191 = vmatpush.msra.mxu0 %v3190
        %v3192 = vand.u32 %v795, 4294901760
        %v3193 = vsub.f32 %v795, %v3192
        %v3194 = vand.u32 %v3193, 4294901760
        %v3195 = vsub.f32 %v3193, %v3194
        %v3196 = vand.u32 %v3195, 4294901760
        %3197 = vmatmul.f32.gmra.mxu0 %v3196
        %v3198 = vpop.f32.mrf.mxu0
        %v3199 = vadd.f32 0.0, %v3198
        %v3200 = vand.u32 %v798, 4294901760
        %v3201 = vsub.f32 %v798, %v3200
        %v3202 = vand.u32 %v3201, 4294901760
        %v3203 = vsub.f32 %v3201, %v3202
        %v3204 = vand.u32 %v3203, 4294901760
        %3205 = vmatmul.f32.gmra.mxu0 %v3204
        %v3206 = vpop.f32.mrf.mxu0
        %v3207 = vadd.f32 0.0, %v3206
        %3208 = vdwg.mxu0
        %3209 = vmatpush.msra.mxu0 0.0
        %3210 = vmatpush.msra.mxu0 0.0
        %3211 = vmatpush.msra.mxu0 0.0
        %3212 = vmatpush.msra.mxu0 0.0
        %3213 = vmatpush.msra.mxu0 0.0
        %3214 = vmatpush.msra.mxu0 0.0
        %3215 = vmatpush.msra.mxu0 0.0
        %3216 = vmatpush.msra.mxu0 0.0
        %3217 = vmatpush.msra.mxu0 0.0
        %3218 = vmatpush.msra.mxu0 0.0
        %3219 = vmatpush.msra.mxu0 0.0
        %3220 = vmatpush.msra.mxu0 0.0
        %3221 = vmatpush.msra.mxu0 0.0
        %3222 = vmatpush.msra.mxu0 0.0
        %v3223 = vand.u32 %v2793, 4294901760
        %v3224 = vsub.f32 %v2793, %v3223
        %v3225 = vand.u32 %v3224, 4294901760
        %v3226 = vsub.f32 %v3224, %v3225
        %v3227 = vand.u32 %v3226, 4294901760
        %3228 = vmatpush.msra.mxu0 %v3227
        %v3229 = vand.u32 %v2792, 4294901760
        %v3230 = vsub.f32 %v2792, %v3229
        %v3231 = vand.u32 %v3230, 4294901760
        %v3232 = vsub.f32 %v3230, %v3231
        %v3233 = vand.u32 %v3232, 4294901760
        %3234 = vmatpush.msra.mxu0 %v3233
        %v3235 = vand.u32 %v795, 4294901760
        %3236 = vmatmul.f32.gmra.mxu0 %v3235
        %v3237 = vpop.f32.mrf.mxu0
        %v3238 = vadd.f32 %v3199, %v3237
        %v3239 = vand.u32 %v798, 4294901760
        %3240 = vmatmul.f32.gmra.mxu0 %v3239
        %v3241 = vpop.f32.mrf.mxu0
        %v3242 = vadd.f32 %v3207, %v3241
        %3243 = vdwg.mxu0
        %3244 = vmatpush.msra.mxu0 0.0
        %3245 = vmatpush.msra.mxu0 0.0
        %3246 = vmatpush.msra.mxu0 0.0
        %3247 = vmatpush.msra.mxu0 0.0
        %3248 = vmatpush.msra.mxu0 0.0
        %3249 = vmatpush.msra.mxu0 0.0
        %3250 = vmatpush.msra.mxu0 0.0
        %3251 = vmatpush.msra.mxu0 0.0
        %3252 = vmatpush.msra.mxu0 0.0
        %3253 = vmatpush.msra.mxu0 0.0
        %3254 = vmatpush.msra.mxu0 0.0
        %3255 = vmatpush.msra.mxu0 0.0
        %3256 = vmatpush.msra.mxu0 0.0
        %3257 = vmatpush.msra.mxu0 0.0
        %v3258 = vand.u32 %v2793, 4294901760
        %v3259 = vsub.f32 %v2793, %v3258
        %3260 = vmatpush.msra.mxu0 %v3259
        %v3261 = vand.u32 %v2792, 4294901760
        %v3262 = vsub.f32 %v2792, %v3261
        %3263 = vmatpush.msra.mxu0 %v3262
        %v3264 = vand.u32 %v795, 4294901760
        %v3265 = vsub.f32 %v795, %v3264
        %3266 = vmatmul.f32.gmra.mxu0 %v3265
        %v3267 = vpop.f32.mrf.mxu0
        %v3268 = vadd.f32 %v3238, %v3267
        %v3269 = vand.u32 %v798, 4294901760
        %v3270 = vsub.f32 %v798, %v3269
        %3271 = vmatmul.f32.gmra.mxu0 %v3270
        %v3272 = vpop.f32.mrf.mxu0
        %v3273 = vadd.f32 %v3242, %v3272
        %3274 = vdwg.mxu0
        %3275 = vmatpush.msra.mxu0 0.0
        %3276 = vmatpush.msra.mxu0 0.0
        %3277 = vmatpush.msra.mxu0 0.0
        %3278 = vmatpush.msra.mxu0 0.0
        %3279 = vmatpush.msra.mxu0 0.0
        %3280 = vmatpush.msra.mxu0 0.0
        %3281 = vmatpush.msra.mxu0 0.0
        %3282 = vmatpush.msra.mxu0 0.0
        %3283 = vmatpush.msra.mxu0 0.0
        %3284 = vmatpush.msra.mxu0 0.0
        %3285 = vmatpush.msra.mxu0 0.0
        %3286 = vmatpush.msra.mxu0 0.0
        %3287 = vmatpush.msra.mxu0 0.0
        %3288 = vmatpush.msra.mxu0 0.0
        %v3289 = vand.u32 %v2793, 4294901760
        %3290 = vmatpush.msra.mxu0 %v3289
        %v3291 = vand.u32 %v2792, 4294901760
        %3292 = vmatpush.msra.mxu0 %v3291
        %v3293 = vand.u32 %v795, 4294901760
        %v3294 = vsub.f32 %v795, %v3293
        %v3295 = vand.u32 %v3294, 4294901760
        %3296 = vmatmul.f32.gmra.mxu0 %v3295
        %v3297 = vpop.f32.mrf.mxu0
        %v3298 = vadd.f32 %v3268, %v3297
        %v3299 = vand.u32 %v798, 4294901760
        %v3300 = vsub.f32 %v798, %v3299
        %v3301 = vand.u32 %v3300, 4294901760
        %3302 = vmatmul.f32.gmra.mxu0 %v3301
        %v3303 = vpop.f32.mrf.mxu0
        %v3304 = vadd.f32 %v3273, %v3303
        %3305 = vdwg.mxu0
        %3306 = vmatpush.msra.mxu0 0.0
        %3307 = vmatpush.msra.mxu0 0.0
        %3308 = vmatpush.msra.mxu0 0.0
        %3309 = vmatpush.msra.mxu0 0.0
        %3310 = vmatpush.msra.mxu0 0.0
        %3311 = vmatpush.msra.mxu0 0.0
        %3312 = vmatpush.msra.mxu0 0.0
        %3313 = vmatpush.msra.mxu0 0.0
        %3314 = vmatpush.msra.mxu0 0.0
        %3315 = vmatpush.msra.mxu0 0.0
        %3316 = vmatpush.msra.mxu0 0.0
        %3317 = vmatpush.msra.mxu0 0.0
        %3318 = vmatpush.msra.mxu0 0.0
        %3319 = vmatpush.msra.mxu0 0.0
        %v3320 = vand.u32 %v2793, 4294901760
        %v3321 = vsub.f32 %v2793, %v3320
        %v3322 = vand.u32 %v3321, 4294901760
        %3323 = vmatpush.msra.mxu0 %v3322
        %v3324 = vand.u32 %v2792, 4294901760
        %v3325 = vsub.f32 %v2792, %v3324
        %v3326 = vand.u32 %v3325, 4294901760
        %3327 = vmatpush.msra.mxu0 %v3326
        %v3328 = vand.u32 %v795, 4294901760
        %3329 = vmatmul.f32.gmra.mxu0 %v3328
        %v3330 = vpop.f32.mrf.mxu0
        %v3331 = vadd.f32 %v3298, %v3330
        %v3332 = vand.u32 %v798, 4294901760
        %3333 = vmatmul.f32.gmra.mxu0 %v3332
        %v3334 = vpop.f32.mrf.mxu0
        %v3335 = vadd.f32 %v3304, %v3334
        %3336 = vdwg.mxu0
        %3337 = vmatpush.msra.mxu0 0.0
        %3338 = vmatpush.msra.mxu0 0.0
        %3339 = vmatpush.msra.mxu0 0.0
        %3340 = vmatpush.msra.mxu0 0.0
        %3341 = vmatpush.msra.mxu0 0.0
        %3342 = vmatpush.msra.mxu0 0.0
        %3343 = vmatpush.msra.mxu0 0.0
        %3344 = vmatpush.msra.mxu0 0.0
        %3345 = vmatpush.msra.mxu0 0.0
        %3346 = vmatpush.msra.mxu0 0.0
        %3347 = vmatpush.msra.mxu0 0.0
        %3348 = vmatpush.msra.mxu0 0.0
        %3349 = vmatpush.msra.mxu0 0.0
        %3350 = vmatpush.msra.mxu0 0.0
        %v3351 = vand.u32 %v2793, 4294901760
        %3352 = vmatpush.msra.mxu0 %v3351
        %v3353 = vand.u32 %v2792, 4294901760
        %3354 = vmatpush.msra.mxu0 %v3353
        %v3355 = vand.u32 %v795, 4294901760
        %3356 = vmatmul.f32.gmra.mxu0 %v3355
        %v3357 = vpop.f32.mrf.mxu0
        %v3358 = vadd.f32 %v3331, %v3357
        %v3359 = vand.u32 %v798, 4294901760
        %3360 = vmatmul.f32.gmra.mxu0 %v3359
        %v3361 = vpop.f32.mrf.mxu0
        %v3362 = vadd.f32 %v3335, %v3361
        %3363 = vdwg.mxu0
        %v3364 = vsub.f32 %v2978, %v3168
        %v3365 = vsub.f32 %v2982, %v3172
        %v3366 = vsub.f32 %v3358, %v2978
        %v3367 = vsub.f32 %v3362, %v2982
        %v3368 = vsub.f32 %v3366, %v3168
        %v3369 = vsub.f32 %v3367, %v3172
        %v3370 = vadd.f32 %v3364, %v3368
        %v3371 = vadd.f32 %v3365, %v3369
        %v3373 = vsel %vm401, %v3364, 0
        %v3376 = vsel %vm401, %v3365, 0
        %3378 = vmatpush.msra.mxu0 0.0
        %3379 = vmatpush.msra.mxu0 0.0
        %3380 = vmatpush.msra.mxu0 0.0
        %3381 = vmatpush.msra.mxu0 0.0
        %3382 = vmatpush.msra.mxu0 0.0
        %3383 = vmatpush.msra.mxu0 0.0
        %3384 = vmatpush.msra.mxu0 0.0
        %3385 = vmatpush.msra.mxu0 0.0
        %3386 = vmatpush.msra.mxu0 0.0
        %3387 = vmatpush.msra.mxu0 0.0
        %3388 = vmatpush.msra.mxu0 0.0
        %3389 = vmatpush.msra.mxu0 0.0
        %3390 = vmatpush.msra.mxu0 0.0
        %3391 = vmatpush.msra.mxu0 0.0
        %v3392 = vand.u32 %v389, 4294901760
        %3393 = vmatpush.msra.mxu0 %v3392
        %v3394 = vand.u32 %v388, 4294901760
        %3395 = vmatpush.msra.mxu0 %v3394
        %v3396 = vand.u32 %v3373, 4294901760
        %v3397 = vsub.f32 %v3373, %v3396
        %v3398 = vand.u32 %v3397, 4294901760
        %v3399 = vsub.f32 %v3397, %v3398
        %v3400 = vand.u32 %v3399, 4294901760
        %3401 = vmatmul.f32.gmra.mxu0 %v3400
        %v3402 = vpop.f32.mrf.mxu0
        %v3403 = vadd.f32 0.0, %v3402
        %v3404 = vand.u32 %v3376, 4294901760
        %v3405 = vsub.f32 %v3376, %v3404
        %v3406 = vand.u32 %v3405, 4294901760
        %v3407 = vsub.f32 %v3405, %v3406
        %v3408 = vand.u32 %v3407, 4294901760
        %3409 = vmatmul.f32.gmra.mxu0 %v3408
        %v3410 = vpop.f32.mrf.mxu0
        %v3411 = vadd.f32 0.0, %v3410
        %3412 = vdwg.mxu0
        %3413 = vmatpush.msra.mxu0 0.0
        %3414 = vmatpush.msra.mxu0 0.0
        %3415 = vmatpush.msra.mxu0 0.0
        %3416 = vmatpush.msra.mxu0 0.0
        %3417 = vmatpush.msra.mxu0 0.0
        %3418 = vmatpush.msra.mxu0 0.0
        %3419 = vmatpush.msra.mxu0 0.0
        %3420 = vmatpush.msra.mxu0 0.0
        %3421 = vmatpush.msra.mxu0 0.0
        %3422 = vmatpush.msra.mxu0 0.0
        %3423 = vmatpush.msra.mxu0 0.0
        %3424 = vmatpush.msra.mxu0 0.0
        %3425 = vmatpush.msra.mxu0 0.0
        %3426 = vmatpush.msra.mxu0 0.0
        %v3427 = vand.u32 %v389, 4294901760
        %v3428 = vsub.f32 %v389, %v3427
        %v3429 = vand.u32 %v3428, 4294901760
        %v3430 = vsub.f32 %v3428, %v3429
        %v3431 = vand.u32 %v3430, 4294901760
        %3432 = vmatpush.msra.mxu0 %v3431
        %v3433 = vand.u32 %v388, 4294901760
        %v3434 = vsub.f32 %v388, %v3433
        %v3435 = vand.u32 %v3434, 4294901760
        %v3436 = vsub.f32 %v3434, %v3435
        %v3437 = vand.u32 %v3436, 4294901760
        %3438 = vmatpush.msra.mxu0 %v3437
        %v3439 = vand.u32 %v3373, 4294901760
        %3440 = vmatmul.f32.gmra.mxu0 %v3439
        %v3441 = vpop.f32.mrf.mxu0
        %v3442 = vadd.f32 %v3403, %v3441
        %v3443 = vand.u32 %v3376, 4294901760
        %3444 = vmatmul.f32.gmra.mxu0 %v3443
        %v3445 = vpop.f32.mrf.mxu0
        %v3446 = vadd.f32 %v3411, %v3445
        %3447 = vdwg.mxu0
        %3448 = vmatpush.msra.mxu0 0.0
        %3449 = vmatpush.msra.mxu0 0.0
        %3450 = vmatpush.msra.mxu0 0.0
        %3451 = vmatpush.msra.mxu0 0.0
        %3452 = vmatpush.msra.mxu0 0.0
        %3453 = vmatpush.msra.mxu0 0.0
        %3454 = vmatpush.msra.mxu0 0.0
        %3455 = vmatpush.msra.mxu0 0.0
        %3456 = vmatpush.msra.mxu0 0.0
        %3457 = vmatpush.msra.mxu0 0.0
        %3458 = vmatpush.msra.mxu0 0.0
        %3459 = vmatpush.msra.mxu0 0.0
        %3460 = vmatpush.msra.mxu0 0.0
        %3461 = vmatpush.msra.mxu0 0.0
        %v3462 = vand.u32 %v389, 4294901760
        %v3463 = vsub.f32 %v389, %v3462
        %3464 = vmatpush.msra.mxu0 %v3463
        %v3465 = vand.u32 %v388, 4294901760
        %v3466 = vsub.f32 %v388, %v3465
        %3467 = vmatpush.msra.mxu0 %v3466
        %v3468 = vand.u32 %v3373, 4294901760
        %v3469 = vsub.f32 %v3373, %v3468
        %3470 = vmatmul.f32.gmra.mxu0 %v3469
        %v3471 = vpop.f32.mrf.mxu0
        %v3472 = vadd.f32 %v3442, %v3471
        %v3473 = vand.u32 %v3376, 4294901760
        %v3474 = vsub.f32 %v3376, %v3473
        %3475 = vmatmul.f32.gmra.mxu0 %v3474
        %v3476 = vpop.f32.mrf.mxu0
        %v3477 = vadd.f32 %v3446, %v3476
        %3478 = vdwg.mxu0
        %3479 = vmatpush.msra.mxu0 0.0
        %3480 = vmatpush.msra.mxu0 0.0
        %3481 = vmatpush.msra.mxu0 0.0
        %3482 = vmatpush.msra.mxu0 0.0
        %3483 = vmatpush.msra.mxu0 0.0
        %3484 = vmatpush.msra.mxu0 0.0
        %3485 = vmatpush.msra.mxu0 0.0
        %3486 = vmatpush.msra.mxu0 0.0
        %3487 = vmatpush.msra.mxu0 0.0
        %3488 = vmatpush.msra.mxu0 0.0
        %3489 = vmatpush.msra.mxu0 0.0
        %3490 = vmatpush.msra.mxu0 0.0
        %3491 = vmatpush.msra.mxu0 0.0
        %3492 = vmatpush.msra.mxu0 0.0
        %v3493 = vand.u32 %v389, 4294901760
        %3494 = vmatpush.msra.mxu0 %v3493
        %v3495 = vand.u32 %v388, 4294901760
        %3496 = vmatpush.msra.mxu0 %v3495
        %v3497 = vand.u32 %v3373, 4294901760
        %v3498 = vsub.f32 %v3373, %v3497
        %v3499 = vand.u32 %v3498, 4294901760
        %3500 = vmatmul.f32.gmra.mxu0 %v3499
        %v3501 = vpop.f32.mrf.mxu0
        %v3502 = vadd.f32 %v3472, %v3501
        %v3503 = vand.u32 %v3376, 4294901760
        %v3504 = vsub.f32 %v3376, %v3503
        %v3505 = vand.u32 %v3504, 4294901760
        %3506 = vmatmul.f32.gmra.mxu0 %v3505
        %v3507 = vpop.f32.mrf.mxu0
        %v3508 = vadd.f32 %v3477, %v3507
        %3509 = vdwg.mxu0
        %3510 = vmatpush.msra.mxu0 0.0
        %3511 = vmatpush.msra.mxu0 0.0
        %3512 = vmatpush.msra.mxu0 0.0
        %3513 = vmatpush.msra.mxu0 0.0
        %3514 = vmatpush.msra.mxu0 0.0
        %3515 = vmatpush.msra.mxu0 0.0
        %3516 = vmatpush.msra.mxu0 0.0
        %3517 = vmatpush.msra.mxu0 0.0
        %3518 = vmatpush.msra.mxu0 0.0
        %3519 = vmatpush.msra.mxu0 0.0
        %3520 = vmatpush.msra.mxu0 0.0
        %3521 = vmatpush.msra.mxu0 0.0
        %3522 = vmatpush.msra.mxu0 0.0
        %3523 = vmatpush.msra.mxu0 0.0
        %v3524 = vand.u32 %v389, 4294901760
        %v3525 = vsub.f32 %v389, %v3524
        %v3526 = vand.u32 %v3525, 4294901760
        %3527 = vmatpush.msra.mxu0 %v3526
        %v3528 = vand.u32 %v388, 4294901760
        %v3529 = vsub.f32 %v388, %v3528
        %v3530 = vand.u32 %v3529, 4294901760
        %3531 = vmatpush.msra.mxu0 %v3530
        %v3532 = vand.u32 %v3373, 4294901760
        %3533 = vmatmul.f32.gmra.mxu0 %v3532
        %v3534 = vpop.f32.mrf.mxu0
        %v3535 = vadd.f32 %v3502, %v3534
        %v3536 = vand.u32 %v3376, 4294901760
        %3537 = vmatmul.f32.gmra.mxu0 %v3536
        %v3538 = vpop.f32.mrf.mxu0
        %v3539 = vadd.f32 %v3508, %v3538
        %3540 = vdwg.mxu0
        %3541 = vmatpush.msra.mxu0 0.0
        %3542 = vmatpush.msra.mxu0 0.0
        %3543 = vmatpush.msra.mxu0 0.0
        %3544 = vmatpush.msra.mxu0 0.0
        %3545 = vmatpush.msra.mxu0 0.0
        %3546 = vmatpush.msra.mxu0 0.0
        %3547 = vmatpush.msra.mxu0 0.0
        %3548 = vmatpush.msra.mxu0 0.0
        %3549 = vmatpush.msra.mxu0 0.0
        %3550 = vmatpush.msra.mxu0 0.0
        %3551 = vmatpush.msra.mxu0 0.0
        %3552 = vmatpush.msra.mxu0 0.0
        %3553 = vmatpush.msra.mxu0 0.0
        %3554 = vmatpush.msra.mxu0 0.0
        %v3555 = vand.u32 %v389, 4294901760
        %3556 = vmatpush.msra.mxu0 %v3555
        %v3557 = vand.u32 %v388, 4294901760
        %3558 = vmatpush.msra.mxu0 %v3557
        %v3559 = vand.u32 %v3373, 4294901760
        %3560 = vmatmul.f32.gmra.mxu0 %v3559
        %v3561 = vpop.f32.mrf.mxu0
        %v3562 = vadd.f32 %v3535, %v3561
        %v3563 = vand.u32 %v3376, 4294901760
        %3564 = vmatmul.f32.gmra.mxu0 %v3563
        %v3565 = vpop.f32.mrf.mxu0
        %v3566 = vadd.f32 %v3539, %v3565
        %3567 = vdwg.mxu0
        %v3569 = vsel %vm401, %v3368, 0
        %v3572 = vsel %vm401, %v3369, 0
        %3574 = vmatpush.msra.mxu0 0.0
        %3575 = vmatpush.msra.mxu0 0.0
        %3576 = vmatpush.msra.mxu0 0.0
        %3577 = vmatpush.msra.mxu0 0.0
        %3578 = vmatpush.msra.mxu0 0.0
        %3579 = vmatpush.msra.mxu0 0.0
        %3580 = vmatpush.msra.mxu0 0.0
        %3581 = vmatpush.msra.mxu0 0.0
        %3582 = vmatpush.msra.mxu0 0.0
        %3583 = vmatpush.msra.mxu0 0.0
        %3584 = vmatpush.msra.mxu0 0.0
        %3585 = vmatpush.msra.mxu0 0.0
        %3586 = vmatpush.msra.mxu0 0.0
        %3587 = vmatpush.msra.mxu0 0.0
        %v3588 = vand.u32 %v391, 4294901760
        %3589 = vmatpush.msra.mxu0 %v3588
        %v3590 = vand.u32 %v390, 4294901760
        %3591 = vmatpush.msra.mxu0 %v3590
        %v3592 = vand.u32 %v3569, 4294901760
        %v3593 = vsub.f32 %v3569, %v3592
        %v3594 = vand.u32 %v3593, 4294901760
        %v3595 = vsub.f32 %v3593, %v3594
        %v3596 = vand.u32 %v3595, 4294901760
        %3597 = vmatmul.f32.gmra.mxu0 %v3596
        %v3598 = vpop.f32.mrf.mxu0
        %v3599 = vadd.f32 0.0, %v3598
        %v3600 = vand.u32 %v3572, 4294901760
        %v3601 = vsub.f32 %v3572, %v3600
        %v3602 = vand.u32 %v3601, 4294901760
        %v3603 = vsub.f32 %v3601, %v3602
        %v3604 = vand.u32 %v3603, 4294901760
        %3605 = vmatmul.f32.gmra.mxu0 %v3604
        %v3606 = vpop.f32.mrf.mxu0
        %v3607 = vadd.f32 0.0, %v3606
        %3608 = vdwg.mxu0
        %3609 = vmatpush.msra.mxu0 0.0
        %3610 = vmatpush.msra.mxu0 0.0
        %3611 = vmatpush.msra.mxu0 0.0
        %3612 = vmatpush.msra.mxu0 0.0
        %3613 = vmatpush.msra.mxu0 0.0
        %3614 = vmatpush.msra.mxu0 0.0
        %3615 = vmatpush.msra.mxu0 0.0
        %3616 = vmatpush.msra.mxu0 0.0
        %3617 = vmatpush.msra.mxu0 0.0
        %3618 = vmatpush.msra.mxu0 0.0
        %3619 = vmatpush.msra.mxu0 0.0
        %3620 = vmatpush.msra.mxu0 0.0
        %3621 = vmatpush.msra.mxu0 0.0
        %3622 = vmatpush.msra.mxu0 0.0
        %v3623 = vand.u32 %v391, 4294901760
        %v3624 = vsub.f32 %v391, %v3623
        %v3625 = vand.u32 %v3624, 4294901760
        %v3626 = vsub.f32 %v3624, %v3625
        %v3627 = vand.u32 %v3626, 4294901760
        %3628 = vmatpush.msra.mxu0 %v3627
        %v3629 = vand.u32 %v390, 4294901760
        %v3630 = vsub.f32 %v390, %v3629
        %v3631 = vand.u32 %v3630, 4294901760
        %v3632 = vsub.f32 %v3630, %v3631
        %v3633 = vand.u32 %v3632, 4294901760
        %3634 = vmatpush.msra.mxu0 %v3633
        %v3635 = vand.u32 %v3569, 4294901760
        %3636 = vmatmul.f32.gmra.mxu0 %v3635
        %v3637 = vpop.f32.mrf.mxu0
        %v3638 = vadd.f32 %v3599, %v3637
        %v3639 = vand.u32 %v3572, 4294901760
        %3640 = vmatmul.f32.gmra.mxu0 %v3639
        %v3641 = vpop.f32.mrf.mxu0
        %v3642 = vadd.f32 %v3607, %v3641
        %3643 = vdwg.mxu0
        %3644 = vmatpush.msra.mxu0 0.0
        %3645 = vmatpush.msra.mxu0 0.0
        %3646 = vmatpush.msra.mxu0 0.0
        %3647 = vmatpush.msra.mxu0 0.0
        %3648 = vmatpush.msra.mxu0 0.0
        %3649 = vmatpush.msra.mxu0 0.0
        %3650 = vmatpush.msra.mxu0 0.0
        %3651 = vmatpush.msra.mxu0 0.0
        %3652 = vmatpush.msra.mxu0 0.0
        %3653 = vmatpush.msra.mxu0 0.0
        %3654 = vmatpush.msra.mxu0 0.0
        %3655 = vmatpush.msra.mxu0 0.0
        %3656 = vmatpush.msra.mxu0 0.0
        %3657 = vmatpush.msra.mxu0 0.0
        %v3658 = vand.u32 %v391, 4294901760
        %v3659 = vsub.f32 %v391, %v3658
        %3660 = vmatpush.msra.mxu0 %v3659
        %v3661 = vand.u32 %v390, 4294901760
        %v3662 = vsub.f32 %v390, %v3661
        %3663 = vmatpush.msra.mxu0 %v3662
        %v3664 = vand.u32 %v3569, 4294901760
        %v3665 = vsub.f32 %v3569, %v3664
        %3666 = vmatmul.f32.gmra.mxu0 %v3665
        %v3667 = vpop.f32.mrf.mxu0
        %v3668 = vadd.f32 %v3638, %v3667
        %v3669 = vand.u32 %v3572, 4294901760
        %v3670 = vsub.f32 %v3572, %v3669
        %3671 = vmatmul.f32.gmra.mxu0 %v3670
        %v3672 = vpop.f32.mrf.mxu0
        %v3673 = vadd.f32 %v3642, %v3672
        %3674 = vdwg.mxu0
        %3675 = vmatpush.msra.mxu0 0.0
        %3676 = vmatpush.msra.mxu0 0.0
        %3677 = vmatpush.msra.mxu0 0.0
        %3678 = vmatpush.msra.mxu0 0.0
        %3679 = vmatpush.msra.mxu0 0.0
        %3680 = vmatpush.msra.mxu0 0.0
        %3681 = vmatpush.msra.mxu0 0.0
        %3682 = vmatpush.msra.mxu0 0.0
        %3683 = vmatpush.msra.mxu0 0.0
        %3684 = vmatpush.msra.mxu0 0.0
        %3685 = vmatpush.msra.mxu0 0.0
        %3686 = vmatpush.msra.mxu0 0.0
        %3687 = vmatpush.msra.mxu0 0.0
        %3688 = vmatpush.msra.mxu0 0.0
        %v3689 = vand.u32 %v391, 4294901760
        %3690 = vmatpush.msra.mxu0 %v3689
        %v3691 = vand.u32 %v390, 4294901760
        %3692 = vmatpush.msra.mxu0 %v3691
        %v3693 = vand.u32 %v3569, 4294901760
        %v3694 = vsub.f32 %v3569, %v3693
        %v3695 = vand.u32 %v3694, 4294901760
        %3696 = vmatmul.f32.gmra.mxu0 %v3695
        %v3697 = vpop.f32.mrf.mxu0
        %v3698 = vadd.f32 %v3668, %v3697
        %v3699 = vand.u32 %v3572, 4294901760
        %v3700 = vsub.f32 %v3572, %v3699
        %v3701 = vand.u32 %v3700, 4294901760
        %3702 = vmatmul.f32.gmra.mxu0 %v3701
        %v3703 = vpop.f32.mrf.mxu0
        %v3704 = vadd.f32 %v3673, %v3703
        %3705 = vdwg.mxu0
        %3706 = vmatpush.msra.mxu0 0.0
        %3707 = vmatpush.msra.mxu0 0.0
        %3708 = vmatpush.msra.mxu0 0.0
        %3709 = vmatpush.msra.mxu0 0.0
        %3710 = vmatpush.msra.mxu0 0.0
        %3711 = vmatpush.msra.mxu0 0.0
        %3712 = vmatpush.msra.mxu0 0.0
        %3713 = vmatpush.msra.mxu0 0.0
        %3714 = vmatpush.msra.mxu0 0.0
        %3715 = vmatpush.msra.mxu0 0.0
        %3716 = vmatpush.msra.mxu0 0.0
        %3717 = vmatpush.msra.mxu0 0.0
        %3718 = vmatpush.msra.mxu0 0.0
        %3719 = vmatpush.msra.mxu0 0.0
        %v3720 = vand.u32 %v391, 4294901760
        %v3721 = vsub.f32 %v391, %v3720
        %v3722 = vand.u32 %v3721, 4294901760
        %3723 = vmatpush.msra.mxu0 %v3722
        %v3724 = vand.u32 %v390, 4294901760
        %v3725 = vsub.f32 %v390, %v3724
        %v3726 = vand.u32 %v3725, 4294901760
        %3727 = vmatpush.msra.mxu0 %v3726
        %v3728 = vand.u32 %v3569, 4294901760
        %3729 = vmatmul.f32.gmra.mxu0 %v3728
        %v3730 = vpop.f32.mrf.mxu0
        %v3731 = vadd.f32 %v3698, %v3730
        %v3732 = vand.u32 %v3572, 4294901760
        %3733 = vmatmul.f32.gmra.mxu0 %v3732
        %v3734 = vpop.f32.mrf.mxu0
        %v3735 = vadd.f32 %v3704, %v3734
        %3736 = vdwg.mxu0
        %3737 = vmatpush.msra.mxu0 0.0
        %3738 = vmatpush.msra.mxu0 0.0
        %3739 = vmatpush.msra.mxu0 0.0
        %3740 = vmatpush.msra.mxu0 0.0
        %3741 = vmatpush.msra.mxu0 0.0
        %3742 = vmatpush.msra.mxu0 0.0
        %3743 = vmatpush.msra.mxu0 0.0
        %3744 = vmatpush.msra.mxu0 0.0
        %3745 = vmatpush.msra.mxu0 0.0
        %3746 = vmatpush.msra.mxu0 0.0
        %3747 = vmatpush.msra.mxu0 0.0
        %3748 = vmatpush.msra.mxu0 0.0
        %3749 = vmatpush.msra.mxu0 0.0
        %3750 = vmatpush.msra.mxu0 0.0
        %v3751 = vand.u32 %v391, 4294901760
        %3752 = vmatpush.msra.mxu0 %v3751
        %v3753 = vand.u32 %v390, 4294901760
        %3754 = vmatpush.msra.mxu0 %v3753
        %v3755 = vand.u32 %v3569, 4294901760
        %3756 = vmatmul.f32.gmra.mxu0 %v3755
        %v3757 = vpop.f32.mrf.mxu0
        %v3758 = vadd.f32 %v3731, %v3757
        %v3759 = vand.u32 %v3572, 4294901760
        %3760 = vmatmul.f32.gmra.mxu0 %v3759
        %v3761 = vpop.f32.mrf.mxu0
        %v3762 = vadd.f32 %v3735, %v3761
        %3763 = vdwg.mxu0
        %v3765 = vsel %vm401, %v3370, 0
        %v3768 = vsel %vm401, %v3371, 0
        %3770 = vmatpush.msra.mxu0 0.0
        %3771 = vmatpush.msra.mxu0 0.0
        %3772 = vmatpush.msra.mxu0 0.0
        %3773 = vmatpush.msra.mxu0 0.0
        %3774 = vmatpush.msra.mxu0 0.0
        %3775 = vmatpush.msra.mxu0 0.0
        %3776 = vmatpush.msra.mxu0 0.0
        %3777 = vmatpush.msra.mxu0 0.0
        %3778 = vmatpush.msra.mxu0 0.0
        %3779 = vmatpush.msra.mxu0 0.0
        %3780 = vmatpush.msra.mxu0 0.0
        %3781 = vmatpush.msra.mxu0 0.0
        %3782 = vmatpush.msra.mxu0 0.0
        %3783 = vmatpush.msra.mxu0 0.0
        %v3784 = vand.u32 %v393, 4294901760
        %3785 = vmatpush.msra.mxu0 %v3784
        %v3786 = vand.u32 %v392, 4294901760
        %3787 = vmatpush.msra.mxu0 %v3786
        %v3788 = vand.u32 %v3765, 4294901760
        %v3789 = vsub.f32 %v3765, %v3788
        %v3790 = vand.u32 %v3789, 4294901760
        %v3791 = vsub.f32 %v3789, %v3790
        %v3792 = vand.u32 %v3791, 4294901760
        %3793 = vmatmul.f32.gmra.mxu0 %v3792
        %v3794 = vpop.f32.mrf.mxu0
        %v3795 = vadd.f32 0.0, %v3794
        %v3796 = vand.u32 %v3768, 4294901760
        %v3797 = vsub.f32 %v3768, %v3796
        %v3798 = vand.u32 %v3797, 4294901760
        %v3799 = vsub.f32 %v3797, %v3798
        %v3800 = vand.u32 %v3799, 4294901760
        %3801 = vmatmul.f32.gmra.mxu0 %v3800
        %v3802 = vpop.f32.mrf.mxu0
        %v3803 = vadd.f32 0.0, %v3802
        %3804 = vdwg.mxu0
        %3805 = vmatpush.msra.mxu0 0.0
        %3806 = vmatpush.msra.mxu0 0.0
        %3807 = vmatpush.msra.mxu0 0.0
        %3808 = vmatpush.msra.mxu0 0.0
        %3809 = vmatpush.msra.mxu0 0.0
        %3810 = vmatpush.msra.mxu0 0.0
        %3811 = vmatpush.msra.mxu0 0.0
        %3812 = vmatpush.msra.mxu0 0.0
        %3813 = vmatpush.msra.mxu0 0.0
        %3814 = vmatpush.msra.mxu0 0.0
        %3815 = vmatpush.msra.mxu0 0.0
        %3816 = vmatpush.msra.mxu0 0.0
        %3817 = vmatpush.msra.mxu0 0.0
        %3818 = vmatpush.msra.mxu0 0.0
        %v3819 = vand.u32 %v393, 4294901760
        %v3820 = vsub.f32 %v393, %v3819
        %v3821 = vand.u32 %v3820, 4294901760
        %v3822 = vsub.f32 %v3820, %v3821
        %v3823 = vand.u32 %v3822, 4294901760
        %3824 = vmatpush.msra.mxu0 %v3823
        %v3825 = vand.u32 %v392, 4294901760
        %v3826 = vsub.f32 %v392, %v3825
        %v3827 = vand.u32 %v3826, 4294901760
        %v3828 = vsub.f32 %v3826, %v3827
        %v3829 = vand.u32 %v3828, 4294901760
        %3830 = vmatpush.msra.mxu0 %v3829
        %v3831 = vand.u32 %v3765, 4294901760
        %3832 = vmatmul.f32.gmra.mxu0 %v3831
        %v3833 = vpop.f32.mrf.mxu0
        %v3834 = vadd.f32 %v3795, %v3833
        %v3835 = vand.u32 %v3768, 4294901760
        %3836 = vmatmul.f32.gmra.mxu0 %v3835
        %v3837 = vpop.f32.mrf.mxu0
        %v3838 = vadd.f32 %v3803, %v3837
        %3839 = vdwg.mxu0
        %3840 = vmatpush.msra.mxu0 0.0
        %3841 = vmatpush.msra.mxu0 0.0
        %3842 = vmatpush.msra.mxu0 0.0
        %3843 = vmatpush.msra.mxu0 0.0
        %3844 = vmatpush.msra.mxu0 0.0
        %3845 = vmatpush.msra.mxu0 0.0
        %3846 = vmatpush.msra.mxu0 0.0
        %3847 = vmatpush.msra.mxu0 0.0
        %3848 = vmatpush.msra.mxu0 0.0
        %3849 = vmatpush.msra.mxu0 0.0
        %3850 = vmatpush.msra.mxu0 0.0
        %3851 = vmatpush.msra.mxu0 0.0
        %3852 = vmatpush.msra.mxu0 0.0
        %3853 = vmatpush.msra.mxu0 0.0
        %v3854 = vand.u32 %v393, 4294901760
        %v3855 = vsub.f32 %v393, %v3854
        %3856 = vmatpush.msra.mxu0 %v3855
        %v3857 = vand.u32 %v392, 4294901760
        %v3858 = vsub.f32 %v392, %v3857
        %3859 = vmatpush.msra.mxu0 %v3858
        %v3860 = vand.u32 %v3765, 4294901760
        %v3861 = vsub.f32 %v3765, %v3860
        %3862 = vmatmul.f32.gmra.mxu0 %v3861
        %v3863 = vpop.f32.mrf.mxu0
        %v3864 = vadd.f32 %v3834, %v3863
        %v3865 = vand.u32 %v3768, 4294901760
        %v3866 = vsub.f32 %v3768, %v3865
        %3867 = vmatmul.f32.gmra.mxu0 %v3866
        %v3868 = vpop.f32.mrf.mxu0
        %v3869 = vadd.f32 %v3838, %v3868
        %3870 = vdwg.mxu0
        %3871 = vmatpush.msra.mxu0 0.0
        %3872 = vmatpush.msra.mxu0 0.0
        %3873 = vmatpush.msra.mxu0 0.0
        %3874 = vmatpush.msra.mxu0 0.0
        %3875 = vmatpush.msra.mxu0 0.0
        %3876 = vmatpush.msra.mxu0 0.0
        %3877 = vmatpush.msra.mxu0 0.0
        %3878 = vmatpush.msra.mxu0 0.0
        %3879 = vmatpush.msra.mxu0 0.0
        %3880 = vmatpush.msra.mxu0 0.0
        %3881 = vmatpush.msra.mxu0 0.0
        %3882 = vmatpush.msra.mxu0 0.0
        %3883 = vmatpush.msra.mxu0 0.0
        %3884 = vmatpush.msra.mxu0 0.0
        %v3885 = vand.u32 %v393, 4294901760
        %3886 = vmatpush.msra.mxu0 %v3885
        %v3887 = vand.u32 %v392, 4294901760
        %3888 = vmatpush.msra.mxu0 %v3887
        %v3889 = vand.u32 %v3765, 4294901760
        %v3890 = vsub.f32 %v3765, %v3889
        %v3891 = vand.u32 %v3890, 4294901760
        %3892 = vmatmul.f32.gmra.mxu0 %v3891
        %v3893 = vpop.f32.mrf.mxu0
        %v3894 = vadd.f32 %v3864, %v3893
        %v3895 = vand.u32 %v3768, 4294901760
        %v3896 = vsub.f32 %v3768, %v3895
        %v3897 = vand.u32 %v3896, 4294901760
        %3898 = vmatmul.f32.gmra.mxu0 %v3897
        %v3899 = vpop.f32.mrf.mxu0
        %v3900 = vadd.f32 %v3869, %v3899
        %3901 = vdwg.mxu0
        %3902 = vmatpush.msra.mxu0 0.0
        %3903 = vmatpush.msra.mxu0 0.0
        %3904 = vmatpush.msra.mxu0 0.0
        %3905 = vmatpush.msra.mxu0 0.0
        %3906 = vmatpush.msra.mxu0 0.0
        %3907 = vmatpush.msra.mxu0 0.0
        %3908 = vmatpush.msra.mxu0 0.0
        %3909 = vmatpush.msra.mxu0 0.0
        %3910 = vmatpush.msra.mxu0 0.0
        %3911 = vmatpush.msra.mxu0 0.0
        %3912 = vmatpush.msra.mxu0 0.0
        %3913 = vmatpush.msra.mxu0 0.0
        %3914 = vmatpush.msra.mxu0 0.0
        %3915 = vmatpush.msra.mxu0 0.0
        %v3916 = vand.u32 %v393, 4294901760
        %v3917 = vsub.f32 %v393, %v3916
        %v3918 = vand.u32 %v3917, 4294901760
        %3919 = vmatpush.msra.mxu0 %v3918
        %v3920 = vand.u32 %v392, 4294901760
        %v3921 = vsub.f32 %v392, %v3920
        %v3922 = vand.u32 %v3921, 4294901760
        %3923 = vmatpush.msra.mxu0 %v3922
        %v3924 = vand.u32 %v3765, 4294901760
        %3925 = vmatmul.f32.gmra.mxu0 %v3924
        %v3926 = vpop.f32.mrf.mxu0
        %v3927 = vadd.f32 %v3894, %v3926
        %v3928 = vand.u32 %v3768, 4294901760
        %3929 = vmatmul.f32.gmra.mxu0 %v3928
        %v3930 = vpop.f32.mrf.mxu0
        %v3931 = vadd.f32 %v3900, %v3930
        %3932 = vdwg.mxu0
        %3933 = vmatpush.msra.mxu0 0.0
        %3934 = vmatpush.msra.mxu0 0.0
        %3935 = vmatpush.msra.mxu0 0.0
        %3936 = vmatpush.msra.mxu0 0.0
        %3937 = vmatpush.msra.mxu0 0.0
        %3938 = vmatpush.msra.mxu0 0.0
        %3939 = vmatpush.msra.mxu0 0.0
        %3940 = vmatpush.msra.mxu0 0.0
        %3941 = vmatpush.msra.mxu0 0.0
        %3942 = vmatpush.msra.mxu0 0.0
        %3943 = vmatpush.msra.mxu0 0.0
        %3944 = vmatpush.msra.mxu0 0.0
        %3945 = vmatpush.msra.mxu0 0.0
        %3946 = vmatpush.msra.mxu0 0.0
        %v3947 = vand.u32 %v393, 4294901760
        %3948 = vmatpush.msra.mxu0 %v3947
        %v3949 = vand.u32 %v392, 4294901760
        %3950 = vmatpush.msra.mxu0 %v3949
        %v3951 = vand.u32 %v3765, 4294901760
        %3952 = vmatmul.f32.gmra.mxu0 %v3951
        %v3953 = vpop.f32.mrf.mxu0
        %v3954 = vadd.f32 %v3927, %v3953
        %v3955 = vand.u32 %v3768, 4294901760
        %3956 = vmatmul.f32.gmra.mxu0 %v3955
        %v3957 = vpop.f32.mrf.mxu0
        %v3958 = vadd.f32 %v3931, %v3957
        %3959 = vdwg.mxu0
        %v3960 = vsub.f32 %v3562, %v3758
        %v3961 = vsub.f32 %v3566, %v3762
        %v3962 = vsub.f32 %v3954, %v3562
        %v3963 = vsub.f32 %v3958, %v3566
        %v3964 = vsub.f32 %v3962, %v3758
        %v3965 = vsub.f32 %v3963, %v3762
        %v3966 = vmul.f32 %v3960, %v3960
        %v3967 = vmul.f32 %v3961, %v3961
        %v3968 = vmul.f32 %v3964, %v3964
        %v3969 = vmul.f32 %v3965, %v3965
        %v3970 = vadd.f32 %v3966, %v3968
        %v3971 = vadd.f32 %v3967, %v3969
        %v3972 = vadd.f32 %v2784, %v3970
        %v3973 = vadd.f32 %v2785, %v3971
        %s3974 = scalar_lea.vmem %s330, 48 [#allocation2]
        %v3975 = vld [vmem:[%s3974] sm:$0xff]
        %v3976 = vld [vmem:[%s3974 + $0x8] sm:$0xff]
        %s3977 = scalar_lea.vmem %s330, 112 [#allocation2]
        %v3978 = vld [vmem:[%s3977] sm:$0xff]
        %v3979 = vld [vmem:[%s3977 + $0x8] sm:$0xff]
        %v3980 = vadd.f32 %v3975, %v3978
        %v3981 = vadd.f32 %v3976, %v3979
        %3982 = vmatpush.msra.mxu0 0.0
        %3983 = vmatpush.msra.mxu0 0.0
        %3984 = vmatpush.msra.mxu0 0.0
        %3985 = vmatpush.msra.mxu0 0.0
        %3986 = vmatpush.msra.mxu0 0.0
        %3987 = vmatpush.msra.mxu0 0.0
        %3988 = vmatpush.msra.mxu0 0.0
        %3989 = vmatpush.msra.mxu0 0.0
        %3990 = vmatpush.msra.mxu0 0.0
        %3991 = vmatpush.msra.mxu0 0.0
        %3992 = vmatpush.msra.mxu0 0.0
        %3993 = vmatpush.msra.mxu0 0.0
        %3994 = vmatpush.msra.mxu0 0.0
        %3995 = vmatpush.msra.mxu0 0.0
        %v3996 = vand.u32 %v3976, 4294901760
        %3997 = vmatpush.msra.mxu0 %v3996
        %v3998 = vand.u32 %v3975, 4294901760
        %3999 = vmatpush.msra.mxu0 %v3998
        %v4000 = vand.u32 %v403, 4294901760
        %v4001 = vsub.f32 %v403, %v4000
        %v4002 = vand.u32 %v4001, 4294901760
        %v4003 = vsub.f32 %v4001, %v4002
        %v4004 = vand.u32 %v4003, 4294901760
        %4005 = vmatmul.f32.gmra.mxu0 %v4004
        %v4006 = vpop.f32.mrf.mxu0
        %v4007 = vadd.f32 0.0, %v4006
        %v4008 = vand.u32 %v406, 4294901760
        %v4009 = vsub.f32 %v406, %v4008
        %v4010 = vand.u32 %v4009, 4294901760
        %v4011 = vsub.f32 %v4009, %v4010
        %v4012 = vand.u32 %v4011, 4294901760
        %4013 = vmatmul.f32.gmra.mxu0 %v4012
        %v4014 = vpop.f32.mrf.mxu0
        %v4015 = vadd.f32 0.0, %v4014
        %4016 = vdwg.mxu0
        %4017 = vmatpush.msra.mxu0 0.0
        %4018 = vmatpush.msra.mxu0 0.0
        %4019 = vmatpush.msra.mxu0 0.0
        %4020 = vmatpush.msra.mxu0 0.0
        %4021 = vmatpush.msra.mxu0 0.0
        %4022 = vmatpush.msra.mxu0 0.0
        %4023 = vmatpush.msra.mxu0 0.0
        %4024 = vmatpush.msra.mxu0 0.0
        %4025 = vmatpush.msra.mxu0 0.0
        %4026 = vmatpush.msra.mxu0 0.0
        %4027 = vmatpush.msra.mxu0 0.0
        %4028 = vmatpush.msra.mxu0 0.0
        %4029 = vmatpush.msra.mxu0 0.0
        %4030 = vmatpush.msra.mxu0 0.0
        %v4031 = vand.u32 %v3976, 4294901760
        %v4032 = vsub.f32 %v3976, %v4031
        %v4033 = vand.u32 %v4032, 4294901760
        %v4034 = vsub.f32 %v4032, %v4033
        %v4035 = vand.u32 %v4034, 4294901760
        %4036 = vmatpush.msra.mxu0 %v4035
        %v4037 = vand.u32 %v3975, 4294901760
        %v4038 = vsub.f32 %v3975, %v4037
        %v4039 = vand.u32 %v4038, 4294901760
        %v4040 = vsub.f32 %v4038, %v4039
        %v4041 = vand.u32 %v4040, 4294901760
        %4042 = vmatpush.msra.mxu0 %v4041
        %v4043 = vand.u32 %v403, 4294901760
        %4044 = vmatmul.f32.gmra.mxu0 %v4043
        %v4045 = vpop.f32.mrf.mxu0
        %v4046 = vadd.f32 %v4007, %v4045
        %v4047 = vand.u32 %v406, 4294901760
        %4048 = vmatmul.f32.gmra.mxu0 %v4047
        %v4049 = vpop.f32.mrf.mxu0
        %v4050 = vadd.f32 %v4015, %v4049
        %4051 = vdwg.mxu0
        %4052 = vmatpush.msra.mxu0 0.0
        %4053 = vmatpush.msra.mxu0 0.0
        %4054 = vmatpush.msra.mxu0 0.0
        %4055 = vmatpush.msra.mxu0 0.0
        %4056 = vmatpush.msra.mxu0 0.0
        %4057 = vmatpush.msra.mxu0 0.0
        %4058 = vmatpush.msra.mxu0 0.0
        %4059 = vmatpush.msra.mxu0 0.0
        %4060 = vmatpush.msra.mxu0 0.0
        %4061 = vmatpush.msra.mxu0 0.0
        %4062 = vmatpush.msra.mxu0 0.0
        %4063 = vmatpush.msra.mxu0 0.0
        %4064 = vmatpush.msra.mxu0 0.0
        %4065 = vmatpush.msra.mxu0 0.0
        %v4066 = vand.u32 %v3976, 4294901760
        %v4067 = vsub.f32 %v3976, %v4066
        %4068 = vmatpush.msra.mxu0 %v4067
        %v4069 = vand.u32 %v3975, 4294901760
        %v4070 = vsub.f32 %v3975, %v4069
        %4071 = vmatpush.msra.mxu0 %v4070
        %v4072 = vand.u32 %v403, 4294901760
        %v4073 = vsub.f32 %v403, %v4072
        %4074 = vmatmul.f32.gmra.mxu0 %v4073
        %v4075 = vpop.f32.mrf.mxu0
        %v4076 = vadd.f32 %v4046, %v4075
        %v4077 = vand.u32 %v406, 4294901760
        %v4078 = vsub.f32 %v406, %v4077
        %4079 = vmatmul.f32.gmra.mxu0 %v4078
        %v4080 = vpop.f32.mrf.mxu0
        %v4081 = vadd.f32 %v4050, %v4080
        %4082 = vdwg.mxu0
        %4083 = vmatpush.msra.mxu0 0.0
        %4084 = vmatpush.msra.mxu0 0.0
        %4085 = vmatpush.msra.mxu0 0.0
        %4086 = vmatpush.msra.mxu0 0.0
        %4087 = vmatpush.msra.mxu0 0.0
        %4088 = vmatpush.msra.mxu0 0.0
        %4089 = vmatpush.msra.mxu0 0.0
        %4090 = vmatpush.msra.mxu0 0.0
        %4091 = vmatpush.msra.mxu0 0.0
        %4092 = vmatpush.msra.mxu0 0.0
        %4093 = vmatpush.msra.mxu0 0.0
        %4094 = vmatpush.msra.mxu0 0.0
        %4095 = vmatpush.msra.mxu0 0.0
        %4096 = vmatpush.msra.mxu0 0.0
        %v4097 = vand.u32 %v3976, 4294901760
        %4098 = vmatpush.msra.mxu0 %v4097
        %v4099 = vand.u32 %v3975, 4294901760
        %4100 = vmatpush.msra.mxu0 %v4099
        %v4101 = vand.u32 %v403, 4294901760
        %v4102 = vsub.f32 %v403, %v4101
        %v4103 = vand.u32 %v4102, 4294901760
        %4104 = vmatmul.f32.gmra.mxu0 %v4103
        %v4105 = vpop.f32.mrf.mxu0
        %v4106 = vadd.f32 %v4076, %v4105
        %v4107 = vand.u32 %v406, 4294901760
        %v4108 = vsub.f32 %v406, %v4107
        %v4109 = vand.u32 %v4108, 4294901760
        %4110 = vmatmul.f32.gmra.mxu0 %v4109
        %v4111 = vpop.f32.mrf.mxu0
        %v4112 = vadd.f32 %v4081, %v4111
        %4113 = vdwg.mxu0
        %4114 = vmatpush.msra.mxu0 0.0
        %4115 = vmatpush.msra.mxu0 0.0
        %4116 = vmatpush.msra.mxu0 0.0
        %4117 = vmatpush.msra.mxu0 0.0
        %4118 = vmatpush.msra.mxu0 0.0
        %4119 = vmatpush.msra.mxu0 0.0
        %4120 = vmatpush.msra.mxu0 0.0
        %4121 = vmatpush.msra.mxu0 0.0
        %4122 = vmatpush.msra.mxu0 0.0
        %4123 = vmatpush.msra.mxu0 0.0
        %4124 = vmatpush.msra.mxu0 0.0
        %4125 = vmatpush.msra.mxu0 0.0
        %4126 = vmatpush.msra.mxu0 0.0
        %4127 = vmatpush.msra.mxu0 0.0
        %v4128 = vand.u32 %v3976, 4294901760
        %v4129 = vsub.f32 %v3976, %v4128
        %v4130 = vand.u32 %v4129, 4294901760
        %4131 = vmatpush.msra.mxu0 %v4130
        %v4132 = vand.u32 %v3975, 4294901760
        %v4133 = vsub.f32 %v3975, %v4132
        %v4134 = vand.u32 %v4133, 4294901760
        %4135 = vmatpush.msra.mxu0 %v4134
        %v4136 = vand.u32 %v403, 4294901760
        %4137 = vmatmul.f32.gmra.mxu0 %v4136
        %v4138 = vpop.f32.mrf.mxu0
        %v4139 = vadd.f32 %v4106, %v4138
        %v4140 = vand.u32 %v406, 4294901760
        %4141 = vmatmul.f32.gmra.mxu0 %v4140
        %v4142 = vpop.f32.mrf.mxu0
        %v4143 = vadd.f32 %v4112, %v4142
        %4144 = vdwg.mxu0
        %4145 = vmatpush.msra.mxu0 0.0
        %4146 = vmatpush.msra.mxu0 0.0
        %4147 = vmatpush.msra.mxu0 0.0
        %4148 = vmatpush.msra.mxu0 0.0
        %4149 = vmatpush.msra.mxu0 0.0
        %4150 = vmatpush.msra.mxu0 0.0
        %4151 = vmatpush.msra.mxu0 0.0
        %4152 = vmatpush.msra.mxu0 0.0
        %4153 = vmatpush.msra.mxu0 0.0
        %4154 = vmatpush.msra.mxu0 0.0
        %4155 = vmatpush.msra.mxu0 0.0
        %4156 = vmatpush.msra.mxu0 0.0
        %4157 = vmatpush.msra.mxu0 0.0
        %4158 = vmatpush.msra.mxu0 0.0
        %v4159 = vand.u32 %v3976, 4294901760
        %4160 = vmatpush.msra.mxu0 %v4159
        %v4161 = vand.u32 %v3975, 4294901760
        %4162 = vmatpush.msra.mxu0 %v4161
        %v4163 = vand.u32 %v403, 4294901760
        %4164 = vmatmul.f32.gmra.mxu0 %v4163
        %v4165 = vpop.f32.mrf.mxu0
        %v4166 = vadd.f32 %v4139, %v4165
        %v4167 = vand.u32 %v406, 4294901760
        %4168 = vmatmul.f32.gmra.mxu0 %v4167
        %v4169 = vpop.f32.mrf.mxu0
        %v4170 = vadd.f32 %v4143, %v4169
        %4171 = vdwg.mxu0
        %4172 = vmatpush.msra.mxu0 0.0
        %4173 = vmatpush.msra.mxu0 0.0
        %4174 = vmatpush.msra.mxu0 0.0
        %4175 = vmatpush.msra.mxu0 0.0
        %4176 = vmatpush.msra.mxu0 0.0
        %4177 = vmatpush.msra.mxu0 0.0
        %4178 = vmatpush.msra.mxu0 0.0
        %4179 = vmatpush.msra.mxu0 0.0
        %4180 = vmatpush.msra.mxu0 0.0
        %4181 = vmatpush.msra.mxu0 0.0
        %4182 = vmatpush.msra.mxu0 0.0
        %4183 = vmatpush.msra.mxu0 0.0
        %4184 = vmatpush.msra.mxu0 0.0
        %4185 = vmatpush.msra.mxu0 0.0
        %v4186 = vand.u32 %v3979, 4294901760
        %4187 = vmatpush.msra.mxu0 %v4186
        %v4188 = vand.u32 %v3978, 4294901760
        %4189 = vmatpush.msra.mxu0 %v4188
        %v4190 = vand.u32 %v599, 4294901760
        %v4191 = vsub.f32 %v599, %v4190
        %v4192 = vand.u32 %v4191, 4294901760
        %v4193 = vsub.f32 %v4191, %v4192
        %v4194 = vand.u32 %v4193, 4294901760
        %4195 = vmatmul.f32.gmra.mxu0 %v4194
        %v4196 = vpop.f32.mrf.mxu0
        %v4197 = vadd.f32 0.0, %v4196
        %v4198 = vand.u32 %v602, 4294901760
        %v4199 = vsub.f32 %v602, %v4198
        %v4200 = vand.u32 %v4199, 4294901760
        %v4201 = vsub.f32 %v4199, %v4200
        %v4202 = vand.u32 %v4201, 4294901760
        %4203 = vmatmul.f32.gmra.mxu0 %v4202
        %v4204 = vpop.f32.mrf.mxu0
        %v4205 = vadd.f32 0.0, %v4204
        %4206 = vdwg.mxu0
        %4207 = vmatpush.msra.mxu0 0.0
        %4208 = vmatpush.msra.mxu0 0.0
        %4209 = vmatpush.msra.mxu0 0.0
        %4210 = vmatpush.msra.mxu0 0.0
        %4211 = vmatpush.msra.mxu0 0.0
        %4212 = vmatpush.msra.mxu0 0.0
        %4213 = vmatpush.msra.mxu0 0.0
        %4214 = vmatpush.msra.mxu0 0.0
        %4215 = vmatpush.msra.mxu0 0.0
        %4216 = vmatpush.msra.mxu0 0.0
        %4217 = vmatpush.msra.mxu0 0.0
        %4218 = vmatpush.msra.mxu0 0.0
        %4219 = vmatpush.msra.mxu0 0.0
        %4220 = vmatpush.msra.mxu0 0.0
        %v4221 = vand.u32 %v3979, 4294901760
        %v4222 = vsub.f32 %v3979, %v4221
        %v4223 = vand.u32 %v4222, 4294901760
        %v4224 = vsub.f32 %v4222, %v4223
        %v4225 = vand.u32 %v4224, 4294901760
        %4226 = vmatpush.msra.mxu0 %v4225
        %v4227 = vand.u32 %v3978, 4294901760
        %v4228 = vsub.f32 %v3978, %v4227
        %v4229 = vand.u32 %v4228, 4294901760
        %v4230 = vsub.f32 %v4228, %v4229
        %v4231 = vand.u32 %v4230, 4294901760
        %4232 = vmatpush.msra.mxu0 %v4231
        %v4233 = vand.u32 %v599, 4294901760
        %4234 = vmatmul.f32.gmra.mxu0 %v4233
        %v4235 = vpop.f32.mrf.mxu0
        %v4236 = vadd.f32 %v4197, %v4235
        %v4237 = vand.u32 %v602, 4294901760
        %4238 = vmatmul.f32.gmra.mxu0 %v4237
        %v4239 = vpop.f32.mrf.mxu0
        %v4240 = vadd.f32 %v4205, %v4239
        %4241 = vdwg.mxu0
        %4242 = vmatpush.msra.mxu0 0.0
        %4243 = vmatpush.msra.mxu0 0.0
        %4244 = vmatpush.msra.mxu0 0.0
        %4245 = vmatpush.msra.mxu0 0.0
        %4246 = vmatpush.msra.mxu0 0.0
        %4247 = vmatpush.msra.mxu0 0.0
        %4248 = vmatpush.msra.mxu0 0.0
        %4249 = vmatpush.msra.mxu0 0.0
        %4250 = vmatpush.msra.mxu0 0.0
        %4251 = vmatpush.msra.mxu0 0.0
        %4252 = vmatpush.msra.mxu0 0.0
        %4253 = vmatpush.msra.mxu0 0.0
        %4254 = vmatpush.msra.mxu0 0.0
        %4255 = vmatpush.msra.mxu0 0.0
        %v4256 = vand.u32 %v3979, 4294901760
        %v4257 = vsub.f32 %v3979, %v4256
        %4258 = vmatpush.msra.mxu0 %v4257
        %v4259 = vand.u32 %v3978, 4294901760
        %v4260 = vsub.f32 %v3978, %v4259
        %4261 = vmatpush.msra.mxu0 %v4260
        %v4262 = vand.u32 %v599, 4294901760
        %v4263 = vsub.f32 %v599, %v4262
        %4264 = vmatmul.f32.gmra.mxu0 %v4263
        %v4265 = vpop.f32.mrf.mxu0
        %v4266 = vadd.f32 %v4236, %v4265
        %v4267 = vand.u32 %v602, 4294901760
        %v4268 = vsub.f32 %v602, %v4267
        %4269 = vmatmul.f32.gmra.mxu0 %v4268
        %v4270 = vpop.f32.mrf.mxu0
        %v4271 = vadd.f32 %v4240, %v4270
        %4272 = vdwg.mxu0
        %4273 = vmatpush.msra.mxu0 0.0
        %4274 = vmatpush.msra.mxu0 0.0
        %4275 = vmatpush.msra.mxu0 0.0
        %4276 = vmatpush.msra.mxu0 0.0
        %4277 = vmatpush.msra.mxu0 0.0
        %4278 = vmatpush.msra.mxu0 0.0
        %4279 = vmatpush.msra.mxu0 0.0
        %4280 = vmatpush.msra.mxu0 0.0
        %4281 = vmatpush.msra.mxu0 0.0
        %4282 = vmatpush.msra.mxu0 0.0
        %4283 = vmatpush.msra.mxu0 0.0
        %4284 = vmatpush.msra.mxu0 0.0
        %4285 = vmatpush.msra.mxu0 0.0
        %4286 = vmatpush.msra.mxu0 0.0
        %v4287 = vand.u32 %v3979, 4294901760
        %4288 = vmatpush.msra.mxu0 %v4287
        %v4289 = vand.u32 %v3978, 4294901760
        %4290 = vmatpush.msra.mxu0 %v4289
        %v4291 = vand.u32 %v599, 4294901760
        %v4292 = vsub.f32 %v599, %v4291
        %v4293 = vand.u32 %v4292, 4294901760
        %4294 = vmatmul.f32.gmra.mxu0 %v4293
        %v4295 = vpop.f32.mrf.mxu0
        %v4296 = vadd.f32 %v4266, %v4295
        %v4297 = vand.u32 %v602, 4294901760
        %v4298 = vsub.f32 %v602, %v4297
        %v4299 = vand.u32 %v4298, 4294901760
        %4300 = vmatmul.f32.gmra.mxu0 %v4299
        %v4301 = vpop.f32.mrf.mxu0
        %v4302 = vadd.f32 %v4271, %v4301
        %4303 = vdwg.mxu0
        %4304 = vmatpush.msra.mxu0 0.0
        %4305 = vmatpush.msra.mxu0 0.0
        %4306 = vmatpush.msra.mxu0 0.0
        %4307 = vmatpush.msra.mxu0 0.0
        %4308 = vmatpush.msra.mxu0 0.0
        %4309 = vmatpush.msra.mxu0 0.0
        %4310 = vmatpush.msra.mxu0 0.0
        %4311 = vmatpush.msra.mxu0 0.0
        %4312 = vmatpush.msra.mxu0 0.0
        %4313 = vmatpush.msra.mxu0 0.0
        %4314 = vmatpush.msra.mxu0 0.0
        %4315 = vmatpush.msra.mxu0 0.0
        %4316 = vmatpush.msra.mxu0 0.0
        %4317 = vmatpush.msra.mxu0 0.0
        %v4318 = vand.u32 %v3979, 4294901760
        %v4319 = vsub.f32 %v3979, %v4318
        %v4320 = vand.u32 %v4319, 4294901760
        %4321 = vmatpush.msra.mxu0 %v4320
        %v4322 = vand.u32 %v3978, 4294901760
        %v4323 = vsub.f32 %v3978, %v4322
        %v4324 = vand.u32 %v4323, 4294901760
        %4325 = vmatpush.msra.mxu0 %v4324
        %v4326 = vand.u32 %v599, 4294901760
        %4327 = vmatmul.f32.gmra.mxu0 %v4326
        %v4328 = vpop.f32.mrf.mxu0
        %v4329 = vadd.f32 %v4296, %v4328
        %v4330 = vand.u32 %v602, 4294901760
        %4331 = vmatmul.f32.gmra.mxu0 %v4330
        %v4332 = vpop.f32.mrf.mxu0
        %v4333 = vadd.f32 %v4302, %v4332
        %4334 = vdwg.mxu0
        %4335 = vmatpush.msra.mxu0 0.0
        %4336 = vmatpush.msra.mxu0 0.0
        %4337 = vmatpush.msra.mxu0 0.0
        %4338 = vmatpush.msra.mxu0 0.0
        %4339 = vmatpush.msra.mxu0 0.0
        %4340 = vmatpush.msra.mxu0 0.0
        %4341 = vmatpush.msra.mxu0 0.0
        %4342 = vmatpush.msra.mxu0 0.0
        %4343 = vmatpush.msra.mxu0 0.0
        %4344 = vmatpush.msra.mxu0 0.0
        %4345 = vmatpush.msra.mxu0 0.0
        %4346 = vmatpush.msra.mxu0 0.0
        %4347 = vmatpush.msra.mxu0 0.0
        %4348 = vmatpush.msra.mxu0 0.0
        %v4349 = vand.u32 %v3979, 4294901760
        %4350 = vmatpush.msra.mxu0 %v4349
        %v4351 = vand.u32 %v3978, 4294901760
        %4352 = vmatpush.msra.mxu0 %v4351
        %v4353 = vand.u32 %v599, 4294901760
        %4354 = vmatmul.f32.gmra.mxu0 %v4353
        %v4355 = vpop.f32.mrf.mxu0
        %v4356 = vadd.f32 %v4329, %v4355
        %v4357 = vand.u32 %v602, 4294901760
        %4358 = vmatmul.f32.gmra.mxu0 %v4357
        %v4359 = vpop.f32.mrf.mxu0
        %v4360 = vadd.f32 %v4333, %v4359
        %4361 = vdwg.mxu0
        %4362 = vmatpush.msra.mxu0 0.0
        %4363 = vmatpush.msra.mxu0 0.0
        %4364 = vmatpush.msra.mxu0 0.0
        %4365 = vmatpush.msra.mxu0 0.0
        %4366 = vmatpush.msra.mxu0 0.0
        %4367 = vmatpush.msra.mxu0 0.0
        %4368 = vmatpush.msra.mxu0 0.0
        %4369 = vmatpush.msra.mxu0 0.0
        %4370 = vmatpush.msra.mxu0 0.0
        %4371 = vmatpush.msra.mxu0 0.0
        %4372 = vmatpush.msra.mxu0 0.0
        %4373 = vmatpush.msra.mxu0 0.0
        %4374 = vmatpush.msra.mxu0 0.0
        %4375 = vmatpush.msra.mxu0 0.0
        %v4376 = vand.u32 %v3981, 4294901760
        %4377 = vmatpush.msra.mxu0 %v4376
        %v4378 = vand.u32 %v3980, 4294901760
        %4379 = vmatpush.msra.mxu0 %v4378
        %v4380 = vand.u32 %v795, 4294901760
        %v4381 = vsub.f32 %v795, %v4380
        %v4382 = vand.u32 %v4381, 4294901760
        %v4383 = vsub.f32 %v4381, %v4382
        %v4384 = vand.u32 %v4383, 4294901760
        %4385 = vmatmul.f32.gmra.mxu0 %v4384
        %v4386 = vpop.f32.mrf.mxu0
        %v4387 = vadd.f32 0.0, %v4386
        %v4388 = vand.u32 %v798, 4294901760
        %v4389 = vsub.f32 %v798, %v4388
        %v4390 = vand.u32 %v4389, 4294901760
        %v4391 = vsub.f32 %v4389, %v4390
        %v4392 = vand.u32 %v4391, 4294901760
        %4393 = vmatmul.f32.gmra.mxu0 %v4392
        %v4394 = vpop.f32.mrf.mxu0
        %v4395 = vadd.f32 0.0, %v4394
        %4396 = vdwg.mxu0
        %4397 = vmatpush.msra.mxu0 0.0
        %4398 = vmatpush.msra.mxu0 0.0
        %4399 = vmatpush.msra.mxu0 0.0
        %4400 = vmatpush.msra.mxu0 0.0
        %4401 = vmatpush.msra.mxu0 0.0
        %4402 = vmatpush.msra.mxu0 0.0
        %4403 = vmatpush.msra.mxu0 0.0
        %4404 = vmatpush.msra.mxu0 0.0
        %4405 = vmatpush.msra.mxu0 0.0
        %4406 = vmatpush.msra.mxu0 0.0
        %4407 = vmatpush.msra.mxu0 0.0
        %4408 = vmatpush.msra.mxu0 0.0
        %4409 = vmatpush.msra.mxu0 0.0
        %4410 = vmatpush.msra.mxu0 0.0
        %v4411 = vand.u32 %v3981, 4294901760
        %v4412 = vsub.f32 %v3981, %v4411
        %v4413 = vand.u32 %v4412, 4294901760
        %v4414 = vsub.f32 %v4412, %v4413
        %v4415 = vand.u32 %v4414, 4294901760
        %4416 = vmatpush.msra.mxu0 %v4415
        %v4417 = vand.u32 %v3980, 4294901760
        %v4418 = vsub.f32 %v3980, %v4417
        %v4419 = vand.u32 %v4418, 4294901760
        %v4420 = vsub.f32 %v4418, %v4419
        %v4421 = vand.u32 %v4420, 4294901760
        %4422 = vmatpush.msra.mxu0 %v4421
        %v4423 = vand.u32 %v795, 4294901760
        %4424 = vmatmul.f32.gmra.mxu0 %v4423
        %v4425 = vpop.f32.mrf.mxu0
        %v4426 = vadd.f32 %v4387, %v4425
        %v4427 = vand.u32 %v798, 4294901760
        %4428 = vmatmul.f32.gmra.mxu0 %v4427
        %v4429 = vpop.f32.mrf.mxu0
        %v4430 = vadd.f32 %v4395, %v4429
        %4431 = vdwg.mxu0
        %4432 = vmatpush.msra.mxu0 0.0
        %4433 = vmatpush.msra.mxu0 0.0
        %4434 = vmatpush.msra.mxu0 0.0
        %4435 = vmatpush.msra.mxu0 0.0
        %4436 = vmatpush.msra.mxu0 0.0
        %4437 = vmatpush.msra.mxu0 0.0
        %4438 = vmatpush.msra.mxu0 0.0
        %4439 = vmatpush.msra.mxu0 0.0
        %4440 = vmatpush.msra.mxu0 0.0
        %4441 = vmatpush.msra.mxu0 0.0
        %4442 = vmatpush.msra.mxu0 0.0
        %4443 = vmatpush.msra.mxu0 0.0
        %4444 = vmatpush.msra.mxu0 0.0
        %4445 = vmatpush.msra.mxu0 0.0
        %v4446 = vand.u32 %v3981, 4294901760
        %v4447 = vsub.f32 %v3981, %v4446
        %4448 = vmatpush.msra.mxu0 %v4447
        %v4449 = vand.u32 %v3980, 4294901760
        %v4450 = vsub.f32 %v3980, %v4449
        %4451 = vmatpush.msra.mxu0 %v4450
        %v4452 = vand.u32 %v795, 4294901760
        %v4453 = vsub.f32 %v795, %v4452
        %4454 = vmatmul.f32.gmra.mxu0 %v4453
        %v4455 = vpop.f32.mrf.mxu0
        %v4456 = vadd.f32 %v4426, %v4455
        %v4457 = vand.u32 %v798, 4294901760
        %v4458 = vsub.f32 %v798, %v4457
        %4459 = vmatmul.f32.gmra.mxu0 %v4458
        %v4460 = vpop.f32.mrf.mxu0
        %v4461 = vadd.f32 %v4430, %v4460
        %4462 = vdwg.mxu0
        %4463 = vmatpush.msra.mxu0 0.0
        %4464 = vmatpush.msra.mxu0 0.0
        %4465 = vmatpush.msra.mxu0 0.0
        %4466 = vmatpush.msra.mxu0 0.0
        %4467 = vmatpush.msra.mxu0 0.0
        %4468 = vmatpush.msra.mxu0 0.0
        %4469 = vmatpush.msra.mxu0 0.0
        %4470 = vmatpush.msra.mxu0 0.0
        %4471 = vmatpush.msra.mxu0 0.0
        %4472 = vmatpush.msra.mxu0 0.0
        %4473 = vmatpush.msra.mxu0 0.0
        %4474 = vmatpush.msra.mxu0 0.0
        %4475 = vmatpush.msra.mxu0 0.0
        %4476 = vmatpush.msra.mxu0 0.0
        %v4477 = vand.u32 %v3981, 4294901760
        %4478 = vmatpush.msra.mxu0 %v4477
        %v4479 = vand.u32 %v3980, 4294901760
        %4480 = vmatpush.msra.mxu0 %v4479
        %v4481 = vand.u32 %v795, 4294901760
        %v4482 = vsub.f32 %v795, %v4481
        %v4483 = vand.u32 %v4482, 4294901760
        %4484 = vmatmul.f32.gmra.mxu0 %v4483
        %v4485 = vpop.f32.mrf.mxu0
        %v4486 = vadd.f32 %v4456, %v4485
        %v4487 = vand.u32 %v798, 4294901760
        %v4488 = vsub.f32 %v798, %v4487
        %v4489 = vand.u32 %v4488, 4294901760
        %4490 = vmatmul.f32.gmra.mxu0 %v4489
        %v4491 = vpop.f32.mrf.mxu0
        %v4492 = vadd.f32 %v4461, %v4491
        %4493 = vdwg.mxu0
        %4494 = vmatpush.msra.mxu0 0.0
        %4495 = vmatpush.msra.mxu0 0.0
        %4496 = vmatpush.msra.mxu0 0.0
        %4497 = vmatpush.msra.mxu0 0.0
        %4498 = vmatpush.msra.mxu0 0.0
        %4499 = vmatpush.msra.mxu0 0.0
        %4500 = vmatpush.msra.mxu0 0.0
        %4501 = vmatpush.msra.mxu0 0.0
        %4502 = vmatpush.msra.mxu0 0.0
        %4503 = vmatpush.msra.mxu0 0.0
        %4504 = vmatpush.msra.mxu0 0.0
        %4505 = vmatpush.msra.mxu0 0.0
        %4506 = vmatpush.msra.mxu0 0.0
        %4507 = vmatpush.msra.mxu0 0.0
        %v4508 = vand.u32 %v3981, 4294901760
        %v4509 = vsub.f32 %v3981, %v4508
        %v4510 = vand.u32 %v4509, 4294901760
        %4511 = vmatpush.msra.mxu0 %v4510
        %v4512 = vand.u32 %v3980, 4294901760
        %v4513 = vsub.f32 %v3980, %v4512
        %v4514 = vand.u32 %v4513, 4294901760
        %4515 = vmatpush.msra.mxu0 %v4514
        %v4516 = vand.u32 %v795, 4294901760
        %4517 = vmatmul.f32.gmra.mxu0 %v4516
        %v4518 = vpop.f32.mrf.mxu0
        %v4519 = vadd.f32 %v4486, %v4518
        %v4520 = vand.u32 %v798, 4294901760
        %4521 = vmatmul.f32.gmra.mxu0 %v4520
        %v4522 = vpop.f32.mrf.mxu0
        %v4523 = vadd.f32 %v4492, %v4522
        %4524 = vdwg.mxu0
        %4525 = vmatpush.msra.mxu0 0.0
        %4526 = vmatpush.msra.mxu0 0.0
        %4527 = vmatpush.msra.mxu0 0.0
        %4528 = vmatpush.msra.mxu0 0.0
        %4529 = vmatpush.msra.mxu0 0.0
        %4530 = vmatpush.msra.mxu0 0.0
        %4531 = vmatpush.msra.mxu0 0.0
        %4532 = vmatpush.msra.mxu0 0.0
        %4533 = vmatpush.msra.mxu0 0.0
        %4534 = vmatpush.msra.mxu0 0.0
        %4535 = vmatpush.msra.mxu0 0.0
        %4536 = vmatpush.msra.mxu0 0.0
        %4537 = vmatpush.msra.mxu0 0.0
        %4538 = vmatpush.msra.mxu0 0.0
        %v4539 = vand.u32 %v3981, 4294901760
        %4540 = vmatpush.msra.mxu0 %v4539
        %v4541 = vand.u32 %v3980, 4294901760
        %4542 = vmatpush.msra.mxu0 %v4541
        %v4543 = vand.u32 %v795, 4294901760
        %4544 = vmatmul.f32.gmra.mxu0 %v4543
        %v4545 = vpop.f32.mrf.mxu0
        %v4546 = vadd.f32 %v4519, %v4545
        %v4547 = vand.u32 %v798, 4294901760
        %4548 = vmatmul.f32.gmra.mxu0 %v4547
        %v4549 = vpop.f32.mrf.mxu0
        %v4550 = vadd.f32 %v4523, %v4549
        %4551 = vdwg.mxu0
        %v4552 = vsub.f32 %v4166, %v4356
        %v4553 = vsub.f32 %v4170, %v4360
        %v4554 = vsub.f32 %v4546, %v4166
        %v4555 = vsub.f32 %v4550, %v4170
        %v4556 = vsub.f32 %v4554, %v4356
        %v4557 = vsub.f32 %v4555, %v4360
        %v4558 = vadd.f32 %v4552, %v4556
        %v4559 = vadd.f32 %v4553, %v4557
        %v4561 = vsel %vm401, %v4552, 0
        %v4564 = vsel %vm401, %v4553, 0
        %4566 = vmatpush.msra.mxu0 0.0
        %4567 = vmatpush.msra.mxu0 0.0
        %4568 = vmatpush.msra.mxu0 0.0
        %4569 = vmatpush.msra.mxu0 0.0
        %4570 = vmatpush.msra.mxu0 0.0
        %4571 = vmatpush.msra.mxu0 0.0
        %4572 = vmatpush.msra.mxu0 0.0
        %4573 = vmatpush.msra.mxu0 0.0
        %4574 = vmatpush.msra.mxu0 0.0
        %4575 = vmatpush.msra.mxu0 0.0
        %4576 = vmatpush.msra.mxu0 0.0
        %4577 = vmatpush.msra.mxu0 0.0
        %4578 = vmatpush.msra.mxu0 0.0
        %4579 = vmatpush.msra.mxu0 0.0
        %v4580 = vand.u32 %v389, 4294901760
        %4581 = vmatpush.msra.mxu0 %v4580
        %v4582 = vand.u32 %v388, 4294901760
        %4583 = vmatpush.msra.mxu0 %v4582
        %v4584 = vand.u32 %v4561, 4294901760
        %v4585 = vsub.f32 %v4561, %v4584
        %v4586 = vand.u32 %v4585, 4294901760
        %v4587 = vsub.f32 %v4585, %v4586
        %v4588 = vand.u32 %v4587, 4294901760
        %4589 = vmatmul.f32.gmra.mxu0 %v4588
        %v4590 = vpop.f32.mrf.mxu0
        %v4591 = vadd.f32 0.0, %v4590
        %v4592 = vand.u32 %v4564, 4294901760
        %v4593 = vsub.f32 %v4564, %v4592
        %v4594 = vand.u32 %v4593, 4294901760
        %v4595 = vsub.f32 %v4593, %v4594
        %v4596 = vand.u32 %v4595, 4294901760
        %4597 = vmatmul.f32.gmra.mxu0 %v4596
        %v4598 = vpop.f32.mrf.mxu0
        %v4599 = vadd.f32 0.0, %v4598
        %4600 = vdwg.mxu0
        %4601 = vmatpush.msra.mxu0 0.0
        %4602 = vmatpush.msra.mxu0 0.0
        %4603 = vmatpush.msra.mxu0 0.0
        %4604 = vmatpush.msra.mxu0 0.0
        %4605 = vmatpush.msra.mxu0 0.0
        %4606 = vmatpush.msra.mxu0 0.0
        %4607 = vmatpush.msra.mxu0 0.0
        %4608 = vmatpush.msra.mxu0 0.0
        %4609 = vmatpush.msra.mxu0 0.0
        %4610 = vmatpush.msra.mxu0 0.0
        %4611 = vmatpush.msra.mxu0 0.0
        %4612 = vmatpush.msra.mxu0 0.0
        %4613 = vmatpush.msra.mxu0 0.0
        %4614 = vmatpush.msra.mxu0 0.0
        %v4615 = vand.u32 %v389, 4294901760
        %v4616 = vsub.f32 %v389, %v4615
        %v4617 = vand.u32 %v4616, 4294901760
        %v4618 = vsub.f32 %v4616, %v4617
        %v4619 = vand.u32 %v4618, 4294901760
        %4620 = vmatpush.msra.mxu0 %v4619
        %v4621 = vand.u32 %v388, 4294901760
        %v4622 = vsub.f32 %v388, %v4621
        %v4623 = vand.u32 %v4622, 4294901760
        %v4624 = vsub.f32 %v4622, %v4623
        %v4625 = vand.u32 %v4624, 4294901760
        %4626 = vmatpush.msra.mxu0 %v4625
        %v4627 = vand.u32 %v4561, 4294901760
        %4628 = vmatmul.f32.gmra.mxu0 %v4627
        %v4629 = vpop.f32.mrf.mxu0
        %v4630 = vadd.f32 %v4591, %v4629
        %v4631 = vand.u32 %v4564, 4294901760
        %4632 = vmatmul.f32.gmra.mxu0 %v4631
        %v4633 = vpop.f32.mrf.mxu0
        %v4634 = vadd.f32 %v4599, %v4633
        %4635 = vdwg.mxu0
        %4636 = vmatpush.msra.mxu0 0.0
        %4637 = vmatpush.msra.mxu0 0.0
        %4638 = vmatpush.msra.mxu0 0.0
        %4639 = vmatpush.msra.mxu0 0.0
        %4640 = vmatpush.msra.mxu0 0.0
        %4641 = vmatpush.msra.mxu0 0.0
        %4642 = vmatpush.msra.mxu0 0.0
        %4643 = vmatpush.msra.mxu0 0.0
        %4644 = vmatpush.msra.mxu0 0.0
        %4645 = vmatpush.msra.mxu0 0.0
        %4646 = vmatpush.msra.mxu0 0.0
        %4647 = vmatpush.msra.mxu0 0.0
        %4648 = vmatpush.msra.mxu0 0.0
        %4649 = vmatpush.msra.mxu0 0.0
        %v4650 = vand.u32 %v389, 4294901760
        %v4651 = vsub.f32 %v389, %v4650
        %4652 = vmatpush.msra.mxu0 %v4651
        %v4653 = vand.u32 %v388, 4294901760
        %v4654 = vsub.f32 %v388, %v4653
        %4655 = vmatpush.msra.mxu0 %v4654
        %v4656 = vand.u32 %v4561, 4294901760
        %v4657 = vsub.f32 %v4561, %v4656
        %4658 = vmatmul.f32.gmra.mxu0 %v4657
        %v4659 = vpop.f32.mrf.mxu0
        %v4660 = vadd.f32 %v4630, %v4659
        %v4661 = vand.u32 %v4564, 4294901760
        %v4662 = vsub.f32 %v4564, %v4661
        %4663 = vmatmul.f32.gmra.mxu0 %v4662
        %v4664 = vpop.f32.mrf.mxu0
        %v4665 = vadd.f32 %v4634, %v4664
        %4666 = vdwg.mxu0
        %4667 = vmatpush.msra.mxu0 0.0
        %4668 = vmatpush.msra.mxu0 0.0
        %4669 = vmatpush.msra.mxu0 0.0
        %4670 = vmatpush.msra.mxu0 0.0
        %4671 = vmatpush.msra.mxu0 0.0
        %4672 = vmatpush.msra.mxu0 0.0
        %4673 = vmatpush.msra.mxu0 0.0
        %4674 = vmatpush.msra.mxu0 0.0
        %4675 = vmatpush.msra.mxu0 0.0
        %4676 = vmatpush.msra.mxu0 0.0
        %4677 = vmatpush.msra.mxu0 0.0
        %4678 = vmatpush.msra.mxu0 0.0
        %4679 = vmatpush.msra.mxu0 0.0
        %4680 = vmatpush.msra.mxu0 0.0
        %v4681 = vand.u32 %v389, 4294901760
        %4682 = vmatpush.msra.mxu0 %v4681
        %v4683 = vand.u32 %v388, 4294901760
        %4684 = vmatpush.msra.mxu0 %v4683
        %v4685 = vand.u32 %v4561, 4294901760
        %v4686 = vsub.f32 %v4561, %v4685
        %v4687 = vand.u32 %v4686, 4294901760
        %4688 = vmatmul.f32.gmra.mxu0 %v4687
        %v4689 = vpop.f32.mrf.mxu0
        %v4690 = vadd.f32 %v4660, %v4689
        %v4691 = vand.u32 %v4564, 4294901760
        %v4692 = vsub.f32 %v4564, %v4691
        %v4693 = vand.u32 %v4692, 4294901760
        %4694 = vmatmul.f32.gmra.mxu0 %v4693
        %v4695 = vpop.f32.mrf.mxu0
        %v4696 = vadd.f32 %v4665, %v4695
        %4697 = vdwg.mxu0
        %4698 = vmatpush.msra.mxu0 0.0
        %4699 = vmatpush.msra.mxu0 0.0
        %4700 = vmatpush.msra.mxu0 0.0
        %4701 = vmatpush.msra.mxu0 0.0
        %4702 = vmatpush.msra.mxu0 0.0
        %4703 = vmatpush.msra.mxu0 0.0
        %4704 = vmatpush.msra.mxu0 0.0
        %4705 = vmatpush.msra.mxu0 0.0
        %4706 = vmatpush.msra.mxu0 0.0
        %4707 = vmatpush.msra.mxu0 0.0
        %4708 = vmatpush.msra.mxu0 0.0
        %4709 = vmatpush.msra.mxu0 0.0
        %4710 = vmatpush.msra.mxu0 0.0
        %4711 = vmatpush.msra.mxu0 0.0
        %v4712 = vand.u32 %v389, 4294901760
        %v4713 = vsub.f32 %v389, %v4712
        %v4714 = vand.u32 %v4713, 4294901760
        %4715 = vmatpush.msra.mxu0 %v4714
        %v4716 = vand.u32 %v388, 4294901760
        %v4717 = vsub.f32 %v388, %v4716
        %v4718 = vand.u32 %v4717, 4294901760
        %4719 = vmatpush.msra.mxu0 %v4718
        %v4720 = vand.u32 %v4561, 4294901760
        %4721 = vmatmul.f32.gmra.mxu0 %v4720
        %v4722 = vpop.f32.mrf.mxu0
        %v4723 = vadd.f32 %v4690, %v4722
        %v4724 = vand.u32 %v4564, 4294901760
        %4725 = vmatmul.f32.gmra.mxu0 %v4724
        %v4726 = vpop.f32.mrf.mxu0
        %v4727 = vadd.f32 %v4696, %v4726
        %4728 = vdwg.mxu0
        %4729 = vmatpush.msra.mxu0 0.0
        %4730 = vmatpush.msra.mxu0 0.0
        %4731 = vmatpush.msra.mxu0 0.0
        %4732 = vmatpush.msra.mxu0 0.0
        %4733 = vmatpush.msra.mxu0 0.0
        %4734 = vmatpush.msra.mxu0 0.0
        %4735 = vmatpush.msra.mxu0 0.0
        %4736 = vmatpush.msra.mxu0 0.0
        %4737 = vmatpush.msra.mxu0 0.0
        %4738 = vmatpush.msra.mxu0 0.0
        %4739 = vmatpush.msra.mxu0 0.0
        %4740 = vmatpush.msra.mxu0 0.0
        %4741 = vmatpush.msra.mxu0 0.0
        %4742 = vmatpush.msra.mxu0 0.0
        %v4743 = vand.u32 %v389, 4294901760
        %4744 = vmatpush.msra.mxu0 %v4743
        %v4745 = vand.u32 %v388, 4294901760
        %4746 = vmatpush.msra.mxu0 %v4745
        %v4747 = vand.u32 %v4561, 4294901760
        %4748 = vmatmul.f32.gmra.mxu0 %v4747
        %v4749 = vpop.f32.mrf.mxu0
        %v4750 = vadd.f32 %v4723, %v4749
        %v4751 = vand.u32 %v4564, 4294901760
        %4752 = vmatmul.f32.gmra.mxu0 %v4751
        %v4753 = vpop.f32.mrf.mxu0
        %v4754 = vadd.f32 %v4727, %v4753
        %4755 = vdwg.mxu0
        %v4757 = vsel %vm401, %v4556, 0
        %v4760 = vsel %vm401, %v4557, 0
        %4762 = vmatpush.msra.mxu0 0.0
        %4763 = vmatpush.msra.mxu0 0.0
        %4764 = vmatpush.msra.mxu0 0.0
        %4765 = vmatpush.msra.mxu0 0.0
        %4766 = vmatpush.msra.mxu0 0.0
        %4767 = vmatpush.msra.mxu0 0.0
        %4768 = vmatpush.msra.mxu0 0.0
        %4769 = vmatpush.msra.mxu0 0.0
        %4770 = vmatpush.msra.mxu0 0.0
        %4771 = vmatpush.msra.mxu0 0.0
        %4772 = vmatpush.msra.mxu0 0.0
        %4773 = vmatpush.msra.mxu0 0.0
        %4774 = vmatpush.msra.mxu0 0.0
        %4775 = vmatpush.msra.mxu0 0.0
        %v4776 = vand.u32 %v391, 4294901760
        %4777 = vmatpush.msra.mxu0 %v4776
        %v4778 = vand.u32 %v390, 4294901760
        %4779 = vmatpush.msra.mxu0 %v4778
        %v4780 = vand.u32 %v4757, 4294901760
        %v4781 = vsub.f32 %v4757, %v4780
        %v4782 = vand.u32 %v4781, 4294901760
        %v4783 = vsub.f32 %v4781, %v4782
        %v4784 = vand.u32 %v4783, 4294901760
        %4785 = vmatmul.f32.gmra.mxu0 %v4784
        %v4786 = vpop.f32.mrf.mxu0
        %v4787 = vadd.f32 0.0, %v4786
        %v4788 = vand.u32 %v4760, 4294901760
        %v4789 = vsub.f32 %v4760, %v4788
        %v4790 = vand.u32 %v4789, 4294901760
        %v4791 = vsub.f32 %v4789, %v4790
        %v4792 = vand.u32 %v4791, 4294901760
        %4793 = vmatmul.f32.gmra.mxu0 %v4792
        %v4794 = vpop.f32.mrf.mxu0
        %v4795 = vadd.f32 0.0, %v4794
        %4796 = vdwg.mxu0
        %4797 = vmatpush.msra.mxu0 0.0
        %4798 = vmatpush.msra.mxu0 0.0
        %4799 = vmatpush.msra.mxu0 0.0
        %4800 = vmatpush.msra.mxu0 0.0
        %4801 = vmatpush.msra.mxu0 0.0
        %4802 = vmatpush.msra.mxu0 0.0
        %4803 = vmatpush.msra.mxu0 0.0
        %4804 = vmatpush.msra.mxu0 0.0
        %4805 = vmatpush.msra.mxu0 0.0
        %4806 = vmatpush.msra.mxu0 0.0
        %4807 = vmatpush.msra.mxu0 0.0
        %4808 = vmatpush.msra.mxu0 0.0
        %4809 = vmatpush.msra.mxu0 0.0
        %4810 = vmatpush.msra.mxu0 0.0
        %v4811 = vand.u32 %v391, 4294901760
        %v4812 = vsub.f32 %v391, %v4811
        %v4813 = vand.u32 %v4812, 4294901760
        %v4814 = vsub.f32 %v4812, %v4813
        %v4815 = vand.u32 %v4814, 4294901760
        %4816 = vmatpush.msra.mxu0 %v4815
        %v4817 = vand.u32 %v390, 4294901760
        %v4818 = vsub.f32 %v390, %v4817
        %v4819 = vand.u32 %v4818, 4294901760
        %v4820 = vsub.f32 %v4818, %v4819
        %v4821 = vand.u32 %v4820, 4294901760
        %4822 = vmatpush.msra.mxu0 %v4821
        %v4823 = vand.u32 %v4757, 4294901760
        %4824 = vmatmul.f32.gmra.mxu0 %v4823
        %v4825 = vpop.f32.mrf.mxu0
        %v4826 = vadd.f32 %v4787, %v4825
        %v4827 = vand.u32 %v4760, 4294901760
        %4828 = vmatmul.f32.gmra.mxu0 %v4827
        %v4829 = vpop.f32.mrf.mxu0
        %v4830 = vadd.f32 %v4795, %v4829
        %4831 = vdwg.mxu0
        %4832 = vmatpush.msra.mxu0 0.0
        %4833 = vmatpush.msra.mxu0 0.0
        %4834 = vmatpush.msra.mxu0 0.0
        %4835 = vmatpush.msra.mxu0 0.0
        %4836 = vmatpush.msra.mxu0 0.0
        %4837 = vmatpush.msra.mxu0 0.0
        %4838 = vmatpush.msra.mxu0 0.0
        %4839 = vmatpush.msra.mxu0 0.0
        %4840 = vmatpush.msra.mxu0 0.0
        %4841 = vmatpush.msra.mxu0 0.0
        %4842 = vmatpush.msra.mxu0 0.0
        %4843 = vmatpush.msra.mxu0 0.0
        %4844 = vmatpush.msra.mxu0 0.0
        %4845 = vmatpush.msra.mxu0 0.0
        %v4846 = vand.u32 %v391, 4294901760
        %v4847 = vsub.f32 %v391, %v4846
        %4848 = vmatpush.msra.mxu0 %v4847
        %v4849 = vand.u32 %v390, 4294901760
        %v4850 = vsub.f32 %v390, %v4849
        %4851 = vmatpush.msra.mxu0 %v4850
        %v4852 = vand.u32 %v4757, 4294901760
        %v4853 = vsub.f32 %v4757, %v4852
        %4854 = vmatmul.f32.gmra.mxu0 %v4853
        %v4855 = vpop.f32.mrf.mxu0
        %v4856 = vadd.f32 %v4826, %v4855
        %v4857 = vand.u32 %v4760, 4294901760
        %v4858 = vsub.f32 %v4760, %v4857
        %4859 = vmatmul.f32.gmra.mxu0 %v4858
        %v4860 = vpop.f32.mrf.mxu0
        %v4861 = vadd.f32 %v4830, %v4860
        %4862 = vdwg.mxu0
        %4863 = vmatpush.msra.mxu0 0.0
        %4864 = vmatpush.msra.mxu0 0.0
        %4865 = vmatpush.msra.mxu0 0.0
        %4866 = vmatpush.msra.mxu0 0.0
        %4867 = vmatpush.msra.mxu0 0.0
        %4868 = vmatpush.msra.mxu0 0.0
        %4869 = vmatpush.msra.mxu0 0.0
        %4870 = vmatpush.msra.mxu0 0.0
        %4871 = vmatpush.msra.mxu0 0.0
        %4872 = vmatpush.msra.mxu0 0.0
        %4873 = vmatpush.msra.mxu0 0.0
        %4874 = vmatpush.msra.mxu0 0.0
        %4875 = vmatpush.msra.mxu0 0.0
        %4876 = vmatpush.msra.mxu0 0.0
        %v4877 = vand.u32 %v391, 4294901760
        %4878 = vmatpush.msra.mxu0 %v4877
        %v4879 = vand.u32 %v390, 4294901760
        %4880 = vmatpush.msra.mxu0 %v4879
        %v4881 = vand.u32 %v4757, 4294901760
        %v4882 = vsub.f32 %v4757, %v4881
        %v4883 = vand.u32 %v4882, 4294901760
        %4884 = vmatmul.f32.gmra.mxu0 %v4883
        %v4885 = vpop.f32.mrf.mxu0
        %v4886 = vadd.f32 %v4856, %v4885
        %v4887 = vand.u32 %v4760, 4294901760
        %v4888 = vsub.f32 %v4760, %v4887
        %v4889 = vand.u32 %v4888, 4294901760
        %4890 = vmatmul.f32.gmra.mxu0 %v4889
        %v4891 = vpop.f32.mrf.mxu0
        %v4892 = vadd.f32 %v4861, %v4891
        %4893 = vdwg.mxu0
        %4894 = vmatpush.msra.mxu0 0.0
        %4895 = vmatpush.msra.mxu0 0.0
        %4896 = vmatpush.msra.mxu0 0.0
        %4897 = vmatpush.msra.mxu0 0.0
        %4898 = vmatpush.msra.mxu0 0.0
        %4899 = vmatpush.msra.mxu0 0.0
        %4900 = vmatpush.msra.mxu0 0.0
        %4901 = vmatpush.msra.mxu0 0.0
        %4902 = vmatpush.msra.mxu0 0.0
        %4903 = vmatpush.msra.mxu0 0.0
        %4904 = vmatpush.msra.mxu0 0.0
        %4905 = vmatpush.msra.mxu0 0.0
        %4906 = vmatpush.msra.mxu0 0.0
        %4907 = vmatpush.msra.mxu0 0.0
        %v4908 = vand.u32 %v391, 4294901760
        %v4909 = vsub.f32 %v391, %v4908
        %v4910 = vand.u32 %v4909, 4294901760
        %4911 = vmatpush.msra.mxu0 %v4910
        %v4912 = vand.u32 %v390, 4294901760
        %v4913 = vsub.f32 %v390, %v4912
        %v4914 = vand.u32 %v4913, 4294901760
        %4915 = vmatpush.msra.mxu0 %v4914
        %v4916 = vand.u32 %v4757, 4294901760
        %4917 = vmatmul.f32.gmra.mxu0 %v4916
        %v4918 = vpop.f32.mrf.mxu0
        %v4919 = vadd.f32 %v4886, %v4918
        %v4920 = vand.u32 %v4760, 4294901760
        %4921 = vmatmul.f32.gmra.mxu0 %v4920
        %v4922 = vpop.f32.mrf.mxu0
        %v4923 = vadd.f32 %v4892, %v4922
        %4924 = vdwg.mxu0
        %4925 = vmatpush.msra.mxu0 0.0
        %4926 = vmatpush.msra.mxu0 0.0
        %4927 = vmatpush.msra.mxu0 0.0
        %4928 = vmatpush.msra.mxu0 0.0
        %4929 = vmatpush.msra.mxu0 0.0
        %4930 = vmatpush.msra.mxu0 0.0
        %4931 = vmatpush.msra.mxu0 0.0
        %4932 = vmatpush.msra.mxu0 0.0
        %4933 = vmatpush.msra.mxu0 0.0
        %4934 = vmatpush.msra.mxu0 0.0
        %4935 = vmatpush.msra.mxu0 0.0
        %4936 = vmatpush.msra.mxu0 0.0
        %4937 = vmatpush.msra.mxu0 0.0
        %4938 = vmatpush.msra.mxu0 0.0
        %v4939 = vand.u32 %v391, 4294901760
        %4940 = vmatpush.msra.mxu0 %v4939
        %v4941 = vand.u32 %v390, 4294901760
        %4942 = vmatpush.msra.mxu0 %v4941
        %v4943 = vand.u32 %v4757, 4294901760
        %4944 = vmatmul.f32.gmra.mxu0 %v4943
        %v4945 = vpop.f32.mrf.mxu0
        %v4946 = vadd.f32 %v4919, %v4945
        %v4947 = vand.u32 %v4760, 4294901760
        %4948 = vmatmul.f32.gmra.mxu0 %v4947
        %v4949 = vpop.f32.mrf.mxu0
        %v4950 = vadd.f32 %v4923, %v4949
        %4951 = vdwg.mxu0
        %v4953 = vsel %vm401, %v4558, 0
        %v4956 = vsel %vm401, %v4559, 0
        %4958 = vmatpush.msra.mxu0 0.0
        %4959 = vmatpush.msra.mxu0 0.0
        %4960 = vmatpush.msra.mxu0 0.0
        %4961 = vmatpush.msra.mxu0 0.0
        %4962 = vmatpush.msra.mxu0 0.0
        %4963 = vmatpush.msra.mxu0 0.0
        %4964 = vmatpush.msra.mxu0 0.0
        %4965 = vmatpush.msra.mxu0 0.0
        %4966 = vmatpush.msra.mxu0 0.0
        %4967 = vmatpush.msra.mxu0 0.0
        %4968 = vmatpush.msra.mxu0 0.0
        %4969 = vmatpush.msra.mxu0 0.0
        %4970 = vmatpush.msra.mxu0 0.0
        %4971 = vmatpush.msra.mxu0 0.0
        %v4972 = vand.u32 %v393, 4294901760
        %4973 = vmatpush.msra.mxu0 %v4972
        %v4974 = vand.u32 %v392, 4294901760
        %4975 = vmatpush.msra.mxu0 %v4974
        %v4976 = vand.u32 %v4953, 4294901760
        %v4977 = vsub.f32 %v4953, %v4976
        %v4978 = vand.u32 %v4977, 4294901760
        %v4979 = vsub.f32 %v4977, %v4978
        %v4980 = vand.u32 %v4979, 4294901760
        %4981 = vmatmul.f32.gmra.mxu0 %v4980
        %v4982 = vpop.f32.mrf.mxu0
        %v4983 = vadd.f32 0.0, %v4982
        %v4984 = vand.u32 %v4956, 4294901760
        %v4985 = vsub.f32 %v4956, %v4984
        %v4986 = vand.u32 %v4985, 4294901760
        %v4987 = vsub.f32 %v4985, %v4986
        %v4988 = vand.u32 %v4987, 4294901760
        %4989 = vmatmul.f32.gmra.mxu0 %v4988
        %v4990 = vpop.f32.mrf.mxu0
        %v4991 = vadd.f32 0.0, %v4990
        %4992 = vdwg.mxu0
        %4993 = vmatpush.msra.mxu0 0.0
        %4994 = vmatpush.msra.mxu0 0.0
        %4995 = vmatpush.msra.mxu0 0.0
        %4996 = vmatpush.msra.mxu0 0.0
        %4997 = vmatpush.msra.mxu0 0.0
        %4998 = vmatpush.msra.mxu0 0.0
        %4999 = vmatpush.msra.mxu0 0.0
        %5000 = vmatpush.msra.mxu0 0.0
        %5001 = vmatpush.msra.mxu0 0.0
        %5002 = vmatpush.msra.mxu0 0.0
        %5003 = vmatpush.msra.mxu0 0.0
        %5004 = vmatpush.msra.mxu0 0.0
        %5005 = vmatpush.msra.mxu0 0.0
        %5006 = vmatpush.msra.mxu0 0.0
        %v5007 = vand.u32 %v393, 4294901760
        %v5008 = vsub.f32 %v393, %v5007
        %v5009 = vand.u32 %v5008, 4294901760
        %v5010 = vsub.f32 %v5008, %v5009
        %v5011 = vand.u32 %v5010, 4294901760
        %5012 = vmatpush.msra.mxu0 %v5011
        %v5013 = vand.u32 %v392, 4294901760
        %v5014 = vsub.f32 %v392, %v5013
        %v5015 = vand.u32 %v5014, 4294901760
        %v5016 = vsub.f32 %v5014, %v5015
        %v5017 = vand.u32 %v5016, 4294901760
        %5018 = vmatpush.msra.mxu0 %v5017
        %v5019 = vand.u32 %v4953, 4294901760
        %5020 = vmatmul.f32.gmra.mxu0 %v5019
        %v5021 = vpop.f32.mrf.mxu0
        %v5022 = vadd.f32 %v4983, %v5021
        %v5023 = vand.u32 %v4956, 4294901760
        %5024 = vmatmul.f32.gmra.mxu0 %v5023
        %v5025 = vpop.f32.mrf.mxu0
        %v5026 = vadd.f32 %v4991, %v5025
        %5027 = vdwg.mxu0
        %5028 = vmatpush.msra.mxu0 0.0
        %5029 = vmatpush.msra.mxu0 0.0
        %5030 = vmatpush.msra.mxu0 0.0
        %5031 = vmatpush.msra.mxu0 0.0
        %5032 = vmatpush.msra.mxu0 0.0
        %5033 = vmatpush.msra.mxu0 0.0
        %5034 = vmatpush.msra.mxu0 0.0
        %5035 = vmatpush.msra.mxu0 0.0
        %5036 = vmatpush.msra.mxu0 0.0
        %5037 = vmatpush.msra.mxu0 0.0
        %5038 = vmatpush.msra.mxu0 0.0
        %5039 = vmatpush.msra.mxu0 0.0
        %5040 = vmatpush.msra.mxu0 0.0
        %5041 = vmatpush.msra.mxu0 0.0
        %v5042 = vand.u32 %v393, 4294901760
        %v5043 = vsub.f32 %v393, %v5042
        %5044 = vmatpush.msra.mxu0 %v5043
        %v5045 = vand.u32 %v392, 4294901760
        %v5046 = vsub.f32 %v392, %v5045
        %5047 = vmatpush.msra.mxu0 %v5046
        %v5048 = vand.u32 %v4953, 4294901760
        %v5049 = vsub.f32 %v4953, %v5048
        %5050 = vmatmul.f32.gmra.mxu0 %v5049
        %v5051 = vpop.f32.mrf.mxu0
        %v5052 = vadd.f32 %v5022, %v5051
        %v5053 = vand.u32 %v4956, 4294901760
        %v5054 = vsub.f32 %v4956, %v5053
        %5055 = vmatmul.f32.gmra.mxu0 %v5054
        %v5056 = vpop.f32.mrf.mxu0
        %v5057 = vadd.f32 %v5026, %v5056
        %5058 = vdwg.mxu0
        %5059 = vmatpush.msra.mxu0 0.0
        %5060 = vmatpush.msra.mxu0 0.0
        %5061 = vmatpush.msra.mxu0 0.0
        %5062 = vmatpush.msra.mxu0 0.0
        %5063 = vmatpush.msra.mxu0 0.0
        %5064 = vmatpush.msra.mxu0 0.0
        %5065 = vmatpush.msra.mxu0 0.0
        %5066 = vmatpush.msra.mxu0 0.0
        %5067 = vmatpush.msra.mxu0 0.0
        %5068 = vmatpush.msra.mxu0 0.0
        %5069 = vmatpush.msra.mxu0 0.0
        %5070 = vmatpush.msra.mxu0 0.0
        %5071 = vmatpush.msra.mxu0 0.0
        %5072 = vmatpush.msra.mxu0 0.0
        %v5073 = vand.u32 %v393, 4294901760
        %5074 = vmatpush.msra.mxu0 %v5073
        %v5075 = vand.u32 %v392, 4294901760
        %5076 = vmatpush.msra.mxu0 %v5075
        %v5077 = vand.u32 %v4953, 4294901760
        %v5078 = vsub.f32 %v4953, %v5077
        %v5079 = vand.u32 %v5078, 4294901760
        %5080 = vmatmul.f32.gmra.mxu0 %v5079
        %v5081 = vpop.f32.mrf.mxu0
        %v5082 = vadd.f32 %v5052, %v5081
        %v5083 = vand.u32 %v4956, 4294901760
        %v5084 = vsub.f32 %v4956, %v5083
        %v5085 = vand.u32 %v5084, 4294901760
        %5086 = vmatmul.f32.gmra.mxu0 %v5085
        %v5087 = vpop.f32.mrf.mxu0
        %v5088 = vadd.f32 %v5057, %v5087
        %5089 = vdwg.mxu0
        %5090 = vmatpush.msra.mxu0 0.0
        %5091 = vmatpush.msra.mxu0 0.0
        %5092 = vmatpush.msra.mxu0 0.0
        %5093 = vmatpush.msra.mxu0 0.0
        %5094 = vmatpush.msra.mxu0 0.0
        %5095 = vmatpush.msra.mxu0 0.0
        %5096 = vmatpush.msra.mxu0 0.0
        %5097 = vmatpush.msra.mxu0 0.0
        %5098 = vmatpush.msra.mxu0 0.0
        %5099 = vmatpush.msra.mxu0 0.0
        %5100 = vmatpush.msra.mxu0 0.0
        %5101 = vmatpush.msra.mxu0 0.0
        %5102 = vmatpush.msra.mxu0 0.0
        %5103 = vmatpush.msra.mxu0 0.0
        %v5104 = vand.u32 %v393, 4294901760
        %v5105 = vsub.f32 %v393, %v5104
        %v5106 = vand.u32 %v5105, 4294901760
        %5107 = vmatpush.msra.mxu0 %v5106
        %v5108 = vand.u32 %v392, 4294901760
        %v5109 = vsub.f32 %v392, %v5108
        %v5110 = vand.u32 %v5109, 4294901760
        %5111 = vmatpush.msra.mxu0 %v5110
        %v5112 = vand.u32 %v4953, 4294901760
        %5113 = vmatmul.f32.gmra.mxu0 %v5112
        %v5114 = vpop.f32.mrf.mxu0
        %v5115 = vadd.f32 %v5082, %v5114
        %v5116 = vand.u32 %v4956, 4294901760
        %5117 = vmatmul.f32.gmra.mxu0 %v5116
        %v5118 = vpop.f32.mrf.mxu0
        %v5119 = vadd.f32 %v5088, %v5118
        %5120 = vdwg.mxu0
        %5121 = vmatpush.msra.mxu0 0.0
        %5122 = vmatpush.msra.mxu0 0.0
        %5123 = vmatpush.msra.mxu0 0.0
        %5124 = vmatpush.msra.mxu0 0.0
        %5125 = vmatpush.msra.mxu0 0.0
        %5126 = vmatpush.msra.mxu0 0.0
        %5127 = vmatpush.msra.mxu0 0.0
        %5128 = vmatpush.msra.mxu0 0.0
        %5129 = vmatpush.msra.mxu0 0.0
        %5130 = vmatpush.msra.mxu0 0.0
        %5131 = vmatpush.msra.mxu0 0.0
        %5132 = vmatpush.msra.mxu0 0.0
        %5133 = vmatpush.msra.mxu0 0.0
        %5134 = vmatpush.msra.mxu0 0.0
        %v5135 = vand.u32 %v393, 4294901760
        %5136 = vmatpush.msra.mxu0 %v5135
        %v5137 = vand.u32 %v392, 4294901760
        %5138 = vmatpush.msra.mxu0 %v5137
        %v5139 = vand.u32 %v4953, 4294901760
        %5140 = vmatmul.f32.gmra.mxu0 %v5139
        %v5141 = vpop.f32.mrf.mxu0
        %v5142 = vadd.f32 %v5115, %v5141
        %v5143 = vand.u32 %v4956, 4294901760
        %5144 = vmatmul.f32.gmra.mxu0 %v5143
        %v5145 = vpop.f32.mrf.mxu0
        %v5146 = vadd.f32 %v5119, %v5145
        %5147 = vdwg.mxu0
        %v5148 = vsub.f32 %v4750, %v4946
        %v5149 = vsub.f32 %v4754, %v4950
        %v5150 = vsub.f32 %v5142, %v4750
        %v5151 = vsub.f32 %v5146, %v4754
        %v5152 = vsub.f32 %v5150, %v4946
        %v5153 = vsub.f32 %v5151, %v4950
        %v5154 = vmul.f32 %v5148, %v5148
        %v5155 = vmul.f32 %v5149, %v5149
        %v5156 = vmul.f32 %v5152, %v5152
        %v5157 = vmul.f32 %v5153, %v5153
        %v5158 = vadd.f32 %v5154, %v5156
        %v5159 = vadd.f32 %v5155, %v5157
        %v5160 = vadd.f32 %v3972, %v5158
        %v5161 = vadd.f32 %v3973, %v5159
        %p5162 = scmp.eq.s32.totalorder %s31, 0
        // Predicated region
        $region61: #{tpu_custom_call.1} parent=39 // pred_check
          %p5163 = pneg %p5162
        $region62: #{tpu_custom_call.1} parent=39 // pred_check_branch
          %5165 = sbr.rel (%p5163) target = $region64
        $region63: #{tpu_custom_call.1} parent=39 // pred_region
          %5166 = vst [vmem:[%s377] sm:$0xff] %v5160
          %5167 = vst [vmem:[%s377 + $0x8] sm:$0xff] %v5161
        $region64: #{tpu_custom_call.1} parent=39 // pred_fallthru
          _
        %p5168 = scmp.ne.s32.totalorder %s31, 0
        // Predicated region
        $region65: #{tpu_custom_call.1} parent=39 // pred_check
          %p5169 = pneg %p5168
        $region66: #{tpu_custom_call.1} parent=39 // pred_check_branch
          %5171 = sbr.rel (%p5169) target = $region68
        $region67: #{tpu_custom_call.1} parent=39 // pred_region
          %v5172 = vld [vmem:[%s377] sm:$0xff]
          %v5173 = vld [vmem:[%s377 + $0x8] sm:$0xff]
          %v5174 = vadd.f32 %v5172, %v5160
          %v5175 = vadd.f32 %v5173, %v5161
          %5176 = vst [vmem:[%s377] sm:$0xff] %v5174
          %5177 = vst [vmem:[%s377 + $0x8] sm:$0xff] %v5175
        $region68: #{tpu_custom_call.1} parent=39 // pred_fallthru
          _
        // Predicated region
        $region69: #{tpu_custom_call.1} parent=39 // pred_check
          %p5178 = pneg %p5162
        $region70: #{tpu_custom_call.1} parent=39 // pred_check_branch
          %5180 = sbr.rel (%p5178) target = $region72
        $region71: #{tpu_custom_call.1} parent=39 // pred_region
          %v5181 = vld [vmem:[%s377] sm:$0xff]
          %v5182 = vld [vmem:[%s377 + $0x8] sm:$0xff]
          %v5183 = vrsqrt.pop %v5181
          %v5184 = vmul.f32 %v5183, %v5181
          %v5185 = vmul.f32 %v5184, %v5183
          %v5186 = vmul.f32 0.5, %v5185
          %v5187 = vsub.f32 1.5, %v5186
          %v5188 = vmul.f32 %v5183, %v5187
          %v5189 = vmul.f32 %v5181, %v5188
          %vm5190 = vcmp.eq.f32.partialorder %v5181, inf
          %v5191 = vsel %vm5190, %v5181, %v5189
          %vm5192 = vcmp.eq.f32.partialorder %v5181, 0.0
          %v5193 = vand.u32 %v5181, 2147483648
          %v5194 = vsel %vm5192, %v5193, %v5191
          %v5195 = vrsqrt.pop %v5182
          %v5196 = vmul.f32 %v5195, %v5182
          %v5197 = vmul.f32 %v5196, %v5195
          %v5198 = vmul.f32 0.5, %v5197
          %v5199 = vsub.f32 1.5, %v5198
          %v5200 = vmul.f32 %v5195, %v5199
          %v5201 = vmul.f32 %v5182, %v5200
          %vm5202 = vcmp.eq.f32.partialorder %v5182, inf
          %v5203 = vsel %vm5202, %v5182, %v5201
          %vm5204 = vcmp.eq.f32.partialorder %v5182, 0.0
          %v5205 = vand.u32 %v5182, 2147483648
          %v5206 = vsel %vm5204, %v5205, %v5203
          %5207 = vst [vmem:[%s377] sm:$0xff] %v5194
          %5208 = vst [vmem:[%s377 + $0x8] sm:$0xff] %v5206
        $region72: #{tpu_custom_call.1} parent=39 // pred_fallthru
          _
        %s5209 = sand.u32 %s175, 1
        %s5210 = scalar_lea.sflag [#allocation4], %s5209
        %s5211 = sand.u32 %s175, 1
        %s5212 = smul.addr %s5211, 16
        %s5213 = scalar_lea.vmem [#allocation11], %s5212
        // Predicated region
        $region73: #{tpu_custom_call.1} parent=39 // pred_check
          %p5214 = pneg %p185
        $region74: #{tpu_custom_call.1} parent=39 // pred_check_branch
          %5216 = sbr.rel (%p5214) target = $region76
        $region75: #{tpu_custom_call.1} parent=39 // pred_region
          %s5217 = smul.u32 2, %s30
          %5219 = vsyncadd %s5210, 0
          %s5220 = smul.addr %s29, 2
          %s5221 = sadd.s32 %s5217, %s5220
          %s5222 = smul.addr %s5221, 8
          %s5223 = scalar_lea.hbm %s5, %s5222
          %s5224 = sshll.u32 %s5213, 4
          %s5225 = int_to_ptr.vmem [resolvable:$true] %s5224
          %s5226 = sshll.u32 %s5223, 4
          %s5227 = int_to_ptr.hbm [resolvable:$true] %s5226
          %5232 = dma.vmem_to_hbm [thread:$0]  %s5225, 256, %s5227, %s5210, 128, 128, 8
        $region76: #{tpu_custom_call.1} parent=39 // pred_fallthru
          _
      $region40: #{tpu_custom_call.1} parent=5 // pred_fallthru
        _
      %p5233 = scmp.le.s32.totalorder 2, %s19
      // Predicated region
      $region77: #{tpu_custom_call.1} parent=5 // pred_check
        %p5234 = pneg %p5233
      $region78: #{tpu_custom_call.1} parent=5 // pred_check_branch
        %5236 = sbr.rel (%p5234) target = $region80
      $region79: #{tpu_custom_call.1} parent=5 // pred_region
        %s5237 = ssub.s32 %s19, 2
        // Predicated region
        $region81: #{tpu_custom_call.1} parent=79 // pred_check
          %p5238 = pneg %p191
        $region82: #{tpu_custom_call.1} parent=79 // pred_check_branch
          %5240 = sbr.rel (%p5238) target = $region84
        $region83: #{tpu_custom_call.1} parent=79 // pred_region
          %s5241 = sand.u32 %s176, 1
          %s5242 = scalar_lea.sflag [#allocation4], %s5241
          %s5243 = sand.u32 %s176, 1
          %s5244 = smul.addr %s5243, 16
          %s5245 = scalar_lea.vmem [#allocation11], %s5244
          %5247 = dma.done %s5242, 256
        $region84: #{tpu_custom_call.1} parent=79 // pred_fallthru
          _
      $region80: #{tpu_custom_call.1} parent=5 // pred_fallthru
        _
    $region6: #{tpu_custom_call.1} parent=1 // loop_footer
      %s23 = sadd.s32 1, %s19
    $region7: #{tpu_custom_call.1} parent=1 // loop_footer_branch
      %18 = sbr.rel target = $region3
    $region8: #{tpu_custom_call.1} parent=1 // loop_exit
      _
    %5248 = vsyncpa [#allocation3], 1
    %s5249 = scalar_lea.sflag [#allocation3], 1
    %5250 = vsyncpa %s5249, 1
    %5251 = vsyncpa [#allocation6], 1
    %5252 = vsyncpa [#allocation9], 1
    %5253 = vsyncpa [#allocation4], 1
    %s5254 = scalar_lea.sflag [#allocation4], 1
    %5255 = vsyncpa %s5254, 1

// kernel: tpu_custom_call.1
$region0: #{tpu_custom_call.1}
  #allocation0 [shape = 'u32[]', space=smem, size = 0x4, offset = 0x4, fixed_abs, tag = 'smem constant byte address 0x4 - core index']
  #allocation1 [shape = 'u32[72,128]{1,0:T(1,128)}', space=vmem, size = 0x9000, scoped, tag = 'internal scratch']
  #allocation12 [shape = 's32[]', space=sflag, size = 0x4, offset = 0, fixed_abs, tag = 'sflag constant byte address 0x0 - dummy sync flag']
  %s0 = inlined_call_operand.hbm [shape: f32[2,2,4,16,16], index: 0, kind: input, shape index: {}]
  %s1 = inlined_call_operand.hbm [shape: f32[16,16], index: 1, kind: input, shape index: {}]
  %s2 = inlined_call_operand.hbm [shape: f32[16,16], index: 2, kind: input, shape index: {}]
  %s3 = inlined_call_operand.hbm [shape: f32[16,128], index: 3, kind: input, shape index: {}]
  %s4 = inlined_call_operand.hbm [shape: f32[16,128], index: 4, kind: input, shape index: {}]
  %s5 = inlined_call_operand.hbm [shape: f32[2,16,128], index: 5, kind: output, shape index: {}]
  %s6 = sld [smem:[#allocation0]]
  $region85: #{tpu_custom_call.1} parent=0
    _
  %s8 = ssub.s32 1, %s6
  %s9 = scalar_select 0, %s8, %s6
  $region1: #{tpu_custom_call.1} parent=0
    #allocation2 [shape = 'u8[131072]{0}', space=vmem, size = 0x20000, scoped, tag = 'input window, operand 0']
    #allocation3 [shape = 's32[2]{0}', space=sflag, size = 0x8, scoped, tag = 'scoped memory for tpu_custom_call.1']
    #allocation4 [shape = 's32[2]{0}', space=sflag, size = 0x8, scoped, tag = 'scoped memory for tpu_custom_call.1']
    #allocation5 [shape = 'u8[8192]{0}', space=vmem, size = 0x2000, scoped, tag = 'input window, operand 1, single buffered']
    #allocation6 [shape = 's32[1]{0}', space=sflag, size = 0x4, scoped, tag = 'scoped memory for tpu_custom_call.1']
    #allocation7 [shape = 'u8[8192]{0}', space=vmem, size = 0x2000, scoped, tag = 'input window, operand 2, single buffered']
    #allocation8 [shape = 'u8[8192]{0}', space=vmem, size = 0x2000, scoped, tag = 'input window, operand 3, single buffered']
    #allocation9 [shape = 's32[1]{0}', space=sflag, size = 0x4, scoped, tag = 'scoped memory for tpu_custom_call.1']
    #allocation10 [shape = 'u8[8192]{0}', space=vmem, size = 0x2000, scoped, tag = 'input window, operand 4, single buffered']
    #allocation11 [shape = 'u8[16384]{0}', space=vmem, size = 0x4000, scoped, tag = 'output window, operand 0']
    %10 = vsyncpa [#allocation3], 0
    %s11 = scalar_lea.sflag [#allocation3], 1
    %12 = vsyncpa %s11, 0
    %13 = vsyncpa [#allocation6], 0
    %14 = vsyncpa [#allocation9], 0
    %15 = vsyncpa [#allocation4], 0
    %s16 = scalar_lea.sflag [#allocation4], 1
    %17 = vsyncpa %s16, 0
    loop: start=0, step=1, limit=4
    $region2: #{tpu_custom_call.1} parent=1 // loop_pre_header
      _
    $region3: #{tpu_custom_call.1} parent=1 // loop_header
      %s19 = sphi 0, %s23
      %p20 = scmp.ge.s32.totalorder %s19, 4
      %s26 = sphi 0, %s45
      %s27 = sphi 0, %s41
      %s28 = sphi 0, %s37
      %s29 = sphi 0, %s26
      %s30 = sphi 0, %s27
      %s31 = sphi 0, %s28
      %s32 = sphi 0, %s29
      %s33 = sphi 0, %s30
      %s34 = sphi 0, %s31
      %s50 = sphi 0, %s52
      %s53 = sphi 0, %s50
      %s54 = sphi 0, %s53
      %s70 = sphi 0, %s54
      %s76 = sphi 0, %s78
      %s79 = sphi 0, %s76
      %s80 = sphi 0, %s79
      %s96 = sphi 0, %s80
      %s102 = sphi 0, %s104
      %s105 = sphi 0, %s102
      %s106 = sphi 0, %s105
      %s122 = sphi 0, %s106
      %s126 = sphi 0, %s126
      %s128 = sphi 0, %s126
      %s129 = sphi 0, %s128
      %s143 = sphi 0, %s129
      %s147 = sphi 0, %s147
      %s149 = sphi 0, %s147
      %s150 = sphi 0, %s149
      %s164 = sphi 0, %s150
      %s172 = sphi 0, %s174
      %s175 = sphi 0, %s172
      %s176 = sphi 0, %s175
      %s192 = sphi 0, %s176
    $region4: #{tpu_custom_call.1} parent=1 // loop_header_branch
      %22 = sbr.rel (%p20) target = $region8
    $region5: #{tpu_custom_call.1} parent=1 // loop_body
      %s24 = ssub.s32 %s19, 1
      %s25 = ssub.s32 %s19, 2
      %s35 = sadd.s32 1, %s28
      %p36 = scmp.ge.s32.totalorder %s35, 1
      %s37 = scalar_select %p36, 0, %s35
      %s38 = sadd.s32 1, %s27
      %s39 = scalar_select %p36, %s38, %s27
      %p40 = scmp.ge.s32.totalorder %s39, 1
      %s41 = scalar_select %p40, 0, %s39
      %s42 = sadd.s32 1, %s26
      %s43 = scalar_select %p40, %s42, %s26
      %p44 = scmp.ge.s32.totalorder %s43, 2
      %s45 = scalar_select %p44, 0, %s43
      %s46 = ssub.s32 %s26, %s45
      %s47 = ssub.s32 %s28, %s37
      %s48 = sor.u32 %s46, %s47
      %p49 = scmp.eq.s32.totalorder %s48, 0
      %s51 = sadd.s32 %s50, 1
      %s52 = scalar_select %p49, %s50, %s51
      %p55 = pneg %p49
      %p56 = scmp.eq.s32.totalorder %s19, 1
      %p57 = por %p55, %p56
      %p58 = scmp.ne.s32.totalorder %s50, %s53
      %p59 = scmp.eq.s32.totalorder %s19, 0
      %p60 = por %p58, %p59
      %p61 = scmp.ne.s32.totalorder %s50, %s53
      %p62 = scmp.eq.s32.totalorder %s24, 1
      %p63 = por %p61, %p62
      %p64 = scmp.ne.s32.totalorder %s53, %s54
      %p65 = scmp.eq.s32.totalorder %s24, 0
      %p66 = por %p64, %p65
      %p67 = scmp.ne.s32.totalorder %s53, %s54
      %p68 = scmp.eq.s32.totalorder %s25, 1
      %p69 = por %p67, %p68
      %p71 = scmp.ne.s32.totalorder %s54, %s70
      %p72 = scmp.eq.s32.totalorder %s25, 0
      %p73 = por %p71, %p72
      %s74 = ssub.s32 %s27, %s41
      %p75 = scmp.eq.s32.totalorder %s74, 0
      %s77 = sadd.s32 %s76, 1
      %s78 = scalar_select %p75, %s76, %s77
      %p81 = pneg %p75
      %p82 = scmp.eq.s32.totalorder %s19, 1
      %p83 = por %p81, %p82
      %p84 = scmp.ne.s32.totalorder %s76, %s79
      %p85 = scmp.eq.s32.totalorder %s19, 0
      %p86 = por %p84, %p85
      %p87 = scmp.ne.s32.totalorder %s76, %s79
      %p88 = scmp.eq.s32.totalorder %s24, 1
      %p89 = por %p87, %p88
      %p90 = scmp.ne.s32.totalorder %s79, %s80
      %p91 = scmp.eq.s32.totalorder %s24, 0
      %p92 = por %p90, %p91
      %p93 = scmp.ne.s32.totalorder %s79, %s80
      %p94 = scmp.eq.s32.totalorder %s25, 1
      %p95 = por %p93, %p94
      %p97 = scmp.ne.s32.totalorder %s80, %s96
      %p98 = scmp.eq.s32.totalorder %s25, 0
      %p99 = por %p97, %p98
      %s100 = ssub.s32 %s27, %s41
      %p101 = scmp.eq.s32.totalorder %s100, 0
      %s103 = sadd.s32 %s102, 1
      %s104 = scalar_select %p101, %s102, %s103
      %p107 = pneg %p101
      %p108 = scmp.eq.s32.totalorder %s19, 1
      %p109 = por %p107, %p108
      %p110 = scmp.ne.s32.totalorder %s102, %s105
      %p111 = scmp.eq.s32.totalorder %s19, 0
      %p112 = por %p110, %p111
      %p113 = scmp.ne.s32.totalorder %s102, %s105
      %p114 = scmp.eq.s32.totalorder %s24, 1
      %p115 = por %p113, %p114
      %p116 = scmp.ne.s32.totalorder %s105, %s106
      %p117 = scmp.eq.s32.totalorder %s24, 0
      %p118 = por %p116, %p117
      %p119 = scmp.ne.s32.totalorder %s105, %s106
      %p120 = scmp.eq.s32.totalorder %s25, 1
      %p121 = por %p119, %p120
      %p123 = scmp.ne.s32.totalorder %s106, %s122
      %p124 = scmp.eq.s32.totalorder %s25, 0
      %p125 = por %p123, %p124
      %s127 = sadd.s32 %s126, 1
      %p130 = scmp.eq.s32.totalorder %s19, 1
      %p131 = scmp.ne.s32.totalorder %s126, %s128
      %p132 = scmp.eq.s32.totalorder %s19, 0
      %p133 = por %p131, %p132
      %p134 = scmp.ne.s32.totalorder %s126, %s128
      %p135 = scmp.eq.s32.totalorder %s24, 1
      %p136 = por %p134, %p135
      %p137 = scmp.ne.s32.totalorder %s128, %s129
      %p138 = scmp.eq.s32.totalorder %s24, 0
      %p139 = por %p137, %p138
      %p140 = scmp.ne.s32.totalorder %s128, %s129
      %p141 = scmp.eq.s32.totalorder %s25, 1
      %p142 = por %p140, %p141
      %p144 = scmp.ne.s32.totalorder %s129, %s143
      %p145 = scmp.eq.s32.totalorder %s25, 0
      %p146 = por %p144, %p145
      %s148 = sadd.s32 %s147, 1
      %p151 = scmp.eq.s32.totalorder %s19, 1
      %p152 = scmp.ne.s32.totalorder %s147, %s149
      %p153 = scmp.eq.s32.totalorder %s19, 0
      %p154 = por %p152, %p153
      %p155 = scmp.ne.s32.totalorder %s147, %s149
      %p156 = scmp.eq.s32.totalorder %s24, 1
      %p157 = por %p155, %p156
      %p158 = scmp.ne.s32.totalorder %s149, %s150
      %p159 = scmp.eq.s32.totalorder %s24, 0
      %p160 = por %p158, %p159
      %p161 = scmp.ne.s32.totalorder %s149, %s150
      %p162 = scmp.eq.s32.totalorder %s25, 1
      %p163 = por %p161, %p162
      %p165 = scmp.ne.s32.totalorder %s150, %s164
      %p166 = scmp.eq.s32.totalorder %s25, 0
      %p167 = por %p165, %p166
      %s168 = ssub.s32 %s26, %s45
      %s169 = ssub.s32 %s27, %s41
      %s170 = sor.u32 %s168, %s169
      %p171 = scmp.eq.s32.totalorder %s170, 0
      %s173 = sadd.s32 %s172, 1
      %s174 = scalar_select %p171, %s172, %s173
      %p177 = pneg %p171
      %p178 = scmp.eq.s32.totalorder %s19, 1
      %p179 = por %p177, %p178
      %p180 = scmp.ne.s32.totalorder %s172, %s175
      %p181 = scmp.eq.s32.totalorder %s19, 0
      %p182 = por %p180, %p181
      %p183 = scmp.ne.s32.totalorder %s172, %s175
      %p184 = scmp.eq.s32.totalorder %s24, 1
      %p185 = por %p183, %p184
      %p186 = scmp.ne.s32.totalorder %s175, %s176
      %p187 = scmp.eq.s32.totalorder %s24, 0
      %p188 = por %p186, %p187
      %p189 = scmp.ne.s32.totalorder %s175, %s176
      %p190 = scmp.eq.s32.totalorder %s25, 1
      %p191 = por %p189, %p190
      %p193 = scmp.ne.s32.totalorder %s176, %s192
      %p194 = scmp.eq.s32.totalorder %s25, 0
      %p195 = por %p193, %p194
      %p196 = scmp.le.s32.totalorder 1, %s19
      %p197 = scmp.lt.s32.totalorder %s19, 3
      %p198 = pnand %p196, %p197
      %p199 = pneg %p198
      // Predicated region
      $region9: #{tpu_custom_call.1} parent=5 // pred_check
        _
      $region10: #{tpu_custom_call.1} parent=5 // pred_check_branch
        %201 = sbr.rel (%p198) target = $region12
      $region11: #{tpu_custom_call.1} parent=5 // pred_region
        %s202 = ssub.s32 %s19, 1
        // Predicated region
        $region13: #{tpu_custom_call.1} parent=11 // pred_check
          %p203 = pneg %p92
        $region14: #{tpu_custom_call.1} parent=11 // pred_check_branch
          %205 = sbr.rel (%p203) target = $region16
        $region15: #{tpu_custom_call.1} parent=11 // pred_region
          %s206 = smul.u32 2, %s30
          %208 = vsyncadd [#allocation6], 0
          %s209 = smul.addr %s206, 8
          %s210 = scalar_lea.hbm %s1, %s209
          %s211 = sshll.u32 %s210, 4
          %s212 = int_to_ptr.hbm [resolvable:$true] %s211
          %s213 = sshll.u32 [#allocation5], 4
          %s214 = int_to_ptr.vmem [resolvable:$true] %s213
          %219 = dma.hbm_to_vmem [thread:$0]  %s212, 256, %s214, [#allocation6], 128, 128, 8
        $region16: #{tpu_custom_call.1} parent=11 // pred_fallthru
          _
        // Predicated region
        $region17: #{tpu_custom_call.1} parent=11 // pred_check
          %p220 = pneg %p118
        $region18: #{tpu_custom_call.1} parent=11 // pred_check_branch
          %222 = sbr.rel (%p220) target = $region20
        $region19: #{tpu_custom_call.1} parent=11 // pred_region
          %s223 = smul.u32 2, %s30
          %225 = vsyncadd [#allocation6], 0
          %s226 = smul.addr %s223, 8
          %s227 = scalar_lea.hbm %s2, %s226
          %s228 = sshll.u32 %s227, 4
          %s229 = int_to_ptr.hbm [resolvable:$true] %s228
          %s230 = sshll.u32 [#allocation7], 4
          %s231 = int_to_ptr.vmem [resolvable:$true] %s230
          %236 = dma.hbm_to_vmem [thread:$0]  %s229, 256, %s231, [#allocation6], 128, 128, 8
        $region20: #{tpu_custom_call.1} parent=11 // pred_fallthru
          _
        // Predicated region
        $region21: #{tpu_custom_call.1} parent=11 // pred_check
          %p237 = pneg %p139
        $region22: #{tpu_custom_call.1} parent=11 // pred_check_branch
          %239 = sbr.rel (%p237) target = $region24
        $region23: #{tpu_custom_call.1} parent=11 // pred_region
          %241 = vsyncadd [#allocation9], 0
          %s242 = sshll.u32 %s3, 4
          %s243 = int_to_ptr.hbm [resolvable:$true] %s242
          %s244 = sshll.u32 [#allocation8], 4
          %s245 = int_to_ptr.vmem [resolvable:$true] %s244
          %250 = dma.hbm_to_vmem [thread:$0]  %s243, 256, %s245, [#allocation9], 128, 128, 8
        $region24: #{tpu_custom_call.1} parent=11 // pred_fallthru
          _
        // Predicated region
        $region25: #{tpu_custom_call.1} parent=11 // pred_check
          %p251 = pneg %p160
        $region26: #{tpu_custom_call.1} parent=11 // pred_check_branch
          %253 = sbr.rel (%p251) target = $region28
        $region27: #{tpu_custom_call.1} parent=11 // pred_region
          %255 = vsyncadd [#allocation9], 0
          %s256 = sshll.u32 %s4, 4
          %s257 = int_to_ptr.hbm [resolvable:$true] %s256
          %s258 = sshll.u32 [#allocation10], 4
          %s259 = int_to_ptr.vmem [resolvable:$true] %s258
          %264 = dma.hbm_to_vmem [thread:$0]  %s257, 256, %s259, [#allocation9], 128, 128, 8
        $region28: #{tpu_custom_call.1} parent=11 // pred_fallthru
          _
      $region12: #{tpu_custom_call.1} parent=5 // pred_fallthru
        _
      %p265 = scmp.lt.s32.totalorder %s19, 2
      // Predicated region
      $region29: #{tpu_custom_call.1} parent=5 // pred_check
        %p266 = pneg %p265
      $region30: #{tpu_custom_call.1} parent=5 // pred_check_branch
        %268 = sbr.rel (%p266) target = $region32
      $region31: #{tpu_custom_call.1} parent=5 // pred_region
        // Predicated region
        $region33: #{tpu_custom_call.1} parent=31 // pred_check
          %p269 = pneg %p60
        $region34: #{tpu_custom_call.1} parent=31 // pred_check_branch
          %271 = sbr.rel (%p269) target = $region36
        $region35: #{tpu_custom_call.1} parent=31 // pred_region
          #allocation13 [shape = 'u32[6]{0}', space=smem, size = 0x18, scoped, tag = 'DMA stride descriptor']
          %s272 = sand.u32 %s50, 1
          %s273 = scalar_lea.sflag [#allocation3], %s272
          %s274 = sand.u32 %s50, 1
          %s275 = smul.addr %s274, 128
          %s276 = scalar_lea.vmem [#allocation2], %s275
          %s277 = smul.u32 4, %s28
          %279 = vsyncadd %s273, 0
          %s280 = smul.addr %s277, 2
          %s281 = smul.addr %s26, 8
          %s282 = sadd.s32 %s280, %s281
          %s283 = smul.addr %s282, 8
          %s284 = scalar_lea.hbm %s0, %s283
          %s286 = sshll.u32 1, 14
          %s287 = sxor.u32 4294967295, %s286
          %s289 = sld [smem:[#allocation0]]
          %s290 = sadd.s32 2, %s289
          %s292 = sshll.u32 7, 26
          %s293 = sxor.u32 4294967295, %s292
          %s294 = sand.u32 0, %s293
          %s295 = sshll.u32 %s290, 26
          %s296 = sor.u32 %s294, %s295
          %s297 = sshll.u32 %s284, 4
          %s298 = int_to_ptr.hbm [resolvable:$true] %s297
          %s299 = sshll.u32 %s276, 4
          %s300 = int_to_ptr.vmem [resolvable:$true] %s299
          %306 = sst [smem:[#allocation13]] 2048
          %s307 = scalar_lea.smem [#allocation13], 1
          %308 = sst [smem:[%s307]] 1024
          %s309 = scalar_lea.smem [#allocation13], 2
          %310 = sst [smem:[%s309]] 8
          %s311 = scalar_lea.smem [#allocation13], 3
          %312 = sst [smem:[%s311]] 128
          %s313 = scalar_lea.smem [#allocation13], 4
          %314 = sst [smem:[%s313]] 128
          %s315 = scalar_lea.smem [#allocation13], 5
          %316 = sst [smem:[%s315]] 8
          %318 = dma.general %s298, 2048, %s300, %s273, [#allocation12], [#allocation13], %s296, 0
        $region36: #{tpu_custom_call.1} parent=31 // pred_fallthru
          _
      $region32: #{tpu_custom_call.1} parent=5 // pred_fallthru
        _
      %p319 = scmp.le.s32.totalorder 1, %s19
      %p320 = scmp.lt.s32.totalorder %s19, 3
      %p321 = pnand %p319, %p320
      %p322 = pneg %p321
      // Predicated region
      $region37: #{tpu_custom_call.1} parent=5 // pred_check
        _
      $region38: #{tpu_custom_call.1} parent=5 // pred_check_branch
        %324 = sbr.rel (%p321) target = $region40
      $region39: #{tpu_custom_call.1} parent=5 // pred_region
        %s325 = ssub.s32 %s19, 1
        %s326 = sand.u32 %s53, 1
        %s327 = scalar_lea.sflag [#allocation3], %s326
        %s328 = sand.u32 %s53, 1
        %s329 = smul.addr %s328, 128
        %s330 = scalar_lea.vmem [#allocation2], %s329
        // Predicated region
        $region41: #{tpu_custom_call.1} parent=39 // pred_check
          %p331 = pneg %p66
        $region42: #{tpu_custom_call.1} parent=39 // pred_check_branch
          %333 = sbr.rel (%p331) target = $region44
        $region43: #{tpu_custom_call.1} parent=39 // pred_region
          %335 = dma.done %s327, 2048
        $region44: #{tpu_custom_call.1} parent=39 // pred_fallthru
          _
        // Predicated region
        $region45: #{tpu_custom_call.1} parent=39 // pred_check
          %p336 = pneg %p92
        $region46: #{tpu_custom_call.1} parent=39 // pred_check_branch
          %338 = sbr.rel (%p336) target = $region48
        $region47: #{tpu_custom_call.1} parent=39 // pred_region
          %340 = dma.done [#allocation6], 256
        $region48: #{tpu_custom_call.1} parent=39 // pred_fallthru
          _
        // Predicated region
        $region49: #{tpu_custom_call.1} parent=39 // pred_check
          %p341 = pneg %p118
        $region50: #{tpu_custom_call.1} parent=39 // pred_check_branch
          %343 = sbr.rel (%p341) target = $region52
        $region51: #{tpu_custom_call.1} parent=39 // pred_region
          %345 = dma.done [#allocation6], 256
        $region52: #{tpu_custom_call.1} parent=39 // pred_fallthru
          _
        // Predicated region
        $region53: #{tpu_custom_call.1} parent=39 // pred_check
          %p346 = pneg %p139
        $region54: #{tpu_custom_call.1} parent=39 // pred_check_branch
          %348 = sbr.rel (%p346) target = $region56
        $region55: #{tpu_custom_call.1} parent=39 // pred_region
          %350 = dma.done [#allocation9], 256
        $region56: #{tpu_custom_call.1} parent=39 // pred_fallthru
          _
        // Predicated region
        $region57: #{tpu_custom_call.1} parent=39 // pred_check
          %p351 = pneg %p160
        $region58: #{tpu_custom_call.1} parent=39 // pred_check_branch
          %353 = sbr.rel (%p351) target = $region60
        $region59: #{tpu_custom_call.1} parent=39 // pred_region
          %355 = dma.done [#allocation9], 256
        $region60: #{tpu_custom_call.1} parent=39 // pred_fallthru
          _
        %s356 = sand.u32 %s53, 1
        %s357 = scalar_lea.sflag [#allocation3], %s356
        %s358 = sand.u32 %s53, 1
        %s359 = smul.addr %s358, 128
        %s360 = scalar_lea.vmem [#allocation2], %s359
        %p361 = pneg %p66
        %p362 = pneg %p63
        %p363 = pneg %p92
        %p364 = pneg %p89
        %p365 = pneg %p118
        %p366 = pneg %p115
        %p367 = pneg %p139
        %p368 = pneg %p136
        %p369 = pneg %p160
        %p370 = pneg %p157
        %p371 = pneg %p188
        %p372 = pneg %p185
        %s373 = sand.u32 %s175, 1
        %s374 = scalar_lea.sflag [#allocation4], %s373
        %s375 = sand.u32 %s175, 1
        %s376 = smul.addr %s375, 16
        %s377 = scalar_lea.vmem [#allocation11], %s376
        %s378 = smul.u32 4, %s31
        %s379 = smul.u32 2, %s30
        %s380 = smul.u32 2, %s30
        %s381 = smul.u32 2, %s30
        %v382 = vld [vmem:[#allocation5] sm:$0xff]
        %v383 = vld [vmem:[#allocation5 + $0x8] sm:$0xff]
        %v384 = vld [vmem:[#allocation7] sm:$0xff]
        %v385 = vld [vmem:[#allocation7 + $0x8] sm:$0xff]
        %v386 = vadd.f32 %v382, %v384
        %v387 = vadd.f32 %v383, %v385
        %v388 = vld [vmem:[#allocation8] sm:$0xff]
        %v389 = vld [vmem:[#allocation8 + $0x8] sm:$0xff]
        %v390 = vld [vmem:[#allocation10] sm:$0xff]
        %v391 = vld [vmem:[#allocation10 + $0x8] sm:$0xff]
        %v392 = vadd.f32 %v388, %v390
        %v393 = vadd.f32 %v389, %v391
        %v394 = vld [vmem:[%s330] sm:$0xff]
        %v395 = vld [vmem:[%s330 + $0x8] sm:$0xff]
        %s396 = scalar_lea.vmem %s330, 64 [#allocation2]
        %v397 = vld [vmem:[%s396] sm:$0xff]
        %v398 = vld [vmem:[%s396 + $0x8] sm:$0xff]
        %v399 = vadd.f32 %v394, %v397
        %v400 = vadd.f32 %v395, %v398
        %vm401 = vcmask 130048
        %v403 = vsel %vm401, %v382, 0
        %v406 = vsel %vm401, %v383, 0
        %408 = vmatpush.msra.mxu0 0.0
        %409 = vmatpush.msra.mxu0 0.0
        %410 = vmatpush.msra.mxu0 0.0
        %411 = vmatpush.msra.mxu0 0.0
        %412 = vmatpush.msra.mxu0 0.0
        %413 = vmatpush.msra.mxu0 0.0
        %414 = vmatpush.msra.mxu0 0.0
        %415 = vmatpush.msra.mxu0 0.0
        %416 = vmatpush.msra.mxu0 0.0
        %417 = vmatpush.msra.mxu0 0.0
        %418 = vmatpush.msra.mxu0 0.0
        %419 = vmatpush.msra.mxu0 0.0
        %420 = vmatpush.msra.mxu0 0.0
        %421 = vmatpush.msra.mxu0 0.0
        %422 = vmatpush.msra.mxu0 %v395
        %423 = vmatpush.msra.mxu0 %v394
        %424 = vmatmul.f32.gmra.mxu0 %v403
        %v425 = vpop.f32.mrf.mxu0
        %v426 = vadd.f32 0.0, %v425
        %427 = vmatmul.f32.gmra.mxu0 %v406
        %v428 = vpop.f32.mrf.mxu0
        %v429 = vadd.f32 0.0, %v428
        %430 = vdwg.mxu0
        %v432 = vsel %vm401, %v384, 0
        %v435 = vsel %vm401, %v385, 0
        %437 = vmatpush.msra.mxu0 0.0
        %438 = vmatpush.msra.mxu0 0.0
        %439 = vmatpush.msra.mxu0 0.0
        %440 = vmatpush.msra.mxu0 0.0
        %441 = vmatpush.msra.mxu0 0.0
        %442 = vmatpush.msra.mxu0 0.0
        %443 = vmatpush.msra.mxu0 0.0
        %444 = vmatpush.msra.mxu0 0.0
        %445 = vmatpush.msra.mxu0 0.0
        %446 = vmatpush.msra.mxu0 0.0
        %447 = vmatpush.msra.mxu0 0.0
        %448 = vmatpush.msra.mxu0 0.0
        %449 = vmatpush.msra.mxu0 0.0
        %450 = vmatpush.msra.mxu0 0.0
        %451 = vmatpush.msra.mxu0 %v398
        %452 = vmatpush.msra.mxu0 %v397
        %453 = vmatmul.f32.gmra.mxu0 %v432
        %v454 = vpop.f32.mrf.mxu0
        %v455 = vadd.f32 0.0, %v454
        %456 = vmatmul.f32.gmra.mxu0 %v435
        %v457 = vpop.f32.mrf.mxu0
        %v458 = vadd.f32 0.0, %v457
        %459 = vdwg.mxu0
        %v461 = vsel %vm401, %v386, 0
        %v464 = vsel %vm401, %v387, 0
        %466 = vmatpush.msra.mxu0 0.0
        %467 = vmatpush.msra.mxu0 0.0
        %468 = vmatpush.msra.mxu0 0.0
        %469 = vmatpush.msra.mxu0 0.0
        %470 = vmatpush.msra.mxu0 0.0
        %471 = vmatpush.msra.mxu0 0.0
        %472 = vmatpush.msra.mxu0 0.0
        %473 = vmatpush.msra.mxu0 0.0
        %474 = vmatpush.msra.mxu0 0.0
        %475 = vmatpush.msra.mxu0 0.0
        %476 = vmatpush.msra.mxu0 0.0
        %477 = vmatpush.msra.mxu0 0.0
        %478 = vmatpush.msra.mxu0 0.0
        %479 = vmatpush.msra.mxu0 0.0
        %480 = vmatpush.msra.mxu0 %v400
        %481 = vmatpush.msra.mxu0 %v399
        %482 = vmatmul.f32.gmra.mxu0 %v461
        %v483 = vpop.f32.mrf.mxu0
        %v484 = vadd.f32 0.0, %v483
        %485 = vmatmul.f32.gmra.mxu0 %v464
        %v486 = vpop.f32.mrf.mxu0
        %v487 = vadd.f32 0.0, %v486
        %488 = vdwg.mxu0
        %v489 = vsub.f32 %v426, %v455
        %v490 = vsub.f32 %v429, %v458
        %v491 = vsub.f32 %v484, %v426
        %v492 = vsub.f32 %v487, %v429
        %v493 = vsub.f32 %v491, %v455
        %v494 = vsub.f32 %v492, %v458
        %v495 = vadd.f32 %v489, %v493
        %v496 = vadd.f32 %v490, %v494
        %v498 = vsel %vm401, %v489, 0
        %v501 = vsel %vm401, %v490, 0
        %503 = vmatpush.msra.mxu0 0.0
        %504 = vmatpush.msra.mxu0 0.0
        %505 = vmatpush.msra.mxu0 0.0
        %506 = vmatpush.msra.mxu0 0.0
        %507 = vmatpush.msra.mxu0 0.0
        %508 = vmatpush.msra.mxu0 0.0
        %509 = vmatpush.msra.mxu0 0.0
        %510 = vmatpush.msra.mxu0 0.0
        %511 = vmatpush.msra.mxu0 0.0
        %512 = vmatpush.msra.mxu0 0.0
        %513 = vmatpush.msra.mxu0 0.0
        %514 = vmatpush.msra.mxu0 0.0
        %515 = vmatpush.msra.mxu0 0.0
        %516 = vmatpush.msra.mxu0 0.0
        %517 = vmatpush.msra.mxu0 %v389
        %518 = vmatpush.msra.mxu0 %v388
        %519 = vmatmul.f32.gmra.mxu0 %v498
        %v520 = vpop.f32.mrf.mxu0
        %v521 = vadd.f32 0.0, %v520
        %522 = vmatmul.f32.gmra.mxu0 %v501
        %v523 = vpop.f32.mrf.mxu0
        %v524 = vadd.f32 0.0, %v523
        %525 = vdwg.mxu0
        %v527 = vsel %vm401, %v493, 0
        %v530 = vsel %vm401, %v494, 0
        %532 = vmatpush.msra.mxu0 0.0
        %533 = vmatpush.msra.mxu0 0.0
        %534 = vmatpush.msra.mxu0 0.0
        %535 = vmatpush.msra.mxu0 0.0
        %536 = vmatpush.msra.mxu0 0.0
        %537 = vmatpush.msra.mxu0 0.0
        %538 = vmatpush.msra.mxu0 0.0
        %539 = vmatpush.msra.mxu0 0.0
        %540 = vmatpush.msra.mxu0 0.0
        %541 = vmatpush.msra.mxu0 0.0
        %542 = vmatpush.msra.mxu0 0.0
        %543 = vmatpush.msra.mxu0 0.0
        %544 = vmatpush.msra.mxu0 0.0
        %545 = vmatpush.msra.mxu0 0.0
        %546 = vmatpush.msra.mxu0 %v391
        %547 = vmatpush.msra.mxu0 %v390
        %548 = vmatmul.f32.gmra.mxu0 %v527
        %v549 = vpop.f32.mrf.mxu0
        %v550 = vadd.f32 0.0, %v549
        %551 = vmatmul.f32.gmra.mxu0 %v530
        %v552 = vpop.f32.mrf.mxu0
        %v553 = vadd.f32 0.0, %v552
        %554 = vdwg.mxu0
        %v556 = vsel %vm401, %v495, 0
        %v559 = vsel %vm401, %v496, 0
        %561 = vmatpush.msra.mxu0 0.0
        %562 = vmatpush.msra.mxu0 0.0
        %563 = vmatpush.msra.mxu0 0.0
        %564 = vmatpush.msra.mxu0 0.0
        %565 = vmatpush.msra.mxu0 0.0
        %566 = vmatpush.msra.mxu0 0.0
        %567 = vmatpush.msra.mxu0 0.0
        %568 = vmatpush.msra.mxu0 0.0
        %569 = vmatpush.msra.mxu0 0.0
        %570 = vmatpush.msra.mxu0 0.0
        %571 = vmatpush.msra.mxu0 0.0
        %572 = vmatpush.msra.mxu0 0.0
        %573 = vmatpush.msra.mxu0 0.0
        %574 = vmatpush.msra.mxu0 0.0
        %575 = vmatpush.msra.mxu0 %v393
        %576 = vmatpush.msra.mxu0 %v392
        %577 = vmatmul.f32.gmra.mxu0 %v556
        %v578 = vpop.f32.mrf.mxu0
        %v579 = vadd.f32 0.0, %v578
        %580 = vmatmul.f32.gmra.mxu0 %v559
        %v581 = vpop.f32.mrf.mxu0
        %v582 = vadd.f32 0.0, %v581
        %583 = vdwg.mxu0
        %v584 = vsub.f32 %v521, %v550
        %v585 = vsub.f32 %v524, %v553
        %v586 = vsub.f32 %v579, %v521
        %v587 = vsub.f32 %v582, %v524
        %v588 = vsub.f32 %v586, %v550
        %v589 = vsub.f32 %v587, %v553
        %v590 = vmul.f32 %v584, %v584
        %v591 = vmul.f32 %v585, %v585
        %v592 = vmul.f32 %v588, %v588
        %v593 = vmul.f32 %v589, %v589
        %v594 = vadd.f32 %v590, %v592
        %v595 = vadd.f32 %v591, %v593
        %s596 = scalar_lea.vmem %s330, 16 [#allocation2]
        %v597 = vld [vmem:[%s596] sm:$0xff]
        %v598 = vld [vmem:[%s596 + $0x8] sm:$0xff]
        %s599 = scalar_lea.vmem %s330, 80 [#allocation2]
        %v600 = vld [vmem:[%s599] sm:$0xff]
        %v601 = vld [vmem:[%s599 + $0x8] sm:$0xff]
        %v602 = vadd.f32 %v597, %v600
        %v603 = vadd.f32 %v598, %v601
        %604 = vmatpush.msra.mxu0 0.0
        %605 = vmatpush.msra.mxu0 0.0
        %606 = vmatpush.msra.mxu0 0.0
        %607 = vmatpush.msra.mxu0 0.0
        %608 = vmatpush.msra.mxu0 0.0
        %609 = vmatpush.msra.mxu0 0.0
        %610 = vmatpush.msra.mxu0 0.0
        %611 = vmatpush.msra.mxu0 0.0
        %612 = vmatpush.msra.mxu0 0.0
        %613 = vmatpush.msra.mxu0 0.0
        %614 = vmatpush.msra.mxu0 0.0
        %615 = vmatpush.msra.mxu0 0.0
        %616 = vmatpush.msra.mxu0 0.0
        %617 = vmatpush.msra.mxu0 0.0
        %618 = vmatpush.msra.mxu0 %v598
        %619 = vmatpush.msra.mxu0 %v597
        %620 = vmatmul.f32.gmra.mxu0 %v403
        %v621 = vpop.f32.mrf.mxu0
        %v622 = vadd.f32 0.0, %v621
        %623 = vmatmul.f32.gmra.mxu0 %v406
        %v624 = vpop.f32.mrf.mxu0
        %v625 = vadd.f32 0.0, %v624
        %626 = vdwg.mxu0
        %627 = vmatpush.msra.mxu0 0.0
        %628 = vmatpush.msra.mxu0 0.0
        %629 = vmatpush.msra.mxu0 0.0
        %630 = vmatpush.msra.mxu0 0.0
        %631 = vmatpush.msra.mxu0 0.0
        %632 = vmatpush.msra.mxu0 0.0
        %633 = vmatpush.msra.mxu0 0.0
        %634 = vmatpush.msra.mxu0 0.0
        %635 = vmatpush.msra.mxu0 0.0
        %636 = vmatpush.msra.mxu0 0.0
        %637 = vmatpush.msra.mxu0 0.0
        %638 = vmatpush.msra.mxu0 0.0
        %639 = vmatpush.msra.mxu0 0.0
        %640 = vmatpush.msra.mxu0 0.0
        %641 = vmatpush.msra.mxu0 %v601
        %642 = vmatpush.msra.mxu0 %v600
        %643 = vmatmul.f32.gmra.mxu0 %v432
        %v644 = vpop.f32.mrf.mxu0
        %v645 = vadd.f32 0.0, %v644
        %646 = vmatmul.f32.gmra.mxu0 %v435
        %v647 = vpop.f32.mrf.mxu0
        %v648 = vadd.f32 0.0, %v647
        %649 = vdwg.mxu0
        %650 = vmatpush.msra.mxu0 0.0
        %651 = vmatpush.msra.mxu0 0.0
        %652 = vmatpush.msra.mxu0 0.0
        %653 = vmatpush.msra.mxu0 0.0
        %654 = vmatpush.msra.mxu0 0.0
        %655 = vmatpush.msra.mxu0 0.0
        %656 = vmatpush.msra.mxu0 0.0
        %657 = vmatpush.msra.mxu0 0.0
        %658 = vmatpush.msra.mxu0 0.0
        %659 = vmatpush.msra.mxu0 0.0
        %660 = vmatpush.msra.mxu0 0.0
        %661 = vmatpush.msra.mxu0 0.0
        %662 = vmatpush.msra.mxu0 0.0
        %663 = vmatpush.msra.mxu0 0.0
        %664 = vmatpush.msra.mxu0 %v603
        %665 = vmatpush.msra.mxu0 %v602
        %666 = vmatmul.f32.gmra.mxu0 %v461
        %v667 = vpop.f32.mrf.mxu0
        %v668 = vadd.f32 0.0, %v667
        %669 = vmatmul.f32.gmra.mxu0 %v464
        %v670 = vpop.f32.mrf.mxu0
        %v671 = vadd.f32 0.0, %v670
        %672 = vdwg.mxu0
        %v673 = vsub.f32 %v622, %v645
        %v674 = vsub.f32 %v625, %v648
        %v675 = vsub.f32 %v668, %v622
        %v676 = vsub.f32 %v671, %v625
        %v677 = vsub.f32 %v675, %v645
        %v678 = vsub.f32 %v676, %v648
        %v679 = vadd.f32 %v673, %v677
        %v680 = vadd.f32 %v674, %v678
        %v682 = vsel %vm401, %v673, 0
        %v685 = vsel %vm401, %v674, 0
        %687 = vmatpush.msra.mxu0 0.0
        %688 = vmatpush.msra.mxu0 0.0
        %689 = vmatpush.msra.mxu0 0.0
        %690 = vmatpush.msra.mxu0 0.0
        %691 = vmatpush.msra.mxu0 0.0
        %692 = vmatpush.msra.mxu0 0.0
        %693 = vmatpush.msra.mxu0 0.0
        %694 = vmatpush.msra.mxu0 0.0
        %695 = vmatpush.msra.mxu0 0.0
        %696 = vmatpush.msra.mxu0 0.0
        %697 = vmatpush.msra.mxu0 0.0
        %698 = vmatpush.msra.mxu0 0.0
        %699 = vmatpush.msra.mxu0 0.0
        %700 = vmatpush.msra.mxu0 0.0
        %701 = vmatpush.msra.mxu0 %v389
        %702 = vmatpush.msra.mxu0 %v388
        %703 = vmatmul.f32.gmra.mxu0 %v682
        %v704 = vpop.f32.mrf.mxu0
        %v705 = vadd.f32 0.0, %v704
        %706 = vmatmul.f32.gmra.mxu0 %v685
        %v707 = vpop.f32.mrf.mxu0
        %v708 = vadd.f32 0.0, %v707
        %709 = vdwg.mxu0
        %v711 = vsel %vm401, %v677, 0
        %v714 = vsel %vm401, %v678, 0
        %716 = vmatpush.msra.mxu0 0.0
        %717 = vmatpush.msra.mxu0 0.0
        %718 = vmatpush.msra.mxu0 0.0
        %719 = vmatpush.msra.mxu0 0.0
        %720 = vmatpush.msra.mxu0 0.0
        %721 = vmatpush.msra.mxu0 0.0
        %722 = vmatpush.msra.mxu0 0.0
        %723 = vmatpush.msra.mxu0 0.0
        %724 = vmatpush.msra.mxu0 0.0
        %725 = vmatpush.msra.mxu0 0.0
        %726 = vmatpush.msra.mxu0 0.0
        %727 = vmatpush.msra.mxu0 0.0
        %728 = vmatpush.msra.mxu0 0.0
        %729 = vmatpush.msra.mxu0 0.0
        %730 = vmatpush.msra.mxu0 %v391
        %731 = vmatpush.msra.mxu0 %v390
        %732 = vmatmul.f32.gmra.mxu0 %v711
        %v733 = vpop.f32.mrf.mxu0
        %v734 = vadd.f32 0.0, %v733
        %735 = vmatmul.f32.gmra.mxu0 %v714
        %v736 = vpop.f32.mrf.mxu0
        %v737 = vadd.f32 0.0, %v736
        %738 = vdwg.mxu0
        %v740 = vsel %vm401, %v679, 0
        %v743 = vsel %vm401, %v680, 0
        %745 = vmatpush.msra.mxu0 0.0
        %746 = vmatpush.msra.mxu0 0.0
        %747 = vmatpush.msra.mxu0 0.0
        %748 = vmatpush.msra.mxu0 0.0
        %749 = vmatpush.msra.mxu0 0.0
        %750 = vmatpush.msra.mxu0 0.0
        %751 = vmatpush.msra.mxu0 0.0
        %752 = vmatpush.msra.mxu0 0.0
        %753 = vmatpush.msra.mxu0 0.0
        %754 = vmatpush.msra.mxu0 0.0
        %755 = vmatpush.msra.mxu0 0.0
        %756 = vmatpush.msra.mxu0 0.0
        %757 = vmatpush.msra.mxu0 0.0
        %758 = vmatpush.msra.mxu0 0.0
        %759 = vmatpush.msra.mxu0 %v393
        %760 = vmatpush.msra.mxu0 %v392
        %761 = vmatmul.f32.gmra.mxu0 %v740
        %v762 = vpop.f32.mrf.mxu0
        %v763 = vadd.f32 0.0, %v762
        %764 = vmatmul.f32.gmra.mxu0 %v743
        %v765 = vpop.f32.mrf.mxu0
        %v766 = vadd.f32 0.0, %v765
        %767 = vdwg.mxu0
        %v768 = vsub.f32 %v705, %v734
        %v769 = vsub.f32 %v708, %v737
        %v770 = vsub.f32 %v763, %v705
        %v771 = vsub.f32 %v766, %v708
        %v772 = vsub.f32 %v770, %v734
        %v773 = vsub.f32 %v771, %v737
        %v774 = vmul.f32 %v768, %v768
        %v775 = vmul.f32 %v769, %v769
        %v776 = vmul.f32 %v772, %v772
        %v777 = vmul.f32 %v773, %v773
        %v778 = vadd.f32 %v774, %v776
        %v779 = vadd.f32 %v775, %v777
        %v780 = vadd.f32 %v594, %v778
        %v781 = vadd.f32 %v595, %v779
        %s782 = scalar_lea.vmem %s330, 32 [#allocation2]
        %v783 = vld [vmem:[%s782] sm:$0xff]
        %v784 = vld [vmem:[%s782 + $0x8] sm:$0xff]
        %s785 = scalar_lea.vmem %s330, 96 [#allocation2]
        %v786 = vld [vmem:[%s785] sm:$0xff]
        %v787 = vld [vmem:[%s785 + $0x8] sm:$0xff]
        %v788 = vadd.f32 %v783, %v786
        %v789 = vadd.f32 %v784, %v787
        %790 = vmatpush.msra.mxu0 0.0
        %791 = vmatpush.msra.mxu0 0.0
        %792 = vmatpush.msra.mxu0 0.0
        %793 = vmatpush.msra.mxu0 0.0
        %794 = vmatpush.msra.mxu0 0.0
        %795 = vmatpush.msra.mxu0 0.0
        %796 = vmatpush.msra.mxu0 0.0
        %797 = vmatpush.msra.mxu0 0.0
        %798 = vmatpush.msra.mxu0 0.0
        %799 = vmatpush.msra.mxu0 0.0
        %800 = vmatpush.msra.mxu0 0.0
        %801 = vmatpush.msra.mxu0 0.0
        %802 = vmatpush.msra.mxu0 0.0
        %803 = vmatpush.msra.mxu0 0.0
        %804 = vmatpush.msra.mxu0 %v784
        %805 = vmatpush.msra.mxu0 %v783
        %806 = vmatmul.f32.gmra.mxu0 %v403
        %v807 = vpop.f32.mrf.mxu0
        %v808 = vadd.f32 0.0, %v807
        %809 = vmatmul.f32.gmra.mxu0 %v406
        %v810 = vpop.f32.mrf.mxu0
        %v811 = vadd.f32 0.0, %v810
        %812 = vdwg.mxu0
        %813 = vmatpush.msra.mxu0 0.0
        %814 = vmatpush.msra.mxu0 0.0
        %815 = vmatpush.msra.mxu0 0.0
        %816 = vmatpush.msra.mxu0 0.0
        %817 = vmatpush.msra.mxu0 0.0
        %818 = vmatpush.msra.mxu0 0.0
        %819 = vmatpush.msra.mxu0 0.0
        %820 = vmatpush.msra.mxu0 0.0
        %821 = vmatpush.msra.mxu0 0.0
        %822 = vmatpush.msra.mxu0 0.0
        %823 = vmatpush.msra.mxu0 0.0
        %824 = vmatpush.msra.mxu0 0.0
        %825 = vmatpush.msra.mxu0 0.0
        %826 = vmatpush.msra.mxu0 0.0
        %827 = vmatpush.msra.mxu0 %v787
        %828 = vmatpush.msra.mxu0 %v786
        %829 = vmatmul.f32.gmra.mxu0 %v432
        %v830 = vpop.f32.mrf.mxu0
        %v831 = vadd.f32 0.0, %v830
        %832 = vmatmul.f32.gmra.mxu0 %v435
        %v833 = vpop.f32.mrf.mxu0
        %v834 = vadd.f32 0.0, %v833
        %835 = vdwg.mxu0
        %836 = vmatpush.msra.mxu0 0.0
        %837 = vmatpush.msra.mxu0 0.0
        %838 = vmatpush.msra.mxu0 0.0
        %839 = vmatpush.msra.mxu0 0.0
        %840 = vmatpush.msra.mxu0 0.0
        %841 = vmatpush.msra.mxu0 0.0
        %842 = vmatpush.msra.mxu0 0.0
        %843 = vmatpush.msra.mxu0 0.0
        %844 = vmatpush.msra.mxu0 0.0
        %845 = vmatpush.msra.mxu0 0.0
        %846 = vmatpush.msra.mxu0 0.0
        %847 = vmatpush.msra.mxu0 0.0
        %848 = vmatpush.msra.mxu0 0.0
        %849 = vmatpush.msra.mxu0 0.0
        %850 = vmatpush.msra.mxu0 %v789
        %851 = vmatpush.msra.mxu0 %v788
        %852 = vmatmul.f32.gmra.mxu0 %v461
        %v853 = vpop.f32.mrf.mxu0
        %v854 = vadd.f32 0.0, %v853
        %855 = vmatmul.f32.gmra.mxu0 %v464
        %v856 = vpop.f32.mrf.mxu0
        %v857 = vadd.f32 0.0, %v856
        %858 = vdwg.mxu0
        %v859 = vsub.f32 %v808, %v831
        %v860 = vsub.f32 %v811, %v834
        %v861 = vsub.f32 %v854, %v808
        %v862 = vsub.f32 %v857, %v811
        %v863 = vsub.f32 %v861, %v831
        %v864 = vsub.f32 %v862, %v834
        %v865 = vadd.f32 %v859, %v863
        %v866 = vadd.f32 %v860, %v864
        %v868 = vsel %vm401, %v859, 0
        %v871 = vsel %vm401, %v860, 0
        %873 = vmatpush.msra.mxu0 0.0
        %874 = vmatpush.msra.mxu0 0.0
        %875 = vmatpush.msra.mxu0 0.0
        %876 = vmatpush.msra.mxu0 0.0
        %877 = vmatpush.msra.mxu0 0.0
        %878 = vmatpush.msra.mxu0 0.0
        %879 = vmatpush.msra.mxu0 0.0
        %880 = vmatpush.msra.mxu0 0.0
        %881 = vmatpush.msra.mxu0 0.0
        %882 = vmatpush.msra.mxu0 0.0
        %883 = vmatpush.msra.mxu0 0.0
        %884 = vmatpush.msra.mxu0 0.0
        %885 = vmatpush.msra.mxu0 0.0
        %886 = vmatpush.msra.mxu0 0.0
        %887 = vmatpush.msra.mxu0 %v389
        %888 = vmatpush.msra.mxu0 %v388
        %889 = vmatmul.f32.gmra.mxu0 %v868
        %v890 = vpop.f32.mrf.mxu0
        %v891 = vadd.f32 0.0, %v890
        %892 = vmatmul.f32.gmra.mxu0 %v871
        %v893 = vpop.f32.mrf.mxu0
        %v894 = vadd.f32 0.0, %v893
        %895 = vdwg.mxu0
        %v897 = vsel %vm401, %v863, 0
        %v900 = vsel %vm401, %v864, 0
        %902 = vmatpush.msra.mxu0 0.0
        %903 = vmatpush.msra.mxu0 0.0
        %904 = vmatpush.msra.mxu0 0.0
        %905 = vmatpush.msra.mxu0 0.0
        %906 = vmatpush.msra.mxu0 0.0
        %907 = vmatpush.msra.mxu0 0.0
        %908 = vmatpush.msra.mxu0 0.0
        %909 = vmatpush.msra.mxu0 0.0
        %910 = vmatpush.msra.mxu0 0.0
        %911 = vmatpush.msra.mxu0 0.0
        %912 = vmatpush.msra.mxu0 0.0
        %913 = vmatpush.msra.mxu0 0.0
        %914 = vmatpush.msra.mxu0 0.0
        %915 = vmatpush.msra.mxu0 0.0
        %916 = vmatpush.msra.mxu0 %v391
        %917 = vmatpush.msra.mxu0 %v390
        %918 = vmatmul.f32.gmra.mxu0 %v897
        %v919 = vpop.f32.mrf.mxu0
        %v920 = vadd.f32 0.0, %v919
        %921 = vmatmul.f32.gmra.mxu0 %v900
        %v922 = vpop.f32.mrf.mxu0
        %v923 = vadd.f32 0.0, %v922
        %924 = vdwg.mxu0
        %v926 = vsel %vm401, %v865, 0
        %v929 = vsel %vm401, %v866, 0
        %931 = vmatpush.msra.mxu0 0.0
        %932 = vmatpush.msra.mxu0 0.0
        %933 = vmatpush.msra.mxu0 0.0
        %934 = vmatpush.msra.mxu0 0.0
        %935 = vmatpush.msra.mxu0 0.0
        %936 = vmatpush.msra.mxu0 0.0
        %937 = vmatpush.msra.mxu0 0.0
        %938 = vmatpush.msra.mxu0 0.0
        %939 = vmatpush.msra.mxu0 0.0
        %940 = vmatpush.msra.mxu0 0.0
        %941 = vmatpush.msra.mxu0 0.0
        %942 = vmatpush.msra.mxu0 0.0
        %943 = vmatpush.msra.mxu0 0.0
        %944 = vmatpush.msra.mxu0 0.0
        %945 = vmatpush.msra.mxu0 %v393
        %946 = vmatpush.msra.mxu0 %v392
        %947 = vmatmul.f32.gmra.mxu0 %v926
        %v948 = vpop.f32.mrf.mxu0
        %v949 = vadd.f32 0.0, %v948
        %950 = vmatmul.f32.gmra.mxu0 %v929
        %v951 = vpop.f32.mrf.mxu0
        %v952 = vadd.f32 0.0, %v951
        %953 = vdwg.mxu0
        %v954 = vsub.f32 %v891, %v920
        %v955 = vsub.f32 %v894, %v923
        %v956 = vsub.f32 %v949, %v891
        %v957 = vsub.f32 %v952, %v894
        %v958 = vsub.f32 %v956, %v920
        %v959 = vsub.f32 %v957, %v923
        %v960 = vmul.f32 %v954, %v954
        %v961 = vmul.f32 %v955, %v955
        %v962 = vmul.f32 %v958, %v958
        %v963 = vmul.f32 %v959, %v959
        %v964 = vadd.f32 %v960, %v962
        %v965 = vadd.f32 %v961, %v963
        %v966 = vadd.f32 %v780, %v964
        %v967 = vadd.f32 %v781, %v965
        %s968 = scalar_lea.vmem %s330, 48 [#allocation2]
        %v969 = vld [vmem:[%s968] sm:$0xff]
        %v970 = vld [vmem:[%s968 + $0x8] sm:$0xff]
        %s971 = scalar_lea.vmem %s330, 112 [#allocation2]
        %v972 = vld [vmem:[%s971] sm:$0xff]
        %v973 = vld [vmem:[%s971 + $0x8] sm:$0xff]
        %v974 = vadd.f32 %v969, %v972
        %v975 = vadd.f32 %v970, %v973
        %976 = vmatpush.msra.mxu0 0.0
        %977 = vmatpush.msra.mxu0 0.0
        %978 = vmatpush.msra.mxu0 0.0
        %979 = vmatpush.msra.mxu0 0.0
        %980 = vmatpush.msra.mxu0 0.0
        %981 = vmatpush.msra.mxu0 0.0
        %982 = vmatpush.msra.mxu0 0.0
        %983 = vmatpush.msra.mxu0 0.0
        %984 = vmatpush.msra.mxu0 0.0
        %985 = vmatpush.msra.mxu0 0.0
        %986 = vmatpush.msra.mxu0 0.0
        %987 = vmatpush.msra.mxu0 0.0
        %988 = vmatpush.msra.mxu0 0.0
        %989 = vmatpush.msra.mxu0 0.0
        %990 = vmatpush.msra.mxu0 %v970
        %991 = vmatpush.msra.mxu0 %v969
        %992 = vmatmul.f32.gmra.mxu0 %v403
        %v993 = vpop.f32.mrf.mxu0
        %v994 = vadd.f32 0.0, %v993
        %995 = vmatmul.f32.gmra.mxu0 %v406
        %v996 = vpop.f32.mrf.mxu0
        %v997 = vadd.f32 0.0, %v996
        %998 = vdwg.mxu0
        %999 = vmatpush.msra.mxu0 0.0
        %1000 = vmatpush.msra.mxu0 0.0
        %1001 = vmatpush.msra.mxu0 0.0
        %1002 = vmatpush.msra.mxu0 0.0
        %1003 = vmatpush.msra.mxu0 0.0
        %1004 = vmatpush.msra.mxu0 0.0
        %1005 = vmatpush.msra.mxu0 0.0
        %1006 = vmatpush.msra.mxu0 0.0
        %1007 = vmatpush.msra.mxu0 0.0
        %1008 = vmatpush.msra.mxu0 0.0
        %1009 = vmatpush.msra.mxu0 0.0
        %1010 = vmatpush.msra.mxu0 0.0
        %1011 = vmatpush.msra.mxu0 0.0
        %1012 = vmatpush.msra.mxu0 0.0
        %1013 = vmatpush.msra.mxu0 %v973
        %1014 = vmatpush.msra.mxu0 %v972
        %1015 = vmatmul.f32.gmra.mxu0 %v432
        %v1016 = vpop.f32.mrf.mxu0
        %v1017 = vadd.f32 0.0, %v1016
        %1018 = vmatmul.f32.gmra.mxu0 %v435
        %v1019 = vpop.f32.mrf.mxu0
        %v1020 = vadd.f32 0.0, %v1019
        %1021 = vdwg.mxu0
        %1022 = vmatpush.msra.mxu0 0.0
        %1023 = vmatpush.msra.mxu0 0.0
        %1024 = vmatpush.msra.mxu0 0.0
        %1025 = vmatpush.msra.mxu0 0.0
        %1026 = vmatpush.msra.mxu0 0.0
        %1027 = vmatpush.msra.mxu0 0.0
        %1028 = vmatpush.msra.mxu0 0.0
        %1029 = vmatpush.msra.mxu0 0.0
        %1030 = vmatpush.msra.mxu0 0.0
        %1031 = vmatpush.msra.mxu0 0.0
        %1032 = vmatpush.msra.mxu0 0.0
        %1033 = vmatpush.msra.mxu0 0.0
        %1034 = vmatpush.msra.mxu0 0.0
        %1035 = vmatpush.msra.mxu0 0.0
        %1036 = vmatpush.msra.mxu0 %v975
        %1037 = vmatpush.msra.mxu0 %v974
        %1038 = vmatmul.f32.gmra.mxu0 %v461
        %v1039 = vpop.f32.mrf.mxu0
        %v1040 = vadd.f32 0.0, %v1039
        %1041 = vmatmul.f32.gmra.mxu0 %v464
        %v1042 = vpop.f32.mrf.mxu0
        %v1043 = vadd.f32 0.0, %v1042
        %1044 = vdwg.mxu0
        %v1045 = vsub.f32 %v994, %v1017
        %v1046 = vsub.f32 %v997, %v1020
        %v1047 = vsub.f32 %v1040, %v994
        %v1048 = vsub.f32 %v1043, %v997
        %v1049 = vsub.f32 %v1047, %v1017
        %v1050 = vsub.f32 %v1048, %v1020
        %v1051 = vadd.f32 %v1045, %v1049
        %v1052 = vadd.f32 %v1046, %v1050
        %v1054 = vsel %vm401, %v1045, 0
        %v1057 = vsel %vm401, %v1046, 0
        %1059 = vmatpush.msra.mxu0 0.0
        %1060 = vmatpush.msra.mxu0 0.0
        %1061 = vmatpush.msra.mxu0 0.0
        %1062 = vmatpush.msra.mxu0 0.0
        %1063 = vmatpush.msra.mxu0 0.0
        %1064 = vmatpush.msra.mxu0 0.0
        %1065 = vmatpush.msra.mxu0 0.0
        %1066 = vmatpush.msra.mxu0 0.0
        %1067 = vmatpush.msra.mxu0 0.0
        %1068 = vmatpush.msra.mxu0 0.0
        %1069 = vmatpush.msra.mxu0 0.0
        %1070 = vmatpush.msra.mxu0 0.0
        %1071 = vmatpush.msra.mxu0 0.0
        %1072 = vmatpush.msra.mxu0 0.0
        %1073 = vmatpush.msra.mxu0 %v389
        %1074 = vmatpush.msra.mxu0 %v388
        %1075 = vmatmul.f32.gmra.mxu0 %v1054
        %v1076 = vpop.f32.mrf.mxu0
        %v1077 = vadd.f32 0.0, %v1076
        %1078 = vmatmul.f32.gmra.mxu0 %v1057
        %v1079 = vpop.f32.mrf.mxu0
        %v1080 = vadd.f32 0.0, %v1079
        %1081 = vdwg.mxu0
        %v1083 = vsel %vm401, %v1049, 0
        %v1086 = vsel %vm401, %v1050, 0
        %1088 = vmatpush.msra.mxu0 0.0
        %1089 = vmatpush.msra.mxu0 0.0
        %1090 = vmatpush.msra.mxu0 0.0
        %1091 = vmatpush.msra.mxu0 0.0
        %1092 = vmatpush.msra.mxu0 0.0
        %1093 = vmatpush.msra.mxu0 0.0
        %1094 = vmatpush.msra.mxu0 0.0
        %1095 = vmatpush.msra.mxu0 0.0
        %1096 = vmatpush.msra.mxu0 0.0
        %1097 = vmatpush.msra.mxu0 0.0
        %1098 = vmatpush.msra.mxu0 0.0
        %1099 = vmatpush.msra.mxu0 0.0
        %1100 = vmatpush.msra.mxu0 0.0
        %1101 = vmatpush.msra.mxu0 0.0
        %1102 = vmatpush.msra.mxu0 %v391
        %1103 = vmatpush.msra.mxu0 %v390
        %1104 = vmatmul.f32.gmra.mxu0 %v1083
        %v1105 = vpop.f32.mrf.mxu0
        %v1106 = vadd.f32 0.0, %v1105
        %1107 = vmatmul.f32.gmra.mxu0 %v1086
        %v1108 = vpop.f32.mrf.mxu0
        %v1109 = vadd.f32 0.0, %v1108
        %1110 = vdwg.mxu0
        %v1112 = vsel %vm401, %v1051, 0
        %v1115 = vsel %vm401, %v1052, 0
        %1117 = vmatpush.msra.mxu0 0.0
        %1118 = vmatpush.msra.mxu0 0.0
        %1119 = vmatpush.msra.mxu0 0.0
        %1120 = vmatpush.msra.mxu0 0.0
        %1121 = vmatpush.msra.mxu0 0.0
        %1122 = vmatpush.msra.mxu0 0.0
        %1123 = vmatpush.msra.mxu0 0.0
        %1124 = vmatpush.msra.mxu0 0.0
        %1125 = vmatpush.msra.mxu0 0.0
        %1126 = vmatpush.msra.mxu0 0.0
        %1127 = vmatpush.msra.mxu0 0.0
        %1128 = vmatpush.msra.mxu0 0.0
        %1129 = vmatpush.msra.mxu0 0.0
        %1130 = vmatpush.msra.mxu0 0.0
        %1131 = vmatpush.msra.mxu0 %v393
        %1132 = vmatpush.msra.mxu0 %v392
        %1133 = vmatmul.f32.gmra.mxu0 %v1112
        %v1134 = vpop.f32.mrf.mxu0
        %v1135 = vadd.f32 0.0, %v1134
        %1136 = vmatmul.f32.gmra.mxu0 %v1115
        %v1137 = vpop.f32.mrf.mxu0
        %v1138 = vadd.f32 0.0, %v1137
        %1139 = vdwg.mxu0
        %v1140 = vsub.f32 %v1077, %v1106
        %v1141 = vsub.f32 %v1080, %v1109
        %v1142 = vsub.f32 %v1135, %v1077
        %v1143 = vsub.f32 %v1138, %v1080
        %v1144 = vsub.f32 %v1142, %v1106
        %v1145 = vsub.f32 %v1143, %v1109
        %v1146 = vmul.f32 %v1140, %v1140
        %v1147 = vmul.f32 %v1141, %v1141
        %v1148 = vmul.f32 %v1144, %v1144
        %v1149 = vmul.f32 %v1145, %v1145
        %v1150 = vadd.f32 %v1146, %v1148
        %v1151 = vadd.f32 %v1147, %v1149
        %v1152 = vadd.f32 %v966, %v1150
        %v1153 = vadd.f32 %v967, %v1151
        %p1154 = scmp.eq.s32.totalorder %s31, 0
        // Predicated region
        $region61: #{tpu_custom_call.1} parent=39 // pred_check
          %p1155 = pneg %p1154
        $region62: #{tpu_custom_call.1} parent=39 // pred_check_branch
          %1157 = sbr.rel (%p1155) target = $region64
        $region63: #{tpu_custom_call.1} parent=39 // pred_region
          %1158 = vst [vmem:[%s377] sm:$0xff] %v1152
          %1159 = vst [vmem:[%s377 + $0x8] sm:$0xff] %v1153
        $region64: #{tpu_custom_call.1} parent=39 // pred_fallthru
          _
        %p1160 = scmp.ne.s32.totalorder %s31, 0
        // Predicated region
        $region65: #{tpu_custom_call.1} parent=39 // pred_check
          %p1161 = pneg %p1160
        $region66: #{tpu_custom_call.1} parent=39 // pred_check_branch
          %1163 = sbr.rel (%p1161) target = $region68
        $region67: #{tpu_custom_call.1} parent=39 // pred_region
          %v1164 = vld [vmem:[%s377] sm:$0xff]
          %v1165 = vld [vmem:[%s377 + $0x8] sm:$0xff]
          %v1166 = vadd.f32 %v1164, %v1152
          %v1167 = vadd.f32 %v1165, %v1153
          %1168 = vst [vmem:[%s377] sm:$0xff] %v1166
          %1169 = vst [vmem:[%s377 + $0x8] sm:$0xff] %v1167
        $region68: #{tpu_custom_call.1} parent=39 // pred_fallthru
          _
        // Predicated region
        $region69: #{tpu_custom_call.1} parent=39 // pred_check
          %p1170 = pneg %p1154
        $region70: #{tpu_custom_call.1} parent=39 // pred_check_branch
          %1172 = sbr.rel (%p1170) target = $region72
        $region71: #{tpu_custom_call.1} parent=39 // pred_region
          %v1173 = vld [vmem:[%s377] sm:$0xff]
          %v1174 = vld [vmem:[%s377 + $0x8] sm:$0xff]
          %v1175 = vrsqrt.pop %v1173
          %v1176 = vmul.f32 %v1175, %v1173
          %v1177 = vmul.f32 %v1176, %v1175
          %v1178 = vmul.f32 0.5, %v1177
          %v1179 = vsub.f32 1.5, %v1178
          %v1180 = vmul.f32 %v1175, %v1179
          %v1181 = vmul.f32 %v1173, %v1180
          %vm1182 = vcmp.eq.f32.partialorder %v1173, inf
          %v1183 = vsel %vm1182, %v1173, %v1181
          %vm1184 = vcmp.eq.f32.partialorder %v1173, 0.0
          %v1185 = vand.u32 %v1173, 2147483648
          %v1186 = vsel %vm1184, %v1185, %v1183
          %v1187 = vrsqrt.pop %v1174
          %v1188 = vmul.f32 %v1187, %v1174
          %v1189 = vmul.f32 %v1188, %v1187
          %v1190 = vmul.f32 0.5, %v1189
          %v1191 = vsub.f32 1.5, %v1190
          %v1192 = vmul.f32 %v1187, %v1191
          %v1193 = vmul.f32 %v1174, %v1192
          %vm1194 = vcmp.eq.f32.partialorder %v1174, inf
          %v1195 = vsel %vm1194, %v1174, %v1193
          %vm1196 = vcmp.eq.f32.partialorder %v1174, 0.0
          %v1197 = vand.u32 %v1174, 2147483648
          %v1198 = vsel %vm1196, %v1197, %v1195
          %1199 = vst [vmem:[%s377] sm:$0xff] %v1186
          %1200 = vst [vmem:[%s377 + $0x8] sm:$0xff] %v1198
        $region72: #{tpu_custom_call.1} parent=39 // pred_fallthru
          _
        %s1201 = sand.u32 %s175, 1
        %s1202 = scalar_lea.sflag [#allocation4], %s1201
        %s1203 = sand.u32 %s175, 1
        %s1204 = smul.addr %s1203, 16
        %s1205 = scalar_lea.vmem [#allocation11], %s1204
        // Predicated region
        $region73: #{tpu_custom_call.1} parent=39 // pred_check
          %p1206 = pneg %p185
        $region74: #{tpu_custom_call.1} parent=39 // pred_check_branch
          %1208 = sbr.rel (%p1206) target = $region76
        $region75: #{tpu_custom_call.1} parent=39 // pred_region
          %s1209 = smul.u32 2, %s30
          %1211 = vsyncadd %s1202, 0
          %s1212 = smul.addr %s29, 2
          %s1213 = sadd.s32 %s1209, %s1212
          %s1214 = smul.addr %s1213, 8
          %s1215 = scalar_lea.hbm %s5, %s1214
          %s1216 = sshll.u32 %s1205, 4
          %s1217 = int_to_ptr.vmem [resolvable:$true] %s1216
          %s1218 = sshll.u32 %s1215, 4
          %s1219 = int_to_ptr.hbm [resolvable:$true] %s1218
          %1224 = dma.vmem_to_hbm [thread:$0]  %s1217, 256, %s1219, %s1202, 128, 128, 8
        $region76: #{tpu_custom_call.1} parent=39 // pred_fallthru
          _
      $region40: #{tpu_custom_call.1} parent=5 // pred_fallthru
        _
      %p1225 = scmp.le.s32.totalorder 2, %s19
      // Predicated region
      $region77: #{tpu_custom_call.1} parent=5 // pred_check
        %p1226 = pneg %p1225
      $region78: #{tpu_custom_call.1} parent=5 // pred_check_branch
        %1228 = sbr.rel (%p1226) target = $region80
      $region79: #{tpu_custom_call.1} parent=5 // pred_region
        %s1229 = ssub.s32 %s19, 2
        // Predicated region
        $region81: #{tpu_custom_call.1} parent=79 // pred_check
          %p1230 = pneg %p191
        $region82: #{tpu_custom_call.1} parent=79 // pred_check_branch
          %1232 = sbr.rel (%p1230) target = $region84
        $region83: #{tpu_custom_call.1} parent=79 // pred_region
          %s1233 = sand.u32 %s176, 1
          %s1234 = scalar_lea.sflag [#allocation4], %s1233
          %s1235 = sand.u32 %s176, 1
          %s1236 = smul.addr %s1235, 16
          %s1237 = scalar_lea.vmem [#allocation11], %s1236
          %1239 = dma.done %s1234, 256
        $region84: #{tpu_custom_call.1} parent=79 // pred_fallthru
          _
      $region80: #{tpu_custom_call.1} parent=5 // pred_fallthru
        _
    $region6: #{tpu_custom_call.1} parent=1 // loop_footer
      %s23 = sadd.s32 1, %s19
    $region7: #{tpu_custom_call.1} parent=1 // loop_footer_branch
      %18 = sbr.rel target = $region3
    $region8: #{tpu_custom_call.1} parent=1 // loop_exit
      _
    %1240 = vsyncpa [#allocation3], 1
    %s1241 = scalar_lea.sflag [#allocation3], 1
    %1242 = vsyncpa %s1241, 1
    %1243 = vsyncpa [#allocation6], 1
    %1244 = vsyncpa [#allocation9], 1
    %1245 = vsyncpa [#allocation4], 1
    %s1246 = scalar_lea.sflag [#allocation4], 1
    %1247 = vsyncpa %s1246, 1

</llo_original>
